<compile_context>
chip_gen: v7x
topology: tpu7x:2x2x1
jax: 0.10.0
libtpu: 0.0.40
codegen_flags: <defaults>
</compile_context>

<pallas_src>
import functools
import math

import jax
import jax.numpy as jnp
from jax import lax
from jax.experimental import pallas as pl
from jax.experimental.pallas import tpu as pltpu


DTYPE = jnp.bfloat16            # storage dtype for params / activations
VMEM_LIMIT = 32 * 1024 * 1024   # safe on v5e/v6e and v7x (64 MiB/TC)
LANE = 128


def _gelu_tanh(y):
    # TODO(synk): roberta-base uses erf-GELU; tanh approximation differs at ~1e-3.
    c = math.sqrt(2.0 / math.pi)
    return 0.5 * y * (1.0 + jnp.tanh(c * (y + 0.044715 * y * y * y)))


def _layernorm_f32(y, g, b, eps):
    mu = jnp.mean(y, axis=-1, keepdims=True)
    var = jnp.mean(jnp.square(y - mu), axis=-1, keepdims=True)
    return (y - mu) * lax.rsqrt(var + eps) * g + b


def _head_pad(dh):
    # pad per-head width up to a multiple of 128 lanes
    return ((dh + LANE - 1) // LANE) * LANE


# ------------------ embedding layernorm (fused residual add) -----------------

def _add_layernorm_kernel(eps, x_ref, r_ref, g_ref, b_ref, o_ref):
    y = x_ref[...].astype(jnp.float32) + r_ref[...].astype(jnp.float32)
    o_ref[...] = _layernorm_f32(
        y, g_ref[...].astype(jnp.float32), b_ref[...].astype(jnp.float32), eps
    ).astype(o_ref.dtype)


def add_layernorm(x, res, g, b, eps=1e-5, tm=256):
    M, H = x.shape
    tm = min(tm, M)
    assert M % tm == 0
    row = pl.BlockSpec((tm, H), lambda i: (i, 0))
    vec = pl.BlockSpec((1, H), lambda i: (0, 0))
    return pl.pallas_call(
        functools.partial(_add_layernorm_kernel, eps),
        out_shape=jax.ShapeDtypeStruct((M, H), x.dtype),
        grid=(M // tm,),
        in_specs=[row, row, vec, vec],
        out_specs=row,
        compiler_params=pltpu.CompilerParams(
            dimension_semantics=("parallel",), vmem_limit_bytes=VMEM_LIMIT),
    )(x, res, g.reshape(1, H), b.reshape(1, H))


# ------- fused attention block: QKV -> attention -> out-proj -> add+LN1 ------

def _attn_block_kernel(num_heads, dp, scale, eps,
                       h_ref, wqkv_ref, bqkv_ref, wo_ref, bo_ref,
                       g_ref, bln_ref, bias_ref, o_ref, qkv_ref, acc_ref):
    x = h_ref[0]                                   # (S, H) bf16
    bias = bias_ref[0].astype(jnp.float32)         # (1, S) additive key mask

    # Fused, head-padded QKV projection. Padded lanes have zero weight/bias so
    # they stay exactly zero and do not perturb the scores / values.
    qkv_ref[...] = (jnp.dot(x, wqkv_ref[...], preferred_element_type=jnp.float32)
                    + bqkv_ref[...].astype(jnp.float32)).astype(qkv_ref.dtype)

    acc_ref[...] = jnp.zeros_like(acc_ref)
    nh = num_heads
    for hd in range(nh):                           # static unroll; 128-aligned slices
        q = qkv_ref[:, hd * dp:(hd + 1) * dp]
        k = qkv_ref[:, (nh + hd) * dp:(nh + hd + 1) * dp]
        v = qkv_ref[:, (2 * nh + hd) * dp:(2 * nh + hd + 1) * dp]
        # scores via dot_general contracting the head dims (no k.T transpose)
        s = lax.dot_general(q, k, (((1,), (1,)), ((), ())),
                            preferred_element_type=jnp.float32) * scale + bias
        m = jnp.max(s, axis=-1, keepdims=True)
        p = jnp.exp(s - m)
        inv = pl.reciprocal(jnp.sum(p, axis=-1, keepdims=True), approx=True)
        # normalize the small (S, Dp) output instead of the (S, S) probabilities
        o_h = jnp.dot(p.astype(v.dtype), v, preferred_element_type=jnp.float32) * inv
        # fold the output projection into the head loop (no concatenate, no
        # materialized (S, H) attention output); padded wo rows are zero.
        acc_ref[...] += jnp.dot(o_h.astype(wo_ref.dtype),
                                wo_ref[hd * dp:(hd + 1) * dp, :],
                                preferred_element_type=jnp.float32)

    # out-proj bias + residual + LayerNorm1, all in f32, one lane-dense store
    y = acc_ref[...] + bo_ref[...].astype(jnp.float32) + x.astype(jnp.float32)
    o_ref[0] = _layernorm_f32(
        y, g_ref[...].astype(jnp.float32), bln_ref[...].astype(jnp.float32), eps
    ).astype(o_ref.dtype)


def attention_block(h, mask_bias, wqkv, bqkv, wo, bo, g, bln,
                    num_heads, dh, dp, eps=1e-5):
    # h: (B, S, H); mask_bias: (B, 1, S) additive f32 key bias
    B, S, H = h.shape
    W3 = wqkv.shape[1]                  # 3 * num_heads * dp
    scale = 1.0 / math.sqrt(dh)
    flops = (2 * B * S * H * W3                       # QKV projection
             + 4 * B * num_heads * S * S * dp         # scores + PV
             + 2 * B * S * num_heads * dp * H)        # output projection
    cost = pl.CostEstimate(
        flops=flops,
        transcendentals=B * num_heads * S * S,
        bytes_accessed=(2 * B * S * H + H * W3 + num_heads * dp * H) * 2)
    return pl.pallas_call(
        functools.partial(_attn_block_kernel, num_heads, dp, scale, eps),
        out_shape=jax.ShapeDtypeStruct((B, S, H), h.dtype),
        grid=(B,),
        in_specs=[
            pl.BlockSpec((1, S, H), lambda b: (b, 0, 0)),
            pl.BlockSpec((H, W3), lambda b: (0, 0)),
            pl.BlockSpec((1, W3), lambda b: (0, 0)),
            pl.BlockSpec((num_heads * dp, H), lambda b: (0, 0)),
            pl.BlockSpec((1, H), lambda b: (0, 0)),
            pl.BlockSpec((1, H), lambda b: (0, 0)),
            pl.BlockSpec((1, H), lambda b: (0, 0)),
            pl.BlockSpec((1, 1, S), lambda b: (b, 0, 0)),
        ],
        out_specs=pl.BlockSpec((1, S, H), lambda b: (b, 0, 0)),
        scratch_shapes=[pltpu.VMEM((S, W3), h.dtype),       # packed QKV activations
                        pltpu.VMEM((S, H), jnp.float32)],    # out-proj accumulator
        compiler_params=pltpu.CompilerParams(
            dimension_semantics=("parallel",), vmem_limit_bytes=VMEM_LIMIT),
        cost_estimate=cost,
    )(h, wqkv, bqkv.reshape(1, W3), wo, bo.reshape(1, H),
      g.reshape(1, H), bln.reshape(1, H), mask_bias)


# --------- fused FFN block: gelu(x@w1+b1)@w2+b2 -> residual add + LN2 --------

def _ffn_ln_kernel(eps, x_ref, w1_ref, b1_ref, w2_ref, b2_ref, g_ref, bln_ref,
                   o_ref, acc_ref):
    j = pl.program_id(1)

    @pl.when(j == 0)
    def _init():
        acc_ref[...] = jnp.zeros_like(acc_ref)

    hmid = jnp.dot(x_ref[...], w1_ref[...], preferred_element_type=jnp.float32)
    hmid = _gelu_tanh(hmid + b1_ref[...].astype(jnp.float32))
    acc_ref[...] += jnp.dot(hmid.astype(w2_ref.dtype), w2_ref[...],
                            preferred_element_type=jnp.float32)

    @pl.when(j == pl.num_programs(1) - 1)
    def _finish():
        y = (acc_ref[...] + b2_ref[...].astype(jnp.float32)
             + x_ref[...].astype(jnp.float32))               # residual fused
        o_ref[...] = _layernorm_f32(
            y, g_ref[...].astype(jnp.float32), bln_ref[...].astype(jnp.float32),
            eps).astype(o_ref.dtype)


def ffn_block(x, w1, b1, w2, b2, g, bln, eps=1e-5, tm=256, tf=512):
    M, H = x.shape
    Hw, F = w1.shape
    assert H == Hw and w2.shape == (F, H)
    tm, tf = min(tm, M), min(tf, F)
    assert M % tm == 0 and F % tf == 0
    cost = pl.CostEstimate(
        flops=4 * M * F * H, transcendentals=M * F,
        bytes_accessed=(2 * M * H + 2 * H * F) * x.dtype.itemsize)
    return pl.pallas_call(
        functools.partial(_ffn_ln_kernel, eps),
        out_shape=jax.ShapeDtypeStruct((M, H), x.dtype),
        grid=(M // tm, F // tf),
        in_specs=[
            pl.BlockSpec((tm, H), lambda i, j: (i, 0)),
            pl.BlockSpec((H, tf), lambda i, j: (0, j)),
            pl.BlockSpec((1, tf), lambda i, j: (0, j)),
            pl.BlockSpec((tf, H), lambda i, j: (j, 0)),
            pl.BlockSpec((1, H), lambda i, j: (0, 0)),
            pl.BlockSpec((1, H), lambda i, j: (0, 0)),
            pl.BlockSpec((1, H), lambda i, j: (0, 0)),
        ],
        out_specs=pl.BlockSpec((tm, H), lambda i, j: (i, 0)),
        scratch_shapes=[pltpu.VMEM((tm, H), jnp.float32)],
        compiler_params=pltpu.CompilerParams(
            dimension_semantics=("parallel", "arbitrary"),
            vmem_limit_bytes=VMEM_LIMIT),
        cost_estimate=cost,
    )(x, w1, b1.reshape(1, F), w2, b2.reshape(1, H),
      g.reshape(1, H), bln.reshape(1, H))


# ------------- fused classifier head: Linear -> ReLU -> (drop) -> Linear -----

def _head_kernel(x_ref, wp_ref, bp_ref, wc_ref, bc_ref, o_ref):
    x = x_ref[...]
    h = jnp.dot(x, wp_ref[...], preferred_element_type=jnp.float32)
    h = jnp.maximum(h + bp_ref[...].astype(jnp.float32), 0.0)
    # TODO(synk): Dropout(p=0.3) is identity in eval/inference; training-mode
    # stochastic dropout not implemented.
    o = jnp.dot(h.astype(wc_ref.dtype), wc_ref[...],
                preferred_element_type=jnp.float32)
    o_ref[...] = (o + bc_ref[...].astype(jnp.float32)).astype(o_ref.dtype)


def classifier_head(pooler, w_pre, b_pre, w_cls, b_cls):
    B, H = pooler.shape
    C = w_cls.shape[1]

    def full(shape):
        zeros = (0,) * len(shape)
        return pl.BlockSpec(shape, lambda i, zeros=zeros: zeros)

    return pl.pallas_call(
        _head_kernel,
        out_shape=jax.ShapeDtypeStruct((B, C), jnp.float32),
        grid=(1,),
        in_specs=[full((B, H)), full((H, H)), full((1, H)),
                  full((H, C)), full((1, C))],
        out_specs=full((B, C)),
        compiler_params=pltpu.CompilerParams(vmem_limit_bytes=VMEM_LIMIT),
    )(pooler, w_pre, b_pre.reshape(1, H), w_cls, b_cls.reshape(1, C))


# ------------------------ parameter init / packing ---------------------------

def _pack_qkv(wq, wk, wv, bq, bk, bv, num_heads, dh, dp):
    # Pack [Q|K|V] with each head's slot padded to dp lanes (pad weights/bias = 0).
    H = wq.shape[0]

    def pad_w(w):
        w = w.reshape(H, num_heads, dh)
        w = jnp.pad(w, ((0, 0), (0, 0), (0, dp - dh)))
        return w.reshape(H, num_heads * dp)

    def pad_b(b):
        b = b.reshape(num_heads, dh)
        b = jnp.pad(b, ((0, 0), (0, dp - dh)))
        return b.reshape(num_heads * dp)

    w = jnp.concatenate([pad_w(wq), pad_w(wk), pad_w(wv)], axis=-1)
    b = jnp.concatenate([pad_b(bq), pad_b(bk), pad_b(bv)], axis=-1)
    return w, b


def _pad_wo(wo, num_heads, dh, dp):
    # Zero-pad out-projection rows to match the padded per-head layout (exact math).
    H = wo.shape[1]
    w = wo.reshape(num_heads, dh, H)
    w = jnp.pad(w, ((0, 0), (0, dp - dh), (0, 0)))
    return w.reshape(num_heads * dp, H)


def init_params(key, cfg, dtype=DTYPE):
    H, F, V, P, C, L, nH = (cfg["hidden"], cfg["ffn"], cfg["vocab"],
                            cfg["max_pos"], cfg["classes"], cfg["layers"],
                            cfg["heads"])
    dh = H // nH
    dp = _head_pad(dh)
    keys = jax.random.split(key, 4 + L)

    def dense(k, shape):
        return (0.02 * jax.random.normal(k, shape, jnp.float32)).astype(dtype)

    params = {
        "word_emb": dense(keys[0], (V, H)),
        "pos_emb": dense(keys[1], (P, H)),
        "tok_emb": dense(keys[2], (1, H)),
        "emb_ln_g": jnp.ones((H,), dtype),
        "emb_ln_b": jnp.zeros((H,), dtype),
        "layers": [],
    }
    for l in range(L):
        lk = jax.random.split(keys[3 + l], 6)
        wq, wk, wv = (dense(lk[0], (H, H)), dense(lk[1], (H, H)),
                      dense(lk[2], (H, H)))
        zb = jnp.zeros((H,), dtype)
        w_qkv, b_qkv = _pack_qkv(wq, wk, wv, zb, zb, zb, nH, dh, dp)
        params["layers"].append({
            "w_qkv": w_qkv, "b_qkv": b_qkv,
            "wo": _pad_wo(dense(lk[3], (H, H)), nH, dh, dp),
            "bo": jnp.zeros((H,), dtype),
            "ln1_g": jnp.ones((H,), dtype), "ln1_b": jnp.zeros((H,), dtype),
            "w1": dense(lk[4], (H, F)), "b1": jnp.zeros((F,), dtype),
            "w2": dense(lk[5], (F, H)), "b2": jnp.zeros((H,), dtype),
            "ln2_g": jnp.ones((H,), dtype), "ln2_b": jnp.zeros((H,), dtype),
        })
    hk = jax.random.split(keys[3 + L], 2)
    params["w_pre"] = dense(hk[0], (H, H))
    params["b_pre"] = jnp.zeros((H,), dtype)
    params["w_cls"] = dense(hk[1], (H, C))
    params["b_cls"] = jnp.zeros((C,), dtype)
    return params


# ----------------------------- model (glue) ----------------------------------

def forward(params, input_ids, attention_mask, cfg):
    B, S = input_ids.shape
    H, nH = cfg["hidden"], cfg["heads"]
    dh = H // nH
    dp = _head_pad(dh)
    pad_id = cfg["pad_id"]
    M = B * S

    # --- roberta embeddings (gathers in plain JAX; add + LN fused in Pallas) ---
    mask_i = attention_mask.astype(jnp.int32)
    position_ids = (jnp.cumsum(mask_i, axis=1) * mask_i + pad_id).astype(jnp.int32)
    we = params["word_emb"][input_ids]                           # (B, S, H)
    pe = params["pos_emb"][position_ids] + params["tok_emb"][0]  # (B, S, H)
    h = add_layernorm(we.reshape(M, H), pe.reshape(M, H),
                      params["emb_ln_g"], params["emb_ln_b"])

    mask_bias = ((1.0 - attention_mask.astype(jnp.float32)) * -1e9).reshape(B, 1, S)

    # --- transformer encoder layers (post-LN, roberta style) ---
    # Two fused pallas_calls per layer:
    #   attention_block : QKV -> MHA -> out-proj -> +residual -> LN1
    #   ffn_block       : GELU FFN -> +residual -> LN2
    for lp in params["layers"]:
        a = attention_block(h.reshape(B, S, H), mask_bias,
                            lp["w_qkv"], lp["b_qkv"], lp["wo"], lp["bo"],
                            lp["ln1_g"], lp["ln1_b"], nH, dh, dp)
        h = ffn_block(a.reshape(M, H), lp["w1"], lp["b1"], lp["w2"], lp["b2"],
                      lp["ln2_g"], lp["ln2_b"])

    hidden_state = h.reshape(B, S, H)

    # --- head: hidden_state[:, 0] -> Linear -> ReLU -> Dropout(id) -> Linear ---
    pooler = hidden_state[:, 0]                                   # (B, H)
    logits = classifier_head(pooler, params["w_pre"], params["b_pre"],
                             params["w_cls"], params["b_cls"])    # (B, 3) f32
    return logits


# --------------------------------- main --------------------------------------

if __name__ == "__main__":
    cfg = dict(vocab=128, max_pos=32, hidden=256, heads=4, layers=2,
               ffn=1024, classes=3, pad_id=1)

    key = jax.random.PRNGKey(0)
    pkey, dkey = jax.random.split(key)
    params = init_params(pkey, cfg)

    B, S = 2, 8
    input_ids = jax.random.randint(dkey, (B, S), 3, cfg["vocab"], dtype=jnp.int32)
    attention_mask = jnp.ones((B, S), jnp.int32).at[1, 6:].set(0)
    input_ids = jnp.where(attention_mask == 1, input_ids, cfg["pad_id"])

    fwd = jax.jit(functools.partial(forward, cfg=cfg))
    logits = fwd(params, input_ids, attention_mask)
    jax.block_until_ready(logits)

    assert logits.shape == (B, cfg["classes"])
    assert logits.dtype == jnp.float32
    assert bool(jnp.all(jnp.isfinite(logits)))
    print("KERNEL_OK")
</pallas_src>

<mosaic_0001>
module attributes {stable_mosaic.version = 11 : i64} {
  func.func @_add_layernorm_kernel(%arg0: i32, %arg1: memref<16x256xbf16, #tpu.memory_space<vmem>>, %arg2: memref<16x256xbf16, #tpu.memory_space<vmem>>, %arg3: memref<1x256xbf16, #tpu.memory_space<vmem>>, %arg4: memref<1x256xbf16, #tpu.memory_space<vmem>>, %arg5: memref<16x256xbf16, #tpu.memory_space<vmem>>) attributes {dimension_semantics = [#tpu.dimension_semantics<parallel>], iteration_bounds = array<i64: 1>, scalar_prefetch = 0 : i64, scratch_operands = 0 : i64, tpu.core_type = #tpu.core_type<tc>, window_params = [{transform_indices = @transform_0, window_bounds = array<i64: 16, 256>}, {transform_indices = @transform_1, window_bounds = array<i64: 16, 256>}, {pipeline_mode = #tpu.pipeline_mode<synchronous>, transform_indices = @transform_2, window_bounds = array<i64: 1, 256>}, {pipeline_mode = #tpu.pipeline_mode<synchronous>, transform_indices = @transform_3, window_bounds = array<i64: 1, 256>}, {transform_indices = @transform_4, window_bounds = array<i64: 16, 256>}]} {
    %c0 = arith.constant 0 : index
    %c0_0 = arith.constant 0 : index
    %0 = vector.load %arg1[%c0, %c0_0] : memref<16x256xbf16, #tpu.memory_space<vmem>>, vector<16x256xbf16>
    %1 = arith.extf %0 : vector<16x256xbf16> to vector<16x256xf32>
    %c0_1 = arith.constant 0 : index
    %c0_2 = arith.constant 0 : index
    %2 = vector.load %arg2[%c0_1, %c0_2] : memref<16x256xbf16, #tpu.memory_space<vmem>>, vector<16x256xbf16>
    %3 = arith.extf %2 : vector<16x256xbf16> to vector<16x256xf32>
    %4 = arith.addf %1, %3 : vector<16x256xf32>
    %c0_3 = arith.constant 0 : index
    %c0_4 = arith.constant 0 : index
    %5 = vector.load %arg3[%c0_3, %c0_4] : memref<1x256xbf16, #tpu.memory_space<vmem>>, vector<1x256xbf16>
    %6 = arith.extf %5 : vector<1x256xbf16> to vector<1x256xf32>
    %c0_5 = arith.constant 0 : index
    %c0_6 = arith.constant 0 : index
    %7 = vector.load %arg4[%c0_5, %c0_6] : memref<1x256xbf16, #tpu.memory_space<vmem>>, vector<1x256xbf16>
    %8 = arith.extf %7 : vector<1x256xbf16> to vector<1x256xf32>
    %cst = arith.constant dense<0.000000e+00> : vector<16xf32>
    %9 = vector.multi_reduction <add>, %4, %cst [1] : vector<16x256xf32> to vector<16xf32>
    %10 = vector.shape_cast %9 : vector<16xf32> to vector<16x1xf32>
    %cst_7 = arith.constant 2.560000e+02 : f32
    %11 = vector.broadcast %cst_7 : f32 to vector<16x1xf32>
    %12 = arith.divf %10, %11 : vector<16x1xf32>
    %13 = vector.broadcast %12 : vector<16x1xf32> to vector<16x256xf32>
    %14 = arith.subf %4, %13 : vector<16x256xf32>
    %15 = arith.mulf %14, %14 : vector<16x256xf32>
    %cst_8 = arith.constant dense<0.000000e+00> : vector<16xf32>
    %16 = vector.multi_reduction <add>, %15, %cst_8 [1] : vector<16x256xf32> to vector<16xf32>
    %17 = vector.shape_cast %16 : vector<16xf32> to vector<16x1xf32>
    %cst_9 = arith.constant 2.560000e+02 : f32
    %18 = vector.broadcast %cst_9 : f32 to vector<16x1xf32>
    %19 = arith.divf %17, %18 : vector<16x1xf32>
    %20 = vector.broadcast %12 : vector<16x1xf32> to vector<16x256xf32>
    %21 = arith.subf %4, %20 : vector<16x256xf32>
    %cst_10 = arith.constant 9.99999974E-6 : f32
    %22 = vector.broadcast %cst_10 : f32 to vector<16x1xf32>
    %23 = arith.addf %19, %22 : vector<16x1xf32>
    %24 = math.rsqrt %23 : vector<16x1xf32>
    %25 = vector.broadcast %24 : vector<16x1xf32> to vector<16x256xf32>
    %26 = arith.mulf %21, %25 : vector<16x256xf32>
    %27 = vector.broadcast %6 : vector<1x256xf32> to vector<16x256xf32>
    %28 = arith.mulf %26, %27 : vector<16x256xf32>
    %29 = vector.broadcast %8 : vector<1x256xf32> to vector<16x256xf32>
    %30 = arith.addf %28, %29 : vector<16x256xf32>
    %31 = arith.truncf %30 : vector<16x256xf32> to vector<16x256xbf16>
    %c0_11 = arith.constant 0 : index
    %c0_12 = arith.constant 0 : index
    %32 = vector.load %arg5[%c0_11, %c0_12] : memref<16x256xbf16, #tpu.memory_space<vmem>>, vector<16x256xbf16>
    tpu.vector_store %arg5[%c0_11, %c0_12], %31 {strides = array<i32>} : memref<16x256xbf16, #tpu.memory_space<vmem>>, vector<16x256xbf16>,
    return
  }
  func.func @transform_0(%arg0: i32) -> (i32, i32) {
    %c0_i32 = arith.constant 0 : i32
    %c0_i32_0 = arith.constant 0 : i32
    return %arg0, %c0_i32 : i32, i32
  }
  func.func @transform_1(%arg0: i32) -> (i32, i32) {
    %c0_i32 = arith.constant 0 : i32
    %c0_i32_0 = arith.constant 0 : i32
    return %arg0, %c0_i32 : i32, i32
  }
  func.func @transform_2(%arg0: i32) -> (i32, i32) {
    %c0_i32 = arith.constant 0 : i32
    %c0_i32_0 = arith.constant 0 : i32
    %c0_i32_1 = arith.constant 0 : i32
    return %c0_i32, %c0_i32_0 : i32, i32
  }
  func.func @transform_3(%arg0: i32) -> (i32, i32) {
    %c0_i32 = arith.constant 0 : i32
    %c0_i32_0 = arith.constant 0 : i32
    %c0_i32_1 = arith.constant 0 : i32
    return %c0_i32, %c0_i32_0 : i32, i32
  }
  func.func @transform_4(%arg0: i32) -> (i32, i32) {
    %c0_i32 = arith.constant 0 : i32
    %c0_i32_0 = arith.constant 0 : i32
    return %arg0, %c0_i32 : i32, i32
  }
}

module attributes {stable_mosaic.version = 11 : i64} {
  func.func @_attn_block_kernel(%arg0: i32, %arg1: memref<1x8x256xbf16, #tpu.memory_space<vmem>>, %arg2: memref<256x1536xbf16, #tpu.memory_space<vmem>>, %arg3: memref<1x1536xbf16, #tpu.memory_space<vmem>>, %arg4: memref<512x256xbf16, #tpu.memory_space<vmem>>, %arg5: memref<1x256xbf16, #tpu.memory_space<vmem>>, %arg6: memref<1x256xbf16, #tpu.memory_space<vmem>>, %arg7: memref<1x256xbf16, #tpu.memory_space<vmem>>, %arg8: memref<1x1x8xf32, #tpu.memory_space<vmem>>, %arg9: memref<1x8x256xbf16, #tpu.memory_space<vmem>>, %arg10: memref<8x1536xbf16, #tpu.memory_space<vmem>>, %arg11: memref<8x256xf32, #tpu.memory_space<vmem>>) attributes {dimension_semantics = [#tpu.dimension_semantics<parallel>], iteration_bounds = array<i64: 2>, scalar_prefetch = 0 : i64, scratch_operands = 2 : i64, tpu.core_type = #tpu.core_type<tc>, window_params = [{transform_indices = @transform_0, window_bounds = array<i64: 1, 8, 256>}, {pipeline_mode = #tpu.pipeline_mode<synchronous>, transform_indices = @transform_1, window_bounds = array<i64: 256, 1536>}, {pipeline_mode = #tpu.pipeline_mode<synchronous>, transform_indices = @transform_2, window_bounds = array<i64: 1, 1536>}, {pipeline_mode = #tpu.pipeline_mode<synchronous>, transform_indices = @transform_3, window_bounds = array<i64: 512, 256>}, {pipeline_mode = #tpu.pipeline_mode<synchronous>, transform_indices = @transform_4, window_bounds = array<i64: 1, 256>}, {pipeline_mode = #tpu.pipeline_mode<synchronous>, transform_indices = @transform_5, window_bounds = array<i64: 1, 256>}, {pipeline_mode = #tpu.pipeline_mode<synchronous>, transform_indices = @transform_6, window_bounds = array<i64: 1, 256>}, {transform_indices = @transform_7, window_bounds = array<i64: 1, 1, 8>}, {transform_indices = @transform_8, window_bounds = array<i64: 1, 8, 256>}]} {
    %c0 = arith.constant 0 : index
    %c0_0 = arith.constant 0 : index
    %c0_1 = arith.constant 0 : index
    %0 = vector.load %arg1[%c0, %c0_0, %c0_1] : memref<1x8x256xbf16, #tpu.memory_space<vmem>>, vector<1x8x256xbf16>
    %1 = vector.shape_cast %0 : vector<1x8x256xbf16> to vector<8x256xbf16>
    %c0_2 = arith.constant 0 : index
    %c0_3 = arith.constant 0 : index
    %c0_4 = arith.constant 0 : index
    %2 = vector.load %arg8[%c0_2, %c0_3, %c0_4] : memref<1x1x8xf32, #tpu.memory_space<vmem>>, vector<1x1x8xf32>
    %3 = vector.shape_cast %2 : vector<1x1x8xf32> to vector<1x8xf32>
    %c0_5 = arith.constant 0 : index
    %c0_6 = arith.constant 0 : index
    %4 = vector.load %arg2[%c0_5, %c0_6] : memref<256x1536xbf16, #tpu.memory_space<vmem>>, vector<256x1536xbf16>
    %cst = arith.constant dense<0.000000e+00> : vector<8x1536xf32>
    %5 = tpu.matmul %1, %4, %cst {dimension_numbers = #tpu.dot_dimension_numbers<[1], [0], [0], [1], [0, 0, 1, 1], [], []>} : vector<8x256xbf16>, vector<256x1536xbf16>, vector<8x1536xf32> -> vector<8x1536xf32>
    %c0_7 = arith.constant 0 : index
    %c0_8 = arith.constant 0 : index
    %6 = vector.load %arg3[%c0_7, %c0_8] : memref<1x1536xbf16, #tpu.memory_space<vmem>>, vector<1x1536xbf16>
    %7 = arith.extf %6 : vector<1x1536xbf16> to vector<1x1536xf32>
    %8 = vector.broadcast %7 : vector<1x1536xf32> to vector<8x1536xf32>
    %9 = arith.addf %5, %8 : vector<8x1536xf32>
    %10 = arith.truncf %9 : vector<8x1536xf32> to vector<8x1536xbf16>
    %c0_9 = arith.constant 0 : index
    %c0_10 = arith.constant 0 : index
    %11 = vector.load %arg10[%c0_9, %c0_10] : memref<8x1536xbf16, #tpu.memory_space<vmem>>, vector<8x1536xbf16>
    tpu.vector_store %arg10[%c0_9, %c0_10], %10 {strides = array<i32>} : memref<8x1536xbf16, #tpu.memory_space<vmem>>, vector<8x1536xbf16>,
    %cst_11 = arith.constant 0.000000e+00 : f32
    %12 = vector.broadcast %cst_11 : f32 to vector<8x256xf32>
    %c0_12 = arith.constant 0 : index
    %c0_13 = arith.constant 0 : index
    %13 = vector.load %arg11[%c0_12, %c0_13] : memref<8x256xf32, #tpu.memory_space<vmem>>, vector<8x256xf32>
    tpu.vector_store %arg11[%c0_12, %c0_13], %12 {strides = array<i32>} : memref<8x256xf32, #tpu.memory_space<vmem>>, vector<8x256xf32>,
    %c0_14 = arith.constant 0 : index
    %c0_15 = arith.constant 0 : index
    %14 = vector.load %arg10[%c0_14, %c0_15] : memref<8x1536xbf16, #tpu.memory_space<vmem>>, vector<8x128xbf16>
    %c0_16 = arith.constant 0 : index
    %c512 = arith.constant 512 : index
    %15 = vector.load %arg10[%c0_16, %c512] : memref<8x1536xbf16, #tpu.memory_space<vmem>>, vector<8x128xbf16>
    %c0_17 = arith.constant 0 : index
    %c1024 = arith.constant 1024 : index
    %16 = vector.load %arg10[%c0_17, %c1024] : memref<8x1536xbf16, #tpu.memory_space<vmem>>, vector<8x128xbf16>
    %cst_18 = arith.constant dense<0.000000e+00> : vector<8x8xf32>
    %17 = tpu.matmul %14, %15, %cst_18 {dimension_numbers = #tpu.dot_dimension_numbers<[1], [1], [0], [0], [0, 0, 1, 0], [], []>} : vector<8x128xbf16>, vector<8x128xbf16>, vector<8x8xf32> -> vector<8x8xf32>
    %cst_19 = arith.constant 1.250000e-01 : f32
    %18 = vector.broadcast %cst_19 : f32 to vector<8x8xf32>
    %19 = arith.mulf %17, %18 : vector<8x8xf32>
    %20 = vector.broadcast %3 : vector<1x8xf32> to vector<8x8xf32>
    %21 = arith.addf %19, %20 : vector<8x8xf32>
    %cst_20 = arith.constant dense<0xFF800000> : vector<8xf32>
    %22 = vector.multi_reduction <maximumf>, %21, %cst_20 [1] : vector<8x8xf32> to vector<8xf32>
    %23 = vector.shape_cast %22 : vector<8xf32> to vector<8x1xf32>
    %24 = vector.broadcast %23 : vector<8x1xf32> to vector<8x8xf32>
    %25 = arith.subf %21, %24 : vector<8x8xf32>
    %26 = math.exp %25 : vector<8x8xf32>
    %cst_21 = arith.constant dense<0.000000e+00> : vector<8xf32>
    %27 = vector.multi_reduction <add>, %26, %cst_21 [1] : vector<8x8xf32> to vector<8xf32>
    %28 = vector.shape_cast %27 : vector<8xf32> to vector<8x1xf32>
    %29 = tpu.reciprocal %28 {approx = true} : vector<8x1xf32> -> vector<8x1xf32>
    %30 = arith.truncf %26 : vector<8x8xf32> to vector<8x8xbf16>
    %cst_22 = arith.constant dense<0.000000e+00> : vector<8x128xf32>
    %31 = tpu.matmul %30, %16, %cst_22 {dimension_numbers = #tpu.dot_dimension_numbers<[1], [0], [0], [1], [0, 0, 1, 1], [], []>} : vector<8x8xbf16>, vector<8x128xbf16>, vector<8x128xf32> -> vector<8x128xf32>
    %32 = vector.broadcast %29 : vector<8x1xf32> to vector<8x128xf32>
    %33 = arith.mulf %31, %32 : vector<8x128xf32>
    %c0_23 = arith.constant 0 : index
    %c0_24 = arith.constant 0 : index
    %34 = vector.load %arg11[%c0_23, %c0_24] : memref<8x256xf32, #tpu.memory_space<vmem>>, vector<8x256xf32>
    %35 = arith.truncf %33 : vector<8x128xf32> to vector<8x128xbf16>
    %c0_25 = arith.constant 0 : index
    %c0_26 = arith.constant 0 : index
    %36 = vector.load %arg4[%c0_25, %c0_26] : memref<512x256xbf16, #tpu.memory_space<vmem>>, vector<128x256xbf16>
    %cst_27 = arith.constant dense<0.000000e+00> : vector<8x256xf32>
    %37 = tpu.matmul %35, %36, %cst_27 {dimension_numbers = #tpu.dot_dimension_numbers<[1], [0], [0], [1], [0, 0, 1, 1], [], []>} : vector<8x128xbf16>, vector<128x256xbf16>, vector<8x256xf32> -> vector<8x256xf32>
    %38 = arith.addf %34, %37 : vector<8x256xf32>
    %c0_28 = arith.constant 0 : index
    %c0_29 = arith.constant 0 : index
    %39 = vector.load %arg11[%c0_28, %c0_29] : memref<8x256xf32, #tpu.memory_space<vmem>>, vector<8x256xf32>
    tpu.vector_store %arg11[%c0_28, %c0_29], %38 {strides = array<i32>} : memref<8x256xf32, #tpu.memory_space<vmem>>, vector<8x256xf32>,
    %c0_30 = arith.constant 0 : index
    %c128 = arith.constant 128 : index
    %40 = vector.load %arg10[%c0_30, %c128] : memref<8x1536xbf16, #tpu.memory_space<vmem>>, vector<8x128xbf16>
    %c0_31 = arith.constant 0 : index
    %c640 = arith.constant 640 : index
    %41 = vector.load %arg10[%c0_31, %c640] : memref<8x1536xbf16, #tpu.memory_space<vmem>>, vector<8x128xbf16>
    %c0_32 = arith.constant 0 : index
    %c1152 = arith.constant 1152 : index
    %42 = vector.load %arg10[%c0_32, %c1152] : memref<8x1536xbf16, #tpu.memory_space<vmem>>, vector<8x128xbf16>
    %cst_33 = arith.constant dense<0.000000e+00> : vector<8x8xf32>
    %43 = tpu.matmul %40, %41, %cst_33 {dimension_numbers = #tpu.dot_dimension_numbers<[1], [1], [0], [0], [0, 0, 1, 0], [], []>} : vector<8x128xbf16>, vector<8x128xbf16>, vector<8x8xf32> -> vector<8x8xf32>
    %cst_34 = arith.constant 1.250000e-01 : f32
    %44 = vector.broadcast %cst_34 : f32 to vector<8x8xf32>
    %45 = arith.mulf %43, %44 : vector<8x8xf32>
    %46 = vector.broadcast %3 : vector<1x8xf32> to vector<8x8xf32>
    %47 = arith.addf %45, %46 : vector<8x8xf32>
    %cst_35 = arith.constant dense<0xFF800000> : vector<8xf32>
    %48 = vector.multi_reduction <maximumf>, %47, %cst_35 [1] : vector<8x8xf32> to vector<8xf32>
    %49 = vector.shape_cast %48 : vector<8xf32> to vector<8x1xf32>
    %50 = vector.broadcast %49 : vector<8x1xf32> to vector<8x8xf32>
    %51 = arith.subf %47, %50 : vector<8x8xf32>
    %52 = math.exp %51 : vector<8x8xf32>
    %cst_36 = arith.constant dense<0.000000e+00> : vector<8xf32>
    %53 = vector.multi_reduction <add>, %52, %cst_36 [1] : vector<8x8xf32> to vector<8xf32>
    %54 = vector.shape_cast %53 : vector<8xf32> to vector<8x1xf32>
    %55 = tpu.reciprocal %54 {approx = true} : vector<8x1xf32> -> vector<8x1xf32>
    %56 = arith.truncf %52 : vector<8x8xf32> to vector<8x8xbf16>
    %cst_37 = arith.constant dense<0.000000e+00> : vector<8x128xf32>
    %57 = tpu.matmul %56, %42, %cst_37 {dimension_numbers = #tpu.dot_dimension_numbers<[1], [0], [0], [1], [0, 0, 1, 1], [], []>} : vector<8x8xbf16>, vector<8x128xbf16>, vector<8x128xf32> -> vector<8x128xf32>
    %58 = vector.broadcast %55 : vector<8x1xf32> to vector<8x128xf32>
    %59 = arith.mulf %57, %58 : vector<8x128xf32>
    %c0_38 = arith.constant 0 : index
    %c0_39 = arith.constant 0 : index
    %60 = vector.load %arg11[%c0_38, %c0_39] : memref<8x256xf32, #tpu.memory_space<vmem>>, vector<8x256xf32>
    %61 = arith.truncf %59 : vector<8x128xf32> to vector<8x128xbf16>
    %c128_40 = arith.constant 128 : index
    %c0_41 = arith.constant 0 : index
    %62 = vector.load %arg4[%c128_40, %c0_41] : memref<512x256xbf16, #tpu.memory_space<vmem>>, vector<128x256xbf16>
    %cst_42 = arith.constant dense<0.000000e+00> : vector<8x256xf32>
    %63 = tpu.matmul %61, %62, %cst_42 {dimension_numbers = #tpu.dot_dimension_numbers<[1], [0], [0], [1], [0, 0, 1, 1], [], []>} : vector<8x128xbf16>, vector<128x256xbf16>, vector<8x256xf32> -> vector<8x256xf32>
    %64 = arith.addf %60, %63 : vector<8x256xf32>
    %c0_43 = arith.constant 0 : index
    %c0_44 = arith.constant 0 : index
    %65 = vector.load %arg11[%c0_43, %c0_44] : memref<8x256xf32, #tpu.memory_space<vmem>>, vector<8x256xf32>
    tpu.vector_store %arg11[%c0_43, %c0_44], %64 {strides = array<i32>} : memref<8x256xf32, #tpu.memory_space<vmem>>, vector<8x256xf32>,
    %c0_45 = arith.constant 0 : index
    %c256 = arith.constant 256 : index
    %66 = vector.load %arg10[%c0_45, %c256] : memref<8x1536xbf16, #tpu.memory_space<vmem>>, vector<8x128xbf16>
    %c0_46 = arith.constant 0 : index
    %c768 = arith.constant 768 : index
    %67 = vector.load %arg10[%c0_46, %c768] : memref<8x1536xbf16, #tpu.memory_space<vmem>>, vector<8x128xbf16>
    %c0_47 = arith.constant 0 : index
    %c1280 = arith.constant 1280 : index
    %68 = vector.load %arg10[%c0_47, %c1280] : memref<8x1536xbf16, #tpu.memory_space<vmem>>, vector<8x128xbf16>
    %cst_48 = arith.constant dense<0.000000e+00> : vector<8x8xf32>
    %69 = tpu.matmul %66, %67, %cst_48 {dimension_numbers = #tpu.dot_dimension_numbers<[1], [1], [0], [0], [0, 0, 1, 0], [], []>} : vector<8x128xbf16>, vector<8x128xbf16>, vector<8x8xf32> -> vector<8x8xf32>
    %cst_49 = arith.constant 1.250000e-01 : f32
    %70 = vector.broadcast %cst_49 : f32 to vector<8x8xf32>
    %71 = arith.mulf %69, %70 : vector<8x8xf32>
    %72 = vector.broadcast %3 : vector<1x8xf32> to vector<8x8xf32>
    %73 = arith.addf %71, %72 : vector<8x8xf32>
    %cst_50 = arith.constant dense<0xFF800000> : vector<8xf32>
    %74 = vector.multi_reduction <maximumf>, %73, %cst_50 [1] : vector<8x8xf32> to vector<8xf32>
    %75 = vector.shape_cast %74 : vector<8xf32> to vector<8x1xf32>
    %76 = vector.broadcast %75 : vector<8x1xf32> to vector<8x8xf32>
    %77 = arith.subf %73, %76 : vector<8x8xf32>
    %78 = math.exp %77 : vector<8x8xf32>
    %cst_51 = arith.constant dense<0.000000e+00> : vector<8xf32>
    %79 = vector.multi_reduction <add>, %78, %cst_51 [1] : vector<8x8xf32> to vector<8xf32>
    %80 = vector.shape_cast %79 : vector<8xf32> to vector<8x1xf32>
    %81 = tpu.reciprocal %80 {approx = true} : vector<8x1xf32> -> vector<8x1xf32>
    %82 = arith.truncf %78 : vector<8x8xf32> to vector<8x8xbf16>
    %cst_52 = arith.constant dense<0.000000e+00> : vector<8x128xf32>
    %83 = tpu.matmul %82, %68, %cst_52 {dimension_numbers = #tpu.dot_dimension_numbers<[1], [0], [0], [1], [0, 0, 1, 1], [], []>} : vector<8x8xbf16>, vector<8x128xbf16>, vector<8x128xf32> -> vector<8x128xf32>
    %84 = vector.broadcast %81 : vector<8x1xf32> to vector<8x128xf32>
    %85 = arith.mulf %83, %84 : vector<8x128xf32>
    %c0_53 = arith.constant 0 : index
    %c0_54 = arith.constant 0 : index
    %86 = vector.load %arg11[%c0_53, %c0_54] : memref<8x256xf32, #tpu.memory_space<vmem>>, vector<8x256xf32>
    %87 = arith.truncf %85 : vector<8x128xf32> to vector<8x128xbf16>
    %c256_55 = arith.constant 256 : index
    %c0_56 = arith.constant 0 : index
    %88 = vector.load %arg4[%c256_55, %c0_56] : memref<512x256xbf16, #tpu.memory_space<vmem>>, vector<128x256xbf16>
    %cst_57 = arith.constant dense<0.000000e+00> : vector<8x256xf32>
    %89 = tpu.matmul %87, %88, %cst_57 {dimension_numbers = #tpu.dot_dimension_numbers<[1], [0], [0], [1], [0, 0, 1, 1], [], []>} : vector<8x128xbf16>, vector<128x256xbf16>, vector<8x256xf32> -> vector<8x256xf32>
    %90 = arith.addf %86, %89 : vector<8x256xf32>
    %c0_58 = arith.constant 0 : index
    %c0_59 = arith.constant 0 : index
    %91 = vector.load %arg11[%c0_58, %c0_59] : memref<8x256xf32, #tpu.memory_space<vmem>>, vector<8x256xf32>
    tpu.vector_store %arg11[%c0_58, %c0_59], %90 {strides = array<i32>} : memref<8x256xf32, #tpu.memory_space<vmem>>, vector<8x256xf32>,
    %c0_60 = arith.constant 0 : index
    %c384 = arith.constant 384 : index
    %92 = vector.load %arg10[%c0_60, %c384] : memref<8x1536xbf16, #tpu.memory_space<vmem>>, vector<8x128xbf16>
    %c0_61 = arith.constant 0 : index
    %c896 = arith.constant 896 : index
    %93 = vector.load %arg10[%c0_61, %c896] : memref<8x1536xbf16, #tpu.memory_space<vmem>>, vector<8x128xbf16>
    %c0_62 = arith.constant 0 : index
    %c1408 = arith.constant 1408 : index
    %94 = vector.load %arg10[%c0_62, %c1408] : memref<8x1536xbf16, #tpu.memory_space<vmem>>, vector<8x128xbf16>
    %cst_63 = arith.constant dense<0.000000e+00> : vector<8x8xf32>
    %95 = tpu.matmul %92, %93, %cst_63 {dimension_numbers = #tpu.dot_dimension_numbers<[1], [1], [0], [0], [0, 0, 1, 0], [], []>} : vector<8x128xbf16>, vector<8x128xbf16>, vector<8x8xf32> -> vector<8x8xf32>
    %cst_64 = arith.constant 1.250000e-01 : f32
    %96 = vector.broadcast %cst_64 : f32 to vector<8x8xf32>
    %97 = arith.mulf %95, %96 : vector<8x8xf32>
    %98 = vector.broadcast %3 : vector<1x8xf32> to vector<8x8xf32>
    %99 = arith.addf %97, %98 : vector<8x8xf32>
    %cst_65 = arith.constant dense<0xFF800000> : vector<8xf32>
    %100 = vector.multi_reduction <maximumf>, %99, %cst_65 [1] : vector<8x8xf32> to vector<8xf32>
    %101 = vector.shape_cast %100 : vector<8xf32> to vector<8x1xf32>
    %102 = vector.broadcast %101 : vector<8x1xf32> to vector<8x8xf32>
    %103 = arith.subf %99, %102 : vector<8x8xf32>
    %104 = math.exp %103 : vector<8x8xf32>
    %cst_66 = arith.constant dense<0.000000e+00> : vector<8xf32>
    %105 = vector.multi_reduction <add>, %104, %cst_66 [1] : vector<8x8xf32> to vector<8xf32>
    %106 = vector.shape_cast %105 : vector<8xf32> to vector<8x1xf32>
    %107 = tpu.reciprocal %106 {approx = true} : vector<8x1xf32> -> vector<8x1xf32>
    %108 = arith.truncf %104 : vector<8x8xf32> to vector<8x8xbf16>
    %cst_67 = arith.constant dense<0.000000e+00> : vector<8x128xf32>
    %109 = tpu.matmul %108, %94, %cst_67 {dimension_numbers = #tpu.dot_dimension_numbers<[1], [0], [0], [1], [0, 0, 1, 1], [], []>} : vector<8x8xbf16>, vector<8x128xbf16>, vector<8x128xf32> -> vector<8x128xf32>
    %110 = vector.broadcast %107 : vector<8x1xf32> to vector<8x128xf32>
    %111 = arith.mulf %109, %110 : vector<8x128xf32>
    %c0_68 = arith.constant 0 : index
    %c0_69 = arith.constant 0 : index
    %112 = vector.load %arg11[%c0_68, %c0_69] : memref<8x256xf32, #tpu.memory_space<vmem>>, vector<8x256xf32>
    %113 = arith.truncf %111 : vector<8x128xf32> to vector<8x128xbf16>
    %c384_70 = arith.constant 384 : index
    %c0_71 = arith.constant 0 : index
    %114 = vector.load %arg4[%c384_70, %c0_71] : memref<512x256xbf16, #tpu.memory_space<vmem>>, vector<128x256xbf16>
    %cst_72 = arith.constant dense<0.000000e+00> : vector<8x256xf32>
    %115 = tpu.matmul %113, %114, %cst_72 {dimension_numbers = #tpu.dot_dimension_numbers<[1], [0], [0], [1], [0, 0, 1, 1], [], []>} : vector<8x128xbf16>, vector<128x256xbf16>, vector<8x256xf32> -> vector<8x256xf32>
    %116 = arith.addf %112, %115 : vector<8x256xf32>
    %c0_73 = arith.constant 0 : index
    %c0_74 = arith.constant 0 : index
    %117 = vector.load %arg11[%c0_73, %c0_74] : memref<8x256xf32, #tpu.memory_space<vmem>>, vector<8x256xf32>
    tpu.vector_store %arg11[%c0_73, %c0_74], %116 {strides = array<i32>} : memref<8x256xf32, #tpu.memory_space<vmem>>, vector<8x256xf32>,
    %c0_75 = arith.constant 0 : index
    %c0_76 = arith.constant 0 : index
    %118 = vector.load %arg11[%c0_75, %c0_76] : memref<8x256xf32, #tpu.memory_space<vmem>>, vector<8x256xf32>
    %c0_77 = arith.constant 0 : index
    %c0_78 = arith.constant 0 : index
    %119 = vector.load %arg5[%c0_77, %c0_78] : memref<1x256xbf16, #tpu.memory_space<vmem>>, vector<1x256xbf16>
    %120 = arith.extf %119 : vector<1x256xbf16> to vector<1x256xf32>
    %121 = vector.broadcast %120 : vector<1x256xf32> to vector<8x256xf32>
    %122 = arith.addf %118, %121 : vector<8x256xf32>
    %123 = arith.extf %1 : vector<8x256xbf16> to vector<8x256xf32>
    %124 = arith.addf %122, %123 : vector<8x256xf32>
    %c0_79 = arith.constant 0 : index
    %c0_80 = arith.constant 0 : index
    %125 = vector.load %arg6[%c0_79, %c0_80] : memref<1x256xbf16, #tpu.memory_space<vmem>>, vector<1x256xbf16>
    %126 = arith.extf %125 : vector<1x256xbf16> to vector<1x256xf32>
    %c0_81 = arith.constant 0 : index
    %c0_82 = arith.constant 0 : index
    %127 = vector.load %arg7[%c0_81, %c0_82] : memref<1x256xbf16, #tpu.memory_space<vmem>>, vector<1x256xbf16>
    %128 = arith.extf %127 : vector<1x256xbf16> to vector<1x256xf32>
    %cst_83 = arith.constant dense<0.000000e+00> : vector<8xf32>
    %129 = vector.multi_reduction <add>, %124, %cst_83 [1] : vector<8x256xf32> to vector<8xf32>
    %130 = vector.shape_cast %129 : vector<8xf32> to vector<8x1xf32>
    %cst_84 = arith.constant 2.560000e+02 : f32
    %131 = vector.broadcast %cst_84 : f32 to vector<8x1xf32>
    %132 = arith.divf %130, %131 : vector<8x1xf32>
    %133 = vector.broadcast %132 : vector<8x1xf32> to vector<8x256xf32>
    %134 = arith.subf %124, %133 : vector<8x256xf32>
    %135 = arith.mulf %134, %134 : vector<8x256xf32>
    %cst_85 = arith.constant dense<0.000000e+00> : vector<8xf32>
    %136 = vector.multi_reduction <add>, %135, %cst_85 [1] : vector<8x256xf32> to vector<8xf32>
    %137 = vector.shape_cast %136 : vector<8xf32> to vector<8x1xf32>
    %cst_86 = arith.constant 2.560000e+02 : f32
    %138 = vector.broadcast %cst_86 : f32 to vector<8x1xf32>
    %139 = arith.divf %137, %138 : vector<8x1xf32>
    %140 = vector.broadcast %132 : vector<8x1xf32> to vector<8x256xf32>
    %141 = arith.subf %124, %140 : vector<8x256xf32>
    %cst_87 = arith.constant 9.99999974E-6 : f32
    %142 = vector.broadcast %cst_87 : f32 to vector<8x1xf32>
    %143 = arith.addf %139, %142 : vector<8x1xf32>
    %144 = math.rsqrt %143 : vector<8x1xf32>
    %145 = vector.broadcast %144 : vector<8x1xf32> to vector<8x256xf32>
    %146 = arith.mulf %141, %145 : vector<8x256xf32>
    %147 = vector.broadcast %126 : vector<1x256xf32> to vector<8x256xf32>
    %148 = arith.mulf %146, %147 : vector<8x256xf32>
    %149 = vector.broadcast %128 : vector<1x256xf32> to vector<8x256xf32>
    %150 = arith.addf %148, %149 : vector<8x256xf32>
    %151 = arith.truncf %150 : vector<8x256xf32> to vector<8x256xbf16>
    %c0_88 = arith.constant 0 : index
    %c0_89 = arith.constant 0 : index
    %c0_90 = arith.constant 0 : index
    %152 = vector.load %arg9[%c0_88, %c0_89, %c0_90] : memref<1x8x256xbf16, #tpu.memory_space<vmem>>, vector<1x8x256xbf16>
    %153 = vector.shape_cast %152 : vector<1x8x256xbf16> to vector<8x256xbf16>
    %154 = vector.shape_cast %151 : vector<8x256xbf16> to vector<1x8x256xbf16>
    tpu.vector_store %arg9[%c0_88, %c0_89, %c0_90], %154 {strides = array<i32>} : memref<1x8x256xbf16, #tpu.memory_space<vmem>>, vector<1x8x256xbf16>,
    return
  }
  func.func @transform_0(%arg0: i32) -> (i32, i32, i32) {
    %c0_i32 = arith.constant 0 : i32
    %c0_i32_0 = arith.constant 0 : i32
    %c0_i32_1 = arith.constant 0 : i32
    return %arg0, %c0_i32, %c0_i32_0 : i32, i32, i32
  }
  func.func @transform_1(%arg0: i32) -> (i32, i32) {
    %c0_i32 = arith.constant 0 : i32
    %c0_i32_0 = arith.constant 0 : i32
    %c0_i32_1 = arith.constant 0 : i32
    return %c0_i32, %c0_i32_0 : i32, i32
  }
  func.func @transform_2(%arg0: i32) -> (i32, i32) {
    %c0_i32 = arith.constant 0 : i32
    %c0_i32_0 = arith.constant 0 : i32
    %c0_i32_1 = arith.constant 0 : i32
    return %c0_i32, %c0_i32_0 : i32, i32
  }
  func.func @transform_3(%arg0: i32) -> (i32, i32) {
    %c0_i32 = arith.constant 0 : i32
    %c0_i32_0 = arith.constant 0 : i32
    %c0_i32_1 = arith.constant 0 : i32
    return %c0_i32, %c0_i32_0 : i32, i32
  }
  func.func @transform_4(%arg0: i32) -> (i32, i32) {
    %c0_i32 = arith.constant 0 : i32
    %c0_i32_0 = arith.constant 0 : i32
    %c0_i32_1 = arith.constant 0 : i32
    return %c0_i32, %c0_i32_0 : i32, i32
  }
  func.func @transform_5(%arg0: i32) -> (i32, i32) {
    %c0_i32 = arith.constant 0 : i32
    %c0_i32_0 = arith.constant 0 : i32
    %c0_i32_1 = arith.constant 0 : i32
    return %c0_i32, %c0_i32_0 : i32, i32
  }
  func.func @transform_6(%arg0: i32) -> (i32, i32) {
    %c0_i32 = arith.constant 0 : i32
    %c0_i32_0 = arith.constant 0 : i32
    %c0_i32_1 = arith.constant 0 : i32
    return %c0_i32, %c0_i32_0 : i32, i32
  }
  func.func @transform_7(%arg0: i32) -> (i32, i32, i32) {
    %c0_i32 = arith.constant 0 : i32
    %c0_i32_0 = arith.constant 0 : i32
    %c0_i32_1 = arith.constant 0 : i32
    return %arg0, %c0_i32, %c0_i32_0 : i32, i32, i32
  }
  func.func @transform_8(%arg0: i32) -> (i32, i32, i32) {
    %c0_i32 = arith.constant 0 : i32
    %c0_i32_0 = arith.constant 0 : i32
    %c0_i32_1 = arith.constant 0 : i32
    return %arg0, %c0_i32, %c0_i32_0 : i32, i32, i32
  }
}

module attributes {stable_mosaic.version = 11 : i64} {
  func.func @_attn_block_kernel(%arg0: i32, %arg1: memref<1x8x256xbf16, #tpu.memory_space<vmem>>, %arg2: memref<256x1536xbf16, #tpu.memory_space<vmem>>, %arg3: memref<1x1536xbf16, #tpu.memory_space<vmem>>, %arg4: memref<512x256xbf16, #tpu.memory_space<vmem>>, %arg5: memref<1x256xbf16, #tpu.memory_space<vmem>>, %arg6: memref<1x256xbf16, #tpu.memory_space<vmem>>, %arg7: memref<1x256xbf16, #tpu.memory_space<vmem>>, %arg8: memref<1x1x8xf32, #tpu.memory_space<vmem>>, %arg9: memref<1x8x256xbf16, #tpu.memory_space<vmem>>, %arg10: memref<8x1536xbf16, #tpu.memory_space<vmem>>, %arg11: memref<8x256xf32, #tpu.memory_space<vmem>>) attributes {dimension_semantics = [#tpu.dimension_semantics<parallel>], iteration_bounds = array<i64: 2>, scalar_prefetch = 0 : i64, scratch_operands = 2 : i64, tpu.core_type = #tpu.core_type<tc>, window_params = [{transform_indices = @transform_0, window_bounds = array<i64: 1, 8, 256>}, {pipeline_mode = #tpu.pipeline_mode<synchronous>, transform_indices = @transform_1, window_bounds = array<i64: 256, 1536>}, {pipeline_mode = #tpu.pipeline_mode<synchronous>, transform_indices = @transform_2, window_bounds = array<i64: 1, 1536>}, {pipeline_mode = #tpu.pipeline_mode<synchronous>, transform_indices = @transform_3, window_bounds = array<i64: 512, 256>}, {pipeline_mode = #tpu.pipeline_mode<synchronous>, transform_indices = @transform_4, window_bounds = array<i64: 1, 256>}, {pipeline_mode = #tpu.pipeline_mode<synchronous>, transform_indices = @transform_5, window_bounds = array<i64: 1, 256>}, {pipeline_mode = #tpu.pipeline_mode<synchronous>, transform_indices = @transform_6, window_bounds = array<i64: 1, 256>}, {transform_indices = @transform_7, window_bounds = array<i64: 1, 1, 8>}, {transform_indices = @transform_8, window_bounds = array<i64: 1, 8, 256>}]} {
    %c0 = arith.constant 0 : index
    %c0_0 = arith.constant 0 : index
    %c0_1 = arith.constant 0 : index
    %0 = vector.load %arg1[%c0, %c0_0, %c0_1] : memref<1x8x256xbf16, #tpu.memory_space<vmem>>, vector<1x8x256xbf16>
    %1 = vector.shape_cast %0 : vector<1x8x256xbf16> to vector<8x256xbf16>
    %c0_2 = arith.constant 0 : index
    %c0_3 = arith.constant 0 : index
    %c0_4 = arith.constant 0 : index
    %2 = vector.load %arg8[%c0_2, %c0_3, %c0_4] : memref<1x1x8xf32, #tpu.memory_space<vmem>>, vector<1x1x8xf32>
    %3 = vector.shape_cast %2 : vector<1x1x8xf32> to vector<1x8xf32>
    %c0_5 = arith.constant 0 : index
    %c0_6 = arith.constant 0 : index
    %4 = vector.load %arg2[%c0_5, %c0_6] : memref<256x1536xbf16, #tpu.memory_space<vmem>>, vector<256x1536xbf16>
    %cst = arith.constant dense<0.000000e+00> : vector<8x1536xf32>
    %5 = tpu.matmul %1, %4, %cst {dimension_numbers = #tpu.dot_dimension_numbers<[1], [0], [0], [1], [0, 0, 1, 1], [], []>} : vector<8x256xbf16>, vector<256x1536xbf16>, vector<8x1536xf32> -> vector<8x1536xf32>
    %c0_7 = arith.constant 0 : index
    %c0_8 = arith.constant 0 : index
    %6 = vector.load %arg3[%c0_7, %c0_8] : memref<1x1536xbf16, #tpu.memory_space<vmem>>, vector<1x1536xbf16>
    %7 = arith.extf %6 : vector<1x1536xbf16> to vector<1x1536xf32>
    %8 = vector.broadcast %7 : vector<1x1536xf32> to vector<8x1536xf32>
    %9 = arith.addf %5, %8 : vector<8x1536xf32>
    %10 = arith.truncf %9 : vector<8x1536xf32> to vector<8x1536xbf16>
    %c0_9 = arith.constant 0 : index
    %c0_10 = arith.constant 0 : index
    %11 = vector.load %arg10[%c0_9, %c0_10] : memref<8x1536xbf16, #tpu.memory_space<vmem>>, vector<8x1536xbf16>
    tpu.vector_store %arg10[%c0_9, %c0_10], %10 {strides = array<i32>} : memref<8x1536xbf16, #tpu.memory_space<vmem>>, vector<8x1536xbf16>,
    %cst_11 = arith.constant 0.000000e+00 : f32
    %12 = vector.broadcast %cst_11 : f32 to vector<8x256xf32>
    %c0_12 = arith.constant 0 : index
    %c0_13 = arith.constant 0 : index
    %13 = vector.load %arg11[%c0_12, %c0_13] : memref<8x256xf32, #tpu.memory_space<vmem>>, vector<8x256xf32>
    tpu.vector_store %arg11[%c0_12, %c0_13], %12 {strides = array<i32>} : memref<8x256xf32, #tpu.memory_space<vmem>>, vector<8x256xf32>,
    %c0_14 = arith.constant 0 : index
    %c0_15 = arith.constant 0 : index
    %14 = vector.load %arg10[%c0_14, %c0_15] : memref<8x1536xbf16, #tpu.memory_space<vmem>>, vector<8x128xbf16>
    %c0_16 = arith.constant 0 : index
    %c512 = arith.constant 512 : index
    %15 = vector.load %arg10[%c0_16, %c512] : memref<8x1536xbf16, #tpu.memory_space<vmem>>, vector<8x128xbf16>
    %c0_17 = arith.constant 0 : index
    %c1024 = arith.constant 1024 : index
    %16 = vector.load %arg10[%c0_17, %c1024] : memref<8x1536xbf16, #tpu.memory_space<vmem>>, vector<8x128xbf16>
    %cst_18 = arith.constant dense<0.000000e+00> : vector<8x8xf32>
    %17 = tpu.matmul %14, %15, %cst_18 {dimension_numbers = #tpu.dot_dimension_numbers<[1], [1], [0], [0], [0, 0, 1, 0], [], []>} : vector<8x128xbf16>, vector<8x128xbf16>, vector<8x8xf32> -> vector<8x8xf32>
    %cst_19 = arith.constant 1.250000e-01 : f32
    %18 = vector.broadcast %cst_19 : f32 to vector<8x8xf32>
    %19 = arith.mulf %17, %18 : vector<8x8xf32>
    %20 = vector.broadcast %3 : vector<1x8xf32> to vector<8x8xf32>
    %21 = arith.addf %19, %20 : vector<8x8xf32>
    %cst_20 = arith.constant dense<0xFF800000> : vector<8xf32>
    %22 = vector.multi_reduction <maximumf>, %21, %cst_20 [1] : vector<8x8xf32> to vector<8xf32>
    %23 = vector.shape_cast %22 : vector<8xf32> to vector<8x1xf32>
    %24 = vector.broadcast %23 : vector<8x1xf32> to vector<8x8xf32>
    %25 = arith.subf %21, %24 : vector<8x8xf32>
    %26 = math.exp %25 : vector<8x8xf32>
    %cst_21 = arith.constant dense<0.000000e+00> : vector<8xf32>
    %27 = vector.multi_reduction <add>, %26, %cst_21 [1] : vector<8x8xf32> to vector<8xf32>
    %28 = vector.shape_cast %27 : vector<8xf32> to vector<8x1xf32>
    %29 = tpu.reciprocal %28 {approx = true} : vector<8x1xf32> -> vector<8x1xf32>
    %30 = arith.truncf %26 : vector<8x8xf32> to vector<8x8xbf16>
    %cst_22 = arith.constant dense<0.000000e+00> : vector<8x128xf32>
    %31 = tpu.matmul %30, %16, %cst_22 {dimension_numbers = #tpu.dot_dimension_numbers<[1], [0], [0], [1], [0, 0, 1, 1], [], []>} : vector<8x8xbf16>, vector<8x128xbf16>, vector<8x128xf32> -> vector<8x128xf32>
    %32 = vector.broadcast %29 : vector<8x1xf32> to vector<8x128xf32>
    %33 = arith.mulf %31, %32 : vector<8x128xf32>
    %c0_23 = arith.constant 0 : index
    %c0_24 = arith.constant 0 : index
    %34 = vector.load %arg11[%c0_23, %c0_24] : memref<8x256xf32, #tpu.memory_space<vmem>>, vector<8x256xf32>
    %35 = arith.truncf %33 : vector<8x128xf32> to vector<8x128xbf16>
    %c0_25 = arith.constant 0 : index
    %c0_26 = arith.constant 0 : index
    %36 = vector.load %arg4[%c0_25, %c0_26] : memref<512x256xbf16, #tpu.memory_space<vmem>>, vector<128x256xbf16>
    %cst_27 = arith.constant dense<0.000000e+00> : vector<8x256xf32>
    %37 = tpu.matmul %35, %36, %cst_27 {dimension_numbers = #tpu.dot_dimension_numbers<[1], [0], [0], [1], [0, 0, 1, 1], [], []>} : vector<8x128xbf16>, vector<128x256xbf16>, vector<8x256xf32> -> vector<8x256xf32>
    %38 = arith.addf %34, %37 : vector<8x256xf32>
    %c0_28 = arith.constant 0 : index
    %c0_29 = arith.constant 0 : index
    %39 = vector.load %arg11[%c0_28, %c0_29] : memref<8x256xf32, #tpu.memory_space<vmem>>, vector<8x256xf32>
    tpu.vector_store %arg11[%c0_28, %c0_29], %38 {strides = array<i32>} : memref<8x256xf32, #tpu.memory_space<vmem>>, vector<8x256xf32>,
    %c0_30 = arith.constant 0 : index
    %c128 = arith.constant 128 : index
    %40 = vector.load %arg10[%c0_30, %c128] : memref<8x1536xbf16, #tpu.memory_space<vmem>>, vector<8x128xbf16>
    %c0_31 = arith.constant 0 : index
    %c640 = arith.constant 640 : index
    %41 = vector.load %arg10[%c0_31, %c640] : memref<8x1536xbf16, #tpu.memory_space<vmem>>, vector<8x128xbf16>
    %c0_32 = arith.constant 0 : index
    %c1152 = arith.constant 1152 : index
    %42 = vector.load %arg10[%c0_32, %c1152] : memref<8x1536xbf16, #tpu.memory_space<vmem>>, vector<8x128xbf16>
    %cst_33 = arith.constant dense<0.000000e+00> : vector<8x8xf32>
    %43 = tpu.matmul %40, %41, %cst_33 {dimension_numbers = #tpu.dot_dimension_numbers<[1], [1], [0], [0], [0, 0, 1, 0], [], []>} : vector<8x128xbf16>, vector<8x128xbf16>, vector<8x8xf32> -> vector<8x8xf32>
    %cst_34 = arith.constant 1.250000e-01 : f32
    %44 = vector.broadcast %cst_34 : f32 to vector<8x8xf32>
    %45 = arith.mulf %43, %44 : vector<8x8xf32>
    %46 = vector.broadcast %3 : vector<1x8xf32> to vector<8x8xf32>
    %47 = arith.addf %45, %46 : vector<8x8xf32>
    %cst_35 = arith.constant dense<0xFF800000> : vector<8xf32>
    %48 = vector.multi_reduction <maximumf>, %47, %cst_35 [1] : vector<8x8xf32> to vector<8xf32>
    %49 = vector.shape_cast %48 : vector<8xf32> to vector<8x1xf32>
    %50 = vector.broadcast %49 : vector<8x1xf32> to vector<8x8xf32>
    %51 = arith.subf %47, %50 : vector<8x8xf32>
    %52 = math.exp %51 : vector<8x8xf32>
    %cst_36 = arith.constant dense<0.000000e+00> : vector<8xf32>
    %53 = vector.multi_reduction <add>, %52, %cst_36 [1] : vector<8x8xf32> to vector<8xf32>
    %54 = vector.shape_cast %53 : vector<8xf32> to vector<8x1xf32>
    %55 = tpu.reciprocal %54 {approx = true} : vector<8x1xf32> -> vector<8x1xf32>
    %56 = arith.truncf %52 : vector<8x8xf32> to vector<8x8xbf16>
    %cst_37 = arith.constant dense<0.000000e+00> : vector<8x128xf32>
    %57 = tpu.matmul %56, %42, %cst_37 {dimension_numbers = #tpu.dot_dimension_numbers<[1], [0], [0], [1], [0, 0, 1, 1], [], []>} : vector<8x8xbf16>, vector<8x128xbf16>, vector<8x128xf32> -> vector<8x128xf32>
    %58 = vector.broadcast %55 : vector<8x1xf32> to vector<8x128xf32>
    %59 = arith.mulf %57, %58 : vector<8x128xf32>
    %c0_38 = arith.constant 0 : index
    %c0_39 = arith.constant 0 : index
    %60 = vector.load %arg11[%c0_38, %c0_39] : memref<8x256xf32, #tpu.memory_space<vmem>>, vector<8x256xf32>
    %61 = arith.truncf %59 : vector<8x128xf32> to vector<8x128xbf16>
    %c128_40 = arith.constant 128 : index
    %c0_41 = arith.constant 0 : index
    %62 = vector.load %arg4[%c128_40, %c0_41] : memref<512x256xbf16, #tpu.memory_space<vmem>>, vector<128x256xbf16>
    %cst_42 = arith.constant dense<0.000000e+00> : vector<8x256xf32>
    %63 = tpu.matmul %61, %62, %cst_42 {dimension_numbers = #tpu.dot_dimension_numbers<[1], [0], [0], [1], [0, 0, 1, 1], [], []>} : vector<8x128xbf16>, vector<128x256xbf16>, vector<8x256xf32> -> vector<8x256xf32>
    %64 = arith.addf %60, %63 : vector<8x256xf32>
    %c0_43 = arith.constant 0 : index
    %c0_44 = arith.constant 0 : index
    %65 = vector.load %arg11[%c0_43, %c0_44] : memref<8x256xf32, #tpu.memory_space<vmem>>, vector<8x256xf32>
    tpu.vector_store %arg11[%c0_43, %c0_44], %64 {strides = array<i32>} : memref<8x256xf32, #tpu.memory_space<vmem>>, vector<8x256xf32>,
    %c0_45 = arith.constant 0 : index
    %c256 = arith.constant 256 : index
    %66 = vector.load %arg10[%c0_45, %c256] : memref<8x1536xbf16, #tpu.memory_space<vmem>>, vector<8x128xbf16>
    %c0_46 = arith.constant 0 : index
    %c768 = arith.constant 768 : index
    %67 = vector.load %arg10[%c0_46, %c768] : memref<8x1536xbf16, #tpu.memory_space<vmem>>, vector<8x128xbf16>
    %c0_47 = arith.constant 0 : index
    %c1280 = arith.constant 1280 : index
    %68 = vector.load %arg10[%c0_47, %c1280] : memref<8x1536xbf16, #tpu.memory_space<vmem>>, vector<8x128xbf16>
    %cst_48 = arith.constant dense<0.000000e+00> : vector<8x8xf32>
    %69 = tpu.matmul %66, %67, %cst_48 {dimension_numbers = #tpu.dot_dimension_numbers<[1], [1], [0], [0], [0, 0, 1, 0], [], []>} : vector<8x128xbf16>, vector<8x128xbf16>, vector<8x8xf32> -> vector<8x8xf32>
    %cst_49 = arith.constant 1.250000e-01 : f32
    %70 = vector.broadcast %cst_49 : f32 to vector<8x8xf32>
    %71 = arith.mulf %69, %70 : vector<8x8xf32>
    %72 = vector.broadcast %3 : vector<1x8xf32> to vector<8x8xf32>
    %73 = arith.addf %71, %72 : vector<8x8xf32>
    %cst_50 = arith.constant dense<0xFF800000> : vector<8xf32>
    %74 = vector.multi_reduction <maximumf>, %73, %cst_50 [1] : vector<8x8xf32> to vector<8xf32>
    %75 = vector.shape_cast %74 : vector<8xf32> to vector<8x1xf32>
    %76 = vector.broadcast %75 : vector<8x1xf32> to vector<8x8xf32>
    %77 = arith.subf %73, %76 : vector<8x8xf32>
    %78 = math.exp %77 : vector<8x8xf32>
    %cst_51 = arith.constant dense<0.000000e+00> : vector<8xf32>
    %79 = vector.multi_reduction <add>, %78, %cst_51 [1] : vector<8x8xf32> to vector<8xf32>
    %80 = vector.shape_cast %79 : vector<8xf32> to vector<8x1xf32>
    %81 = tpu.reciprocal %80 {approx = true} : vector<8x1xf32> -> vector<8x1xf32>
    %82 = arith.truncf %78 : vector<8x8xf32> to vector<8x8xbf16>
    %cst_52 = arith.constant dense<0.000000e+00> : vector<8x128xf32>
    %83 = tpu.matmul %82, %68, %cst_52 {dimension_numbers = #tpu.dot_dimension_numbers<[1], [0], [0], [1], [0, 0, 1, 1], [], []>} : vector<8x8xbf16>, vector<8x128xbf16>, vector<8x128xf32> -> vector<8x128xf32>
    %84 = vector.broadcast %81 : vector<8x1xf32> to vector<8x128xf32>
    %85 = arith.mulf %83, %84 : vector<8x128xf32>
    %c0_53 = arith.constant 0 : index
    %c0_54 = arith.constant 0 : index
    %86 = vector.load %arg11[%c0_53, %c0_54] : memref<8x256xf32, #tpu.memory_space<vmem>>, vector<8x256xf32>
    %87 = arith.truncf %85 : vector<8x128xf32> to vector<8x128xbf16>
    %c256_55 = arith.constant 256 : index
    %c0_56 = arith.constant 0 : index
    %88 = vector.load %arg4[%c256_55, %c0_56] : memref<512x256xbf16, #tpu.memory_space<vmem>>, vector<128x256xbf16>
    %cst_57 = arith.constant dense<0.000000e+00> : vector<8x256xf32>
    %89 = tpu.matmul %87, %88, %cst_57 {dimension_numbers = #tpu.dot_dimension_numbers<[1], [0], [0], [1], [0, 0, 1, 1], [], []>} : vector<8x128xbf16>, vector<128x256xbf16>, vector<8x256xf32> -> vector<8x256xf32>
    %90 = arith.addf %86, %89 : vector<8x256xf32>
    %c0_58 = arith.constant 0 : index
    %c0_59 = arith.constant 0 : index
    %91 = vector.load %arg11[%c0_58, %c0_59] : memref<8x256xf32, #tpu.memory_space<vmem>>, vector<8x256xf32>
    tpu.vector_store %arg11[%c0_58, %c0_59], %90 {strides = array<i32>} : memref<8x256xf32, #tpu.memory_space<vmem>>, vector<8x256xf32>,
    %c0_60 = arith.constant 0 : index
    %c384 = arith.constant 384 : index
    %92 = vector.load %arg10[%c0_60, %c384] : memref<8x1536xbf16, #tpu.memory_space<vmem>>, vector<8x128xbf16>
    %c0_61 = arith.constant 0 : index
    %c896 = arith.constant 896 : index
    %93 = vector.load %arg10[%c0_61, %c896] : memref<8x1536xbf16, #tpu.memory_space<vmem>>, vector<8x128xbf16>
    %c0_62 = arith.constant 0 : index
    %c1408 = arith.constant 1408 : index
    %94 = vector.load %arg10[%c0_62, %c1408] : memref<8x1536xbf16, #tpu.memory_space<vmem>>, vector<8x128xbf16>
    %cst_63 = arith.constant dense<0.000000e+00> : vector<8x8xf32>
    %95 = tpu.matmul %92, %93, %cst_63 {dimension_numbers = #tpu.dot_dimension_numbers<[1], [1], [0], [0], [0, 0, 1, 0], [], []>} : vector<8x128xbf16>, vector<8x128xbf16>, vector<8x8xf32> -> vector<8x8xf32>
    %cst_64 = arith.constant 1.250000e-01 : f32
    %96 = vector.broadcast %cst_64 : f32 to vector<8x8xf32>
    %97 = arith.mulf %95, %96 : vector<8x8xf32>
    %98 = vector.broadcast %3 : vector<1x8xf32> to vector<8x8xf32>
    %99 = arith.addf %97, %98 : vector<8x8xf32>
    %cst_65 = arith.constant dense<0xFF800000> : vector<8xf32>
    %100 = vector.multi_reduction <maximumf>, %99, %cst_65 [1] : vector<8x8xf32> to vector<8xf32>
    %101 = vector.shape_cast %100 : vector<8xf32> to vector<8x1xf32>
    %102 = vector.broadcast %101 : vector<8x1xf32> to vector<8x8xf32>
    %103 = arith.subf %99, %102 : vector<8x8xf32>
    %104 = math.exp %103 : vector<8x8xf32>
    %cst_66 = arith.constant dense<0.000000e+00> : vector<8xf32>
    %105 = vector.multi_reduction <add>, %104, %cst_66 [1] : vector<8x8xf32> to vector<8xf32>
    %106 = vector.shape_cast %105 : vector<8xf32> to vector<8x1xf32>
    %107 = tpu.reciprocal %106 {approx = true} : vector<8x1xf32> -> vector<8x1xf32>
    %108 = arith.truncf %104 : vector<8x8xf32> to vector<8x8xbf16>
    %cst_67 = arith.constant dense<0.000000e+00> : vector<8x128xf32>
    %109 = tpu.matmul %108, %94, %cst_67 {dimension_numbers = #tpu.dot_dimension_numbers<[1], [0], [0], [1], [0, 0, 1, 1], [], []>} : vector<8x8xbf16>, vector<8x128xbf16>, vector<8x128xf32> -> vector<8x128xf32>
    %110 = vector.broadcast %107 : vector<8x1xf32> to vector<8x128xf32>
    %111 = arith.mulf %109, %110 : vector<8x128xf32>
    %c0_68 = arith.constant 0 : index
    %c0_69 = arith.constant 0 : index
    %112 = vector.load %arg11[%c0_68, %c0_69] : memref<8x256xf32, #tpu.memory_space<vmem>>, vector<8x256xf32>
    %113 = arith.truncf %111 : vector<8x128xf32> to vector<8x128xbf16>
    %c384_70 = arith.constant 384 : index
    %c0_71 = arith.constant 0 : index
    %114 = vector.load %arg4[%c384_70, %c0_71] : memref<512x256xbf16, #tpu.memory_space<vmem>>, vector<128x256xbf16>
    %cst_72 = arith.constant dense<0.000000e+00> : vector<8x256xf32>
    %115 = tpu.matmul %113, %114, %cst_72 {dimension_numbers = #tpu.dot_dimension_numbers<[1], [0], [0], [1], [0, 0, 1, 1], [], []>} : vector<8x128xbf16>, vector<128x256xbf16>, vector<8x256xf32> -> vector<8x256xf32>
    %116 = arith.addf %112, %115 : vector<8x256xf32>
    %c0_73 = arith.constant 0 : index
    %c0_74 = arith.constant 0 : index
    %117 = vector.load %arg11[%c0_73, %c0_74] : memref<8x256xf32, #tpu.memory_space<vmem>>, vector<8x256xf32>
    tpu.vector_store %arg11[%c0_73, %c0_74], %116 {strides = array<i32>} : memref<8x256xf32, #tpu.memory_space<vmem>>, vector<8x256xf32>,
    %c0_75 = arith.constant 0 : index
    %c0_76 = arith.constant 0 : index
    %118 = vector.load %arg11[%c0_75, %c0_76] : memref<8x256xf32, #tpu.memory_space<vmem>>, vector<8x256xf32>
    %c0_77 = arith.constant 0 : index
    %c0_78 = arith.constant 0 : index
    %119 = vector.load %arg5[%c0_77, %c0_78] : memref<1x256xbf16, #tpu.memory_space<vmem>>, vector<1x256xbf16>
    %120 = arith.extf %119 : vector<1x256xbf16> to vector<1x256xf32>
    %121 = vector.broadcast %120 : vector<1x256xf32> to vector<8x256xf32>
    %122 = arith.addf %118, %121 : vector<8x256xf32>
    %123 = arith.extf %1 : vector<8x256xbf16> to vector<8x256xf32>
    %124 = arith.addf %122, %123 : vector<8x256xf32>
    %c0_79 = arith.constant 0 : index
    %c0_80 = arith.constant 0 : index
    %125 = vector.load %arg6[%c0_79, %c0_80] : memref<1x256xbf16, #tpu.memory_space<vmem>>, vector<1x256xbf16>
    %126 = arith.extf %125 : vector<1x256xbf16> to vector<1x256xf32>
    %c0_81 = arith.constant 0 : index
    %c0_82 = arith.constant 0 : index
    %127 = vector.load %arg7[%c0_81, %c0_82] : memref<1x256xbf16, #tpu.memory_space<vmem>>, vector<1x256xbf16>
    %128 = arith.extf %127 : vector<1x256xbf16> to vector<1x256xf32>
    %cst_83 = arith.constant dense<0.000000e+00> : vector<8xf32>
    %129 = vector.multi_reduction <add>, %124, %cst_83 [1] : vector<8x256xf32> to vector<8xf32>
    %130 = vector.shape_cast %129 : vector<8xf32> to vector<8x1xf32>
    %cst_84 = arith.constant 2.560000e+02 : f32
    %131 = vector.broadcast %cst_84 : f32 to vector<8x1xf32>
    %132 = arith.divf %130, %131 : vector<8x1xf32>
    %133 = vector.broadcast %132 : vector<8x1xf32> to vector<8x256xf32>
    %134 = arith.subf %124, %133 : vector<8x256xf32>
    %135 = arith.mulf %134, %134 : vector<8x256xf32>
    %cst_85 = arith.constant dense<0.000000e+00> : vector<8xf32>
    %136 = vector.multi_reduction <add>, %135, %cst_85 [1] : vector<8x256xf32> to vector<8xf32>
    %137 = vector.shape_cast %136 : vector<8xf32> to vector<8x1xf32>
    %cst_86 = arith.constant 2.560000e+02 : f32
    %138 = vector.broadcast %cst_86 : f32 to vector<8x1xf32>
    %139 = arith.divf %137, %138 : vector<8x1xf32>
    %140 = vector.broadcast %132 : vector<8x1xf32> to vector<8x256xf32>
    %141 = arith.subf %124, %140 : vector<8x256xf32>
    %cst_87 = arith.constant 9.99999974E-6 : f32
    %142 = vector.broadcast %cst_87 : f32 to vector<8x1xf32>
    %143 = arith.addf %139, %142 : vector<8x1xf32>
    %144 = math.rsqrt %143 : vector<8x1xf32>
    %145 = vector.broadcast %144 : vector<8x1xf32> to vector<8x256xf32>
    %146 = arith.mulf %141, %145 : vector<8x256xf32>
    %147 = vector.broadcast %126 : vector<1x256xf32> to vector<8x256xf32>
    %148 = arith.mulf %146, %147 : vector<8x256xf32>
    %149 = vector.broadcast %128 : vector<1x256xf32> to vector<8x256xf32>
    %150 = arith.addf %148, %149 : vector<8x256xf32>
    %151 = arith.truncf %150 : vector<8x256xf32> to vector<8x256xbf16>
    %c0_88 = arith.constant 0 : index
    %c0_89 = arith.constant 0 : index
    %c0_90 = arith.constant 0 : index
    %152 = vector.load %arg9[%c0_88, %c0_89, %c0_90] : memref<1x8x256xbf16, #tpu.memory_space<vmem>>, vector<1x8x256xbf16>
    %153 = vector.shape_cast %152 : vector<1x8x256xbf16> to vector<8x256xbf16>
    %154 = vector.shape_cast %151 : vector<8x256xbf16> to vector<1x8x256xbf16>
    tpu.vector_store %arg9[%c0_88, %c0_89, %c0_90], %154 {strides = array<i32>} : memref<1x8x256xbf16, #tpu.memory_space<vmem>>, vector<1x8x256xbf16>,
    return
  }
  func.func @transform_0(%arg0: i32) -> (i32, i32, i32) {
    %c0_i32 = arith.constant 0 : i32
    %c0_i32_0 = arith.constant 0 : i32
    %c0_i32_1 = arith.constant 0 : i32
    return %arg0, %c0_i32, %c0_i32_0 : i32, i32, i32
  }
  func.func @transform_1(%arg0: i32) -> (i32, i32) {
    %c0_i32 = arith.constant 0 : i32
    %c0_i32_0 = arith.constant 0 : i32
    %c0_i32_1 = arith.constant 0 : i32
    return %c0_i32, %c0_i32_0 : i32, i32
  }
  func.func @transform_2(%arg0: i32) -> (i32, i32) {
    %c0_i32 = arith.constant 0 : i32
    %c0_i32_0 = arith.constant 0 : i32
    %c0_i32_1 = arith.constant 0 : i32
    return %c0_i32, %c0_i32_0 : i32, i32
  }
  func.func @transform_3(%arg0: i32) -> (i32, i32) {
    %c0_i32 = arith.constant 0 : i32
    %c0_i32_0 = arith.constant 0 : i32
    %c0_i32_1 = arith.constant 0 : i32
    return %c0_i32, %c0_i32_0 : i32, i32
  }
  func.func @transform_4(%arg0: i32) -> (i32, i32) {
    %c0_i32 = arith.constant 0 : i32
    %c0_i32_0 = arith.constant 0 : i32
    %c0_i32_1 = arith.constant 0 : i32
    return %c0_i32, %c0_i32_0 : i32, i32
  }
  func.func @transform_5(%arg0: i32) -> (i32, i32) {
    %c0_i32 = arith.constant 0 : i32
    %c0_i32_0 = arith.constant 0 : i32
    %c0_i32_1 = arith.constant 0 : i32
    return %c0_i32, %c0_i32_0 : i32, i32
  }
  func.func @transform_6(%arg0: i32) -> (i32, i32) {
    %c0_i32 = arith.constant 0 : i32
    %c0_i32_0 = arith.constant 0 : i32
    %c0_i32_1 = arith.constant 0 : i32
    return %c0_i32, %c0_i32_0 : i32, i32
  }
  func.func @transform_7(%arg0: i32) -> (i32, i32, i32) {
    %c0_i32 = arith.constant 0 : i32
    %c0_i32_0 = arith.constant 0 : i32
    %c0_i32_1 = arith.constant 0 : i32
    return %arg0, %c0_i32, %c0_i32_0 : i32, i32, i32
  }
  func.func @transform_8(%arg0: i32) -> (i32, i32, i32) {
    %c0_i32 = arith.constant 0 : i32
    %c0_i32_0 = arith.constant 0 : i32
    %c0_i32_1 = arith.constant 0 : i32
    return %arg0, %c0_i32, %c0_i32_0 : i32, i32, i32
  }
}

module attributes {stable_mosaic.version = 11 : i64} {
  func.func @_ffn_ln_kernel(%arg0: i32, %arg1: i32, %arg2: memref<16x256xbf16, #tpu.memory_space<vmem>>, %arg3: memref<256x512xbf16, #tpu.memory_space<vmem>>, %arg4: memref<1x512xbf16, #tpu.memory_space<vmem>>, %arg5: memref<512x256xbf16, #tpu.memory_space<vmem>>, %arg6: memref<1x256xbf16, #tpu.memory_space<vmem>>, %arg7: memref<1x256xbf16, #tpu.memory_space<vmem>>, %arg8: memref<1x256xbf16, #tpu.memory_space<vmem>>, %arg9: memref<16x256xbf16, #tpu.memory_space<vmem>>, %arg10: memref<16x256xf32, #tpu.memory_space<vmem>>) attributes {dimension_semantics = [#tpu.dimension_semantics<parallel>, #tpu.dimension_semantics<arbitrary>], iteration_bounds = array<i64: 1, 2>, scalar_prefetch = 0 : i64, scratch_operands = 1 : i64, tpu.core_type = #tpu.core_type<tc>, window_params = [{transform_indices = @transform_0, window_bounds = array<i64: 16, 256>}, {transform_indices = @transform_1, window_bounds = array<i64: 256, 512>}, {transform_indices = @transform_2, window_bounds = array<i64: 1, 512>}, {transform_indices = @transform_3, window_bounds = array<i64: 512, 256>}, {pipeline_mode = #tpu.pipeline_mode<synchronous>, transform_indices = @transform_4, window_bounds = array<i64: 1, 256>}, {pipeline_mode = #tpu.pipeline_mode<synchronous>, transform_indices = @transform_5, window_bounds = array<i64: 1, 256>}, {pipeline_mode = #tpu.pipeline_mode<synchronous>, transform_indices = @transform_6, window_bounds = array<i64: 1, 256>}, {transform_indices = @transform_7, window_bounds = array<i64: 16, 256>}]} {
    %c0_i32 = arith.constant 0 : i32
    %0 = arith.cmpi eq, %arg1, %c0_i32 : i32
    %1 = arith.extui %0 : i1 to i32
    %c0_i32_0 = arith.constant 0 : i32
    %2 = arith.cmpi ne, %1, %c0_i32_0 : i32
    scf.if %2 {
      %cst_18 = arith.constant 0.000000e+00 : f32
      %32 = vector.broadcast %cst_18 : f32 to vector<16x256xf32>
      %c0_19 = arith.constant 0 : index
      %c0_20 = arith.constant 0 : index
      %33 = vector.load %arg10[%c0_19, %c0_20] : memref<16x256xf32, #tpu.memory_space<vmem>>, vector<16x256xf32>
      tpu.vector_store %arg10[%c0_19, %c0_20], %32 {strides = array<i32>} : memref<16x256xf32, #tpu.memory_space<vmem>>, vector<16x256xf32>,
    } else {
    }
    %c0 = arith.constant 0 : index
    %c0_1 = arith.constant 0 : index
    %3 = vector.load %arg2[%c0, %c0_1] : memref<16x256xbf16, #tpu.memory_space<vmem>>, vector<16x256xbf16>
    %c0_2 = arith.constant 0 : index
    %c0_3 = arith.constant 0 : index
    %4 = vector.load %arg3[%c0_2, %c0_3] : memref<256x512xbf16, #tpu.memory_space<vmem>>, vector<256x512xbf16>
    %cst = arith.constant dense<0.000000e+00> : vector<16x512xf32>
    %5 = tpu.matmul %3, %4, %cst {dimension_numbers = #tpu.dot_dimension_numbers<[1], [0], [0], [1], [0, 0, 1, 1], [], []>} : vector<16x256xbf16>, vector<256x512xbf16>, vector<16x512xf32> -> vector<16x512xf32>
    %c0_4 = arith.constant 0 : index
    %c0_5 = arith.constant 0 : index
    %6 = vector.load %arg4[%c0_4, %c0_5] : memref<1x512xbf16, #tpu.memory_space<vmem>>, vector<1x512xbf16>
    %7 = arith.extf %6 : vector<1x512xbf16> to vector<1x512xf32>
    %8 = vector.broadcast %7 : vector<1x512xf32> to vector<16x512xf32>
    %9 = arith.addf %5, %8 : vector<16x512xf32>
    %cst_6 = arith.constant 5.000000e-01 : f32
    %10 = vector.broadcast %cst_6 : f32 to vector<16x512xf32>
    %11 = arith.mulf %10, %9 : vector<16x512xf32>
    %cst_7 = arith.constant 4.471500e-02 : f32
    %12 = vector.broadcast %cst_7 : f32 to vector<16x512xf32>
    %13 = arith.mulf %12, %9 : vector<16x512xf32>
    %14 = arith.mulf %13, %9 : vector<16x512xf32>
    %15 = arith.mulf %14, %9 : vector<16x512xf32>
    %16 = arith.addf %9, %15 : vector<16x512xf32>
    %cst_8 = arith.constant 0.797884583 : f32
    %17 = vector.broadcast %cst_8 : f32 to vector<16x512xf32>
    %18 = arith.mulf %17, %16 : vector<16x512xf32>
    %19 = math.tanh %18 : vector<16x512xf32>
    %cst_9 = arith.constant 1.000000e+00 : f32
    %20 = vector.broadcast %cst_9 : f32 to vector<16x512xf32>
    %21 = arith.addf %20, %19 : vector<16x512xf32>
    %22 = arith.mulf %11, %21 : vector<16x512xf32>
    %c0_10 = arith.constant 0 : index
    %c0_11 = arith.constant 0 : index
    %23 = vector.load %arg10[%c0_10, %c0_11] : memref<16x256xf32, #tpu.memory_space<vmem>>, vector<16x256xf32>
    %24 = arith.truncf %22 : vector<16x512xf32> to vector<16x512xbf16>
    %c0_12 = arith.constant 0 : index
    %c0_13 = arith.constant 0 : index
    %25 = vector.load %arg5[%c0_12, %c0_13] : memref<512x256xbf16, #tpu.memory_space<vmem>>, vector<512x256xbf16>
    %cst_14 = arith.constant dense<0.000000e+00> : vector<16x256xf32>
    %26 = tpu.matmul %24, %25, %cst_14 {dimension_numbers = #tpu.dot_dimension_numbers<[1], [0], [0], [1], [0, 0, 1, 1], [], []>} : vector<16x512xbf16>, vector<512x256xbf16>, vector<16x256xf32> -> vector<16x256xf32>
    %27 = arith.addf %23, %26 : vector<16x256xf32>
    %c0_15 = arith.constant 0 : index
    %c0_16 = arith.constant 0 : index
    %28 = vector.load %arg10[%c0_15, %c0_16] : memref<16x256xf32, #tpu.memory_space<vmem>>, vector<16x256xf32>
    tpu.vector_store %arg10[%c0_15, %c0_16], %27 {strides = array<i32>} : memref<16x256xf32, #tpu.memory_space<vmem>>, vector<16x256xf32>,
    %c1_i32 = arith.constant 1 : i32
    %29 = arith.cmpi eq, %arg1, %c1_i32 : i32
    %30 = arith.extui %29 : i1 to i32
    %c0_i32_17 = arith.constant 0 : i32
    %31 = arith.cmpi ne, %30, %c0_i32_17 : i32
    scf.if %31 {
      %c0_18 = arith.constant 0 : index
      %c0_19 = arith.constant 0 : index
      %32 = vector.load %arg10[%c0_18, %c0_19] : memref<16x256xf32, #tpu.memory_space<vmem>>, vector<16x256xf32>
      %c0_20 = arith.constant 0 : index
      %c0_21 = arith.constant 0 : index
      %33 = vector.load %arg6[%c0_20, %c0_21] : memref<1x256xbf16, #tpu.memory_space<vmem>>, vector<1x256xbf16>
      %34 = arith.extf %33 : vector<1x256xbf16> to vector<1x256xf32>
      %35 = vector.broadcast %34 : vector<1x256xf32> to vector<16x256xf32>
      %36 = arith.addf %32, %35 : vector<16x256xf32>
      %c0_22 = arith.constant 0 : index
      %c0_23 = arith.constant 0 : index
      %37 = vector.load %arg2[%c0_22, %c0_23] : memref<16x256xbf16, #tpu.memory_space<vmem>>, vector<16x256xbf16>
      %38 = arith.extf %37 : vector<16x256xbf16> to vector<16x256xf32>
      %39 = arith.addf %36, %38 : vector<16x256xf32>
      %c0_24 = arith.constant 0 : index
      %c0_25 = arith.constant 0 : index
      %40 = vector.load %arg7[%c0_24, %c0_25] : memref<1x256xbf16, #tpu.memory_space<vmem>>, vector<1x256xbf16>
      %41 = arith.extf %40 : vector<1x256xbf16> to vector<1x256xf32>
      %c0_26 = arith.constant 0 : index
      %c0_27 = arith.constant 0 : index
      %42 = vector.load %arg8[%c0_26, %c0_27] : memref<1x256xbf16, #tpu.memory_space<vmem>>, vector<1x256xbf16>
      %43 = arith.extf %42 : vector<1x256xbf16> to vector<1x256xf32>
      %cst_28 = arith.constant dense<0.000000e+00> : vector<16xf32>
      %44 = vector.multi_reduction <add>, %39, %cst_28 [1] : vector<16x256xf32> to vector<16xf32>
      %45 = vector.shape_cast %44 : vector<16xf32> to vector<16x1xf32>
      %cst_29 = arith.constant 2.560000e+02 : f32
      %46 = vector.broadcast %cst_29 : f32 to vector<16x1xf32>
      %47 = arith.divf %45, %46 : vector<16x1xf32>
      %48 = vector.broadcast %47 : vector<16x1xf32> to vector<16x256xf32>
      %49 = arith.subf %39, %48 : vector<16x256xf32>
      %50 = arith.mulf %49, %49 : vector<16x256xf32>
      %cst_30 = arith.constant dense<0.000000e+00> : vector<16xf32>
      %51 = vector.multi_reduction <add>, %50, %cst_30 [1] : vector<16x256xf32> to vector<16xf32>
      %52 = vector.shape_cast %51 : vector<16xf32> to vector<16x1xf32>
      %cst_31 = arith.constant 2.560000e+02 : f32
      %53 = vector.broadcast %cst_31 : f32 to vector<16x1xf32>
      %54 = arith.divf %52, %53 : vector<16x1xf32>
      %55 = vector.broadcast %47 : vector<16x1xf32> to vector<16x256xf32>
      %56 = arith.subf %39, %55 : vector<16x256xf32>
      %cst_32 = arith.constant 9.99999974E-6 : f32
      %57 = vector.broadcast %cst_32 : f32 to vector<16x1xf32>
      %58 = arith.addf %54, %57 : vector<16x1xf32>
      %59 = math.rsqrt %58 : vector<16x1xf32>
      %60 = vector.broadcast %59 : vector<16x1xf32> to vector<16x256xf32>
      %61 = arith.mulf %56, %60 : vector<16x256xf32>
      %62 = vector.broadcast %41 : vector<1x256xf32> to vector<16x256xf32>
      %63 = arith.mulf %61, %62 : vector<16x256xf32>
      %64 = vector.broadcast %43 : vector<1x256xf32> to vector<16x256xf32>
      %65 = arith.addf %63, %64 : vector<16x256xf32>
      %66 = arith.truncf %65 : vector<16x256xf32> to vector<16x256xbf16>
      %c0_33 = arith.constant 0 : index
      %c0_34 = arith.constant 0 : index
      %67 = vector.load %arg9[%c0_33, %c0_34] : memref<16x256xbf16, #tpu.memory_space<vmem>>, vector<16x256xbf16>
      tpu.vector_store %arg9[%c0_33, %c0_34], %66 {strides = array<i32>} : memref<16x256xbf16, #tpu.memory_space<vmem>>, vector<16x256xbf16>,
    } else {
    }
    return
  }
  func.func @transform_0(%arg0: i32, %arg1: i32) -> (i32, i32) {
    %c0_i32 = arith.constant 0 : i32
    %c0_i32_0 = arith.constant 0 : i32
    return %arg0, %c0_i32 : i32, i32
  }
  func.func @transform_1(%arg0: i32, %arg1: i32) -> (i32, i32) {
    %c0_i32 = arith.constant 0 : i32
    %c0_i32_0 = arith.constant 0 : i32
    return %c0_i32, %arg1 : i32, i32
  }
  func.func @transform_2(%arg0: i32, %arg1: i32) -> (i32, i32) {
    %c0_i32 = arith.constant 0 : i32
    %c0_i32_0 = arith.constant 0 : i32
    return %c0_i32, %arg1 : i32, i32
  }
  func.func @transform_3(%arg0: i32, %arg1: i32) -> (i32, i32) {
    %c0_i32 = arith.constant 0 : i32
    %c0_i32_0 = arith.constant 0 : i32
    return %arg1, %c0_i32 : i32, i32
  }
  func.func @transform_4(%arg0: i32, %arg1: i32) -> (i32, i32) {
    %c0_i32 = arith.constant 0 : i32
    %c0_i32_0 = arith.constant 0 : i32
    %c0_i32_1 = arith.constant 0 : i32
    return %c0_i32, %c0_i32_0 : i32, i32
  }
  func.func @transform_5(%arg0: i32, %arg1: i32) -> (i32, i32) {
    %c0_i32 = arith.constant 0 : i32
    %c0_i32_0 = arith.constant 0 : i32
    %c0_i32_1 = arith.constant 0 : i32
    return %c0_i32, %c0_i32_0 : i32, i32
  }
  func.func @transform_6(%arg0: i32, %arg1: i32) -> (i32, i32) {
    %c0_i32 = arith.constant 0 : i32
    %c0_i32_0 = arith.constant 0 : i32
    %c0_i32_1 = arith.constant 0 : i32
    return %c0_i32, %c0_i32_0 : i32, i32
  }
  func.func @transform_7(%arg0: i32, %arg1: i32) -> (i32, i32) {
    %c0_i32 = arith.constant 0 : i32
    %c0_i32_0 = arith.constant 0 : i32
    return %arg0, %c0_i32 : i32, i32
  }
}

module attributes {stable_mosaic.version = 11 : i64} {
  func.func @_head_kernel(%arg0: i32, %arg1: memref<2x256xbf16, #tpu.memory_space<vmem>>, %arg2: memref<256x256xbf16, #tpu.memory_space<vmem>>, %arg3: memref<1x256xbf16, #tpu.memory_space<vmem>>, %arg4: memref<256x3xbf16, #tpu.memory_space<vmem>>, %arg5: memref<1x3xbf16, #tpu.memory_space<vmem>>, %arg6: memref<2x3xf32, #tpu.memory_space<vmem>>) attributes {dimension_semantics = [#tpu.dimension_semantics<arbitrary>], iteration_bounds = array<i64: 1>, scalar_prefetch = 0 : i64, scratch_operands = 0 : i64, tpu.core_type = #tpu.core_type<tc>, window_params = [{pipeline_mode = #tpu.pipeline_mode<synchronous>, transform_indices = @transform_0, window_bounds = array<i64: 2, 256>}, {pipeline_mode = #tpu.pipeline_mode<synchronous>, transform_indices = @transform_1, window_bounds = array<i64: 256, 256>}, {pipeline_mode = #tpu.pipeline_mode<synchronous>, transform_indices = @transform_2, window_bounds = array<i64: 1, 256>}, {pipeline_mode = #tpu.pipeline_mode<synchronous>, transform_indices = @transform_3, window_bounds = array<i64: 256, 3>}, {pipeline_mode = #tpu.pipeline_mode<synchronous>, transform_indices = @transform_4, window_bounds = array<i64: 1, 3>}, {pipeline_mode = #tpu.pipeline_mode<synchronous>, transform_indices = @transform_5, window_bounds = array<i64: 2, 3>}]} {
    %c0 = arith.constant 0 : index
    %c0_0 = arith.constant 0 : index
    %0 = vector.load %arg1[%c0, %c0_0] : memref<2x256xbf16, #tpu.memory_space<vmem>>, vector<2x256xbf16>
    %c0_1 = arith.constant 0 : index
    %c0_2 = arith.constant 0 : index
    %1 = vector.load %arg2[%c0_1, %c0_2] : memref<256x256xbf16, #tpu.memory_space<vmem>>, vector<256x256xbf16>
    %cst = arith.constant dense<0.000000e+00> : vector<2x256xf32>
    %2 = tpu.matmul %0, %1, %cst {dimension_numbers = #tpu.dot_dimension_numbers<[1], [0], [0], [1], [0, 0, 1, 1], [], []>} : vector<2x256xbf16>, vector<256x256xbf16>, vector<2x256xf32> -> vector<2x256xf32>
    %c0_3 = arith.constant 0 : index
    %c0_4 = arith.constant 0 : index
    %3 = vector.load %arg3[%c0_3, %c0_4] : memref<1x256xbf16, #tpu.memory_space<vmem>>, vector<1x256xbf16>
    %4 = arith.extf %3 : vector<1x256xbf16> to vector<1x256xf32>
    %5 = vector.broadcast %4 : vector<1x256xf32> to vector<2x256xf32>
    %6 = arith.addf %2, %5 : vector<2x256xf32>
    %cst_5 = arith.constant 0.000000e+00 : f32
    %7 = vector.broadcast %cst_5 : f32 to vector<2x256xf32>
    %8 = arith.maximumf %6, %7 : vector<2x256xf32>
    %9 = arith.truncf %8 : vector<2x256xf32> to vector<2x256xbf16>
    %c0_6 = arith.constant 0 : index
    %c0_7 = arith.constant 0 : index
    %10 = vector.load %arg4[%c0_6, %c0_7] : memref<256x3xbf16, #tpu.memory_space<vmem>>, vector<256x3xbf16>
    %cst_8 = arith.constant dense<0.000000e+00> : vector<2x3xf32>
    %11 = tpu.matmul %9, %10, %cst_8 {dimension_numbers = #tpu.dot_dimension_numbers<[1], [0], [0], [1], [0, 0, 1, 1], [], []>} : vector<2x256xbf16>, vector<256x3xbf16>, vector<2x3xf32> -> vector<2x3xf32>
    %c0_9 = arith.constant 0 : index
    %c0_10 = arith.constant 0 : index
    %12 = vector.load %arg5[%c0_9, %c0_10] : memref<1x3xbf16, #tpu.memory_space<vmem>>, vector<1x3xbf16>
    %13 = arith.extf %12 : vector<1x3xbf16> to vector<1x3xf32>
    %14 = vector.broadcast %13 : vector<1x3xf32> to vector<2x3xf32>
    %15 = arith.addf %11, %14 : vector<2x3xf32>
    %c0_11 = arith.constant 0 : index
    %c0_12 = arith.constant 0 : index
    %16 = vector.load %arg6[%c0_11, %c0_12] : memref<2x3xf32, #tpu.memory_space<vmem>>, vector<2x3xf32>
    tpu.vector_store %arg6[%c0_11, %c0_12], %15 {strides = array<i32>} : memref<2x3xf32, #tpu.memory_space<vmem>>, vector<2x3xf32>,
    return
  }
  func.func @transform_0(%arg0: i32) -> (i32, i32) {
    %c0_i32 = arith.constant 0 : i32
    %c0_i32_0 = arith.constant 0 : i32
    %c0_i32_1 = arith.constant 0 : i32
    return %c0_i32, %c0_i32_0 : i32, i32
  }
  func.func @transform_1(%arg0: i32) -> (i32, i32) {
    %c0_i32 = arith.constant 0 : i32
    %c0_i32_0 = arith.constant 0 : i32
    %c0_i32_1 = arith.constant 0 : i32
    return %c0_i32, %c0_i32_0 : i32, i32
  }
  func.func @transform_2(%arg0: i32) -> (i32, i32) {
    %c0_i32 = arith.constant 0 : i32
    %c0_i32_0 = arith.constant 0 : i32
    %c0_i32_1 = arith.constant 0 : i32
    return %c0_i32, %c0_i32_0 : i32, i32
  }
  func.func @transform_3(%arg0: i32) -> (i32, i32) {
    %c0_i32 = arith.constant 0 : i32
    %c0_i32_0 = arith.constant 0 : i32
    %c0_i32_1 = arith.constant 0 : i32
    return %c0_i32, %c0_i32_0 : i32, i32
  }
  func.func @transform_4(%arg0: i32) -> (i32, i32) {
    %c0_i32 = arith.constant 0 : i32
    %c0_i32_0 = arith.constant 0 : i32
    %c0_i32_1 = arith.constant 0 : i32
    return %c0_i32, %c0_i32_0 : i32, i32
  }
  func.func @transform_5(%arg0: i32) -> (i32, i32) {
    %c0_i32 = arith.constant 0 : i32
    %c0_i32_0 = arith.constant 0 : i32
    %c0_i32_1 = arith.constant 0 : i32
    return %c0_i32, %c0_i32_0 : i32, i32
  }
}

</mosaic_0001>

<llo_original>
// kernel: forward.6
$region0: #{forward.6}
  #allocation0 [shape = 'u32[]', space=smem, size = 0x4, offset = 0x4, fixed_abs, tag = 'smem constant byte address 0x4 - core index']
  #allocation1 [shape = 'u32[144,128]{1,0:T(1,128)}', space=vmem, size = 0x12000, scoped, tag = 'internal scratch']
  %s0 = inlined_call_operand.vmem [shape: bf16[16,256], index: 0, kind: input, shape index: {}]
  %s1 = inlined_call_operand.vmem [shape: bf16[16,256], index: 1, kind: input, shape index: {}]
  %s2 = inlined_call_operand.vmem [shape: bf16[1,256], index: 2, kind: input, shape index: {}]
  %s3 = inlined_call_operand.vmem [shape: bf16[1,256], index: 3, kind: input, shape index: {}]
  %s4 = inlined_call_operand.vmem [shape: bf16[16,256], index: 4, kind: output, shape index: {}]
  %s5 = sld [smem:[#allocation0]]
  $region26: #{forward.6} parent=0
    _
  %s7 = ssub.s32 1, %s5
  %s8 = scalar_select 0, %s7, %s5
  // Predicated region
  $region2: #{forward.6} parent=0 // pred_check
    _
  $region3: #{forward.6} parent=0 // pred_check_branch
    %10 = sbr.rel (0) target = $region5
  $region4: #{forward.6} parent=0 // pred_region
    _
  $region5: #{forward.6} parent=0 // pred_fallthru
    _
  // Predicated region
  $region6: #{forward.6} parent=0 // pred_check
    _
  $region7: #{forward.6} parent=0 // pred_check_branch
    %12 = sbr.rel (0) target = $region9
  $region8: #{forward.6} parent=0 // pred_region
    _
  $region9: #{forward.6} parent=0 // pred_fallthru
    _
  // Predicated region
  $region10: #{forward.6} parent=0 // pred_check
    _
  $region11: #{forward.6} parent=0 // pred_check_branch
    %14 = sbr.rel (0) target = $region13
  $region12: #{forward.6} parent=0 // pred_region
    _
  $region13: #{forward.6} parent=0 // pred_fallthru
    _
  // Predicated region
  $region14: #{forward.6} parent=0 // pred_check
    _
  $region15: #{forward.6} parent=0 // pred_check_branch
    %16 = sbr.rel (0) target = $region17
  $region16: #{forward.6} parent=0 // pred_region
    _
  $region17: #{forward.6} parent=0 // pred_fallthru
    _
  %v17 = vld [vmem:[%s0] sm:$0xff]
  %v18 = vld [vmem:[%s0 + $0x8] sm:$0xff]
  %v19 = vunpack.c.l.bf16 %v17
  %v20 = vunpack.c.h.bf16 %v17
  %v21 = vunpack.c.l.bf16 %v18
  %v22 = vunpack.c.h.bf16 %v18
  %v23 = vld [vmem:[%s1] sm:$0xff]
  %v24 = vld [vmem:[%s1 + $0x8] sm:$0xff]
  %v25 = vunpack.c.l.bf16 %v23
  %v26 = vunpack.c.h.bf16 %v23
  %v27 = vunpack.c.l.bf16 %v24
  %v28 = vunpack.c.h.bf16 %v24
  %v29 = vadd.f32 %v19, %v25
  %v30 = vadd.f32 %v20, %v26
  %v31 = vadd.f32 %v21, %v27
  %v32 = vadd.f32 %v22, %v28
  %v33 = vld [vmem:[%s2] sm:$0x3]
  %v34 = vunpack.c.l.bf16 %v33
  %v35 = vld [vmem:[%s3] sm:$0x3]
  %v36 = vunpack.c.l.bf16 %v35
  %v37 = vadd.f32 %v29, %v30
  %38 = vadd.xlane.f32.xlu0 %v37
  %v39 = vpop.xlane.xlu0 %38
  %v40 = vadd.f32 %v31, %v32
  %41 = vadd.xlane.f32.xlu0 %v40
  %v42 = vpop.xlane.xlu0 %41
  %v43 = vrcp.pop 256.0
  %v44 = vmul.f32 %v39, %v43
  %v45 = vmul.f32 %v42, %v43
  %v46 = vsub.f32 %v29, %v44
  %v47 = vsub.f32 %v30, %v44
  %v48 = vsub.f32 %v31, %v45
  %v49 = vsub.f32 %v32, %v45
  %v50 = vmul.f32 %v46, %v46
  %v51 = vmul.f32 %v47, %v47
  %v52 = vmul.f32 %v48, %v48
  %v53 = vmul.f32 %v49, %v49
  %v54 = vadd.f32 %v50, %v51
  %55 = vadd.xlane.f32.xlu0 %v54
  %v56 = vpop.xlane.xlu0 %55
  %v57 = vadd.f32 %v52, %v53
  %58 = vadd.xlane.f32.xlu0 %v57
  %v59 = vpop.xlane.xlu0 %58
  %v60 = vmul.f32 %v56, %v43
  %v61 = vmul.f32 %v59, %v43
  %v62 = vadd.f32 %v60, 1e-05
  %v63 = vadd.f32 %v61, 1e-05
  %v64 = vrsqrt.pop %v62
  %v65 = vrsqrt.pop %v63
  %v66 = vmul.f32 %v46, %v64
  %v67 = vmul.f32 %v47, %v64
  %v68 = vmul.f32 %v48, %v65
  %v69 = vmul.f32 %v49, %v65
  %v71 = vlaneseq
  %v72 = vshrl.u32 %v71, 7
  %v73 = vsub.s32 0, %v72
  %v74 = vrot.slane %v34, %v73
  %v75 = vlaneseq
  %v76 = vshrl.u32 %v75, 7
  %v77 = vsub.s32 2, %v76
  %v78 = vrot.slane %v34, %v77
  %v81 = vlaneseq
  %v82 = vshrl.u32 %v81, 7
  %v83 = vsub.s32 0, %v82
  %v84 = vrot.slane %v74, %v83
  %v85 = vlaneseq
  %v86 = vshrl.u32 %v85, 7
  %v87 = vsub.s32 0, %v86
  %v88 = vrot.slane %v78, %v87
  %v89 = vmul.f32 %v66, %v84
  %v90 = vmul.f32 %v67, %v88
  %v91 = vmul.f32 %v68, %v84
  %v92 = vmul.f32 %v69, %v88
  %v94 = vlaneseq
  %v95 = vshrl.u32 %v94, 7
  %v96 = vsub.s32 0, %v95
  %v97 = vrot.slane %v36, %v96
  %v98 = vlaneseq
  %v99 = vshrl.u32 %v98, 7
  %v100 = vsub.s32 2, %v99
  %v101 = vrot.slane %v36, %v100
  %v104 = vlaneseq
  %v105 = vshrl.u32 %v104, 7
  %v106 = vsub.s32 0, %v105
  %v107 = vrot.slane %v97, %v106
  %v108 = vlaneseq
  %v109 = vshrl.u32 %v108, 7
  %v110 = vsub.s32 0, %v109
  %v111 = vrot.slane %v101, %v110
  %v112 = vadd.f32 %v89, %v107
  %v113 = vadd.f32 %v90, %v111
  %v114 = vadd.f32 %v91, %v107
  %v115 = vadd.f32 %v92, %v111
  %v116 = vpack.c.bf16 %v114, %v112
  %v117 = vpack.c.bf16 %v115, %v113
  %v120 = vunpack.c.l.b16 %v116
  %v121 = vunpack.c.l.b16 %v117
  %v122 = vunpack.c.h.b16 %v116
  %v123 = vunpack.c.h.b16 %v117
  %v124 = vpack.c.b16 %v121, %v120
  %v125 = vpack.c.b16 %v123, %v122
  %128 = vst [vmem:[%s4] sm:$0xff] %v124
  %129 = vst [vmem:[%s4 + $0x8] sm:$0xff] %v125
  // Predicated region
  $region18: #{forward.6} parent=0 // pred_check
    _
  $region19: #{forward.6} parent=0 // pred_check_branch
    %131 = sbr.rel (0) target = $region21
  $region20: #{forward.6} parent=0 // pred_region
    _
  $region21: #{forward.6} parent=0 // pred_fallthru
    _
  // Predicated region
  $region22: #{forward.6} parent=0 // pred_check
    _
  $region23: #{forward.6} parent=0 // pred_check_branch
    %133 = sbr.rel (0) target = $region25
  $region24: #{forward.6} parent=0 // pred_region
    _
  $region25: #{forward.6} parent=0 // pred_fallthru
    _

// kernel: forward.8
$region0: #{forward.8}
  #allocation0 [shape = 'u32[]', space=smem, size = 0x4, offset = 0x4, fixed_abs, tag = 'smem constant byte address 0x4 - core index']
  #allocation1 [shape = 'u32[144,128]{1,0:T(1,128)}', space=vmem, size = 0x12000, scoped, tag = 'internal scratch']
  #allocation2 [shape = 'f32[16,256]{1,0:T(8,128)}', space=vmem, size = 0x4000, scoped, tag = 'scratch operand']
  %s0 = inlined_call_operand.vmem [shape: bf16[16,256], index: 0, kind: input, shape index: {}]
  %s1 = inlined_call_operand.vmem [shape: bf16[256,1024], index: 1, kind: input, shape index: {}]
  %s2 = inlined_call_operand.vmem [shape: bf16[1,1024], index: 2, kind: input, shape index: {}]
  %s3 = inlined_call_operand.vmem [shape: bf16[1024,256], index: 3, kind: input, shape index: {}]
  %s4 = inlined_call_operand.vmem [shape: bf16[1,256], index: 4, kind: input, shape index: {}]
  %s5 = inlined_call_operand.vmem [shape: bf16[1,256], index: 5, kind: input, shape index: {}]
  %s6 = inlined_call_operand.vmem [shape: bf16[1,256], index: 6, kind: input, shape index: {}]
  %s7 = inlined_call_operand.vmem [shape: bf16[16,256], index: 7, kind: output, shape index: {}]
  %s8 = sld [smem:[#allocation0]]
  $region92: #{forward.8} parent=0
    _
  %s10 = ssub.s32 1, %s8
  %s11 = scalar_select 0, %s10, %s8
  $region1: #{forward.8} parent=0
    #allocation3 [shape = 'u8[524288]{0}', space=vmem, size = 0x80000, scoped, tag = 'input window, operand 1']
    loop: start=0, step=1, limit=4
    $region2: #{forward.8} parent=1 // loop_pre_header
      _
    $region3: #{forward.8} parent=1 // loop_header
      %s13 = sphi 0, %s17
      %p14 = scmp.ge.s32.totalorder %s13, 4
      %s20 = sphi 0, %s32
      %s21 = sphi 0, %s28
      %s22 = sphi 0, %s20
      %s23 = sphi 0, %s21
      %s24 = sphi 0, %s22
      %s25 = sphi 0, %s23
      %s35 = sphi 0, %s37
      %s38 = sphi 0, %s35
      %s39 = sphi 0, %s38
      %s55 = sphi 0, %s39
      %s61 = sphi 0, %s63
      %s64 = sphi 0, %s61
      %s65 = sphi 0, %s64
      %s81 = sphi 0, %s65
      %s87 = sphi 0, %s89
      %s90 = sphi 0, %s87
      %s91 = sphi 0, %s90
      %s107 = sphi 0, %s91
      %s113 = sphi 0, %s115
      %s116 = sphi 0, %s113
      %s117 = sphi 0, %s116
      %s133 = sphi 0, %s117
      %s137 = sphi 0, %s137
      %s139 = sphi 0, %s137
      %s140 = sphi 0, %s139
      %s154 = sphi 0, %s140
      %s158 = sphi 0, %s158
      %s160 = sphi 0, %s158
      %s161 = sphi 0, %s160
      %s175 = sphi 0, %s161
      %s179 = sphi 0, %s179
      %s181 = sphi 0, %s179
      %s182 = sphi 0, %s181
      %s196 = sphi 0, %s182
      %s202 = sphi 0, %s204
      %s205 = sphi 0, %s202
      %s206 = sphi 0, %s205
      %s222 = sphi 0, %s206
    $region4: #{forward.8} parent=1 // loop_header_branch
      %16 = sbr.rel (%p14) target = $region8
    $region5: #{forward.8} parent=1 // loop_body
      %s18 = ssub.s32 %s13, 1
      %s19 = ssub.s32 %s13, 2
      %s26 = sadd.s32 1, %s21
      %p27 = scmp.ge.s32.totalorder %s26, 2
      %s28 = scalar_select %p27, 0, %s26
      %s29 = sadd.s32 1, %s20
      %s30 = scalar_select %p27, %s29, %s20
      %p31 = scmp.ge.s32.totalorder %s30, 1
      %s32 = scalar_select %p31, 0, %s30
      %s33 = ssub.s32 %s20, %s32
      %p34 = scmp.eq.s32.totalorder %s33, 0
      %s36 = sadd.s32 %s35, 1
      %s37 = scalar_select %p34, %s35, %s36
      %p40 = pneg %p34
      %p41 = scmp.eq.s32.totalorder %s13, 1
      %p42 = por %p40, %p41
      %p43 = scmp.ne.s32.totalorder %s35, %s38
      %p44 = scmp.eq.s32.totalorder %s13, 0
      %p45 = por %p43, %p44
      %p46 = scmp.ne.s32.totalorder %s35, %s38
      %p47 = scmp.eq.s32.totalorder %s18, 1
      %p48 = por %p46, %p47
      %p49 = scmp.ne.s32.totalorder %s38, %s39
      %p50 = scmp.eq.s32.totalorder %s18, 0
      %p51 = por %p49, %p50
      %p52 = scmp.ne.s32.totalorder %s38, %s39
      %p53 = scmp.eq.s32.totalorder %s19, 1
      %p54 = por %p52, %p53
      %p56 = scmp.ne.s32.totalorder %s39, %s55
      %p57 = scmp.eq.s32.totalorder %s19, 0
      %p58 = por %p56, %p57
      %s59 = ssub.s32 %s21, %s28
      %p60 = scmp.eq.s32.totalorder %s59, 0
      %s62 = sadd.s32 %s61, 1
      %s63 = scalar_select %p60, %s61, %s62
      %p66 = pneg %p60
      %p67 = scmp.eq.s32.totalorder %s13, 1
      %p68 = por %p66, %p67
      %p69 = scmp.ne.s32.totalorder %s61, %s64
      %p70 = scmp.eq.s32.totalorder %s13, 0
      %p71 = por %p69, %p70
      %p72 = scmp.ne.s32.totalorder %s61, %s64
      %p73 = scmp.eq.s32.totalorder %s18, 1
      %p74 = por %p72, %p73
      %p75 = scmp.ne.s32.totalorder %s64, %s65
      %p76 = scmp.eq.s32.totalorder %s18, 0
      %p77 = por %p75, %p76
      %p78 = scmp.ne.s32.totalorder %s64, %s65
      %p79 = scmp.eq.s32.totalorder %s19, 1
      %p80 = por %p78, %p79
      %p82 = scmp.ne.s32.totalorder %s65, %s81
      %p83 = scmp.eq.s32.totalorder %s19, 0
      %p84 = por %p82, %p83
      %s85 = ssub.s32 %s21, %s28
      %p86 = scmp.eq.s32.totalorder %s85, 0
      %s88 = sadd.s32 %s87, 1
      %s89 = scalar_select %p86, %s87, %s88
      %p92 = pneg %p86
      %p93 = scmp.eq.s32.totalorder %s13, 1
      %p94 = por %p92, %p93
      %p95 = scmp.ne.s32.totalorder %s87, %s90
      %p96 = scmp.eq.s32.totalorder %s13, 0
      %p97 = por %p95, %p96
      %p98 = scmp.ne.s32.totalorder %s87, %s90
      %p99 = scmp.eq.s32.totalorder %s18, 1
      %p100 = por %p98, %p99
      %p101 = scmp.ne.s32.totalorder %s90, %s91
      %p102 = scmp.eq.s32.totalorder %s18, 0
      %p103 = por %p101, %p102
      %p104 = scmp.ne.s32.totalorder %s90, %s91
      %p105 = scmp.eq.s32.totalorder %s19, 1
      %p106 = por %p104, %p105
      %p108 = scmp.ne.s32.totalorder %s91, %s107
      %p109 = scmp.eq.s32.totalorder %s19, 0
      %p110 = por %p108, %p109
      %s111 = ssub.s32 %s21, %s28
      %p112 = scmp.eq.s32.totalorder %s111, 0
      %s114 = sadd.s32 %s113, 1
      %s115 = scalar_select %p112, %s113, %s114
      %p118 = pneg %p112
      %p119 = scmp.eq.s32.totalorder %s13, 1
      %p120 = por %p118, %p119
      %p121 = scmp.ne.s32.totalorder %s113, %s116
      %p122 = scmp.eq.s32.totalorder %s13, 0
      %p123 = por %p121, %p122
      %p124 = scmp.ne.s32.totalorder %s113, %s116
      %p125 = scmp.eq.s32.totalorder %s18, 1
      %p126 = por %p124, %p125
      %p127 = scmp.ne.s32.totalorder %s116, %s117
      %p128 = scmp.eq.s32.totalorder %s18, 0
      %p129 = por %p127, %p128
      %p130 = scmp.ne.s32.totalorder %s116, %s117
      %p131 = scmp.eq.s32.totalorder %s19, 1
      %p132 = por %p130, %p131
      %p134 = scmp.ne.s32.totalorder %s117, %s133
      %p135 = scmp.eq.s32.totalorder %s19, 0
      %p136 = por %p134, %p135
      %s138 = sadd.s32 %s137, 1
      %p141 = scmp.eq.s32.totalorder %s13, 1
      %p142 = scmp.ne.s32.totalorder %s137, %s139
      %p143 = scmp.eq.s32.totalorder %s13, 0
      %p144 = por %p142, %p143
      %p145 = scmp.ne.s32.totalorder %s137, %s139
      %p146 = scmp.eq.s32.totalorder %s18, 1
      %p147 = por %p145, %p146
      %p148 = scmp.ne.s32.totalorder %s139, %s140
      %p149 = scmp.eq.s32.totalorder %s18, 0
      %p150 = por %p148, %p149
      %p151 = scmp.ne.s32.totalorder %s139, %s140
      %p152 = scmp.eq.s32.totalorder %s19, 1
      %p153 = por %p151, %p152
      %p155 = scmp.ne.s32.totalorder %s140, %s154
      %p156 = scmp.eq.s32.totalorder %s19, 0
      %p157 = por %p155, %p156
      %s159 = sadd.s32 %s158, 1
      %p162 = scmp.eq.s32.totalorder %s13, 1
      %p163 = scmp.ne.s32.totalorder %s158, %s160
      %p164 = scmp.eq.s32.totalorder %s13, 0
      %p165 = por %p163, %p164
      %p166 = scmp.ne.s32.totalorder %s158, %s160
      %p167 = scmp.eq.s32.totalorder %s18, 1
      %p168 = por %p166, %p167
      %p169 = scmp.ne.s32.totalorder %s160, %s161
      %p170 = scmp.eq.s32.totalorder %s18, 0
      %p171 = por %p169, %p170
      %p172 = scmp.ne.s32.totalorder %s160, %s161
      %p173 = scmp.eq.s32.totalorder %s19, 1
      %p174 = por %p172, %p173
      %p176 = scmp.ne.s32.totalorder %s161, %s175
      %p177 = scmp.eq.s32.totalorder %s19, 0
      %p178 = por %p176, %p177
      %s180 = sadd.s32 %s179, 1
      %p183 = scmp.eq.s32.totalorder %s13, 1
      %p184 = scmp.ne.s32.totalorder %s179, %s181
      %p185 = scmp.eq.s32.totalorder %s13, 0
      %p186 = por %p184, %p185
      %p187 = scmp.ne.s32.totalorder %s179, %s181
      %p188 = scmp.eq.s32.totalorder %s18, 1
      %p189 = por %p187, %p188
      %p190 = scmp.ne.s32.totalorder %s181, %s182
      %p191 = scmp.eq.s32.totalorder %s18, 0
      %p192 = por %p190, %p191
      %p193 = scmp.ne.s32.totalorder %s181, %s182
      %p194 = scmp.eq.s32.totalorder %s19, 1
      %p195 = por %p193, %p194
      %p197 = scmp.ne.s32.totalorder %s182, %s196
      %p198 = scmp.eq.s32.totalorder %s19, 0
      %p199 = por %p197, %p198
      %s200 = ssub.s32 %s20, %s32
      %p201 = scmp.eq.s32.totalorder %s200, 0
      %s203 = sadd.s32 %s202, 1
      %s204 = scalar_select %p201, %s202, %s203
      %p207 = pneg %p201
      %p208 = scmp.eq.s32.totalorder %s13, 1
      %p209 = por %p207, %p208
      %p210 = scmp.ne.s32.totalorder %s202, %s205
      %p211 = scmp.eq.s32.totalorder %s13, 0
      %p212 = por %p210, %p211
      %p213 = scmp.ne.s32.totalorder %s202, %s205
      %p214 = scmp.eq.s32.totalorder %s18, 1
      %p215 = por %p213, %p214
      %p216 = scmp.ne.s32.totalorder %s205, %s206
      %p217 = scmp.eq.s32.totalorder %s18, 0
      %p218 = por %p216, %p217
      %p219 = scmp.ne.s32.totalorder %s205, %s206
      %p220 = scmp.eq.s32.totalorder %s19, 1
      %p221 = por %p219, %p220
      %p223 = scmp.ne.s32.totalorder %s206, %s222
      %p224 = scmp.eq.s32.totalorder %s19, 0
      %p225 = por %p223, %p224
      %p226 = scmp.le.s32.totalorder 1, %s13
      %p227 = scmp.lt.s32.totalorder %s13, 3
      %p228 = pnand %p226, %p227
      %p229 = pneg %p228
      // Predicated region
      $region9: #{forward.8} parent=5 // pred_check
        _
      $region10: #{forward.8} parent=5 // pred_check_branch
        %231 = sbr.rel (%p228) target = $region12
      $region11: #{forward.8} parent=5 // pred_region
        %s232 = ssub.s32 %s13, 1
        // Predicated region
        $region13: #{forward.8} parent=11 // pred_check
          %p233 = pneg %p51
        $region14: #{forward.8} parent=11 // pred_check_branch
          %235 = sbr.rel (%p233) target = $region16
        $region15: #{forward.8} parent=11 // pred_region
          %s236 = smul.u32 2, %s22
          %p237 = scmp.lt.s32.totalorder %s236, 1
          %s238 = scalar_select %p237, %s236, 1
          %s239 = smul.addr %s238, 2
          %s240 = smul.addr %s239, 4
          %s241 = scalar_lea.vmem %s0, %s240
          %s242 = smul.u32 2, %s22
        $region16: #{forward.8} parent=11 // pred_fallthru
          _
        // Predicated region
        $region17: #{forward.8} parent=11 // pred_check
          %p243 = pneg %p150
        $region18: #{forward.8} parent=11 // pred_check_branch
          %245 = sbr.rel (%p243) target = $region20
        $region19: #{forward.8} parent=11 // pred_region
          _
        $region20: #{forward.8} parent=11 // pred_fallthru
          _
        // Predicated region
        $region21: #{forward.8} parent=11 // pred_check
          %p246 = pneg %p171
        $region22: #{forward.8} parent=11 // pred_check_branch
          %248 = sbr.rel (%p246) target = $region24
        $region23: #{forward.8} parent=11 // pred_region
          _
        $region24: #{forward.8} parent=11 // pred_fallthru
          _
        // Predicated region
        $region25: #{forward.8} parent=11 // pred_check
          %p249 = pneg %p192
        $region26: #{forward.8} parent=11 // pred_check_branch
          %251 = sbr.rel (%p249) target = $region28
        $region27: #{forward.8} parent=11 // pred_region
          _
        $region28: #{forward.8} parent=11 // pred_fallthru
          _
      $region12: #{forward.8} parent=5 // pred_fallthru
        _
      %p252 = scmp.lt.s32.totalorder %s13, 2
      // Predicated region
      $region29: #{forward.8} parent=5 // pred_check
        %p253 = pneg %p252
      $region30: #{forward.8} parent=5 // pred_check_branch
        %255 = sbr.rel (%p253) target = $region32
      $region31: #{forward.8} parent=5 // pred_region
        // Predicated region
        $region33: #{forward.8} parent=31 // pred_check
          %p256 = pneg %p71
        $region34: #{forward.8} parent=31 // pred_check_branch
          %258 = sbr.rel (%p256) target = $region36
        $region35: #{forward.8} parent=31 // pred_region
          %s259 = sand.u32 %s61, 1
          %s260 = sand.u32 %s61, 1
          %s261 = smul.addr %s260, 512
          %s262 = scalar_lea.vmem [#allocation3], %s261
          %s263 = smul.u32 4, %s21
          %s264 = smul.addr %s263, 4
          %s265 = scalar_lea.vmem %s1, %s264
          // Predicated region
          $region37: #{forward.8} parent=35 // pred_check
            _
          $region38: #{forward.8} parent=35 // pred_check_branch
            %267 = sbr.rel (0) target = $region40
          $region39: #{forward.8} parent=35 // pred_region
            // Predicated region
            $region41: #{forward.8} parent=39 // pred_check
              _
            $region42: #{forward.8} parent=39 // pred_check_branch
              %269 = sbr.rel (0) target = $region44
            $region43: #{forward.8} parent=39 // pred_region
              loop: start=0, step=1, limit=1
              $region45: #{forward.8} parent=43 // loop_pre_header
                _
              $region46: #{forward.8} parent=43 // loop_header
                %s271 = sphi 0, %s275
                %p272 = scmp.ge.s32.totalorder %s271, 1
                %s276 = sphi %s265, %s265
                %s277 = sphi %s262, %s262
              $region47: #{forward.8} parent=43 // loop_header_branch
                %274 = sbr.rel (%p272) target = $region51
              $region48: #{forward.8} parent=43 // loop_body
                %v278 = vld [vmem:[%s276] sm:$0xff]
                %279 = vst [vmem:[%s277] sm:$0xff] %v278
                %v280 = vld [vmem:[%s276 + $0x8] sm:$0xff]
                %281 = vst [vmem:[%s277 + $0x8] sm:$0xff] %v280
                %v282 = vld [vmem:[%s276 + $0x20] sm:$0xff]
                %283 = vst [vmem:[%s277 + $0x10] sm:$0xff] %v282
                %v284 = vld [vmem:[%s276 + $0x28] sm:$0xff]
                %285 = vst [vmem:[%s277 + $0x18] sm:$0xff] %v284
                %v286 = vld [vmem:[%s276 + $0x40] sm:$0xff]
                %287 = vst [vmem:[%s277 + $0x20] sm:$0xff] %v286
                %v288 = vld [vmem:[%s276 + $0x48] sm:$0xff]
                %289 = vst [vmem:[%s277 + $0x28] sm:$0xff] %v288
                %v290 = vld [vmem:[%s276 + $0x60] sm:$0xff]
                %291 = vst [vmem:[%s277 + $0x30] sm:$0xff] %v290
                %v292 = vld [vmem:[%s276 + $0x68] sm:$0xff]
                %293 = vst [vmem:[%s277 + $0x38] sm:$0xff] %v292
                %v294 = vld [vmem:[%s276 + $0x80] sm:$0xff]
                %295 = vst [vmem:[%s277 + $0x40] sm:$0xff] %v294
                %v296 = vld [vmem:[%s276 + $0x88] sm:$0xff]
                %297 = vst [vmem:[%s277 + $0x48] sm:$0xff] %v296
                %v298 = vld [vmem:[%s276 + $0xa0] sm:$0xff]
                %299 = vst [vmem:[%s277 + $0x50] sm:$0xff] %v298
                %v300 = vld [vmem:[%s276 + $0xa8] sm:$0xff]
                %301 = vst [vmem:[%s277 + $0x58] sm:$0xff] %v300
                %v302 = vld [vmem:[%s276 + $0xc0] sm:$0xff]
                %303 = vst [vmem:[%s277 + $0x60] sm:$0xff] %v302
                %v304 = vld [vmem:[%s276 + $0xc8] sm:$0xff]
                %305 = vst [vmem:[%s277 + $0x68] sm:$0xff] %v304
                %v306 = vld [vmem:[%s276 + $0xe0] sm:$0xff]
                %307 = vst [vmem:[%s277 + $0x70] sm:$0xff] %v306
                %v308 = vld [vmem:[%s276 + $0xe8] sm:$0xff]
                %309 = vst [vmem:[%s277 + $0x78] sm:$0xff] %v308
                %v310 = vld [vmem:[%s276 + $0x100] sm:$0xff]
                %311 = vst [vmem:[%s277 + $0x80] sm:$0xff] %v310
                %v312 = vld [vmem:[%s276 + $0x108] sm:$0xff]
                %313 = vst [vmem:[%s277 + $0x88] sm:$0xff] %v312
                %v314 = vld [vmem:[%s276 + $0x120] sm:$0xff]
                %315 = vst [vmem:[%s277 + $0x90] sm:$0xff] %v314
                %v316 = vld [vmem:[%s276 + $0x128] sm:$0xff]
                %317 = vst [vmem:[%s277 + $0x98] sm:$0xff] %v316
                %v318 = vld [vmem:[%s276 + $0x140] sm:$0xff]
                %319 = vst [vmem:[%s277 + $0xa0] sm:$0xff] %v318
                %v320 = vld [vmem:[%s276 + $0x148] sm:$0xff]
                %321 = vst [vmem:[%s277 + $0xa8] sm:$0xff] %v320
                %v322 = vld [vmem:[%s276 + $0x160] sm:$0xff]
                %323 = vst [vmem:[%s277 + $0xb0] sm:$0xff] %v322
                %v324 = vld [vmem:[%s276 + $0x168] sm:$0xff]
                %325 = vst [vmem:[%s277 + $0xb8] sm:$0xff] %v324
                %v326 = vld [vmem:[%s276 + $0x180] sm:$0xff]
                %327 = vst [vmem:[%s277 + $0xc0] sm:$0xff] %v326
                %v328 = vld [vmem:[%s276 + $0x188] sm:$0xff]
                %329 = vst [vmem:[%s277 + $0xc8] sm:$0xff] %v328
                %v330 = vld [vmem:[%s276 + $0x1a0] sm:$0xff]
                %331 = vst [vmem:[%s277 + $0xd0] sm:$0xff] %v330
                %v332 = vld [vmem:[%s276 + $0x1a8] sm:$0xff]
                %333 = vst [vmem:[%s277 + $0xd8] sm:$0xff] %v332
                %v334 = vld [vmem:[%s276 + $0x1c0] sm:$0xff]
                %335 = vst [vmem:[%s277 + $0xe0] sm:$0xff] %v334
                %v336 = vld [vmem:[%s276 + $0x1c8] sm:$0xff]
                %337 = vst [vmem:[%s277 + $0xe8] sm:$0xff] %v336
                %v338 = vld [vmem:[%s276 + $0x1e0] sm:$0xff]
                %339 = vst [vmem:[%s277 + $0xf0] sm:$0xff] %v338
                %v340 = vld [vmem:[%s276 + $0x1e8] sm:$0xff]
                %341 = vst [vmem:[%s277 + $0xf8] sm:$0xff] %v340
                %v342 = vld [vmem:[%s276 + $0x200] sm:$0xff]
                %343 = vst [vmem:[%s277 + $0x100] sm:$0xff] %v342
                %v344 = vld [vmem:[%s276 + $0x208] sm:$0xff]
                %345 = vst [vmem:[%s277 + $0x108] sm:$0xff] %v344
                %v346 = vld [vmem:[%s276 + $0x220] sm:$0xff]
                %347 = vst [vmem:[%s277 + $0x110] sm:$0xff] %v346
                %v348 = vld [vmem:[%s276 + $0x228] sm:$0xff]
                %349 = vst [vmem:[%s277 + $0x118] sm:$0xff] %v348
                %v350 = vld [vmem:[%s276 + $0x240] sm:$0xff]
                %351 = vst [vmem:[%s277 + $0x120] sm:$0xff] %v350
                %v352 = vld [vmem:[%s276 + $0x248] sm:$0xff]
                %353 = vst [vmem:[%s277 + $0x128] sm:$0xff] %v352
                %v354 = vld [vmem:[%s276 + $0x260] sm:$0xff]
                %355 = vst [vmem:[%s277 + $0x130] sm:$0xff] %v354
                %v356 = vld [vmem:[%s276 + $0x268] sm:$0xff]
                %357 = vst [vmem:[%s277 + $0x138] sm:$0xff] %v356
                %v358 = vld [vmem:[%s276 + $0x280] sm:$0xff]
                %359 = vst [vmem:[%s277 + $0x140] sm:$0xff] %v358
                %v360 = vld [vmem:[%s276 + $0x288] sm:$0xff]
                %361 = vst [vmem:[%s277 + $0x148] sm:$0xff] %v360
                %v362 = vld [vmem:[%s276 + $0x2a0] sm:$0xff]
                %363 = vst [vmem:[%s277 + $0x150] sm:$0xff] %v362
                %v364 = vld [vmem:[%s276 + $0x2a8] sm:$0xff]
                %365 = vst [vmem:[%s277 + $0x158] sm:$0xff] %v364
                %v366 = vld [vmem:[%s276 + $0x2c0] sm:$0xff]
                %367 = vst [vmem:[%s277 + $0x160] sm:$0xff] %v366
                %v368 = vld [vmem:[%s276 + $0x2c8] sm:$0xff]
                %369 = vst [vmem:[%s277 + $0x168] sm:$0xff] %v368
                %v370 = vld [vmem:[%s276 + $0x2e0] sm:$0xff]
                %371 = vst [vmem:[%s277 + $0x170] sm:$0xff] %v370
                %v372 = vld [vmem:[%s276 + $0x2e8] sm:$0xff]
                %373 = vst [vmem:[%s277 + $0x178] sm:$0xff] %v372
                %v374 = vld [vmem:[%s276 + $0x300] sm:$0xff]
                %375 = vst [vmem:[%s277 + $0x180] sm:$0xff] %v374
                %v376 = vld [vmem:[%s276 + $0x308] sm:$0xff]
                %377 = vst [vmem:[%s277 + $0x188] sm:$0xff] %v376
                %v378 = vld [vmem:[%s276 + $0x320] sm:$0xff]
                %379 = vst [vmem:[%s277 + $0x190] sm:$0xff] %v378
                %v380 = vld [vmem:[%s276 + $0x328] sm:$0xff]
                %381 = vst [vmem:[%s277 + $0x198] sm:$0xff] %v380
                %v382 = vld [vmem:[%s276 + $0x340] sm:$0xff]
                %383 = vst [vmem:[%s277 + $0x1a0] sm:$0xff] %v382
                %v384 = vld [vmem:[%s276 + $0x348] sm:$0xff]
                %385 = vst [vmem:[%s277 + $0x1a8] sm:$0xff] %v384
                %v386 = vld [vmem:[%s276 + $0x360] sm:$0xff]
                %387 = vst [vmem:[%s277 + $0x1b0] sm:$0xff] %v386
                %v388 = vld [vmem:[%s276 + $0x368] sm:$0xff]
                %389 = vst [vmem:[%s277 + $0x1b8] sm:$0xff] %v388
                %v390 = vld [vmem:[%s276 + $0x380] sm:$0xff]
                %391 = vst [vmem:[%s277 + $0x1c0] sm:$0xff] %v390
                %v392 = vld [vmem:[%s276 + $0x388] sm:$0xff]
                %393 = vst [vmem:[%s277 + $0x1c8] sm:$0xff] %v392
                %v394 = vld [vmem:[%s276 + $0x3a0] sm:$0xff]
                %395 = vst [vmem:[%s277 + $0x1d0] sm:$0xff] %v394
                %v396 = vld [vmem:[%s276 + $0x3a8] sm:$0xff]
                %397 = vst [vmem:[%s277 + $0x1d8] sm:$0xff] %v396
                %v398 = vld [vmem:[%s276 + $0x3c0] sm:$0xff]
                %399 = vst [vmem:[%s277 + $0x1e0] sm:$0xff] %v398
                %v400 = vld [vmem:[%s276 + $0x3c8] sm:$0xff]
                %401 = vst [vmem:[%s277 + $0x1e8] sm:$0xff] %v400
                %v402 = vld [vmem:[%s276 + $0x3e0] sm:$0xff]
                %403 = vst [vmem:[%s277 + $0x1f0] sm:$0xff] %v402
                %v404 = vld [vmem:[%s276 + $0x3e8] sm:$0xff]
                %405 = vst [vmem:[%s277 + $0x1f8] sm:$0xff] %v404
              $region49: #{forward.8} parent=43 // loop_footer
                %s275 = sadd.s32 1, %s271
              $region50: #{forward.8} parent=43 // loop_footer_branch
                %270 = sbr.rel target = $region46
              $region51: #{forward.8} parent=43 // loop_exit
                _
            $region44: #{forward.8} parent=39 // pred_fallthru
              _
            // Predicated region
            $region52: #{forward.8} parent=39 // pred_check
              _
            $region53: #{forward.8} parent=39 // pred_check_branch
              %407 = sbr.rel target = $region55
            $region54: #{forward.8} parent=39 // pred_region
              _
            $region55: #{forward.8} parent=39 // pred_fallthru
              _
          $region40: #{forward.8} parent=35 // pred_fallthru
            _
          %408 = vnop
        $region36: #{forward.8} parent=31 // pred_fallthru
          _
        // Predicated region
        $region56: #{forward.8} parent=31 // pred_check
          %p409 = pneg %p97
        $region57: #{forward.8} parent=31 // pred_check_branch
          %411 = sbr.rel (%p409) target = $region59
        $region58: #{forward.8} parent=31 // pred_region
          %s412 = smul.u32 4, %s21
          %p413 = scmp.lt.s32.totalorder %s412, 7
          %s414 = scalar_select %p413, %s412, 7
          %s415 = scalar_lea.vmem %s2, %s414
          %s416 = smul.u32 4, %s21
        $region59: #{forward.8} parent=31 // pred_fallthru
          _
        // Predicated region
        $region60: #{forward.8} parent=31 // pred_check
          %p417 = pneg %p123
        $region61: #{forward.8} parent=31 // pred_check_branch
          %419 = sbr.rel (%p417) target = $region63
        $region62: #{forward.8} parent=31 // pred_region
          %s420 = smul.u32 64, %s21
          %p421 = scmp.lt.s32.totalorder %s420, 127
          %s422 = scalar_select %p421, %s420, 127
          %s423 = smul.addr %s422, 2
          %s424 = smul.addr %s423, 4
          %s425 = scalar_lea.vmem %s3, %s424
          %s426 = smul.u32 64, %s21
        $region63: #{forward.8} parent=31 // pred_fallthru
          _
      $region32: #{forward.8} parent=5 // pred_fallthru
        _
      %p427 = scmp.le.s32.totalorder 1, %s13
      %p428 = scmp.lt.s32.totalorder %s13, 3
      %p429 = pnand %p427, %p428
      %p430 = pneg %p429
      // Predicated region
      $region64: #{forward.8} parent=5 // pred_check
        _
      $region65: #{forward.8} parent=5 // pred_check_branch
        %432 = sbr.rel (%p429) target = $region67
      $region66: #{forward.8} parent=5 // pred_region
        %s433 = ssub.s32 %s13, 1
        %s434 = sand.u32 %s64, 1
        %s435 = sand.u32 %s64, 1
        %s436 = smul.addr %s435, 512
        %s437 = scalar_lea.vmem [#allocation3], %s436
        // Predicated region
        $region68: #{forward.8} parent=66 // pred_check
          %p438 = pneg %p77
        $region69: #{forward.8} parent=66 // pred_check_branch
          %440 = sbr.rel (%p438) target = $region71
        $region70: #{forward.8} parent=66 // pred_region
          _
        $region71: #{forward.8} parent=66 // pred_fallthru
          _
        %s441 = smul.u32 2, %s22
        %p442 = scmp.lt.s32.totalorder %s441, 1
        %s443 = scalar_select %p442, %s441, 1
        %s444 = smul.addr %s443, 2
        %s445 = smul.addr %s444, 4
        %s446 = scalar_lea.vmem %s0, %s445
        %p447 = pneg %p51
        %p448 = pneg %p48
        %s449 = sand.u32 %s64, 1
        %s450 = sand.u32 %s64, 1
        %s451 = smul.addr %s450, 512
        %s452 = scalar_lea.vmem [#allocation3], %s451
        %p453 = pneg %p77
        %p454 = pneg %p74
        %s455 = smul.u32 4, %s23
        %p456 = scmp.lt.s32.totalorder %s455, 7
        %s457 = scalar_select %p456, %s455, 7
        %s458 = scalar_lea.vmem %s2, %s457
        %p459 = pneg %p103
        %p460 = pneg %p100
        %s461 = smul.u32 64, %s23
        %p462 = scmp.lt.s32.totalorder %s461, 127
        %s463 = scalar_select %p462, %s461, 127
        %s464 = smul.addr %s463, 2
        %s465 = smul.addr %s464, 4
        %s466 = scalar_lea.vmem %s3, %s465
        %p467 = pneg %p129
        %p468 = pneg %p126
        %p469 = pneg %p150
        %p470 = pneg %p147
        %p471 = pneg %p171
        %p472 = pneg %p168
        %p473 = pneg %p192
        %p474 = pneg %p189
        %p475 = pneg %p218
        %p476 = pneg %p215
        %s477 = smul.u32 2, %s22
        %p478 = scmp.lt.s32.totalorder %s477, 1
        %s479 = scalar_select %p478, %s477, 1
        %s480 = smul.addr %s479, 2
        %s481 = smul.addr %s480, 4
        %s482 = scalar_lea.vmem %s7, %s481
        %s483 = smul.u32 2, %s22
        %p484 = scmp.lt.s32.totalorder %s483, 1
        %s485 = scalar_select %p484, %s483, 1
        %s486 = smul.addr %s485, 2
        %s487 = smul.addr %s486, 4
        %s488 = scalar_lea.vmem %s0, %s487
        %s489 = smul.u32 2, %s22
        %s490 = smul.u32 4, %s23
        %s491 = smul.u32 4, %s23
        %p492 = scmp.lt.s32.totalorder %s491, 7
        %s493 = scalar_select %p492, %s491, 7
        %s494 = scalar_lea.vmem %s2, %s493
        %s495 = smul.u32 4, %s23
        %s496 = smul.u32 64, %s23
        %p497 = scmp.lt.s32.totalorder %s496, 127
        %s498 = scalar_select %p497, %s496, 127
        %s499 = smul.addr %s498, 2
        %s500 = smul.addr %s499, 4
        %s501 = scalar_lea.vmem %s3, %s500
        %s502 = smul.u32 64, %s23
        %s503 = smul.u32 2, %s22
        %p504 = scmp.lt.s32.totalorder %s503, 1
        %s505 = scalar_select %p504, %s503, 1
        %s506 = smul.addr %s505, 2
        %s507 = smul.addr %s506, 4
        %s508 = scalar_lea.vmem %s7, %s507
        %s509 = smul.u32 2, %s22
        %p510 = scmp.eq.s32.totalorder %s23, 0
        // Predicated region
        $region72: #{forward.8} parent=66 // pred_check
          %p511 = pneg %p510
        $region73: #{forward.8} parent=66 // pred_check_branch
          %513 = sbr.rel (%p511) target = $region75
        $region74: #{forward.8} parent=66 // pred_region
          %514 = vst [vmem:[#allocation2] sm:$0xff] 0.0
          %515 = vst [vmem:[#allocation2 + $0x8] sm:$0xff] 0.0
          %516 = vst [vmem:[#allocation2 + $0x10] sm:$0xff] 0.0
          %517 = vst [vmem:[#allocation2 + $0x18] sm:$0xff] 0.0
        $region75: #{forward.8} parent=66 // pred_fallthru
          _
        %v518 = vld [vmem:[%s488] sm:$0xff]
        %v519 = vld [vmem:[%s488 + $0x8] sm:$0xff]
        %v520 = vld [vmem:[%s437] sm:$0xff]
        %v521 = vld [vmem:[%s437 + $0x8] sm:$0xff]
        %v522 = vld [vmem:[%s437 + $0x10] sm:$0xff]
        %v523 = vld [vmem:[%s437 + $0x18] sm:$0xff]
        %v524 = vld [vmem:[%s437 + $0x20] sm:$0xff]
        %v525 = vld [vmem:[%s437 + $0x28] sm:$0xff]
        %v526 = vld [vmem:[%s437 + $0x30] sm:$0xff]
        %v527 = vld [vmem:[%s437 + $0x38] sm:$0xff]
        %v528 = vld [vmem:[%s437 + $0x40] sm:$0xff]
        %v529 = vld [vmem:[%s437 + $0x48] sm:$0xff]
        %v530 = vld [vmem:[%s437 + $0x50] sm:$0xff]
        %v531 = vld [vmem:[%s437 + $0x58] sm:$0xff]
        %v532 = vld [vmem:[%s437 + $0x60] sm:$0xff]
        %v533 = vld [vmem:[%s437 + $0x68] sm:$0xff]
        %v534 = vld [vmem:[%s437 + $0x70] sm:$0xff]
        %v535 = vld [vmem:[%s437 + $0x78] sm:$0xff]
        %v536 = vld [vmem:[%s437 + $0x80] sm:$0xff]
        %v537 = vld [vmem:[%s437 + $0x88] sm:$0xff]
        %v538 = vld [vmem:[%s437 + $0x90] sm:$0xff]
        %v539 = vld [vmem:[%s437 + $0x98] sm:$0xff]
        %v540 = vld [vmem:[%s437 + $0xa0] sm:$0xff]
        %v541 = vld [vmem:[%s437 + $0xa8] sm:$0xff]
        %v542 = vld [vmem:[%s437 + $0xb0] sm:$0xff]
        %v543 = vld [vmem:[%s437 + $0xb8] sm:$0xff]
        %v544 = vld [vmem:[%s437 + $0xc0] sm:$0xff]
        %v545 = vld [vmem:[%s437 + $0xc8] sm:$0xff]
        %v546 = vld [vmem:[%s437 + $0xd0] sm:$0xff]
        %v547 = vld [vmem:[%s437 + $0xd8] sm:$0xff]
        %v548 = vld [vmem:[%s437 + $0xe0] sm:$0xff]
        %v549 = vld [vmem:[%s437 + $0xe8] sm:$0xff]
        %v550 = vld [vmem:[%s437 + $0xf0] sm:$0xff]
        %v551 = vld [vmem:[%s437 + $0xf8] sm:$0xff]
        %v552 = vld [vmem:[%s437 + $0x100] sm:$0xff]
        %v553 = vld [vmem:[%s437 + $0x108] sm:$0xff]
        %v554 = vld [vmem:[%s437 + $0x110] sm:$0xff]
        %v555 = vld [vmem:[%s437 + $0x118] sm:$0xff]
        %v556 = vld [vmem:[%s437 + $0x120] sm:$0xff]
        %v557 = vld [vmem:[%s437 + $0x128] sm:$0xff]
        %v558 = vld [vmem:[%s437 + $0x130] sm:$0xff]
        %v559 = vld [vmem:[%s437 + $0x138] sm:$0xff]
        %v560 = vld [vmem:[%s437 + $0x140] sm:$0xff]
        %v561 = vld [vmem:[%s437 + $0x148] sm:$0xff]
        %v562 = vld [vmem:[%s437 + $0x150] sm:$0xff]
        %v563 = vld [vmem:[%s437 + $0x158] sm:$0xff]
        %v564 = vld [vmem:[%s437 + $0x160] sm:$0xff]
        %v565 = vld [vmem:[%s437 + $0x168] sm:$0xff]
        %v566 = vld [vmem:[%s437 + $0x170] sm:$0xff]
        %v567 = vld [vmem:[%s437 + $0x178] sm:$0xff]
        %v568 = vld [vmem:[%s437 + $0x180] sm:$0xff]
        %v569 = vld [vmem:[%s437 + $0x188] sm:$0xff]
        %v570 = vld [vmem:[%s437 + $0x190] sm:$0xff]
        %v571 = vld [vmem:[%s437 + $0x198] sm:$0xff]
        %v572 = vld [vmem:[%s437 + $0x1a0] sm:$0xff]
        %v573 = vld [vmem:[%s437 + $0x1a8] sm:$0xff]
        %v574 = vld [vmem:[%s437 + $0x1b0] sm:$0xff]
        %v575 = vld [vmem:[%s437 + $0x1b8] sm:$0xff]
        %v576 = vld [vmem:[%s437 + $0x1c0] sm:$0xff]
        %v577 = vld [vmem:[%s437 + $0x1c8] sm:$0xff]
        %v578 = vld [vmem:[%s437 + $0x1d0] sm:$0xff]
        %v579 = vld [vmem:[%s437 + $0x1d8] sm:$0xff]
        %v580 = vld [vmem:[%s437 + $0x1e0] sm:$0xff]
        %v581 = vld [vmem:[%s437 + $0x1e8] sm:$0xff]
        %v582 = vld [vmem:[%s437 + $0x1f0] sm:$0xff]
        %v583 = vld [vmem:[%s437 + $0x1f8] sm:$0xff]
        %v584 = vld [vmem:[%s494] sm:$0xf]
        %v585 = vunpack.c.l.bf16 %v584
        %v587 = vlaneseq
        %v588 = vshrl.u32 %v587, 7
        %v589 = vsub.s32 0, %v588
        %v590 = vrot.slane %v585, %v589
        %v591 = vlaneseq
        %v592 = vshrl.u32 %v591, 7
        %v593 = vsub.s32 2, %v592
        %v594 = vrot.slane %v585, %v593
        %v595 = vlaneseq
        %v596 = vshrl.u32 %v595, 7
        %v597 = vsub.s32 4, %v596
        %v598 = vrot.slane %v585, %v597
        %v599 = vlaneseq
        %v600 = vshrl.u32 %v599, 7
        %v601 = vsub.s32 6, %v600
        %v602 = vrot.slane %v585, %v601
        %v607 = vlaneseq
        %v608 = vshrl.u32 %v607, 7
        %v609 = vsub.s32 0, %v608
        %v610 = vrot.slane %v590, %v609
        %v611 = vlaneseq
        %v612 = vshrl.u32 %v611, 7
        %v613 = vsub.s32 0, %v612
        %v614 = vrot.slane %v594, %v613
        %v615 = vlaneseq
        %v616 = vshrl.u32 %v615, 7
        %v617 = vsub.s32 0, %v616
        %v618 = vrot.slane %v598, %v617
        %v619 = vlaneseq
        %v620 = vshrl.u32 %v619, 7
        %v621 = vsub.s32 0, %v620
        %v622 = vrot.slane %v602, %v621
        %v625 = vunpack.c.l.b16 %v518
        %v626 = vunpack.c.h.b16 %v518
        %v627 = vunpack.c.l.b16 %v519
        %v628 = vunpack.c.h.b16 %v519
        %v629 = vpack.c.b16 %v627, %v625
        %v630 = vpack.c.b16 %v628, %v626
        %v697 = vunpack.c.l.b16 %v520
        %v698 = vunpack.c.h.b16 %v520
        %v699 = vunpack.c.l.b16 %v521
        %v700 = vunpack.c.h.b16 %v521
        %v701 = vunpack.c.l.b16 %v522
        %v702 = vunpack.c.h.b16 %v522
        %v703 = vunpack.c.l.b16 %v523
        %v704 = vunpack.c.h.b16 %v523
        %v705 = vunpack.c.l.b16 %v524
        %v706 = vunpack.c.h.b16 %v524
        %v707 = vunpack.c.l.b16 %v525
        %v708 = vunpack.c.h.b16 %v525
        %v709 = vunpack.c.l.b16 %v526
        %v710 = vunpack.c.h.b16 %v526
        %v711 = vunpack.c.l.b16 %v527
        %v712 = vunpack.c.h.b16 %v527
        %v713 = vunpack.c.l.b16 %v528
        %v714 = vunpack.c.h.b16 %v528
        %v715 = vunpack.c.l.b16 %v529
        %v716 = vunpack.c.h.b16 %v529
        %v717 = vunpack.c.l.b16 %v530
        %v718 = vunpack.c.h.b16 %v530
        %v719 = vunpack.c.l.b16 %v531
        %v720 = vunpack.c.h.b16 %v531
        %v721 = vunpack.c.l.b16 %v532
        %v722 = vunpack.c.h.b16 %v532
        %v723 = vunpack.c.l.b16 %v533
        %v724 = vunpack.c.h.b16 %v533
        %v725 = vunpack.c.l.b16 %v534
        %v726 = vunpack.c.h.b16 %v534
        %v727 = vunpack.c.l.b16 %v535
        %v728 = vunpack.c.h.b16 %v535
        %v729 = vunpack.c.l.b16 %v536
        %v730 = vunpack.c.h.b16 %v536
        %v731 = vunpack.c.l.b16 %v537
        %v732 = vunpack.c.h.b16 %v537
        %v733 = vunpack.c.l.b16 %v538
        %v734 = vunpack.c.h.b16 %v538
        %v735 = vunpack.c.l.b16 %v539
        %v736 = vunpack.c.h.b16 %v539
        %v737 = vunpack.c.l.b16 %v540
        %v738 = vunpack.c.h.b16 %v540
        %v739 = vunpack.c.l.b16 %v541
        %v740 = vunpack.c.h.b16 %v541
        %v741 = vunpack.c.l.b16 %v542
        %v742 = vunpack.c.h.b16 %v542
        %v743 = vunpack.c.l.b16 %v543
        %v744 = vunpack.c.h.b16 %v543
        %v745 = vunpack.c.l.b16 %v544
        %v746 = vunpack.c.h.b16 %v544
        %v747 = vunpack.c.l.b16 %v545
        %v748 = vunpack.c.h.b16 %v545
        %v749 = vunpack.c.l.b16 %v546
        %v750 = vunpack.c.h.b16 %v546
        %v751 = vunpack.c.l.b16 %v547
        %v752 = vunpack.c.h.b16 %v547
        %v753 = vunpack.c.l.b16 %v548
        %v754 = vunpack.c.h.b16 %v548
        %v755 = vunpack.c.l.b16 %v549
        %v756 = vunpack.c.h.b16 %v549
        %v757 = vunpack.c.l.b16 %v550
        %v758 = vunpack.c.h.b16 %v550
        %v759 = vunpack.c.l.b16 %v551
        %v760 = vunpack.c.h.b16 %v551
        %v761 = vunpack.c.l.b16 %v552
        %v762 = vunpack.c.h.b16 %v552
        %v763 = vunpack.c.l.b16 %v553
        %v764 = vunpack.c.h.b16 %v553
        %v765 = vunpack.c.l.b16 %v554
        %v766 = vunpack.c.h.b16 %v554
        %v767 = vunpack.c.l.b16 %v555
        %v768 = vunpack.c.h.b16 %v555
        %v769 = vunpack.c.l.b16 %v556
        %v770 = vunpack.c.h.b16 %v556
        %v771 = vunpack.c.l.b16 %v557
        %v772 = vunpack.c.h.b16 %v557
        %v773 = vunpack.c.l.b16 %v558
        %v774 = vunpack.c.h.b16 %v558
        %v775 = vunpack.c.l.b16 %v559
        %v776 = vunpack.c.h.b16 %v559
        %v777 = vunpack.c.l.b16 %v560
        %v778 = vunpack.c.h.b16 %v560
        %v779 = vunpack.c.l.b16 %v561
        %v780 = vunpack.c.h.b16 %v561
        %v781 = vunpack.c.l.b16 %v562
        %v782 = vunpack.c.h.b16 %v562
        %v783 = vunpack.c.l.b16 %v563
        %v784 = vunpack.c.h.b16 %v563
        %v785 = vunpack.c.l.b16 %v564
        %v786 = vunpack.c.h.b16 %v564
        %v787 = vunpack.c.l.b16 %v565
        %v788 = vunpack.c.h.b16 %v565
        %v789 = vunpack.c.l.b16 %v566
        %v790 = vunpack.c.h.b16 %v566
        %v791 = vunpack.c.l.b16 %v567
        %v792 = vunpack.c.h.b16 %v567
        %v793 = vunpack.c.l.b16 %v568
        %v794 = vunpack.c.h.b16 %v568
        %v795 = vunpack.c.l.b16 %v569
        %v796 = vunpack.c.h.b16 %v569
        %v797 = vunpack.c.l.b16 %v570
        %v798 = vunpack.c.h.b16 %v570
        %v799 = vunpack.c.l.b16 %v571
        %v800 = vunpack.c.h.b16 %v571
        %v801 = vunpack.c.l.b16 %v572
        %v802 = vunpack.c.h.b16 %v572
        %v803 = vunpack.c.l.b16 %v573
        %v804 = vunpack.c.h.b16 %v573
        %v805 = vunpack.c.l.b16 %v574
        %v806 = vunpack.c.h.b16 %v574
        %v807 = vunpack.c.l.b16 %v575
        %v808 = vunpack.c.h.b16 %v575
        %v809 = vunpack.c.l.b16 %v576
        %v810 = vunpack.c.h.b16 %v576
        %v811 = vunpack.c.l.b16 %v577
        %v812 = vunpack.c.h.b16 %v577
        %v813 = vunpack.c.l.b16 %v578
        %v814 = vunpack.c.h.b16 %v578
        %v815 = vunpack.c.l.b16 %v579
        %v816 = vunpack.c.h.b16 %v579
        %v817 = vunpack.c.l.b16 %v580
        %v818 = vunpack.c.h.b16 %v580
        %v819 = vunpack.c.l.b16 %v581
        %v820 = vunpack.c.h.b16 %v581
        %v821 = vunpack.c.l.b16 %v582
        %v822 = vunpack.c.h.b16 %v582
        %v823 = vunpack.c.l.b16 %v583
        %v824 = vunpack.c.h.b16 %v583
        %v825 = vpack.c.b16 %v701, %v697
        %v826 = vpack.c.b16 %v702, %v698
        %v827 = vpack.c.b16 %v703, %v699
        %v828 = vpack.c.b16 %v704, %v700
        %v829 = vpack.c.b16 %v709, %v705
        %v830 = vpack.c.b16 %v710, %v706
        %v831 = vpack.c.b16 %v711, %v707
        %v832 = vpack.c.b16 %v712, %v708
        %v833 = vpack.c.b16 %v717, %v713
        %v834 = vpack.c.b16 %v718, %v714
        %v835 = vpack.c.b16 %v719, %v715
        %v836 = vpack.c.b16 %v720, %v716
        %v837 = vpack.c.b16 %v725, %v721
        %v838 = vpack.c.b16 %v726, %v722
        %v839 = vpack.c.b16 %v727, %v723
        %v840 = vpack.c.b16 %v728, %v724
        %v841 = vpack.c.b16 %v733, %v729
        %v842 = vpack.c.b16 %v734, %v730
        %v843 = vpack.c.b16 %v735, %v731
        %v844 = vpack.c.b16 %v736, %v732
        %v845 = vpack.c.b16 %v741, %v737
        %v846 = vpack.c.b16 %v742, %v738
        %v847 = vpack.c.b16 %v743, %v739
        %v848 = vpack.c.b16 %v744, %v740
        %v849 = vpack.c.b16 %v749, %v745
        %v850 = vpack.c.b16 %v750, %v746
        %v851 = vpack.c.b16 %v751, %v747
        %v852 = vpack.c.b16 %v752, %v748
        %v853 = vpack.c.b16 %v757, %v753
        %v854 = vpack.c.b16 %v758, %v754
        %v855 = vpack.c.b16 %v759, %v755
        %v856 = vpack.c.b16 %v760, %v756
        %v857 = vpack.c.b16 %v765, %v761
        %v858 = vpack.c.b16 %v766, %v762
        %v859 = vpack.c.b16 %v767, %v763
        %v860 = vpack.c.b16 %v768, %v764
        %v861 = vpack.c.b16 %v773, %v769
        %v862 = vpack.c.b16 %v774, %v770
        %v863 = vpack.c.b16 %v775, %v771
        %v864 = vpack.c.b16 %v776, %v772
        %v865 = vpack.c.b16 %v781, %v777
        %v866 = vpack.c.b16 %v782, %v778
        %v867 = vpack.c.b16 %v783, %v779
        %v868 = vpack.c.b16 %v784, %v780
        %v869 = vpack.c.b16 %v789, %v785
        %v870 = vpack.c.b16 %v790, %v786
        %v871 = vpack.c.b16 %v791, %v787
        %v872 = vpack.c.b16 %v792, %v788
        %v873 = vpack.c.b16 %v797, %v793
        %v874 = vpack.c.b16 %v798, %v794
        %v875 = vpack.c.b16 %v799, %v795
        %v876 = vpack.c.b16 %v800, %v796
        %v877 = vpack.c.b16 %v805, %v801
        %v878 = vpack.c.b16 %v806, %v802
        %v879 = vpack.c.b16 %v807, %v803
        %v880 = vpack.c.b16 %v808, %v804
        %v881 = vpack.c.b16 %v813, %v809
        %v882 = vpack.c.b16 %v814, %v810
        %v883 = vpack.c.b16 %v815, %v811
        %v884 = vpack.c.b16 %v816, %v812
        %v885 = vpack.c.b16 %v821, %v817
        %v886 = vpack.c.b16 %v822, %v818
        %v887 = vpack.c.b16 %v823, %v819
        %v888 = vpack.c.b16 %v824, %v820
        %953 = vmatprep.subr.bf16.mxu0 %v826
        %954 = vmatpush1.bf16.msra.mxu0 %v825
        %955 = vmatprep.subr.bf16.mxu0 %v830
        %956 = vmatpush1.bf16.msra.mxu0 %v829
        %957 = vmatprep.subr.bf16.mxu0 %v834
        %958 = vmatpush1.bf16.msra.mxu0 %v833
        %959 = vmatprep.subr.bf16.mxu0 %v838
        %960 = vmatpush1.bf16.msra.mxu0 %v837
        %961 = vmatprep.subr.bf16.mxu0 %v842
        %962 = vmatpush1.bf16.msra.mxu0 %v841
        %963 = vmatprep.subr.bf16.mxu0 %v846
        %964 = vmatpush1.bf16.msra.mxu0 %v845
        %965 = vmatprep.subr.bf16.mxu0 %v850
        %966 = vmatpush1.bf16.msra.mxu0 %v849
        %967 = vmatprep.subr.bf16.mxu0 %v854
        %968 = vmatpush1.bf16.msra.mxu0 %v853
        %969 = vmatprep.subr.bf16.mxu0 %v858
        %970 = vmatpush1.bf16.msra.mxu0 %v857
        %971 = vmatprep.subr.bf16.mxu0 %v862
        %972 = vmatpush1.bf16.msra.mxu0 %v861
        %973 = vmatprep.subr.bf16.mxu0 %v866
        %974 = vmatpush1.bf16.msra.mxu0 %v865
        %975 = vmatprep.subr.bf16.mxu0 %v870
        %976 = vmatpush1.bf16.msra.mxu0 %v869
        %977 = vmatprep.subr.bf16.mxu0 %v874
        %978 = vmatpush1.bf16.msra.mxu0 %v873
        %979 = vmatprep.subr.bf16.mxu0 %v878
        %980 = vmatpush1.bf16.msra.mxu0 %v877
        %981 = vmatprep.subr.bf16.mxu0 %v882
        %982 = vmatpush1.bf16.msra.mxu0 %v881
        %983 = vmatprep.subr.bf16.mxu0 %v886
        %984 = vmatpush1.bf16.msra.mxu0 %v885
        %985 = vmatprep.mubr.bf16.mxu0 %v630
        %986 = vmatmul.mubr.bf16.gmra.mrb[0].mxu0 %v629
        %v987 = vpop.f32.mrb[0].mxu0
        %v988 = vadd.f32 %v610, %v987
        %v989 = vpop.f32.mrb[0].mxu0
        %v990 = vadd.f32 %v614, %v989
        %v991 = vpop.f32.mrb[0].mxu0
        %v992 = vadd.f32 %v610, %v991
        %v993 = vpop.f32.mrb[0].mxu0
        %v994 = vadd.f32 %v614, %v993
        %995 = vdwg.mxu0
        %996 = vmatprep.subr.bf16.mxu0 %v828
        %997 = vmatpush1.bf16.msra.mxu0 %v827
        %998 = vmatprep.subr.bf16.mxu0 %v832
        %999 = vmatpush1.bf16.msra.mxu0 %v831
        %1000 = vmatprep.subr.bf16.mxu0 %v836
        %1001 = vmatpush1.bf16.msra.mxu0 %v835
        %1002 = vmatprep.subr.bf16.mxu0 %v840
        %1003 = vmatpush1.bf16.msra.mxu0 %v839
        %1004 = vmatprep.subr.bf16.mxu0 %v844
        %1005 = vmatpush1.bf16.msra.mxu0 %v843
        %1006 = vmatprep.subr.bf16.mxu0 %v848
        %1007 = vmatpush1.bf16.msra.mxu0 %v847
        %1008 = vmatprep.subr.bf16.mxu0 %v852
        %1009 = vmatpush1.bf16.msra.mxu0 %v851
        %1010 = vmatprep.subr.bf16.mxu0 %v856
        %1011 = vmatpush1.bf16.msra.mxu0 %v855
        %1012 = vmatprep.subr.bf16.mxu0 %v860
        %1013 = vmatpush1.bf16.msra.mxu0 %v859
        %1014 = vmatprep.subr.bf16.mxu0 %v864
        %1015 = vmatpush1.bf16.msra.mxu0 %v863
        %1016 = vmatprep.subr.bf16.mxu0 %v868
        %1017 = vmatpush1.bf16.msra.mxu0 %v867
        %1018 = vmatprep.subr.bf16.mxu0 %v872
        %1019 = vmatpush1.bf16.msra.mxu0 %v871
        %1020 = vmatprep.subr.bf16.mxu0 %v876
        %1021 = vmatpush1.bf16.msra.mxu0 %v875
        %1022 = vmatprep.subr.bf16.mxu0 %v880
        %1023 = vmatpush1.bf16.msra.mxu0 %v879
        %1024 = vmatprep.subr.bf16.mxu0 %v884
        %1025 = vmatpush1.bf16.msra.mxu0 %v883
        %1026 = vmatprep.subr.bf16.mxu0 %v888
        %1027 = vmatpush1.bf16.msra.mxu0 %v887
        %1028 = vmatprep.mubr.bf16.mxu0 %v630
        %1029 = vmatmul.mubr.bf16.gmra.mrb[0].mxu0 %v629
        %v1030 = vpop.f32.mrb[0].mxu0
        %v1031 = vadd.f32 %v618, %v1030
        %v1032 = vpop.f32.mrb[0].mxu0
        %v1033 = vadd.f32 %v622, %v1032
        %v1034 = vpop.f32.mrb[0].mxu0
        %v1035 = vadd.f32 %v618, %v1034
        %v1036 = vpop.f32.mrb[0].mxu0
        %v1037 = vadd.f32 %v622, %v1036
        %1038 = vdwg.mxu0
        %v1039 = vmul.f32 %v988, 0.5
        %v1040 = vmul.f32 %v990, 0.5
        %v1041 = vmul.f32 %v1031, 0.5
        %v1042 = vmul.f32 %v1033, 0.5
        %v1043 = vmul.f32 %v992, 0.5
        %v1044 = vmul.f32 %v994, 0.5
        %v1045 = vmul.f32 %v1035, 0.5
        %v1046 = vmul.f32 %v1037, 0.5
        %v1047 = vmul.f32 %v988, 0.044715
        %v1048 = vmul.f32 %v990, 0.044715
        %v1049 = vmul.f32 %v1031, 0.044715
        %v1050 = vmul.f32 %v1033, 0.044715
        %v1051 = vmul.f32 %v992, 0.044715
        %v1052 = vmul.f32 %v994, 0.044715
        %v1053 = vmul.f32 %v1035, 0.044715
        %v1054 = vmul.f32 %v1037, 0.044715
        %v1055 = vmul.f32 %v1047, %v988
        %v1056 = vmul.f32 %v1048, %v990
        %v1057 = vmul.f32 %v1049, %v1031
        %v1058 = vmul.f32 %v1050, %v1033
        %v1059 = vmul.f32 %v1051, %v992
        %v1060 = vmul.f32 %v1052, %v994
        %v1061 = vmul.f32 %v1053, %v1035
        %v1062 = vmul.f32 %v1054, %v1037
        %v1063 = vmul.f32 %v1055, %v988
        %v1064 = vmul.f32 %v1056, %v990
        %v1065 = vmul.f32 %v1057, %v1031
        %v1066 = vmul.f32 %v1058, %v1033
        %v1067 = vmul.f32 %v1059, %v992
        %v1068 = vmul.f32 %v1060, %v994
        %v1069 = vmul.f32 %v1061, %v1035
        %v1070 = vmul.f32 %v1062, %v1037
        %v1071 = vadd.f32 %v988, %v1063
        %v1072 = vadd.f32 %v990, %v1064
        %v1073 = vadd.f32 %v1031, %v1065
        %v1074 = vadd.f32 %v1033, %v1066
        %v1075 = vadd.f32 %v992, %v1067
        %v1076 = vadd.f32 %v994, %v1068
        %v1077 = vadd.f32 %v1035, %v1069
        %v1078 = vadd.f32 %v1037, %v1070
        %v1079 = vmul.f32 %v1071, 0.7978846
        %v1080 = vmul.f32 %v1072, 0.7978846
        %v1081 = vmul.f32 %v1073, 0.7978846
        %v1082 = vmul.f32 %v1074, 0.7978846
        %v1083 = vmul.f32 %v1075, 0.7978846
        %v1084 = vmul.f32 %v1076, 0.7978846
        %v1085 = vmul.f32 %v1077, 0.7978846
        %v1086 = vmul.f32 %v1078, 0.7978846
        %v1087 = vtanh.pop %v1079
        %v1088 = vtanh.pop %v1080
        %v1089 = vtanh.pop %v1081
        %v1090 = vtanh.pop %v1082
        %v1091 = vtanh.pop %v1083
        %v1092 = vtanh.pop %v1084
        %v1093 = vtanh.pop %v1085
        %v1094 = vtanh.pop %v1086
        %v1095 = vadd.f32 %v1087, 1.0
        %v1096 = vadd.f32 %v1088, 1.0
        %v1097 = vadd.f32 %v1089, 1.0
        %v1098 = vadd.f32 %v1090, 1.0
        %v1099 = vadd.f32 %v1091, 1.0
        %v1100 = vadd.f32 %v1092, 1.0
        %v1101 = vadd.f32 %v1093, 1.0
        %v1102 = vadd.f32 %v1094, 1.0
        %v1103 = vmul.f32 %v1039, %v1095
        %v1104 = vmul.f32 %v1040, %v1096
        %v1105 = vmul.f32 %v1041, %v1097
        %v1106 = vmul.f32 %v1042, %v1098
        %v1107 = vmul.f32 %v1043, %v1099
        %v1108 = vmul.f32 %v1044, %v1100
        %v1109 = vmul.f32 %v1045, %v1101
        %v1110 = vmul.f32 %v1046, %v1102
        %v1111 = vld [vmem:[#allocation2] sm:$0xff]
        %v1112 = vld [vmem:[#allocation2 + $0x8] sm:$0xff]
        %v1113 = vld [vmem:[#allocation2 + $0x10] sm:$0xff]
        %v1114 = vld [vmem:[#allocation2 + $0x18] sm:$0xff]
        %v1115 = vpack.c.bf16 %v1107, %v1103
        %v1116 = vpack.c.bf16 %v1108, %v1104
        %v1117 = vpack.c.bf16 %v1109, %v1105
        %v1118 = vpack.c.bf16 %v1110, %v1106
        %v1119 = vld [vmem:[%s501] sm:$0xff]
        %v1120 = vld [vmem:[%s501 + $0x8] sm:$0xff]
        %v1121 = vld [vmem:[%s501 + $0x10] sm:$0xff]
        %v1122 = vld [vmem:[%s501 + $0x18] sm:$0xff]
        %v1123 = vld [vmem:[%s501 + $0x20] sm:$0xff]
        %v1124 = vld [vmem:[%s501 + $0x28] sm:$0xff]
        %v1125 = vld [vmem:[%s501 + $0x30] sm:$0xff]
        %v1126 = vld [vmem:[%s501 + $0x38] sm:$0xff]
        %v1127 = vld [vmem:[%s501 + $0x40] sm:$0xff]
        %v1128 = vld [vmem:[%s501 + $0x48] sm:$0xff]
        %v1129 = vld [vmem:[%s501 + $0x50] sm:$0xff]
        %v1130 = vld [vmem:[%s501 + $0x58] sm:$0xff]
        %v1131 = vld [vmem:[%s501 + $0x60] sm:$0xff]
        %v1132 = vld [vmem:[%s501 + $0x68] sm:$0xff]
        %v1133 = vld [vmem:[%s501 + $0x70] sm:$0xff]
        %v1134 = vld [vmem:[%s501 + $0x78] sm:$0xff]
        %v1135 = vld [vmem:[%s501 + $0x80] sm:$0xff]
        %v1136 = vld [vmem:[%s501 + $0x88] sm:$0xff]
        %v1137 = vld [vmem:[%s501 + $0x90] sm:$0xff]
        %v1138 = vld [vmem:[%s501 + $0x98] sm:$0xff]
        %v1139 = vld [vmem:[%s501 + $0xa0] sm:$0xff]
        %v1140 = vld [vmem:[%s501 + $0xa8] sm:$0xff]
        %v1141 = vld [vmem:[%s501 + $0xb0] sm:$0xff]
        %v1142 = vld [vmem:[%s501 + $0xb8] sm:$0xff]
        %v1143 = vld [vmem:[%s501 + $0xc0] sm:$0xff]
        %v1144 = vld [vmem:[%s501 + $0xc8] sm:$0xff]
        %v1145 = vld [vmem:[%s501 + $0xd0] sm:$0xff]
        %v1146 = vld [vmem:[%s501 + $0xd8] sm:$0xff]
        %v1147 = vld [vmem:[%s501 + $0xe0] sm:$0xff]
        %v1148 = vld [vmem:[%s501 + $0xe8] sm:$0xff]
        %v1149 = vld [vmem:[%s501 + $0xf0] sm:$0xff]
        %v1150 = vld [vmem:[%s501 + $0xf8] sm:$0xff]
        %v1151 = vld [vmem:[%s501 + $0x100] sm:$0xff]
        %v1152 = vld [vmem:[%s501 + $0x108] sm:$0xff]
        %v1153 = vld [vmem:[%s501 + $0x110] sm:$0xff]
        %v1154 = vld [vmem:[%s501 + $0x118] sm:$0xff]
        %v1155 = vld [vmem:[%s501 + $0x120] sm:$0xff]
        %v1156 = vld [vmem:[%s501 + $0x128] sm:$0xff]
        %v1157 = vld [vmem:[%s501 + $0x130] sm:$0xff]
        %v1158 = vld [vmem:[%s501 + $0x138] sm:$0xff]
        %v1159 = vld [vmem:[%s501 + $0x140] sm:$0xff]
        %v1160 = vld [vmem:[%s501 + $0x148] sm:$0xff]
        %v1161 = vld [vmem:[%s501 + $0x150] sm:$0xff]
        %v1162 = vld [vmem:[%s501 + $0x158] sm:$0xff]
        %v1163 = vld [vmem:[%s501 + $0x160] sm:$0xff]
        %v1164 = vld [vmem:[%s501 + $0x168] sm:$0xff]
        %v1165 = vld [vmem:[%s501 + $0x170] sm:$0xff]
        %v1166 = vld [vmem:[%s501 + $0x178] sm:$0xff]
        %v1167 = vld [vmem:[%s501 + $0x180] sm:$0xff]
        %v1168 = vld [vmem:[%s501 + $0x188] sm:$0xff]
        %v1169 = vld [vmem:[%s501 + $0x190] sm:$0xff]
        %v1170 = vld [vmem:[%s501 + $0x198] sm:$0xff]
        %v1171 = vld [vmem:[%s501 + $0x1a0] sm:$0xff]
        %v1172 = vld [vmem:[%s501 + $0x1a8] sm:$0xff]
        %v1173 = vld [vmem:[%s501 + $0x1b0] sm:$0xff]
        %v1174 = vld [vmem:[%s501 + $0x1b8] sm:$0xff]
        %v1175 = vld [vmem:[%s501 + $0x1c0] sm:$0xff]
        %v1176 = vld [vmem:[%s501 + $0x1c8] sm:$0xff]
        %v1177 = vld [vmem:[%s501 + $0x1d0] sm:$0xff]
        %v1178 = vld [vmem:[%s501 + $0x1d8] sm:$0xff]
        %v1179 = vld [vmem:[%s501 + $0x1e0] sm:$0xff]
        %v1180 = vld [vmem:[%s501 + $0x1e8] sm:$0xff]
        %v1181 = vld [vmem:[%s501 + $0x1f0] sm:$0xff]
        %v1182 = vld [vmem:[%s501 + $0x1f8] sm:$0xff]
        %v1247 = vunpack.c.l.b16 %v1119
        %v1248 = vunpack.c.h.b16 %v1119
        %v1249 = vunpack.c.l.b16 %v1120
        %v1250 = vunpack.c.h.b16 %v1120
        %v1251 = vunpack.c.l.b16 %v1121
        %v1252 = vunpack.c.h.b16 %v1121
        %v1253 = vunpack.c.l.b16 %v1122
        %v1254 = vunpack.c.h.b16 %v1122
        %v1255 = vunpack.c.l.b16 %v1123
        %v1256 = vunpack.c.h.b16 %v1123
        %v1257 = vunpack.c.l.b16 %v1124
        %v1258 = vunpack.c.h.b16 %v1124
        %v1259 = vunpack.c.l.b16 %v1125
        %v1260 = vunpack.c.h.b16 %v1125
        %v1261 = vunpack.c.l.b16 %v1126
        %v1262 = vunpack.c.h.b16 %v1126
        %v1263 = vunpack.c.l.b16 %v1127
        %v1264 = vunpack.c.h.b16 %v1127
        %v1265 = vunpack.c.l.b16 %v1128
        %v1266 = vunpack.c.h.b16 %v1128
        %v1267 = vunpack.c.l.b16 %v1129
        %v1268 = vunpack.c.h.b16 %v1129
        %v1269 = vunpack.c.l.b16 %v1130
        %v1270 = vunpack.c.h.b16 %v1130
        %v1271 = vunpack.c.l.b16 %v1131
        %v1272 = vunpack.c.h.b16 %v1131
        %v1273 = vunpack.c.l.b16 %v1132
        %v1274 = vunpack.c.h.b16 %v1132
        %v1275 = vunpack.c.l.b16 %v1133
        %v1276 = vunpack.c.h.b16 %v1133
        %v1277 = vunpack.c.l.b16 %v1134
        %v1278 = vunpack.c.h.b16 %v1134
        %v1279 = vunpack.c.l.b16 %v1135
        %v1280 = vunpack.c.h.b16 %v1135
        %v1281 = vunpack.c.l.b16 %v1136
        %v1282 = vunpack.c.h.b16 %v1136
        %v1283 = vunpack.c.l.b16 %v1137
        %v1284 = vunpack.c.h.b16 %v1137
        %v1285 = vunpack.c.l.b16 %v1138
        %v1286 = vunpack.c.h.b16 %v1138
        %v1287 = vunpack.c.l.b16 %v1139
        %v1288 = vunpack.c.h.b16 %v1139
        %v1289 = vunpack.c.l.b16 %v1140
        %v1290 = vunpack.c.h.b16 %v1140
        %v1291 = vunpack.c.l.b16 %v1141
        %v1292 = vunpack.c.h.b16 %v1141
        %v1293 = vunpack.c.l.b16 %v1142
        %v1294 = vunpack.c.h.b16 %v1142
        %v1295 = vunpack.c.l.b16 %v1143
        %v1296 = vunpack.c.h.b16 %v1143
        %v1297 = vunpack.c.l.b16 %v1144
        %v1298 = vunpack.c.h.b16 %v1144
        %v1299 = vunpack.c.l.b16 %v1145
        %v1300 = vunpack.c.h.b16 %v1145
        %v1301 = vunpack.c.l.b16 %v1146
        %v1302 = vunpack.c.h.b16 %v1146
        %v1303 = vunpack.c.l.b16 %v1147
        %v1304 = vunpack.c.h.b16 %v1147
        %v1305 = vunpack.c.l.b16 %v1148
        %v1306 = vunpack.c.h.b16 %v1148
        %v1307 = vunpack.c.l.b16 %v1149
        %v1308 = vunpack.c.h.b16 %v1149
        %v1309 = vunpack.c.l.b16 %v1150
        %v1310 = vunpack.c.h.b16 %v1150
        %v1311 = vunpack.c.l.b16 %v1151
        %v1312 = vunpack.c.h.b16 %v1151
        %v1313 = vunpack.c.l.b16 %v1152
        %v1314 = vunpack.c.h.b16 %v1152
        %v1315 = vunpack.c.l.b16 %v1153
        %v1316 = vunpack.c.h.b16 %v1153
        %v1317 = vunpack.c.l.b16 %v1154
        %v1318 = vunpack.c.h.b16 %v1154
        %v1319 = vunpack.c.l.b16 %v1155
        %v1320 = vunpack.c.h.b16 %v1155
        %v1321 = vunpack.c.l.b16 %v1156
        %v1322 = vunpack.c.h.b16 %v1156
        %v1323 = vunpack.c.l.b16 %v1157
        %v1324 = vunpack.c.h.b16 %v1157
        %v1325 = vunpack.c.l.b16 %v1158
        %v1326 = vunpack.c.h.b16 %v1158
        %v1327 = vunpack.c.l.b16 %v1159
        %v1328 = vunpack.c.h.b16 %v1159
        %v1329 = vunpack.c.l.b16 %v1160
        %v1330 = vunpack.c.h.b16 %v1160
        %v1331 = vunpack.c.l.b16 %v1161
        %v1332 = vunpack.c.h.b16 %v1161
        %v1333 = vunpack.c.l.b16 %v1162
        %v1334 = vunpack.c.h.b16 %v1162
        %v1335 = vunpack.c.l.b16 %v1163
        %v1336 = vunpack.c.h.b16 %v1163
        %v1337 = vunpack.c.l.b16 %v1164
        %v1338 = vunpack.c.h.b16 %v1164
        %v1339 = vunpack.c.l.b16 %v1165
        %v1340 = vunpack.c.h.b16 %v1165
        %v1341 = vunpack.c.l.b16 %v1166
        %v1342 = vunpack.c.h.b16 %v1166
        %v1343 = vunpack.c.l.b16 %v1167
        %v1344 = vunpack.c.h.b16 %v1167
        %v1345 = vunpack.c.l.b16 %v1168
        %v1346 = vunpack.c.h.b16 %v1168
        %v1347 = vunpack.c.l.b16 %v1169
        %v1348 = vunpack.c.h.b16 %v1169
        %v1349 = vunpack.c.l.b16 %v1170
        %v1350 = vunpack.c.h.b16 %v1170
        %v1351 = vunpack.c.l.b16 %v1171
        %v1352 = vunpack.c.h.b16 %v1171
        %v1353 = vunpack.c.l.b16 %v1172
        %v1354 = vunpack.c.h.b16 %v1172
        %v1355 = vunpack.c.l.b16 %v1173
        %v1356 = vunpack.c.h.b16 %v1173
        %v1357 = vunpack.c.l.b16 %v1174
        %v1358 = vunpack.c.h.b16 %v1174
        %v1359 = vunpack.c.l.b16 %v1175
        %v1360 = vunpack.c.h.b16 %v1175
        %v1361 = vunpack.c.l.b16 %v1176
        %v1362 = vunpack.c.h.b16 %v1176
        %v1363 = vunpack.c.l.b16 %v1177
        %v1364 = vunpack.c.h.b16 %v1177
        %v1365 = vunpack.c.l.b16 %v1178
        %v1366 = vunpack.c.h.b16 %v1178
        %v1367 = vunpack.c.l.b16 %v1179
        %v1368 = vunpack.c.h.b16 %v1179
        %v1369 = vunpack.c.l.b16 %v1180
        %v1370 = vunpack.c.h.b16 %v1180
        %v1371 = vunpack.c.l.b16 %v1181
        %v1372 = vunpack.c.h.b16 %v1181
        %v1373 = vunpack.c.l.b16 %v1182
        %v1374 = vunpack.c.h.b16 %v1182
        %v1375 = vpack.c.b16 %v1249, %v1247
        %v1376 = vpack.c.b16 %v1250, %v1248
        %v1377 = vpack.c.b16 %v1253, %v1251
        %v1378 = vpack.c.b16 %v1254, %v1252
        %v1379 = vpack.c.b16 %v1257, %v1255
        %v1380 = vpack.c.b16 %v1258, %v1256
        %v1381 = vpack.c.b16 %v1261, %v1259
        %v1382 = vpack.c.b16 %v1262, %v1260
        %v1383 = vpack.c.b16 %v1265, %v1263
        %v1384 = vpack.c.b16 %v1266, %v1264
        %v1385 = vpack.c.b16 %v1269, %v1267
        %v1386 = vpack.c.b16 %v1270, %v1268
        %v1387 = vpack.c.b16 %v1273, %v1271
        %v1388 = vpack.c.b16 %v1274, %v1272
        %v1389 = vpack.c.b16 %v1277, %v1275
        %v1390 = vpack.c.b16 %v1278, %v1276
        %v1391 = vpack.c.b16 %v1281, %v1279
        %v1392 = vpack.c.b16 %v1282, %v1280
        %v1393 = vpack.c.b16 %v1285, %v1283
        %v1394 = vpack.c.b16 %v1286, %v1284
        %v1395 = vpack.c.b16 %v1289, %v1287
        %v1396 = vpack.c.b16 %v1290, %v1288
        %v1397 = vpack.c.b16 %v1293, %v1291
        %v1398 = vpack.c.b16 %v1294, %v1292
        %v1399 = vpack.c.b16 %v1297, %v1295
        %v1400 = vpack.c.b16 %v1298, %v1296
        %v1401 = vpack.c.b16 %v1301, %v1299
        %v1402 = vpack.c.b16 %v1302, %v1300
        %v1403 = vpack.c.b16 %v1305, %v1303
        %v1404 = vpack.c.b16 %v1306, %v1304
        %v1405 = vpack.c.b16 %v1309, %v1307
        %v1406 = vpack.c.b16 %v1310, %v1308
        %v1407 = vpack.c.b16 %v1313, %v1311
        %v1408 = vpack.c.b16 %v1314, %v1312
        %v1409 = vpack.c.b16 %v1317, %v1315
        %v1410 = vpack.c.b16 %v1318, %v1316
        %v1411 = vpack.c.b16 %v1321, %v1319
        %v1412 = vpack.c.b16 %v1322, %v1320
        %v1413 = vpack.c.b16 %v1325, %v1323
        %v1414 = vpack.c.b16 %v1326, %v1324
        %v1415 = vpack.c.b16 %v1329, %v1327
        %v1416 = vpack.c.b16 %v1330, %v1328
        %v1417 = vpack.c.b16 %v1333, %v1331
        %v1418 = vpack.c.b16 %v1334, %v1332
        %v1419 = vpack.c.b16 %v1337, %v1335
        %v1420 = vpack.c.b16 %v1338, %v1336
        %v1421 = vpack.c.b16 %v1341, %v1339
        %v1422 = vpack.c.b16 %v1342, %v1340
        %v1423 = vpack.c.b16 %v1345, %v1343
        %v1424 = vpack.c.b16 %v1346, %v1344
        %v1425 = vpack.c.b16 %v1349, %v1347
        %v1426 = vpack.c.b16 %v1350, %v1348
        %v1427 = vpack.c.b16 %v1353, %v1351
        %v1428 = vpack.c.b16 %v1354, %v1352
        %v1429 = vpack.c.b16 %v1357, %v1355
        %v1430 = vpack.c.b16 %v1358, %v1356
        %v1431 = vpack.c.b16 %v1361, %v1359
        %v1432 = vpack.c.b16 %v1362, %v1360
        %v1433 = vpack.c.b16 %v1365, %v1363
        %v1434 = vpack.c.b16 %v1366, %v1364
        %v1435 = vpack.c.b16 %v1369, %v1367
        %v1436 = vpack.c.b16 %v1370, %v1368
        %v1437 = vpack.c.b16 %v1373, %v1371
        %v1438 = vpack.c.b16 %v1374, %v1372
        %1503 = vmatprep.subr.bf16.mxu0 %v1376
        %1504 = vmatpush1.bf16.msra.mxu0 %v1375
        %1505 = vmatprep.subr.bf16.mxu0 %v1378
        %1506 = vmatpush1.bf16.msra.mxu0 %v1377
        %1507 = vmatprep.subr.bf16.mxu0 %v1380
        %1508 = vmatpush1.bf16.msra.mxu0 %v1379
        %1509 = vmatprep.subr.bf16.mxu0 %v1382
        %1510 = vmatpush1.bf16.msra.mxu0 %v1381
        %1511 = vmatprep.subr.bf16.mxu0 %v1384
        %1512 = vmatpush1.bf16.msra.mxu0 %v1383
        %1513 = vmatprep.subr.bf16.mxu0 %v1386
        %1514 = vmatpush1.bf16.msra.mxu0 %v1385
        %1515 = vmatprep.subr.bf16.mxu0 %v1388
        %1516 = vmatpush1.bf16.msra.mxu0 %v1387
        %1517 = vmatprep.subr.bf16.mxu0 %v1390
        %1518 = vmatpush1.bf16.msra.mxu0 %v1389
        %1519 = vmatprep.subr.bf16.mxu0 %v1392
        %1520 = vmatpush1.bf16.msra.mxu0 %v1391
        %1521 = vmatprep.subr.bf16.mxu0 %v1394
        %1522 = vmatpush1.bf16.msra.mxu0 %v1393
        %1523 = vmatprep.subr.bf16.mxu0 %v1396
        %1524 = vmatpush1.bf16.msra.mxu0 %v1395
        %1525 = vmatprep.subr.bf16.mxu0 %v1398
        %1526 = vmatpush1.bf16.msra.mxu0 %v1397
        %1527 = vmatprep.subr.bf16.mxu0 %v1400
        %1528 = vmatpush1.bf16.msra.mxu0 %v1399
        %1529 = vmatprep.subr.bf16.mxu0 %v1402
        %1530 = vmatpush1.bf16.msra.mxu0 %v1401
        %1531 = vmatprep.subr.bf16.mxu0 %v1404
        %1532 = vmatpush1.bf16.msra.mxu0 %v1403
        %1533 = vmatprep.subr.bf16.mxu0 %v1406
        %1534 = vmatpush1.bf16.msra.mxu0 %v1405
        %1535 = vmatprep.mubr.bf16.mxu0 %v1116
        %1536 = vmatmul.mubr.bf16.gmra.mrb[0].mxu0 %v1115
        %v1537 = vpop.f32.mrb[0].mxu0
        %v1538 = vadd.f32 0.0, %v1537
        %v1539 = vpop.f32.mrb[0].mxu0
        %v1540 = vadd.f32 0.0, %v1539
        %v1541 = vpop.f32.mrb[0].mxu0
        %v1542 = vadd.f32 0.0, %v1541
        %v1543 = vpop.f32.mrb[0].mxu0
        %v1544 = vadd.f32 0.0, %v1543
        %1545 = vdwg.mxu0
        %1546 = vmatprep.subr.bf16.mxu0 %v1408
        %1547 = vmatpush1.bf16.msra.mxu0 %v1407
        %1548 = vmatprep.subr.bf16.mxu0 %v1410
        %1549 = vmatpush1.bf16.msra.mxu0 %v1409
        %1550 = vmatprep.subr.bf16.mxu0 %v1412
        %1551 = vmatpush1.bf16.msra.mxu0 %v1411
        %1552 = vmatprep.subr.bf16.mxu0 %v1414
        %1553 = vmatpush1.bf16.msra.mxu0 %v1413
        %1554 = vmatprep.subr.bf16.mxu0 %v1416
        %1555 = vmatpush1.bf16.msra.mxu0 %v1415
        %1556 = vmatprep.subr.bf16.mxu0 %v1418
        %1557 = vmatpush1.bf16.msra.mxu0 %v1417
        %1558 = vmatprep.subr.bf16.mxu0 %v1420
        %1559 = vmatpush1.bf16.msra.mxu0 %v1419
        %1560 = vmatprep.subr.bf16.mxu0 %v1422
        %1561 = vmatpush1.bf16.msra.mxu0 %v1421
        %1562 = vmatprep.subr.bf16.mxu0 %v1424
        %1563 = vmatpush1.bf16.msra.mxu0 %v1423
        %1564 = vmatprep.subr.bf16.mxu0 %v1426
        %1565 = vmatpush1.bf16.msra.mxu0 %v1425
        %1566 = vmatprep.subr.bf16.mxu0 %v1428
        %1567 = vmatpush1.bf16.msra.mxu0 %v1427
        %1568 = vmatprep.subr.bf16.mxu0 %v1430
        %1569 = vmatpush1.bf16.msra.mxu0 %v1429
        %1570 = vmatprep.subr.bf16.mxu0 %v1432
        %1571 = vmatpush1.bf16.msra.mxu0 %v1431
        %1572 = vmatprep.subr.bf16.mxu0 %v1434
        %1573 = vmatpush1.bf16.msra.mxu0 %v1433
        %1574 = vmatprep.subr.bf16.mxu0 %v1436
        %1575 = vmatpush1.bf16.msra.mxu0 %v1435
        %1576 = vmatprep.subr.bf16.mxu0 %v1438
        %1577 = vmatpush1.bf16.msra.mxu0 %v1437
        %1578 = vmatprep.mubr.bf16.mxu0 %v1118
        %1579 = vmatmul.mubr.bf16.gmra.mrb[0].mxu0 %v1117
        %v1580 = vpop.f32.mrb[0].mxu0
        %v1581 = vadd.f32 %v1538, %v1580
        %v1582 = vpop.f32.mrb[0].mxu0
        %v1583 = vadd.f32 %v1540, %v1582
        %v1584 = vpop.f32.mrb[0].mxu0
        %v1585 = vadd.f32 %v1542, %v1584
        %v1586 = vpop.f32.mrb[0].mxu0
        %v1587 = vadd.f32 %v1544, %v1586
        %1588 = vdwg.mxu0
        %v1589 = vadd.f32 %v1111, %v1581
        %v1590 = vadd.f32 %v1112, %v1583
        %v1591 = vadd.f32 %v1113, %v1585
        %v1592 = vadd.f32 %v1114, %v1587
        %1593 = vst [vmem:[#allocation2] sm:$0xff] %v1589
        %1594 = vst [vmem:[#allocation2 + $0x8] sm:$0xff] %v1590
        %1595 = vst [vmem:[#allocation2 + $0x10] sm:$0xff] %v1591
        %1596 = vst [vmem:[#allocation2 + $0x18] sm:$0xff] %v1592
        %p1597 = scmp.eq.s32.totalorder %s23, 1
        // Predicated region
        $region76: #{forward.8} parent=66 // pred_check
          %p1598 = pneg %p1597
        $region77: #{forward.8} parent=66 // pred_check_branch
          %1600 = sbr.rel (%p1598) target = $region79
        $region78: #{forward.8} parent=66 // pred_region
          %v1601 = vld [vmem:[#allocation2] sm:$0xff]
          %v1602 = vld [vmem:[#allocation2 + $0x8] sm:$0xff]
          %v1603 = vld [vmem:[#allocation2 + $0x10] sm:$0xff]
          %v1604 = vld [vmem:[#allocation2 + $0x18] sm:$0xff]
          %v1605 = vld [vmem:[%s4] sm:$0x3]
          %v1606 = vunpack.c.l.bf16 %v1605
          %v1608 = vlaneseq
          %v1609 = vshrl.u32 %v1608, 7
          %v1610 = vsub.s32 0, %v1609
          %v1611 = vrot.slane %v1606, %v1610
          %v1612 = vlaneseq
          %v1613 = vshrl.u32 %v1612, 7
          %v1614 = vsub.s32 2, %v1613
          %v1615 = vrot.slane %v1606, %v1614
          %v1618 = vlaneseq
          %v1619 = vshrl.u32 %v1618, 7
          %v1620 = vsub.s32 0, %v1619
          %v1621 = vrot.slane %v1611, %v1620
          %v1622 = vlaneseq
          %v1623 = vshrl.u32 %v1622, 7
          %v1624 = vsub.s32 0, %v1623
          %v1625 = vrot.slane %v1615, %v1624
          %v1626 = vadd.f32 %v1601, %v1621
          %v1627 = vadd.f32 %v1602, %v1625
          %v1628 = vadd.f32 %v1603, %v1621
          %v1629 = vadd.f32 %v1604, %v1625
          %v1630 = vld [vmem:[%s488] sm:$0xff]
          %v1631 = vld [vmem:[%s488 + $0x8] sm:$0xff]
          %v1632 = vunpack.c.l.bf16 %v1630
          %v1633 = vunpack.c.h.bf16 %v1630
          %v1634 = vunpack.c.l.bf16 %v1631
          %v1635 = vunpack.c.h.bf16 %v1631
          %v1636 = vadd.f32 %v1626, %v1632
          %v1637 = vadd.f32 %v1627, %v1633
          %v1638 = vadd.f32 %v1628, %v1634
          %v1639 = vadd.f32 %v1629, %v1635
          %v1640 = vld [vmem:[%s5] sm:$0x3]
          %v1641 = vunpack.c.l.bf16 %v1640
          %v1642 = vld [vmem:[%s6] sm:$0x3]
          %v1643 = vunpack.c.l.bf16 %v1642
          %v1644 = vadd.f32 %v1636, %v1637
          %1645 = vadd.xlane.f32.xlu0 %v1644
          %v1646 = vpop.xlane.xlu0 %1645
          %v1647 = vadd.f32 %v1638, %v1639
          %1648 = vadd.xlane.f32.xlu0 %v1647
          %v1649 = vpop.xlane.xlu0 %1648
          %v1650 = vrcp.pop 256.0
          %v1651 = vmul.f32 %v1646, %v1650
          %v1652 = vmul.f32 %v1649, %v1650
          %v1653 = vsub.f32 %v1636, %v1651
          %v1654 = vsub.f32 %v1637, %v1651
          %v1655 = vsub.f32 %v1638, %v1652
          %v1656 = vsub.f32 %v1639, %v1652
          %v1657 = vmul.f32 %v1653, %v1653
          %v1658 = vmul.f32 %v1654, %v1654
          %v1659 = vmul.f32 %v1655, %v1655
          %v1660 = vmul.f32 %v1656, %v1656
          %v1661 = vadd.f32 %v1657, %v1658
          %1662 = vadd.xlane.f32.xlu0 %v1661
          %v1663 = vpop.xlane.xlu0 %1662
          %v1664 = vadd.f32 %v1659, %v1660
          %1665 = vadd.xlane.f32.xlu0 %v1664
          %v1666 = vpop.xlane.xlu0 %1665
          %v1667 = vmul.f32 %v1663, %v1650
          %v1668 = vmul.f32 %v1666, %v1650
          %v1669 = vadd.f32 %v1667, 1e-05
          %v1670 = vadd.f32 %v1668, 1e-05
          %v1671 = vrsqrt.pop %v1669
          %v1672 = vrsqrt.pop %v1670
          %v1673 = vmul.f32 %v1653, %v1671
          %v1674 = vmul.f32 %v1654, %v1671
          %v1675 = vmul.f32 %v1655, %v1672
          %v1676 = vmul.f32 %v1656, %v1672
          %v1678 = vlaneseq
          %v1679 = vshrl.u32 %v1678, 7
          %v1680 = vsub.s32 0, %v1679
          %v1681 = vrot.slane %v1641, %v1680
          %v1682 = vlaneseq
          %v1683 = vshrl.u32 %v1682, 7
          %v1684 = vsub.s32 2, %v1683
          %v1685 = vrot.slane %v1641, %v1684
          %v1688 = vlaneseq
          %v1689 = vshrl.u32 %v1688, 7
          %v1690 = vsub.s32 0, %v1689
          %v1691 = vrot.slane %v1681, %v1690
          %v1692 = vlaneseq
          %v1693 = vshrl.u32 %v1692, 7
          %v1694 = vsub.s32 0, %v1693
          %v1695 = vrot.slane %v1685, %v1694
          %v1696 = vmul.f32 %v1673, %v1691
          %v1697 = vmul.f32 %v1674, %v1695
          %v1698 = vmul.f32 %v1675, %v1691
          %v1699 = vmul.f32 %v1676, %v1695
          %v1701 = vlaneseq
          %v1702 = vshrl.u32 %v1701, 7
          %v1703 = vsub.s32 0, %v1702
          %v1704 = vrot.slane %v1643, %v1703
          %v1705 = vlaneseq
          %v1706 = vshrl.u32 %v1705, 7
          %v1707 = vsub.s32 2, %v1706
          %v1708 = vrot.slane %v1643, %v1707
          %v1711 = vlaneseq
          %v1712 = vshrl.u32 %v1711, 7
          %v1713 = vsub.s32 0, %v1712
          %v1714 = vrot.slane %v1704, %v1713
          %v1715 = vlaneseq
          %v1716 = vshrl.u32 %v1715, 7
          %v1717 = vsub.s32 0, %v1716
          %v1718 = vrot.slane %v1708, %v1717
          %v1719 = vadd.f32 %v1696, %v1714
          %v1720 = vadd.f32 %v1697, %v1718
          %v1721 = vadd.f32 %v1698, %v1714
          %v1722 = vadd.f32 %v1699, %v1718
          %v1723 = vpack.c.bf16 %v1721, %v1719
          %v1724 = vpack.c.bf16 %v1722, %v1720
          %v1727 = vunpack.c.l.b16 %v1723
          %v1728 = vunpack.c.l.b16 %v1724
          %v1729 = vunpack.c.h.b16 %v1723
          %v1730 = vunpack.c.h.b16 %v1724
          %v1731 = vpack.c.b16 %v1728, %v1727
          %v1732 = vpack.c.b16 %v1730, %v1729
          %1735 = vst [vmem:[%s508] sm:$0xff] %v1731
          %1736 = vst [vmem:[%s508 + $0x8] sm:$0xff] %v1732
        $region79: #{forward.8} parent=66 // pred_fallthru
          _
        %s1737 = smul.u32 2, %s22
        %p1738 = scmp.lt.s32.totalorder %s1737, 1
        %s1739 = scalar_select %p1738, %s1737, 1
        %s1740 = smul.addr %s1739, 2
        %s1741 = smul.addr %s1740, 4
        %s1742 = scalar_lea.vmem %s7, %s1741
        // Predicated region
        $region80: #{forward.8} parent=66 // pred_check
          %p1743 = pneg %p215
        $region81: #{forward.8} parent=66 // pred_check_branch
          %1745 = sbr.rel (%p1743) target = $region83
        $region82: #{forward.8} parent=66 // pred_region
          %s1746 = smul.u32 2, %s22
        $region83: #{forward.8} parent=66 // pred_fallthru
          _
        // Predicated region
        $region84: #{forward.8} parent=66 // pred_check
          %p1747 = pneg %p215
        $region85: #{forward.8} parent=66 // pred_check_branch
          %1749 = sbr.rel (%p1747) target = $region87
        $region86: #{forward.8} parent=66 // pred_region
          %s1750 = smul.u32 2, %s22
          %p1751 = scmp.lt.s32.totalorder %s1750, 1
          %s1752 = scalar_select %p1751, %s1750, 1
          %s1753 = smul.addr %s1752, 2
          %s1754 = smul.addr %s1753, 4
          %s1755 = scalar_lea.vmem %s7, %s1754
        $region87: #{forward.8} parent=66 // pred_fallthru
          _
      $region67: #{forward.8} parent=5 // pred_fallthru
        _
      %p1756 = scmp.le.s32.totalorder 2, %s13
      // Predicated region
      $region88: #{forward.8} parent=5 // pred_check
        %p1757 = pneg %p1756
      $region89: #{forward.8} parent=5 // pred_check_branch
        %1759 = sbr.rel (%p1757) target = $region91
      $region90: #{forward.8} parent=5 // pred_region
        %s1760 = ssub.s32 %s13, 2
      $region91: #{forward.8} parent=5 // pred_fallthru
        _
    $region6: #{forward.8} parent=1 // loop_footer
      %s17 = sadd.s32 1, %s13
    $region7: #{forward.8} parent=1 // loop_footer_branch
      %12 = sbr.rel target = $region3
    $region8: #{forward.8} parent=1 // loop_exit
      _

// kernel: forward.11
$region0: #{forward.11}
  #allocation0 [shape = 'u32[]', space=smem, size = 0x4, offset = 0x4, fixed_abs, tag = 'smem constant byte address 0x4 - core index']
  #allocation1 [shape = 'u32[144,128]{1,0:T(1,128)}', space=vmem, size = 0x12000, scoped, tag = 'internal scratch']
  %s0 = inlined_call_operand.vmem [shape: bf16[2,256], index: 0, kind: input, shape index: {}]
  %s1 = inlined_call_operand.vmem [shape: bf16[256,256], index: 1, kind: input, shape index: {}]
  %s2 = inlined_call_operand.vmem [shape: bf16[1,256], index: 2, kind: input, shape index: {}]
  %s3 = inlined_call_operand.vmem [shape: bf16[256,3], index: 3, kind: input, shape index: {}]
  %s4 = inlined_call_operand.vmem [shape: bf16[1,3], index: 4, kind: input, shape index: {}]
  %s5 = inlined_call_operand.hbm [shape: f32[2,3], index: 5, kind: output, shape index: {}]
  %s6 = sld [smem:[#allocation0]]
  $region30: #{forward.11} parent=0
    _
  %s8 = ssub.s32 1, %s6
  %s9 = scalar_select 0, %s8, %s6
  $region1: #{forward.11} parent=0
    #allocation2 [shape = 'u8[1024]{0}', space=vmem, size = 0x400, scoped, tag = 'output window, operand 0, single buffered']
    #allocation3 [shape = 's32[1]{0}', space=sflag, size = 0x4, scoped, tag = 'scoped memory for forward.11']
    %10 = vsyncpa [#allocation3], 0
    // Predicated region
    $region2: #{forward.11} parent=1 // pred_check
      _
    $region3: #{forward.11} parent=1 // pred_check_branch
      %12 = sbr.rel (0) target = $region5
    $region4: #{forward.11} parent=1 // pred_region
      _
    $region5: #{forward.11} parent=1 // pred_fallthru
      _
    // Predicated region
    $region6: #{forward.11} parent=1 // pred_check
      _
    $region7: #{forward.11} parent=1 // pred_check_branch
      %14 = sbr.rel (0) target = $region9
    $region8: #{forward.11} parent=1 // pred_region
      _
    $region9: #{forward.11} parent=1 // pred_fallthru
      _
    // Predicated region
    $region10: #{forward.11} parent=1 // pred_check
      _
    $region11: #{forward.11} parent=1 // pred_check_branch
      %16 = sbr.rel (0) target = $region13
    $region12: #{forward.11} parent=1 // pred_region
      _
    $region13: #{forward.11} parent=1 // pred_fallthru
      _
    // Predicated region
    $region14: #{forward.11} parent=1 // pred_check
      _
    $region15: #{forward.11} parent=1 // pred_check_branch
      %18 = sbr.rel (0) target = $region17
    $region16: #{forward.11} parent=1 // pred_region
      _
    $region17: #{forward.11} parent=1 // pred_fallthru
      _
    // Predicated region
    $region18: #{forward.11} parent=1 // pred_check
      _
    $region19: #{forward.11} parent=1 // pred_check_branch
      %20 = sbr.rel (0) target = $region21
    $region20: #{forward.11} parent=1 // pred_region
      _
    $region21: #{forward.11} parent=1 // pred_fallthru
      _
    %v22 = vld [vmem:[%s0] sm:$0x3]
    %v23 = vld [vmem:[%s1] sm:$0xff]
    %v24 = vld [vmem:[%s1 + $0x8] sm:$0xff]
    %v25 = vld [vmem:[%s1 + $0x10] sm:$0xff]
    %v26 = vld [vmem:[%s1 + $0x18] sm:$0xff]
    %v27 = vld [vmem:[%s1 + $0x20] sm:$0xff]
    %v28 = vld [vmem:[%s1 + $0x28] sm:$0xff]
    %v29 = vld [vmem:[%s1 + $0x30] sm:$0xff]
    %v30 = vld [vmem:[%s1 + $0x38] sm:$0xff]
    %v31 = vld [vmem:[%s1 + $0x40] sm:$0xff]
    %v32 = vld [vmem:[%s1 + $0x48] sm:$0xff]
    %v33 = vld [vmem:[%s1 + $0x50] sm:$0xff]
    %v34 = vld [vmem:[%s1 + $0x58] sm:$0xff]
    %v35 = vld [vmem:[%s1 + $0x60] sm:$0xff]
    %v36 = vld [vmem:[%s1 + $0x68] sm:$0xff]
    %v37 = vld [vmem:[%s1 + $0x70] sm:$0xff]
    %v38 = vld [vmem:[%s1 + $0x78] sm:$0xff]
    %v39 = vld [vmem:[%s1 + $0x80] sm:$0xff]
    %v40 = vld [vmem:[%s1 + $0x88] sm:$0xff]
    %v41 = vld [vmem:[%s1 + $0x90] sm:$0xff]
    %v42 = vld [vmem:[%s1 + $0x98] sm:$0xff]
    %v43 = vld [vmem:[%s1 + $0xa0] sm:$0xff]
    %v44 = vld [vmem:[%s1 + $0xa8] sm:$0xff]
    %v45 = vld [vmem:[%s1 + $0xb0] sm:$0xff]
    %v46 = vld [vmem:[%s1 + $0xb8] sm:$0xff]
    %v47 = vld [vmem:[%s1 + $0xc0] sm:$0xff]
    %v48 = vld [vmem:[%s1 + $0xc8] sm:$0xff]
    %v49 = vld [vmem:[%s1 + $0xd0] sm:$0xff]
    %v50 = vld [vmem:[%s1 + $0xd8] sm:$0xff]
    %v51 = vld [vmem:[%s1 + $0xe0] sm:$0xff]
    %v52 = vld [vmem:[%s1 + $0xe8] sm:$0xff]
    %v53 = vld [vmem:[%s1 + $0xf0] sm:$0xff]
    %v54 = vld [vmem:[%s1 + $0xf8] sm:$0xff]
    %v55 = vld [vmem:[%s2] sm:$0x3]
    %v56 = vunpack.c.l.bf16 %v55
    %v58 = vlaneseq
    %v59 = vshrl.u32 %v58, 7
    %v60 = vsub.s32 0, %v59
    %v61 = vrot.slane %v56, %v60
    %v62 = vlaneseq
    %v63 = vshrl.u32 %v62, 7
    %v64 = vsub.s32 2, %v63
    %v65 = vrot.slane %v56, %v64
    %v68 = vlaneseq
    %v69 = vshrl.u32 %v68, 7
    %v70 = vsub.s32 0, %v69
    %v71 = vrot.slane %v61, %v70
    %v72 = vlaneseq
    %v73 = vshrl.u32 %v72, 7
    %v74 = vsub.s32 0, %v73
    %v75 = vrot.slane %v65, %v74
    %v78 = vunpack.c.l.s4 1966171168
    %v79 = vunpack.c.0.s8 %v78
    %v80 = vlaneseq
    %v81 = vshrl.u32 %v80, 7
    %v82 = vsub.s32 %v79, %v81
    %v83 = vrot.slane %v22, %v82
    %v84 = vcombine.high %v83, %v83
    %v86 = vunpack.c.l.s4 1966171168
    %v87 = vunpack.c.0.s8 %v86
    %v88 = vlaneseq
    %v89 = vshrl.u32 %v88, 7
    %v90 = vsub.s32 %v87, %v89
    %v91 = vrot.slane %v83, %v90
    %v93 = vunpack.c.l.s4 1966171168
    %v94 = vunpack.c.0.s8 %v93
    %v95 = vlaneseq
    %v96 = vshrl.u32 %v95, 7
    %v97 = vsub.s32 %v94, %v96
    %v98 = vrot.slane %v84, %v97
    %v133 = vunpack.c.l.b16 %v23
    %v134 = vunpack.c.h.b16 %v23
    %v135 = vunpack.c.l.b16 %v24
    %v136 = vunpack.c.h.b16 %v24
    %v137 = vunpack.c.l.b16 %v25
    %v138 = vunpack.c.h.b16 %v25
    %v139 = vunpack.c.l.b16 %v26
    %v140 = vunpack.c.h.b16 %v26
    %v141 = vunpack.c.l.b16 %v27
    %v142 = vunpack.c.h.b16 %v27
    %v143 = vunpack.c.l.b16 %v28
    %v144 = vunpack.c.h.b16 %v28
    %v145 = vunpack.c.l.b16 %v29
    %v146 = vunpack.c.h.b16 %v29
    %v147 = vunpack.c.l.b16 %v30
    %v148 = vunpack.c.h.b16 %v30
    %v149 = vunpack.c.l.b16 %v31
    %v150 = vunpack.c.h.b16 %v31
    %v151 = vunpack.c.l.b16 %v32
    %v152 = vunpack.c.h.b16 %v32
    %v153 = vunpack.c.l.b16 %v33
    %v154 = vunpack.c.h.b16 %v33
    %v155 = vunpack.c.l.b16 %v34
    %v156 = vunpack.c.h.b16 %v34
    %v157 = vunpack.c.l.b16 %v35
    %v158 = vunpack.c.h.b16 %v35
    %v159 = vunpack.c.l.b16 %v36
    %v160 = vunpack.c.h.b16 %v36
    %v161 = vunpack.c.l.b16 %v37
    %v162 = vunpack.c.h.b16 %v37
    %v163 = vunpack.c.l.b16 %v38
    %v164 = vunpack.c.h.b16 %v38
    %v165 = vunpack.c.l.b16 %v39
    %v166 = vunpack.c.h.b16 %v39
    %v167 = vunpack.c.l.b16 %v40
    %v168 = vunpack.c.h.b16 %v40
    %v169 = vunpack.c.l.b16 %v41
    %v170 = vunpack.c.h.b16 %v41
    %v171 = vunpack.c.l.b16 %v42
    %v172 = vunpack.c.h.b16 %v42
    %v173 = vunpack.c.l.b16 %v43
    %v174 = vunpack.c.h.b16 %v43
    %v175 = vunpack.c.l.b16 %v44
    %v176 = vunpack.c.h.b16 %v44
    %v177 = vunpack.c.l.b16 %v45
    %v178 = vunpack.c.h.b16 %v45
    %v179 = vunpack.c.l.b16 %v46
    %v180 = vunpack.c.h.b16 %v46
    %v181 = vunpack.c.l.b16 %v47
    %v182 = vunpack.c.h.b16 %v47
    %v183 = vunpack.c.l.b16 %v48
    %v184 = vunpack.c.h.b16 %v48
    %v185 = vunpack.c.l.b16 %v49
    %v186 = vunpack.c.h.b16 %v49
    %v187 = vunpack.c.l.b16 %v50
    %v188 = vunpack.c.h.b16 %v50
    %v189 = vunpack.c.l.b16 %v51
    %v190 = vunpack.c.h.b16 %v51
    %v191 = vunpack.c.l.b16 %v52
    %v192 = vunpack.c.h.b16 %v52
    %v193 = vunpack.c.l.b16 %v53
    %v194 = vunpack.c.h.b16 %v53
    %v195 = vunpack.c.l.b16 %v54
    %v196 = vunpack.c.h.b16 %v54
    %v197 = vpack.c.b16 %v135, %v133
    %v198 = vpack.c.b16 %v136, %v134
    %v199 = vpack.c.b16 %v139, %v137
    %v200 = vpack.c.b16 %v140, %v138
    %v201 = vpack.c.b16 %v143, %v141
    %v202 = vpack.c.b16 %v144, %v142
    %v203 = vpack.c.b16 %v147, %v145
    %v204 = vpack.c.b16 %v148, %v146
    %v205 = vpack.c.b16 %v151, %v149
    %v206 = vpack.c.b16 %v152, %v150
    %v207 = vpack.c.b16 %v155, %v153
    %v208 = vpack.c.b16 %v156, %v154
    %v209 = vpack.c.b16 %v159, %v157
    %v210 = vpack.c.b16 %v160, %v158
    %v211 = vpack.c.b16 %v163, %v161
    %v212 = vpack.c.b16 %v164, %v162
    %v213 = vpack.c.b16 %v167, %v165
    %v214 = vpack.c.b16 %v168, %v166
    %v215 = vpack.c.b16 %v171, %v169
    %v216 = vpack.c.b16 %v172, %v170
    %v217 = vpack.c.b16 %v175, %v173
    %v218 = vpack.c.b16 %v176, %v174
    %v219 = vpack.c.b16 %v179, %v177
    %v220 = vpack.c.b16 %v180, %v178
    %v221 = vpack.c.b16 %v183, %v181
    %v222 = vpack.c.b16 %v184, %v182
    %v223 = vpack.c.b16 %v187, %v185
    %v224 = vpack.c.b16 %v188, %v186
    %v225 = vpack.c.b16 %v191, %v189
    %v226 = vpack.c.b16 %v192, %v190
    %v227 = vpack.c.b16 %v195, %v193
    %v228 = vpack.c.b16 %v196, %v194
    %261 = vmatprep.subr.bf16.mxu0 %v198
    %262 = vmatpush1.bf16.msra.mxu0 %v197
    %263 = vmatprep.subr.bf16.mxu0 %v200
    %264 = vmatpush1.bf16.msra.mxu0 %v199
    %265 = vmatprep.subr.bf16.mxu0 %v202
    %266 = vmatpush1.bf16.msra.mxu0 %v201
    %267 = vmatprep.subr.bf16.mxu0 %v204
    %268 = vmatpush1.bf16.msra.mxu0 %v203
    %269 = vmatprep.subr.bf16.mxu0 %v206
    %270 = vmatpush1.bf16.msra.mxu0 %v205
    %271 = vmatprep.subr.bf16.mxu0 %v208
    %272 = vmatpush1.bf16.msra.mxu0 %v207
    %273 = vmatprep.subr.bf16.mxu0 %v210
    %274 = vmatpush1.bf16.msra.mxu0 %v209
    %275 = vmatprep.subr.bf16.mxu0 %v212
    %276 = vmatpush1.bf16.msra.mxu0 %v211
    %277 = vmatprep.subr.bf16.mxu0 %v214
    %278 = vmatpush1.bf16.msra.mxu0 %v213
    %279 = vmatprep.subr.bf16.mxu0 %v216
    %280 = vmatpush1.bf16.msra.mxu0 %v215
    %281 = vmatprep.subr.bf16.mxu0 %v218
    %282 = vmatpush1.bf16.msra.mxu0 %v217
    %283 = vmatprep.subr.bf16.mxu0 %v220
    %284 = vmatpush1.bf16.msra.mxu0 %v219
    %285 = vmatprep.subr.bf16.mxu0 %v222
    %286 = vmatpush1.bf16.msra.mxu0 %v221
    %287 = vmatprep.subr.bf16.mxu0 %v224
    %288 = vmatpush1.bf16.msra.mxu0 %v223
    %289 = vmatprep.subr.bf16.mxu0 %v226
    %290 = vmatpush1.bf16.msra.mxu0 %v225
    %291 = vmatprep.subr.bf16.mxu0 %v228
    %292 = vmatpush1.bf16.msra.mxu0 %v227
    %293 = vmatprep.mubr.bf16.mxu0 %v98
    %294 = vmatmul.mubr.bf16.gmra.mrb[0].mxu0 %v91
    %v295 = vpop.f32.mrb[0].mxu0
    %v296 = vadd.f32 %v71, %v295
    %v297 = vpop.f32.mrb[0].mxu0
    %v298 = vadd.f32 %v75, %v297
    %v299 = vpop.f32.mrb[0].mxu0
    %v300 = vpop.f32.mrb[0].mxu0
    %301 = vdwg.mxu0
    %v302 = vmax.f32 %v296, 0.0
    %v303 = vmax.f32 %v298, 0.0
    %v304 = vpack.c.bf16 %v302, %v302
    %v305 = vpack.c.bf16 %v303, %v303
    %v306 = vld [vmem:[%s3] sm:$0xf]
    %v307 = vld [vmem:[%s3 + $0x4] sm:$0xf]
    %v308 = vld [vmem:[%s3 + $0x8] sm:$0xf]
    %v309 = vld [vmem:[%s3 + $0xc] sm:$0xf]
    %v310 = vld [vmem:[%s3 + $0x10] sm:$0xf]
    %v311 = vld [vmem:[%s3 + $0x14] sm:$0xf]
    %v312 = vld [vmem:[%s3 + $0x18] sm:$0xf]
    %v313 = vld [vmem:[%s3 + $0x1c] sm:$0xf]
    %v314 = vld [vmem:[%s3 + $0x20] sm:$0xf]
    %v315 = vld [vmem:[%s3 + $0x24] sm:$0xf]
    %v316 = vld [vmem:[%s3 + $0x28] sm:$0xf]
    %v317 = vld [vmem:[%s3 + $0x2c] sm:$0xf]
    %v318 = vld [vmem:[%s3 + $0x30] sm:$0xf]
    %v319 = vld [vmem:[%s3 + $0x34] sm:$0xf]
    %v320 = vld [vmem:[%s3 + $0x38] sm:$0xf]
    %v321 = vld [vmem:[%s3 + $0x3c] sm:$0xf]
    %v322 = vld [vmem:[%s3 + $0x40] sm:$0xf]
    %v323 = vld [vmem:[%s3 + $0x44] sm:$0xf]
    %v324 = vld [vmem:[%s3 + $0x48] sm:$0xf]
    %v325 = vld [vmem:[%s3 + $0x4c] sm:$0xf]
    %v326 = vld [vmem:[%s3 + $0x50] sm:$0xf]
    %v327 = vld [vmem:[%s3 + $0x54] sm:$0xf]
    %v328 = vld [vmem:[%s3 + $0x58] sm:$0xf]
    %v329 = vld [vmem:[%s3 + $0x5c] sm:$0xf]
    %v330 = vld [vmem:[%s3 + $0x60] sm:$0xf]
    %v331 = vld [vmem:[%s3 + $0x64] sm:$0xf]
    %v332 = vld [vmem:[%s3 + $0x68] sm:$0xf]
    %v333 = vld [vmem:[%s3 + $0x6c] sm:$0xf]
    %v334 = vld [vmem:[%s3 + $0x70] sm:$0xf]
    %v335 = vld [vmem:[%s3 + $0x74] sm:$0xf]
    %v336 = vld [vmem:[%s3 + $0x78] sm:$0xf]
    %v337 = vld [vmem:[%s3 + $0x7c] sm:$0xf]
    %v338 = vld [vmem:[%s4] sm:$0x1]
    %v339 = vunpack.c.l.bf16 %v338
    %v340 = vlaneseq
    %v341 = vshrl.u32 %v340, 7
    %v342 = vsub.s32 0, %v341
    %v343 = vrot.slane %v339, %v342
    %v376 = vunpack.c.l.b16 %v306
    %v377 = vunpack.c.l.b16 %v307
    %v378 = vunpack.c.l.b16 %v308
    %v379 = vunpack.c.l.b16 %v309
    %v380 = vunpack.c.l.b16 %v310
    %v381 = vunpack.c.l.b16 %v311
    %v382 = vunpack.c.l.b16 %v312
    %v383 = vunpack.c.l.b16 %v313
    %v384 = vunpack.c.l.b16 %v314
    %v385 = vunpack.c.l.b16 %v315
    %v386 = vunpack.c.l.b16 %v316
    %v387 = vunpack.c.l.b16 %v317
    %v388 = vunpack.c.l.b16 %v318
    %v389 = vunpack.c.l.b16 %v319
    %v390 = vunpack.c.l.b16 %v320
    %v391 = vunpack.c.l.b16 %v321
    %v392 = vunpack.c.l.b16 %v322
    %v393 = vunpack.c.l.b16 %v323
    %v394 = vunpack.c.l.b16 %v324
    %v395 = vunpack.c.l.b16 %v325
    %v396 = vunpack.c.l.b16 %v326
    %v397 = vunpack.c.l.b16 %v327
    %v398 = vunpack.c.l.b16 %v328
    %v399 = vunpack.c.l.b16 %v329
    %v400 = vunpack.c.l.b16 %v330
    %v401 = vunpack.c.l.b16 %v331
    %v402 = vunpack.c.l.b16 %v332
    %v403 = vunpack.c.l.b16 %v333
    %v404 = vunpack.c.l.b16 %v334
    %v405 = vunpack.c.l.b16 %v335
    %v406 = vunpack.c.l.b16 %v336
    %v407 = vunpack.c.l.b16 %v337
    %v408 = vpack.c.b16 %v377, %v376
    %v409 = vpack.c.b16 %v379, %v378
    %v410 = vpack.c.b16 %v381, %v380
    %v411 = vpack.c.b16 %v383, %v382
    %v412 = vpack.c.b16 %v385, %v384
    %v413 = vpack.c.b16 %v387, %v386
    %v414 = vpack.c.b16 %v389, %v388
    %v415 = vpack.c.b16 %v391, %v390
    %v416 = vpack.c.b16 %v393, %v392
    %v417 = vpack.c.b16 %v395, %v394
    %v418 = vpack.c.b16 %v397, %v396
    %v419 = vpack.c.b16 %v399, %v398
    %v420 = vpack.c.b16 %v401, %v400
    %v421 = vpack.c.b16 %v403, %v402
    %v422 = vpack.c.b16 %v405, %v404
    %v423 = vpack.c.b16 %v407, %v406
    %440 = vmatprep.subr.bf16.mxu0 0
    %441 = vmatpush1.bf16.msra.mxu0 %v408
    %442 = vmatprep.subr.bf16.mxu0 0
    %443 = vmatpush1.bf16.msra.mxu0 %v409
    %444 = vmatprep.subr.bf16.mxu0 0
    %445 = vmatpush1.bf16.msra.mxu0 %v410
    %446 = vmatprep.subr.bf16.mxu0 0
    %447 = vmatpush1.bf16.msra.mxu0 %v411
    %448 = vmatprep.subr.bf16.mxu0 0
    %449 = vmatpush1.bf16.msra.mxu0 %v412
    %450 = vmatprep.subr.bf16.mxu0 0
    %451 = vmatpush1.bf16.msra.mxu0 %v413
    %452 = vmatprep.subr.bf16.mxu0 0
    %453 = vmatpush1.bf16.msra.mxu0 %v414
    %454 = vmatprep.subr.bf16.mxu0 0
    %455 = vmatpush1.bf16.msra.mxu0 %v415
    %456 = vmatprep.subr.bf16.mxu0 0
    %457 = vmatpush1.bf16.msra.mxu0 %v416
    %458 = vmatprep.subr.bf16.mxu0 0
    %459 = vmatpush1.bf16.msra.mxu0 %v417
    %460 = vmatprep.subr.bf16.mxu0 0
    %461 = vmatpush1.bf16.msra.mxu0 %v418
    %462 = vmatprep.subr.bf16.mxu0 0
    %463 = vmatpush1.bf16.msra.mxu0 %v419
    %464 = vmatprep.subr.bf16.mxu0 0
    %465 = vmatpush1.bf16.msra.mxu0 %v420
    %466 = vmatprep.subr.bf16.mxu0 0
    %467 = vmatpush1.bf16.msra.mxu0 %v421
    %468 = vmatprep.subr.bf16.mxu0 0
    %469 = vmatpush1.bf16.msra.mxu0 %v422
    %470 = vmatprep.subr.bf16.mxu0 0
    %471 = vmatpush1.bf16.msra.mxu0 %v423
    %472 = vmatprep.mubr.bf16.mxu0 %v305
    %473 = vmatmul.mubr.bf16.gmra.mrb[0].mxu0 %v304
    %v474 = vpop.f32.mrb[0].mxu0
    %v475 = vadd.f32 %v343, %v474
    %v476 = vpop.f32.mrb[0].mxu0
    %v477 = vpop.f32.mrb[0].mxu0
    %v478 = vpop.f32.mrb[0].mxu0
    %479 = vdwg.mxu0
    %vm480 = vcmask 17408
    %481 = vst.msk [vmem:[#allocation2] sm:$0x3] %vm480, %v475
    // Predicated region
    $region22: #{forward.11} parent=1 // pred_check
      _
    $region23: #{forward.11} parent=1 // pred_check_branch
      %483 = sbr.rel (0) target = $region25
    $region24: #{forward.11} parent=1 // pred_region
      %s485 = ssub.s32 32, 32
      %486 = vsyncadd [#allocation3], %s485
      %s488 = sshll.u32 [#allocation2], 4
      %s489 = int_to_ptr.vmem [resolvable:$true] %s488
      %491 = dma.vmem_to_hbm [thread:$0]  %s489, 32, %s5, [#allocation3]
    $region25: #{forward.11} parent=1 // pred_fallthru
      _
    // Predicated region
    $region26: #{forward.11} parent=1 // pred_check
      _
    $region27: #{forward.11} parent=1 // pred_check_branch
      %493 = sbr.rel (0) target = $region29
    $region28: #{forward.11} parent=1 // pred_region
      %494 = dma.done [#allocation3], 32
    $region29: #{forward.11} parent=1 // pred_fallthru
      _
    %495 = vsyncpa [#allocation3], 1

// kernel: forward.7
$region0: #{forward.7}
  #allocation0 [shape = 'u32[]', space=smem, size = 0x4, offset = 0x4, fixed_abs, tag = 'smem constant byte address 0x4 - core index']
  #allocation1 [shape = 'u32[144,128]{1,0:T(1,128)}', space=vmem, size = 0x12000, scoped, tag = 'internal scratch']
  #allocation2 [shape = 'bf16[8,1536]{1,0:T(8,128)(2,1)}', space=vmem, size = 0x6000, scoped, tag = 'scratch operand']
  #allocation3 [shape = 'f32[8,256]{1,0:T(8,128)}', space=vmem, size = 0x2000, scoped, tag = 'scratch operand']
  %s0 = inlined_call_operand.vmem [shape: bf16[2,8,256], index: 0, kind: input, shape index: {}]
  %s1 = inlined_call_operand.hbm [shape: bf16[256,1536], index: 1, kind: input, shape index: {}]
  %s2 = inlined_call_operand.vmem [shape: bf16[1,1536], index: 2, kind: input, shape index: {}]
  %s3 = inlined_call_operand.hbm [shape: bf16[512,256], index: 3, kind: input, shape index: {}]
  %s4 = inlined_call_operand.vmem [shape: bf16[1,256], index: 4, kind: input, shape index: {}]
  %s5 = inlined_call_operand.vmem [shape: bf16[1,256], index: 5, kind: input, shape index: {}]
  %s6 = inlined_call_operand.vmem [shape: bf16[1,256], index: 6, kind: input, shape index: {}]
  %s7 = inlined_call_operand.vmem [shape: f32[2,1,8], index: 7, kind: input, shape index: {}]
  %s8 = inlined_call_operand.vmem [shape: bf16[2,8,256], index: 8, kind: output, shape index: {}]
  %s9 = sld [smem:[#allocation0]]
  $region73: #{forward.7} parent=0
    _
  %s11 = ssub.s32 1, %s9
  %s12 = scalar_select 0, %s11, %s9
  $region1: #{forward.7} parent=0
    #allocation4 [shape = 'u8[786432]{0}', space=vmem, size = 0xc0000, scoped, tag = 'input window, operand 1, single buffered']
    #allocation5 [shape = 's32[2]{0}', space=sflag, size = 0x8, scoped, tag = 'scoped memory for forward.7']
    #allocation6 [shape = 'u8[262144]{0}', space=vmem, size = 0x40000, scoped, tag = 'input window, operand 3, single buffered']
    #allocation7 [shape = 's32[1]{0}', space=sflag, size = 0x4, scoped, tag = 'scoped memory for forward.7']
    %13 = vsyncpa [#allocation5], 0
    %14 = vsyncpa [#allocation7], 0
    loop: start=0, step=1, limit=4
    $region2: #{forward.7} parent=1 // loop_pre_header
      _
    $region3: #{forward.7} parent=1 // loop_header
      %s16 = sphi 0, %s20
      %p17 = scmp.ge.s32.totalorder %s16, 4
      %s26 = sphi 0, %s28
      %s29 = sphi 0, %s26
      %s30 = sphi 0, %s29
      %s46 = sphi 0, %s30
      %s50 = sphi 0, %s50
      %s52 = sphi 0, %s50
      %s53 = sphi 0, %s52
      %s67 = sphi 0, %s53
      %s71 = sphi 0, %s71
      %s73 = sphi 0, %s71
      %s74 = sphi 0, %s73
      %s88 = sphi 0, %s74
      %s92 = sphi 0, %s92
      %s94 = sphi 0, %s92
      %s95 = sphi 0, %s94
      %s109 = sphi 0, %s95
      %s113 = sphi 0, %s113
      %s115 = sphi 0, %s113
      %s116 = sphi 0, %s115
      %s130 = sphi 0, %s116
      %s134 = sphi 0, %s134
      %s136 = sphi 0, %s134
      %s137 = sphi 0, %s136
      %s151 = sphi 0, %s137
      %s155 = sphi 0, %s155
      %s157 = sphi 0, %s155
      %s158 = sphi 0, %s157
      %s172 = sphi 0, %s158
      %s178 = sphi 0, %s180
      %s181 = sphi 0, %s178
      %s182 = sphi 0, %s181
      %s198 = sphi 0, %s182
      %s204 = sphi 0, %s206
      %s207 = sphi 0, %s204
      %s208 = sphi 0, %s207
      %s224 = sphi 0, %s208
    $region4: #{forward.7} parent=1 // loop_header_branch
      %19 = sbr.rel (%p17) target = $region8
    $region5: #{forward.7} parent=1 // loop_body
      %s21 = ssub.s32 %s16, 1
      %s22 = ssub.s32 %s16, 2
      %s23 = sadd.s32 %s16, 1
      %s24 = ssub.s32 %s16, %s23
      %p25 = scmp.eq.s32.totalorder %s24, 0
      %s27 = sadd.s32 %s26, 1
      %s28 = scalar_select %p25, %s26, %s27
      %p31 = pneg %p25
      %p32 = scmp.eq.s32.totalorder %s16, 1
      %p33 = por %p31, %p32
      %p34 = scmp.ne.s32.totalorder %s26, %s29
      %p35 = scmp.eq.s32.totalorder %s16, 0
      %p36 = por %p34, %p35
      %p37 = scmp.ne.s32.totalorder %s26, %s29
      %p38 = scmp.eq.s32.totalorder %s21, 1
      %p39 = por %p37, %p38
      %p40 = scmp.ne.s32.totalorder %s29, %s30
      %p41 = scmp.eq.s32.totalorder %s21, 0
      %p42 = por %p40, %p41
      %p43 = scmp.ne.s32.totalorder %s29, %s30
      %p44 = scmp.eq.s32.totalorder %s22, 1
      %p45 = por %p43, %p44
      %p47 = scmp.ne.s32.totalorder %s30, %s46
      %p48 = scmp.eq.s32.totalorder %s22, 0
      %p49 = por %p47, %p48
      %s51 = sadd.s32 %s50, 1
      %p54 = scmp.eq.s32.totalorder %s16, 1
      %p55 = scmp.ne.s32.totalorder %s50, %s52
      %p56 = scmp.eq.s32.totalorder %s16, 0
      %p57 = por %p55, %p56
      %p58 = scmp.ne.s32.totalorder %s50, %s52
      %p59 = scmp.eq.s32.totalorder %s21, 1
      %p60 = por %p58, %p59
      %p61 = scmp.ne.s32.totalorder %s52, %s53
      %p62 = scmp.eq.s32.totalorder %s21, 0
      %p63 = por %p61, %p62
      %p64 = scmp.ne.s32.totalorder %s52, %s53
      %p65 = scmp.eq.s32.totalorder %s22, 1
      %p66 = por %p64, %p65
      %p68 = scmp.ne.s32.totalorder %s53, %s67
      %p69 = scmp.eq.s32.totalorder %s22, 0
      %p70 = por %p68, %p69
      %s72 = sadd.s32 %s71, 1
      %p75 = scmp.eq.s32.totalorder %s16, 1
      %p76 = scmp.ne.s32.totalorder %s71, %s73
      %p77 = scmp.eq.s32.totalorder %s16, 0
      %p78 = por %p76, %p77
      %p79 = scmp.ne.s32.totalorder %s71, %s73
      %p80 = scmp.eq.s32.totalorder %s21, 1
      %p81 = por %p79, %p80
      %p82 = scmp.ne.s32.totalorder %s73, %s74
      %p83 = scmp.eq.s32.totalorder %s21, 0
      %p84 = por %p82, %p83
      %p85 = scmp.ne.s32.totalorder %s73, %s74
      %p86 = scmp.eq.s32.totalorder %s22, 1
      %p87 = por %p85, %p86
      %p89 = scmp.ne.s32.totalorder %s74, %s88
      %p90 = scmp.eq.s32.totalorder %s22, 0
      %p91 = por %p89, %p90
      %s93 = sadd.s32 %s92, 1
      %p96 = scmp.eq.s32.totalorder %s16, 1
      %p97 = scmp.ne.s32.totalorder %s92, %s94
      %p98 = scmp.eq.s32.totalorder %s16, 0
      %p99 = por %p97, %p98
      %p100 = scmp.ne.s32.totalorder %s92, %s94
      %p101 = scmp.eq.s32.totalorder %s21, 1
      %p102 = por %p100, %p101
      %p103 = scmp.ne.s32.totalorder %s94, %s95
      %p104 = scmp.eq.s32.totalorder %s21, 0
      %p105 = por %p103, %p104
      %p106 = scmp.ne.s32.totalorder %s94, %s95
      %p107 = scmp.eq.s32.totalorder %s22, 1
      %p108 = por %p106, %p107
      %p110 = scmp.ne.s32.totalorder %s95, %s109
      %p111 = scmp.eq.s32.totalorder %s22, 0
      %p112 = por %p110, %p111
      %s114 = sadd.s32 %s113, 1
      %p117 = scmp.eq.s32.totalorder %s16, 1
      %p118 = scmp.ne.s32.totalorder %s113, %s115
      %p119 = scmp.eq.s32.totalorder %s16, 0
      %p120 = por %p118, %p119
      %p121 = scmp.ne.s32.totalorder %s113, %s115
      %p122 = scmp.eq.s32.totalorder %s21, 1
      %p123 = por %p121, %p122
      %p124 = scmp.ne.s32.totalorder %s115, %s116
      %p125 = scmp.eq.s32.totalorder %s21, 0
      %p126 = por %p124, %p125
      %p127 = scmp.ne.s32.totalorder %s115, %s116
      %p128 = scmp.eq.s32.totalorder %s22, 1
      %p129 = por %p127, %p128
      %p131 = scmp.ne.s32.totalorder %s116, %s130
      %p132 = scmp.eq.s32.totalorder %s22, 0
      %p133 = por %p131, %p132
      %s135 = sadd.s32 %s134, 1
      %p138 = scmp.eq.s32.totalorder %s16, 1
      %p139 = scmp.ne.s32.totalorder %s134, %s136
      %p140 = scmp.eq.s32.totalorder %s16, 0
      %p141 = por %p139, %p140
      %p142 = scmp.ne.s32.totalorder %s134, %s136
      %p143 = scmp.eq.s32.totalorder %s21, 1
      %p144 = por %p142, %p143
      %p145 = scmp.ne.s32.totalorder %s136, %s137
      %p146 = scmp.eq.s32.totalorder %s21, 0
      %p147 = por %p145, %p146
      %p148 = scmp.ne.s32.totalorder %s136, %s137
      %p149 = scmp.eq.s32.totalorder %s22, 1
      %p150 = por %p148, %p149
      %p152 = scmp.ne.s32.totalorder %s137, %s151
      %p153 = scmp.eq.s32.totalorder %s22, 0
      %p154 = por %p152, %p153
      %s156 = sadd.s32 %s155, 1
      %p159 = scmp.eq.s32.totalorder %s16, 1
      %p160 = scmp.ne.s32.totalorder %s155, %s157
      %p161 = scmp.eq.s32.totalorder %s16, 0
      %p162 = por %p160, %p161
      %p163 = scmp.ne.s32.totalorder %s155, %s157
      %p164 = scmp.eq.s32.totalorder %s21, 1
      %p165 = por %p163, %p164
      %p166 = scmp.ne.s32.totalorder %s157, %s158
      %p167 = scmp.eq.s32.totalorder %s21, 0
      %p168 = por %p166, %p167
      %p169 = scmp.ne.s32.totalorder %s157, %s158
      %p170 = scmp.eq.s32.totalorder %s22, 1
      %p171 = por %p169, %p170
      %p173 = scmp.ne.s32.totalorder %s158, %s172
      %p174 = scmp.eq.s32.totalorder %s22, 0
      %p175 = por %p173, %p174
      %s176 = ssub.s32 %s16, %s23
      %p177 = scmp.eq.s32.totalorder %s176, 0
      %s179 = sadd.s32 %s178, 1
      %s180 = scalar_select %p177, %s178, %s179
      %p183 = pneg %p177
      %p184 = scmp.eq.s32.totalorder %s16, 1
      %p185 = por %p183, %p184
      %p186 = scmp.ne.s32.totalorder %s178, %s181
      %p187 = scmp.eq.s32.totalorder %s16, 0
      %p188 = por %p186, %p187
      %p189 = scmp.ne.s32.totalorder %s178, %s181
      %p190 = scmp.eq.s32.totalorder %s21, 1
      %p191 = por %p189, %p190
      %p192 = scmp.ne.s32.totalorder %s181, %s182
      %p193 = scmp.eq.s32.totalorder %s21, 0
      %p194 = por %p192, %p193
      %p195 = scmp.ne.s32.totalorder %s181, %s182
      %p196 = scmp.eq.s32.totalorder %s22, 1
      %p197 = por %p195, %p196
      %p199 = scmp.ne.s32.totalorder %s182, %s198
      %p200 = scmp.eq.s32.totalorder %s22, 0
      %p201 = por %p199, %p200
      %s202 = ssub.s32 %s16, %s23
      %p203 = scmp.eq.s32.totalorder %s202, 0
      %s205 = sadd.s32 %s204, 1
      %s206 = scalar_select %p203, %s204, %s205
      %p209 = pneg %p203
      %p210 = scmp.eq.s32.totalorder %s16, 1
      %p211 = por %p209, %p210
      %p212 = scmp.ne.s32.totalorder %s204, %s207
      %p213 = scmp.eq.s32.totalorder %s16, 0
      %p214 = por %p212, %p213
      %p215 = scmp.ne.s32.totalorder %s204, %s207
      %p216 = scmp.eq.s32.totalorder %s21, 1
      %p217 = por %p215, %p216
      %p218 = scmp.ne.s32.totalorder %s207, %s208
      %p219 = scmp.eq.s32.totalorder %s21, 0
      %p220 = por %p218, %p219
      %p221 = scmp.ne.s32.totalorder %s207, %s208
      %p222 = scmp.eq.s32.totalorder %s22, 1
      %p223 = por %p221, %p222
      %p225 = scmp.ne.s32.totalorder %s208, %s224
      %p226 = scmp.eq.s32.totalorder %s22, 0
      %p227 = por %p225, %p226
      %p228 = scmp.le.s32.totalorder 1, %s16
      %p229 = scmp.lt.s32.totalorder %s16, 3
      %p230 = pnand %p228, %p229
      %p231 = pneg %p230
      // Predicated region
      $region9: #{forward.7} parent=5 // pred_check
        _
      $region10: #{forward.7} parent=5 // pred_check_branch
        %233 = sbr.rel (%p230) target = $region12
      $region11: #{forward.7} parent=5 // pred_region
        %s234 = ssub.s32 %s16, 1
        // Predicated region
        $region13: #{forward.7} parent=11 // pred_check
          %p235 = pneg %p63
        $region14: #{forward.7} parent=11 // pred_check_branch
          %237 = sbr.rel (%p235) target = $region16
        $region15: #{forward.7} parent=11 // pred_region
          %s239 = ssub.s32 24576, 24576
          %240 = vsyncadd [#allocation5], %s239
          %s241 = sshll.u32 [#allocation4], 4
          %s242 = int_to_ptr.vmem [resolvable:$true] %s241
          %247 = dma.hbm_to_vmem [thread:$0]  %s1, 24576, %s242, [#allocation5], 768, 768, 48
        $region16: #{forward.7} parent=11 // pred_fallthru
          _
        // Predicated region
        $region17: #{forward.7} parent=11 // pred_check
          %p248 = pneg %p84
        $region18: #{forward.7} parent=11 // pred_check_branch
          %250 = sbr.rel (%p248) target = $region20
        $region19: #{forward.7} parent=11 // pred_region
          _
        $region20: #{forward.7} parent=11 // pred_fallthru
          _
        // Predicated region
        $region21: #{forward.7} parent=11 // pred_check
          %p251 = pneg %p105
        $region22: #{forward.7} parent=11 // pred_check_branch
          %253 = sbr.rel (%p251) target = $region24
        $region23: #{forward.7} parent=11 // pred_region
          %s255 = ssub.s32 8192, 8192
          %256 = vsyncadd [#allocation7], %s255
          %s257 = sshll.u32 [#allocation6], 4
          %s258 = int_to_ptr.vmem [resolvable:$true] %s257
          %263 = dma.hbm_to_vmem [thread:$0]  %s3, 8192, %s258, [#allocation7], 128, 128, 8
        $region24: #{forward.7} parent=11 // pred_fallthru
          _
        // Predicated region
        $region25: #{forward.7} parent=11 // pred_check
          %p264 = pneg %p126
        $region26: #{forward.7} parent=11 // pred_check_branch
          %266 = sbr.rel (%p264) target = $region28
        $region27: #{forward.7} parent=11 // pred_region
          _
        $region28: #{forward.7} parent=11 // pred_fallthru
          _
        // Predicated region
        $region29: #{forward.7} parent=11 // pred_check
          %p267 = pneg %p147
        $region30: #{forward.7} parent=11 // pred_check_branch
          %269 = sbr.rel (%p267) target = $region32
        $region31: #{forward.7} parent=11 // pred_region
          _
        $region32: #{forward.7} parent=11 // pred_fallthru
          _
        // Predicated region
        $region33: #{forward.7} parent=11 // pred_check
          %p270 = pneg %p168
        $region34: #{forward.7} parent=11 // pred_check_branch
          %272 = sbr.rel (%p270) target = $region36
        $region35: #{forward.7} parent=11 // pred_region
          _
        $region36: #{forward.7} parent=11 // pred_fallthru
          _
      $region12: #{forward.7} parent=5 // pred_fallthru
        _
      %p273 = scmp.lt.s32.totalorder %s16, 2
      // Predicated region
      $region37: #{forward.7} parent=5 // pred_check
        %p274 = pneg %p273
      $region38: #{forward.7} parent=5 // pred_check_branch
        %276 = sbr.rel (%p274) target = $region40
      $region39: #{forward.7} parent=5 // pred_region
        // Predicated region
        $region41: #{forward.7} parent=39 // pred_check
          %p277 = pneg %p36
        $region42: #{forward.7} parent=39 // pred_check_branch
          %279 = sbr.rel (%p277) target = $region44
        $region43: #{forward.7} parent=39 // pred_region
          %p280 = scmp.lt.s32.totalorder %s16, 1
          %s281 = scalar_select %p280, %s16, 1
          %s282 = smul.addr %s281, 2
          %s283 = smul.addr %s282, 4
          %s284 = scalar_lea.vmem %s0, %s283
        $region44: #{forward.7} parent=39 // pred_fallthru
          _
        // Predicated region
        $region45: #{forward.7} parent=39 // pred_check
          %p285 = pneg %p188
        $region46: #{forward.7} parent=39 // pred_check_branch
          %287 = sbr.rel (%p285) target = $region48
        $region47: #{forward.7} parent=39 // pred_region
          %p288 = scmp.lt.s32.totalorder %s16, 1
          %s289 = scalar_select %p288, %s16, 1
          %s290 = scalar_lea.vmem %s7, %s289
        $region48: #{forward.7} parent=39 // pred_fallthru
          _
      $region40: #{forward.7} parent=5 // pred_fallthru
        _
      %p291 = scmp.le.s32.totalorder 1, %s16
      %p292 = scmp.lt.s32.totalorder %s16, 3
      %p293 = pnand %p291, %p292
      %p294 = pneg %p293
      // Predicated region
      $region49: #{forward.7} parent=5 // pred_check
        _
      $region50: #{forward.7} parent=5 // pred_check_branch
        %296 = sbr.rel (%p293) target = $region52
      $region51: #{forward.7} parent=5 // pred_region
        %s297 = ssub.s32 %s16, 1
        // Predicated region
        $region53: #{forward.7} parent=51 // pred_check
          %p298 = pneg %p63
        $region54: #{forward.7} parent=51 // pred_check_branch
          %300 = sbr.rel (%p298) target = $region56
        $region55: #{forward.7} parent=51 // pred_region
          %301 = dma.done [#allocation5], 24576
        $region56: #{forward.7} parent=51 // pred_fallthru
          _
        // Predicated region
        $region57: #{forward.7} parent=51 // pred_check
          %p302 = pneg %p105
        $region58: #{forward.7} parent=51 // pred_check_branch
          %304 = sbr.rel (%p302) target = $region60
        $region59: #{forward.7} parent=51 // pred_region
          %305 = dma.done [#allocation7], 8192
        $region60: #{forward.7} parent=51 // pred_fallthru
          _
        %p306 = scmp.lt.s32.totalorder %s21, 1
        %s307 = scalar_select %p306, %s21, 1
        %s308 = smul.addr %s307, 2
        %s309 = smul.addr %s308, 4
        %s310 = scalar_lea.vmem %s0, %s309
        %p311 = pneg %p42
        %p312 = pneg %p39
        %p313 = pneg %p63
        %p314 = pneg %p60
        %p315 = pneg %p84
        %p316 = pneg %p81
        %p317 = pneg %p105
        %p318 = pneg %p102
        %p319 = pneg %p126
        %p320 = pneg %p123
        %p321 = pneg %p147
        %p322 = pneg %p144
        %p323 = pneg %p168
        %p324 = pneg %p165
        %p325 = scmp.lt.s32.totalorder %s21, 1
        %s326 = scalar_select %p325, %s21, 1
        %s327 = scalar_lea.vmem %s7, %s326
        %p328 = pneg %p194
        %p329 = pneg %p191
        %p330 = pneg %p220
        %p331 = pneg %p217
        %p332 = scmp.lt.s32.totalorder %s21, 1
        %s333 = scalar_select %p332, %s21, 1
        %s334 = smul.addr %s333, 2
        %s335 = smul.addr %s334, 4
        %s336 = scalar_lea.vmem %s8, %s335
        %p337 = scmp.lt.s32.totalorder %s21, 1
        %s338 = scalar_select %p337, %s21, 1
        %s339 = smul.addr %s338, 2
        %s340 = smul.addr %s339, 4
        %s341 = scalar_lea.vmem %s0, %s340
        %p342 = scmp.lt.s32.totalorder %s21, 1
        %s343 = scalar_select %p342, %s21, 1
        %s344 = scalar_lea.vmem %s7, %s343
        %p345 = scmp.lt.s32.totalorder %s21, 1
        %s346 = scalar_select %p345, %s21, 1
        %s347 = smul.addr %s346, 2
        %s348 = smul.addr %s347, 4
        %s349 = scalar_lea.vmem %s8, %s348
        %v351 = vld [vmem:[%s341] sm:$0xff]
        %v352 = vld [vmem:[%s344] sm:$0x1]
        %v353 = vld [vmem:[#allocation4] sm:$0xff]
        %v354 = vld [vmem:[#allocation4 + $0x8] sm:$0xff]
        %v355 = vld [vmem:[#allocation4 + $0x10] sm:$0xff]
        %v356 = vld [vmem:[#allocation4 + $0x18] sm:$0xff]
        %v357 = vld [vmem:[#allocation4 + $0x20] sm:$0xff]
        %v358 = vld [vmem:[#allocation4 + $0x28] sm:$0xff]
        %v359 = vld [vmem:[#allocation4 + $0x30] sm:$0xff]
        %v360 = vld [vmem:[#allocation4 + $0x38] sm:$0xff]
        %v361 = vld [vmem:[#allocation4 + $0x40] sm:$0xff]
        %v362 = vld [vmem:[#allocation4 + $0x48] sm:$0xff]
        %v363 = vld [vmem:[#allocation4 + $0x50] sm:$0xff]
        %v364 = vld [vmem:[#allocation4 + $0x58] sm:$0xff]
        %v365 = vld [vmem:[#allocation4 + $0x60] sm:$0xff]
        %v366 = vld [vmem:[#allocation4 + $0x68] sm:$0xff]
        %v367 = vld [vmem:[#allocation4 + $0x70] sm:$0xff]
        %v368 = vld [vmem:[#allocation4 + $0x78] sm:$0xff]
        %v369 = vld [vmem:[#allocation4 + $0x80] sm:$0xff]
        %v370 = vld [vmem:[#allocation4 + $0x88] sm:$0xff]
        %v371 = vld [vmem:[#allocation4 + $0x90] sm:$0xff]
        %v372 = vld [vmem:[#allocation4 + $0x98] sm:$0xff]
        %v373 = vld [vmem:[#allocation4 + $0xa0] sm:$0xff]
        %v374 = vld [vmem:[#allocation4 + $0xa8] sm:$0xff]
        %v375 = vld [vmem:[#allocation4 + $0xb0] sm:$0xff]
        %v376 = vld [vmem:[#allocation4 + $0xb8] sm:$0xff]
        %v377 = vld [vmem:[#allocation4 + $0xc0] sm:$0xff]
        %v378 = vld [vmem:[#allocation4 + $0xc8] sm:$0xff]
        %v379 = vld [vmem:[#allocation4 + $0xd0] sm:$0xff]
        %v380 = vld [vmem:[#allocation4 + $0xd8] sm:$0xff]
        %v381 = vld [vmem:[#allocation4 + $0xe0] sm:$0xff]
        %v382 = vld [vmem:[#allocation4 + $0xe8] sm:$0xff]
        %v383 = vld [vmem:[#allocation4 + $0xf0] sm:$0xff]
        %v384 = vld [vmem:[#allocation4 + $0xf8] sm:$0xff]
        %v385 = vld [vmem:[#allocation4 + $0x100] sm:$0xff]
        %v386 = vld [vmem:[#allocation4 + $0x108] sm:$0xff]
        %v387 = vld [vmem:[#allocation4 + $0x110] sm:$0xff]
        %v388 = vld [vmem:[#allocation4 + $0x118] sm:$0xff]
        %v389 = vld [vmem:[#allocation4 + $0x120] sm:$0xff]
        %v390 = vld [vmem:[#allocation4 + $0x128] sm:$0xff]
        %v391 = vld [vmem:[#allocation4 + $0x130] sm:$0xff]
        %v392 = vld [vmem:[#allocation4 + $0x138] sm:$0xff]
        %v393 = vld [vmem:[#allocation4 + $0x140] sm:$0xff]
        %v394 = vld [vmem:[#allocation4 + $0x148] sm:$0xff]
        %v395 = vld [vmem:[#allocation4 + $0x150] sm:$0xff]
        %v396 = vld [vmem:[#allocation4 + $0x158] sm:$0xff]
        %v397 = vld [vmem:[#allocation4 + $0x160] sm:$0xff]
        %v398 = vld [vmem:[#allocation4 + $0x168] sm:$0xff]
        %v399 = vld [vmem:[#allocation4 + $0x170] sm:$0xff]
        %v400 = vld [vmem:[#allocation4 + $0x178] sm:$0xff]
        %v401 = vld [vmem:[#allocation4 + $0x180] sm:$0xff]
        %v402 = vld [vmem:[#allocation4 + $0x188] sm:$0xff]
        %v403 = vld [vmem:[#allocation4 + $0x190] sm:$0xff]
        %v404 = vld [vmem:[#allocation4 + $0x198] sm:$0xff]
        %v405 = vld [vmem:[#allocation4 + $0x1a0] sm:$0xff]
        %v406 = vld [vmem:[#allocation4 + $0x1a8] sm:$0xff]
        %v407 = vld [vmem:[#allocation4 + $0x1b0] sm:$0xff]
        %v408 = vld [vmem:[#allocation4 + $0x1b8] sm:$0xff]
        %v409 = vld [vmem:[#allocation4 + $0x1c0] sm:$0xff]
        %v410 = vld [vmem:[#allocation4 + $0x1c8] sm:$0xff]
        %v411 = vld [vmem:[#allocation4 + $0x1d0] sm:$0xff]
        %v412 = vld [vmem:[#allocation4 + $0x1d8] sm:$0xff]
        %v413 = vld [vmem:[#allocation4 + $0x1e0] sm:$0xff]
        %v414 = vld [vmem:[#allocation4 + $0x1e8] sm:$0xff]
        %v415 = vld [vmem:[#allocation4 + $0x1f0] sm:$0xff]
        %v416 = vld [vmem:[#allocation4 + $0x1f8] sm:$0xff]
        %v417 = vld [vmem:[#allocation4 + $0x200] sm:$0xff]
        %v418 = vld [vmem:[#allocation4 + $0x208] sm:$0xff]
        %v419 = vld [vmem:[#allocation4 + $0x210] sm:$0xff]
        %v420 = vld [vmem:[#allocation4 + $0x218] sm:$0xff]
        %v421 = vld [vmem:[#allocation4 + $0x220] sm:$0xff]
        %v422 = vld [vmem:[#allocation4 + $0x228] sm:$0xff]
        %v423 = vld [vmem:[#allocation4 + $0x230] sm:$0xff]
        %v424 = vld [vmem:[#allocation4 + $0x238] sm:$0xff]
        %v425 = vld [vmem:[#allocation4 + $0x240] sm:$0xff]
        %v426 = vld [vmem:[#allocation4 + $0x248] sm:$0xff]
        %v427 = vld [vmem:[#allocation4 + $0x250] sm:$0xff]
        %v428 = vld [vmem:[#allocation4 + $0x258] sm:$0xff]
        %v429 = vld [vmem:[#allocation4 + $0x260] sm:$0xff]
        %v430 = vld [vmem:[#allocation4 + $0x268] sm:$0xff]
        %v431 = vld [vmem:[#allocation4 + $0x270] sm:$0xff]
        %v432 = vld [vmem:[#allocation4 + $0x278] sm:$0xff]
        %v433 = vld [vmem:[#allocation4 + $0x280] sm:$0xff]
        %v434 = vld [vmem:[#allocation4 + $0x288] sm:$0xff]
        %v435 = vld [vmem:[#allocation4 + $0x290] sm:$0xff]
        %v436 = vld [vmem:[#allocation4 + $0x298] sm:$0xff]
        %v437 = vld [vmem:[#allocation4 + $0x2a0] sm:$0xff]
        %v438 = vld [vmem:[#allocation4 + $0x2a8] sm:$0xff]
        %v439 = vld [vmem:[#allocation4 + $0x2b0] sm:$0xff]
        %v440 = vld [vmem:[#allocation4 + $0x2b8] sm:$0xff]
        %v441 = vld [vmem:[#allocation4 + $0x2c0] sm:$0xff]
        %v442 = vld [vmem:[#allocation4 + $0x2c8] sm:$0xff]
        %v443 = vld [vmem:[#allocation4 + $0x2d0] sm:$0xff]
        %v444 = vld [vmem:[#allocation4 + $0x2d8] sm:$0xff]
        %v445 = vld [vmem:[#allocation4 + $0x2e0] sm:$0xff]
        %v446 = vld [vmem:[#allocation4 + $0x2e8] sm:$0xff]
        %v447 = vld [vmem:[#allocation4 + $0x2f0] sm:$0xff]
        %v448 = vld [vmem:[#allocation4 + $0x2f8] sm:$0xff]
        %v449 = vld [vmem:[#allocation4 + $0x300] sm:$0xff]
        %v450 = vld [vmem:[#allocation4 + $0x308] sm:$0xff]
        %v451 = vld [vmem:[#allocation4 + $0x310] sm:$0xff]
        %v452 = vld [vmem:[#allocation4 + $0x318] sm:$0xff]
        %v453 = vld [vmem:[#allocation4 + $0x320] sm:$0xff]
        %v454 = vld [vmem:[#allocation4 + $0x328] sm:$0xff]
        %v455 = vld [vmem:[#allocation4 + $0x330] sm:$0xff]
        %v456 = vld [vmem:[#allocation4 + $0x338] sm:$0xff]
        %v457 = vld [vmem:[#allocation4 + $0x340] sm:$0xff]
        %v458 = vld [vmem:[#allocation4 + $0x348] sm:$0xff]
        %v459 = vld [vmem:[#allocation4 + $0x350] sm:$0xff]
        %v460 = vld [vmem:[#allocation4 + $0x358] sm:$0xff]
        %v461 = vld [vmem:[#allocation4 + $0x360] sm:$0xff]
        %v462 = vld [vmem:[#allocation4 + $0x368] sm:$0xff]
        %v463 = vld [vmem:[#allocation4 + $0x370] sm:$0xff]
        %v464 = vld [vmem:[#allocation4 + $0x378] sm:$0xff]
        %v465 = vld [vmem:[#allocation4 + $0x380] sm:$0xff]
        %v466 = vld [vmem:[#allocation4 + $0x388] sm:$0xff]
        %v467 = vld [vmem:[#allocation4 + $0x390] sm:$0xff]
        %v468 = vld [vmem:[#allocation4 + $0x398] sm:$0xff]
        %v469 = vld [vmem:[#allocation4 + $0x3a0] sm:$0xff]
        %v470 = vld [vmem:[#allocation4 + $0x3a8] sm:$0xff]
        %v471 = vld [vmem:[#allocation4 + $0x3b0] sm:$0xff]
        %v472 = vld [vmem:[#allocation4 + $0x3b8] sm:$0xff]
        %v473 = vld [vmem:[#allocation4 + $0x3c0] sm:$0xff]
        %v474 = vld [vmem:[#allocation4 + $0x3c8] sm:$0xff]
        %v475 = vld [vmem:[#allocation4 + $0x3d0] sm:$0xff]
        %v476 = vld [vmem:[#allocation4 + $0x3d8] sm:$0xff]
        %v477 = vld [vmem:[#allocation4 + $0x3e0] sm:$0xff]
        %v478 = vld [vmem:[#allocation4 + $0x3e8] sm:$0xff]
        %v479 = vld [vmem:[#allocation4 + $0x3f0] sm:$0xff]
        %v480 = vld [vmem:[#allocation4 + $0x3f8] sm:$0xff]
        %v481 = vld [vmem:[#allocation4 + $0x400] sm:$0xff]
        %v482 = vld [vmem:[#allocation4 + $0x408] sm:$0xff]
        %v483 = vld [vmem:[#allocation4 + $0x410] sm:$0xff]
        %v484 = vld [vmem:[#allocation4 + $0x418] sm:$0xff]
        %v485 = vld [vmem:[#allocation4 + $0x420] sm:$0xff]
        %v486 = vld [vmem:[#allocation4 + $0x428] sm:$0xff]
        %v487 = vld [vmem:[#allocation4 + $0x430] sm:$0xff]
        %v488 = vld [vmem:[#allocation4 + $0x438] sm:$0xff]
        %v489 = vld [vmem:[#allocation4 + $0x440] sm:$0xff]
        %v490 = vld [vmem:[#allocation4 + $0x448] sm:$0xff]
        %v491 = vld [vmem:[#allocation4 + $0x450] sm:$0xff]
        %v492 = vld [vmem:[#allocation4 + $0x458] sm:$0xff]
        %v493 = vld [vmem:[#allocation4 + $0x460] sm:$0xff]
        %v494 = vld [vmem:[#allocation4 + $0x468] sm:$0xff]
        %v495 = vld [vmem:[#allocation4 + $0x470] sm:$0xff]
        %v496 = vld [vmem:[#allocation4 + $0x478] sm:$0xff]
        %v497 = vld [vmem:[#allocation4 + $0x480] sm:$0xff]
        %v498 = vld [vmem:[#allocation4 + $0x488] sm:$0xff]
        %v499 = vld [vmem:[#allocation4 + $0x490] sm:$0xff]
        %v500 = vld [vmem:[#allocation4 + $0x498] sm:$0xff]
        %v501 = vld [vmem:[#allocation4 + $0x4a0] sm:$0xff]
        %v502 = vld [vmem:[#allocation4 + $0x4a8] sm:$0xff]
        %v503 = vld [vmem:[#allocation4 + $0x4b0] sm:$0xff]
        %v504 = vld [vmem:[#allocation4 + $0x4b8] sm:$0xff]
        %v505 = vld [vmem:[#allocation4 + $0x4c0] sm:$0xff]
        %v506 = vld [vmem:[#allocation4 + $0x4c8] sm:$0xff]
        %v507 = vld [vmem:[#allocation4 + $0x4d0] sm:$0xff]
        %v508 = vld [vmem:[#allocation4 + $0x4d8] sm:$0xff]
        %v509 = vld [vmem:[#allocation4 + $0x4e0] sm:$0xff]
        %v510 = vld [vmem:[#allocation4 + $0x4e8] sm:$0xff]
        %v511 = vld [vmem:[#allocation4 + $0x4f0] sm:$0xff]
        %v512 = vld [vmem:[#allocation4 + $0x4f8] sm:$0xff]
        %v513 = vld [vmem:[#allocation4 + $0x500] sm:$0xff]
        %v514 = vld [vmem:[#allocation4 + $0x508] sm:$0xff]
        %v515 = vld [vmem:[#allocation4 + $0x510] sm:$0xff]
        %v516 = vld [vmem:[#allocation4 + $0x518] sm:$0xff]
        %v517 = vld [vmem:[#allocation4 + $0x520] sm:$0xff]
        %v518 = vld [vmem:[#allocation4 + $0x528] sm:$0xff]
        %v519 = vld [vmem:[#allocation4 + $0x530] sm:$0xff]
        %v520 = vld [vmem:[#allocation4 + $0x538] sm:$0xff]
        %v521 = vld [vmem:[#allocation4 + $0x540] sm:$0xff]
        %v522 = vld [vmem:[#allocation4 + $0x548] sm:$0xff]
        %v523 = vld [vmem:[#allocation4 + $0x550] sm:$0xff]
        %v524 = vld [vmem:[#allocation4 + $0x558] sm:$0xff]
        %v525 = vld [vmem:[#allocation4 + $0x560] sm:$0xff]
        %v526 = vld [vmem:[#allocation4 + $0x568] sm:$0xff]
        %v527 = vld [vmem:[#allocation4 + $0x570] sm:$0xff]
        %v528 = vld [vmem:[#allocation4 + $0x578] sm:$0xff]
        %v529 = vld [vmem:[#allocation4 + $0x580] sm:$0xff]
        %v530 = vld [vmem:[#allocation4 + $0x588] sm:$0xff]
        %v531 = vld [vmem:[#allocation4 + $0x590] sm:$0xff]
        %v532 = vld [vmem:[#allocation4 + $0x598] sm:$0xff]
        %v533 = vld [vmem:[#allocation4 + $0x5a0] sm:$0xff]
        %v534 = vld [vmem:[#allocation4 + $0x5a8] sm:$0xff]
        %v535 = vld [vmem:[#allocation4 + $0x5b0] sm:$0xff]
        %v536 = vld [vmem:[#allocation4 + $0x5b8] sm:$0xff]
        %v537 = vld [vmem:[#allocation4 + $0x5c0] sm:$0xff]
        %v538 = vld [vmem:[#allocation4 + $0x5c8] sm:$0xff]
        %v539 = vld [vmem:[#allocation4 + $0x5d0] sm:$0xff]
        %v540 = vld [vmem:[#allocation4 + $0x5d8] sm:$0xff]
        %v541 = vld [vmem:[#allocation4 + $0x5e0] sm:$0xff]
        %v542 = vld [vmem:[#allocation4 + $0x5e8] sm:$0xff]
        %v543 = vld [vmem:[#allocation4 + $0x5f0] sm:$0xff]
        %v544 = vld [vmem:[#allocation4 + $0x5f8] sm:$0xff]
        %v545 = vld [vmem:[%s2] sm:$0xff]
        %v546 = vld [vmem:[%s2 + $0x8] sm:$0xf]
        %v547 = vunpack.c.l.bf16 %v545
        %v548 = vunpack.c.h.bf16 %v545
        %v549 = vunpack.c.l.bf16 %v546
        %v553 = vlaneseq
        %v554 = vshrl.u32 %v553, 7
        %v555 = vsub.s32 0, %v554
        %v556 = vrot.slane %v547, %v555
        %v557 = vlaneseq
        %v558 = vshrl.u32 %v557, 7
        %v559 = vsub.s32 2, %v558
        %v560 = vrot.slane %v547, %v559
        %v561 = vlaneseq
        %v562 = vshrl.u32 %v561, 7
        %v563 = vsub.s32 4, %v562
        %v564 = vrot.slane %v547, %v563
        %v565 = vlaneseq
        %v566 = vshrl.u32 %v565, 7
        %v567 = vsub.s32 6, %v566
        %v568 = vrot.slane %v547, %v567
        %v569 = vlaneseq
        %v570 = vshrl.u32 %v569, 7
        %v571 = vsub.s32 0, %v570
        %v572 = vrot.slane %v548, %v571
        %v573 = vlaneseq
        %v574 = vshrl.u32 %v573, 7
        %v575 = vsub.s32 2, %v574
        %v576 = vrot.slane %v548, %v575
        %v577 = vlaneseq
        %v578 = vshrl.u32 %v577, 7
        %v579 = vsub.s32 4, %v578
        %v580 = vrot.slane %v548, %v579
        %v581 = vlaneseq
        %v582 = vshrl.u32 %v581, 7
        %v583 = vsub.s32 6, %v582
        %v584 = vrot.slane %v548, %v583
        %v585 = vlaneseq
        %v586 = vshrl.u32 %v585, 7
        %v587 = vsub.s32 0, %v586
        %v588 = vrot.slane %v549, %v587
        %v589 = vlaneseq
        %v590 = vshrl.u32 %v589, 7
        %v591 = vsub.s32 2, %v590
        %v592 = vrot.slane %v549, %v591
        %v593 = vlaneseq
        %v594 = vshrl.u32 %v593, 7
        %v595 = vsub.s32 4, %v594
        %v596 = vrot.slane %v549, %v595
        %v597 = vlaneseq
        %v598 = vshrl.u32 %v597, 7
        %v599 = vsub.s32 6, %v598
        %v600 = vrot.slane %v549, %v599
        %v613 = vlaneseq
        %v614 = vshrl.u32 %v613, 7
        %v615 = vsub.s32 0, %v614
        %v616 = vrot.slane %v556, %v615
        %v617 = vlaneseq
        %v618 = vshrl.u32 %v617, 7
        %v619 = vsub.s32 0, %v618
        %v620 = vrot.slane %v560, %v619
        %v621 = vlaneseq
        %v622 = vshrl.u32 %v621, 7
        %v623 = vsub.s32 0, %v622
        %v624 = vrot.slane %v564, %v623
        %v625 = vlaneseq
        %v626 = vshrl.u32 %v625, 7
        %v627 = vsub.s32 0, %v626
        %v628 = vrot.slane %v568, %v627
        %v629 = vlaneseq
        %v630 = vshrl.u32 %v629, 7
        %v631 = vsub.s32 0, %v630
        %v632 = vrot.slane %v572, %v631
        %v633 = vlaneseq
        %v634 = vshrl.u32 %v633, 7
        %v635 = vsub.s32 0, %v634
        %v636 = vrot.slane %v576, %v635
        %v637 = vlaneseq
        %v638 = vshrl.u32 %v637, 7
        %v639 = vsub.s32 0, %v638
        %v640 = vrot.slane %v580, %v639
        %v641 = vlaneseq
        %v642 = vshrl.u32 %v641, 7
        %v643 = vsub.s32 0, %v642
        %v644 = vrot.slane %v584, %v643
        %v645 = vlaneseq
        %v646 = vshrl.u32 %v645, 7
        %v647 = vsub.s32 0, %v646
        %v648 = vrot.slane %v588, %v647
        %v649 = vlaneseq
        %v650 = vshrl.u32 %v649, 7
        %v651 = vsub.s32 0, %v650
        %v652 = vrot.slane %v592, %v651
        %v653 = vlaneseq
        %v654 = vshrl.u32 %v653, 7
        %v655 = vsub.s32 0, %v654
        %v656 = vrot.slane %v596, %v655
        %v657 = vlaneseq
        %v658 = vshrl.u32 %v657, 7
        %v659 = vsub.s32 0, %v658
        %v660 = vrot.slane %v600, %v659
        %v662 = vunpack.c.l.b16 %v351
        %v663 = vunpack.c.h.b16 %v351
        %v664 = vpack.c.b16 %v662, %v662
        %v665 = vpack.c.b16 %v663, %v663
        %v860 = vunpack.c.l.b16 %v353
        %v861 = vunpack.c.h.b16 %v353
        %v862 = vunpack.c.l.b16 %v354
        %v863 = vunpack.c.h.b16 %v354
        %v864 = vunpack.c.l.b16 %v355
        %v865 = vunpack.c.h.b16 %v355
        %v866 = vunpack.c.l.b16 %v356
        %v867 = vunpack.c.h.b16 %v356
        %v868 = vunpack.c.l.b16 %v357
        %v869 = vunpack.c.h.b16 %v357
        %v870 = vunpack.c.l.b16 %v358
        %v871 = vunpack.c.h.b16 %v358
        %v872 = vunpack.c.l.b16 %v359
        %v873 = vunpack.c.h.b16 %v359
        %v874 = vunpack.c.l.b16 %v360
        %v875 = vunpack.c.h.b16 %v360
        %v876 = vunpack.c.l.b16 %v361
        %v877 = vunpack.c.h.b16 %v361
        %v878 = vunpack.c.l.b16 %v362
        %v879 = vunpack.c.h.b16 %v362
        %v880 = vunpack.c.l.b16 %v363
        %v881 = vunpack.c.h.b16 %v363
        %v882 = vunpack.c.l.b16 %v364
        %v883 = vunpack.c.h.b16 %v364
        %v884 = vunpack.c.l.b16 %v365
        %v885 = vunpack.c.h.b16 %v365
        %v886 = vunpack.c.l.b16 %v366
        %v887 = vunpack.c.h.b16 %v366
        %v888 = vunpack.c.l.b16 %v367
        %v889 = vunpack.c.h.b16 %v367
        %v890 = vunpack.c.l.b16 %v368
        %v891 = vunpack.c.h.b16 %v368
        %v892 = vunpack.c.l.b16 %v369
        %v893 = vunpack.c.h.b16 %v369
        %v894 = vunpack.c.l.b16 %v370
        %v895 = vunpack.c.h.b16 %v370
        %v896 = vunpack.c.l.b16 %v371
        %v897 = vunpack.c.h.b16 %v371
        %v898 = vunpack.c.l.b16 %v372
        %v899 = vunpack.c.h.b16 %v372
        %v900 = vunpack.c.l.b16 %v373
        %v901 = vunpack.c.h.b16 %v373
        %v902 = vunpack.c.l.b16 %v374
        %v903 = vunpack.c.h.b16 %v374
        %v904 = vunpack.c.l.b16 %v375
        %v905 = vunpack.c.h.b16 %v375
        %v906 = vunpack.c.l.b16 %v376
        %v907 = vunpack.c.h.b16 %v376
        %v908 = vunpack.c.l.b16 %v377
        %v909 = vunpack.c.h.b16 %v377
        %v910 = vunpack.c.l.b16 %v378
        %v911 = vunpack.c.h.b16 %v378
        %v912 = vunpack.c.l.b16 %v379
        %v913 = vunpack.c.h.b16 %v379
        %v914 = vunpack.c.l.b16 %v380
        %v915 = vunpack.c.h.b16 %v380
        %v916 = vunpack.c.l.b16 %v381
        %v917 = vunpack.c.h.b16 %v381
        %v918 = vunpack.c.l.b16 %v382
        %v919 = vunpack.c.h.b16 %v382
        %v920 = vunpack.c.l.b16 %v383
        %v921 = vunpack.c.h.b16 %v383
        %v922 = vunpack.c.l.b16 %v384
        %v923 = vunpack.c.h.b16 %v384
        %v924 = vunpack.c.l.b16 %v385
        %v925 = vunpack.c.h.b16 %v385
        %v926 = vunpack.c.l.b16 %v386
        %v927 = vunpack.c.h.b16 %v386
        %v928 = vunpack.c.l.b16 %v387
        %v929 = vunpack.c.h.b16 %v387
        %v930 = vunpack.c.l.b16 %v388
        %v931 = vunpack.c.h.b16 %v388
        %v932 = vunpack.c.l.b16 %v389
        %v933 = vunpack.c.h.b16 %v389
        %v934 = vunpack.c.l.b16 %v390
        %v935 = vunpack.c.h.b16 %v390
        %v936 = vunpack.c.l.b16 %v391
        %v937 = vunpack.c.h.b16 %v391
        %v938 = vunpack.c.l.b16 %v392
        %v939 = vunpack.c.h.b16 %v392
        %v940 = vunpack.c.l.b16 %v393
        %v941 = vunpack.c.h.b16 %v393
        %v942 = vunpack.c.l.b16 %v394
        %v943 = vunpack.c.h.b16 %v394
        %v944 = vunpack.c.l.b16 %v395
        %v945 = vunpack.c.h.b16 %v395
        %v946 = vunpack.c.l.b16 %v396
        %v947 = vunpack.c.h.b16 %v396
        %v948 = vunpack.c.l.b16 %v397
        %v949 = vunpack.c.h.b16 %v397
        %v950 = vunpack.c.l.b16 %v398
        %v951 = vunpack.c.h.b16 %v398
        %v952 = vunpack.c.l.b16 %v399
        %v953 = vunpack.c.h.b16 %v399
        %v954 = vunpack.c.l.b16 %v400
        %v955 = vunpack.c.h.b16 %v400
        %v956 = vunpack.c.l.b16 %v401
        %v957 = vunpack.c.h.b16 %v401
        %v958 = vunpack.c.l.b16 %v402
        %v959 = vunpack.c.h.b16 %v402
        %v960 = vunpack.c.l.b16 %v403
        %v961 = vunpack.c.h.b16 %v403
        %v962 = vunpack.c.l.b16 %v404
        %v963 = vunpack.c.h.b16 %v404
        %v964 = vunpack.c.l.b16 %v405
        %v965 = vunpack.c.h.b16 %v405
        %v966 = vunpack.c.l.b16 %v406
        %v967 = vunpack.c.h.b16 %v406
        %v968 = vunpack.c.l.b16 %v407
        %v969 = vunpack.c.h.b16 %v407
        %v970 = vunpack.c.l.b16 %v408
        %v971 = vunpack.c.h.b16 %v408
        %v972 = vunpack.c.l.b16 %v409
        %v973 = vunpack.c.h.b16 %v409
        %v974 = vunpack.c.l.b16 %v410
        %v975 = vunpack.c.h.b16 %v410
        %v976 = vunpack.c.l.b16 %v411
        %v977 = vunpack.c.h.b16 %v411
        %v978 = vunpack.c.l.b16 %v412
        %v979 = vunpack.c.h.b16 %v412
        %v980 = vunpack.c.l.b16 %v413
        %v981 = vunpack.c.h.b16 %v413
        %v982 = vunpack.c.l.b16 %v414
        %v983 = vunpack.c.h.b16 %v414
        %v984 = vunpack.c.l.b16 %v415
        %v985 = vunpack.c.h.b16 %v415
        %v986 = vunpack.c.l.b16 %v416
        %v987 = vunpack.c.h.b16 %v416
        %v988 = vunpack.c.l.b16 %v417
        %v989 = vunpack.c.h.b16 %v417
        %v990 = vunpack.c.l.b16 %v418
        %v991 = vunpack.c.h.b16 %v418
        %v992 = vunpack.c.l.b16 %v419
        %v993 = vunpack.c.h.b16 %v419
        %v994 = vunpack.c.l.b16 %v420
        %v995 = vunpack.c.h.b16 %v420
        %v996 = vunpack.c.l.b16 %v421
        %v997 = vunpack.c.h.b16 %v421
        %v998 = vunpack.c.l.b16 %v422
        %v999 = vunpack.c.h.b16 %v422
        %v1000 = vunpack.c.l.b16 %v423
        %v1001 = vunpack.c.h.b16 %v423
        %v1002 = vunpack.c.l.b16 %v424
        %v1003 = vunpack.c.h.b16 %v424
        %v1004 = vunpack.c.l.b16 %v425
        %v1005 = vunpack.c.h.b16 %v425
        %v1006 = vunpack.c.l.b16 %v426
        %v1007 = vunpack.c.h.b16 %v426
        %v1008 = vunpack.c.l.b16 %v427
        %v1009 = vunpack.c.h.b16 %v427
        %v1010 = vunpack.c.l.b16 %v428
        %v1011 = vunpack.c.h.b16 %v428
        %v1012 = vunpack.c.l.b16 %v429
        %v1013 = vunpack.c.h.b16 %v429
        %v1014 = vunpack.c.l.b16 %v430
        %v1015 = vunpack.c.h.b16 %v430
        %v1016 = vunpack.c.l.b16 %v431
        %v1017 = vunpack.c.h.b16 %v431
        %v1018 = vunpack.c.l.b16 %v432
        %v1019 = vunpack.c.h.b16 %v432
        %v1020 = vunpack.c.l.b16 %v433
        %v1021 = vunpack.c.h.b16 %v433
        %v1022 = vunpack.c.l.b16 %v434
        %v1023 = vunpack.c.h.b16 %v434
        %v1024 = vunpack.c.l.b16 %v435
        %v1025 = vunpack.c.h.b16 %v435
        %v1026 = vunpack.c.l.b16 %v436
        %v1027 = vunpack.c.h.b16 %v436
        %v1028 = vunpack.c.l.b16 %v437
        %v1029 = vunpack.c.h.b16 %v437
        %v1030 = vunpack.c.l.b16 %v438
        %v1031 = vunpack.c.h.b16 %v438
        %v1032 = vunpack.c.l.b16 %v439
        %v1033 = vunpack.c.h.b16 %v439
        %v1034 = vunpack.c.l.b16 %v440
        %v1035 = vunpack.c.h.b16 %v440
        %v1036 = vunpack.c.l.b16 %v441
        %v1037 = vunpack.c.h.b16 %v441
        %v1038 = vunpack.c.l.b16 %v442
        %v1039 = vunpack.c.h.b16 %v442
        %v1040 = vunpack.c.l.b16 %v443
        %v1041 = vunpack.c.h.b16 %v443
        %v1042 = vunpack.c.l.b16 %v444
        %v1043 = vunpack.c.h.b16 %v444
        %v1044 = vunpack.c.l.b16 %v445
        %v1045 = vunpack.c.h.b16 %v445
        %v1046 = vunpack.c.l.b16 %v446
        %v1047 = vunpack.c.h.b16 %v446
        %v1048 = vunpack.c.l.b16 %v447
        %v1049 = vunpack.c.h.b16 %v447
        %v1050 = vunpack.c.l.b16 %v448
        %v1051 = vunpack.c.h.b16 %v448
        %v1052 = vunpack.c.l.b16 %v449
        %v1053 = vunpack.c.h.b16 %v449
        %v1054 = vunpack.c.l.b16 %v450
        %v1055 = vunpack.c.h.b16 %v450
        %v1056 = vunpack.c.l.b16 %v451
        %v1057 = vunpack.c.h.b16 %v451
        %v1058 = vunpack.c.l.b16 %v452
        %v1059 = vunpack.c.h.b16 %v452
        %v1060 = vunpack.c.l.b16 %v453
        %v1061 = vunpack.c.h.b16 %v453
        %v1062 = vunpack.c.l.b16 %v454
        %v1063 = vunpack.c.h.b16 %v454
        %v1064 = vunpack.c.l.b16 %v455
        %v1065 = vunpack.c.h.b16 %v455
        %v1066 = vunpack.c.l.b16 %v456
        %v1067 = vunpack.c.h.b16 %v456
        %v1068 = vunpack.c.l.b16 %v457
        %v1069 = vunpack.c.h.b16 %v457
        %v1070 = vunpack.c.l.b16 %v458
        %v1071 = vunpack.c.h.b16 %v458
        %v1072 = vunpack.c.l.b16 %v459
        %v1073 = vunpack.c.h.b16 %v459
        %v1074 = vunpack.c.l.b16 %v460
        %v1075 = vunpack.c.h.b16 %v460
        %v1076 = vunpack.c.l.b16 %v461
        %v1077 = vunpack.c.h.b16 %v461
        %v1078 = vunpack.c.l.b16 %v462
        %v1079 = vunpack.c.h.b16 %v462
        %v1080 = vunpack.c.l.b16 %v463
        %v1081 = vunpack.c.h.b16 %v463
        %v1082 = vunpack.c.l.b16 %v464
        %v1083 = vunpack.c.h.b16 %v464
        %v1084 = vunpack.c.l.b16 %v465
        %v1085 = vunpack.c.h.b16 %v465
        %v1086 = vunpack.c.l.b16 %v466
        %v1087 = vunpack.c.h.b16 %v466
        %v1088 = vunpack.c.l.b16 %v467
        %v1089 = vunpack.c.h.b16 %v467
        %v1090 = vunpack.c.l.b16 %v468
        %v1091 = vunpack.c.h.b16 %v468
        %v1092 = vunpack.c.l.b16 %v469
        %v1093 = vunpack.c.h.b16 %v469
        %v1094 = vunpack.c.l.b16 %v470
        %v1095 = vunpack.c.h.b16 %v470
        %v1096 = vunpack.c.l.b16 %v471
        %v1097 = vunpack.c.h.b16 %v471
        %v1098 = vunpack.c.l.b16 %v472
        %v1099 = vunpack.c.h.b16 %v472
        %v1100 = vunpack.c.l.b16 %v473
        %v1101 = vunpack.c.h.b16 %v473
        %v1102 = vunpack.c.l.b16 %v474
        %v1103 = vunpack.c.h.b16 %v474
        %v1104 = vunpack.c.l.b16 %v475
        %v1105 = vunpack.c.h.b16 %v475
        %v1106 = vunpack.c.l.b16 %v476
        %v1107 = vunpack.c.h.b16 %v476
        %v1108 = vunpack.c.l.b16 %v477
        %v1109 = vunpack.c.h.b16 %v477
        %v1110 = vunpack.c.l.b16 %v478
        %v1111 = vunpack.c.h.b16 %v478
        %v1112 = vunpack.c.l.b16 %v479
        %v1113 = vunpack.c.h.b16 %v479
        %v1114 = vunpack.c.l.b16 %v480
        %v1115 = vunpack.c.h.b16 %v480
        %v1116 = vunpack.c.l.b16 %v481
        %v1117 = vunpack.c.h.b16 %v481
        %v1118 = vunpack.c.l.b16 %v482
        %v1119 = vunpack.c.h.b16 %v482
        %v1120 = vunpack.c.l.b16 %v483
        %v1121 = vunpack.c.h.b16 %v483
        %v1122 = vunpack.c.l.b16 %v484
        %v1123 = vunpack.c.h.b16 %v484
        %v1124 = vunpack.c.l.b16 %v485
        %v1125 = vunpack.c.h.b16 %v485
        %v1126 = vunpack.c.l.b16 %v486
        %v1127 = vunpack.c.h.b16 %v486
        %v1128 = vunpack.c.l.b16 %v487
        %v1129 = vunpack.c.h.b16 %v487
        %v1130 = vunpack.c.l.b16 %v488
        %v1131 = vunpack.c.h.b16 %v488
        %v1132 = vunpack.c.l.b16 %v489
        %v1133 = vunpack.c.h.b16 %v489
        %v1134 = vunpack.c.l.b16 %v490
        %v1135 = vunpack.c.h.b16 %v490
        %v1136 = vunpack.c.l.b16 %v491
        %v1137 = vunpack.c.h.b16 %v491
        %v1138 = vunpack.c.l.b16 %v492
        %v1139 = vunpack.c.h.b16 %v492
        %v1140 = vunpack.c.l.b16 %v493
        %v1141 = vunpack.c.h.b16 %v493
        %v1142 = vunpack.c.l.b16 %v494
        %v1143 = vunpack.c.h.b16 %v494
        %v1144 = vunpack.c.l.b16 %v495
        %v1145 = vunpack.c.h.b16 %v495
        %v1146 = vunpack.c.l.b16 %v496
        %v1147 = vunpack.c.h.b16 %v496
        %v1148 = vunpack.c.l.b16 %v497
        %v1149 = vunpack.c.h.b16 %v497
        %v1150 = vunpack.c.l.b16 %v498
        %v1151 = vunpack.c.h.b16 %v498
        %v1152 = vunpack.c.l.b16 %v499
        %v1153 = vunpack.c.h.b16 %v499
        %v1154 = vunpack.c.l.b16 %v500
        %v1155 = vunpack.c.h.b16 %v500
        %v1156 = vunpack.c.l.b16 %v501
        %v1157 = vunpack.c.h.b16 %v501
        %v1158 = vunpack.c.l.b16 %v502
        %v1159 = vunpack.c.h.b16 %v502
        %v1160 = vunpack.c.l.b16 %v503
        %v1161 = vunpack.c.h.b16 %v503
        %v1162 = vunpack.c.l.b16 %v504
        %v1163 = vunpack.c.h.b16 %v504
        %v1164 = vunpack.c.l.b16 %v505
        %v1165 = vunpack.c.h.b16 %v505
        %v1166 = vunpack.c.l.b16 %v506
        %v1167 = vunpack.c.h.b16 %v506
        %v1168 = vunpack.c.l.b16 %v507
        %v1169 = vunpack.c.h.b16 %v507
        %v1170 = vunpack.c.l.b16 %v508
        %v1171 = vunpack.c.h.b16 %v508
        %v1172 = vunpack.c.l.b16 %v509
        %v1173 = vunpack.c.h.b16 %v509
        %v1174 = vunpack.c.l.b16 %v510
        %v1175 = vunpack.c.h.b16 %v510
        %v1176 = vunpack.c.l.b16 %v511
        %v1177 = vunpack.c.h.b16 %v511
        %v1178 = vunpack.c.l.b16 %v512
        %v1179 = vunpack.c.h.b16 %v512
        %v1180 = vunpack.c.l.b16 %v513
        %v1181 = vunpack.c.h.b16 %v513
        %v1182 = vunpack.c.l.b16 %v514
        %v1183 = vunpack.c.h.b16 %v514
        %v1184 = vunpack.c.l.b16 %v515
        %v1185 = vunpack.c.h.b16 %v515
        %v1186 = vunpack.c.l.b16 %v516
        %v1187 = vunpack.c.h.b16 %v516
        %v1188 = vunpack.c.l.b16 %v517
        %v1189 = vunpack.c.h.b16 %v517
        %v1190 = vunpack.c.l.b16 %v518
        %v1191 = vunpack.c.h.b16 %v518
        %v1192 = vunpack.c.l.b16 %v519
        %v1193 = vunpack.c.h.b16 %v519
        %v1194 = vunpack.c.l.b16 %v520
        %v1195 = vunpack.c.h.b16 %v520
        %v1196 = vunpack.c.l.b16 %v521
        %v1197 = vunpack.c.h.b16 %v521
        %v1198 = vunpack.c.l.b16 %v522
        %v1199 = vunpack.c.h.b16 %v522
        %v1200 = vunpack.c.l.b16 %v523
        %v1201 = vunpack.c.h.b16 %v523
        %v1202 = vunpack.c.l.b16 %v524
        %v1203 = vunpack.c.h.b16 %v524
        %v1204 = vunpack.c.l.b16 %v525
        %v1205 = vunpack.c.h.b16 %v525
        %v1206 = vunpack.c.l.b16 %v526
        %v1207 = vunpack.c.h.b16 %v526
        %v1208 = vunpack.c.l.b16 %v527
        %v1209 = vunpack.c.h.b16 %v527
        %v1210 = vunpack.c.l.b16 %v528
        %v1211 = vunpack.c.h.b16 %v528
        %v1212 = vunpack.c.l.b16 %v529
        %v1213 = vunpack.c.h.b16 %v529
        %v1214 = vunpack.c.l.b16 %v530
        %v1215 = vunpack.c.h.b16 %v530
        %v1216 = vunpack.c.l.b16 %v531
        %v1217 = vunpack.c.h.b16 %v531
        %v1218 = vunpack.c.l.b16 %v532
        %v1219 = vunpack.c.h.b16 %v532
        %v1220 = vunpack.c.l.b16 %v533
        %v1221 = vunpack.c.h.b16 %v533
        %v1222 = vunpack.c.l.b16 %v534
        %v1223 = vunpack.c.h.b16 %v534
        %v1224 = vunpack.c.l.b16 %v535
        %v1225 = vunpack.c.h.b16 %v535
        %v1226 = vunpack.c.l.b16 %v536
        %v1227 = vunpack.c.h.b16 %v536
        %v1228 = vunpack.c.l.b16 %v537
        %v1229 = vunpack.c.h.b16 %v537
        %v1230 = vunpack.c.l.b16 %v538
        %v1231 = vunpack.c.h.b16 %v538
        %v1232 = vunpack.c.l.b16 %v539
        %v1233 = vunpack.c.h.b16 %v539
        %v1234 = vunpack.c.l.b16 %v540
        %v1235 = vunpack.c.h.b16 %v540
        %v1236 = vunpack.c.l.b16 %v541
        %v1237 = vunpack.c.h.b16 %v541
        %v1238 = vunpack.c.l.b16 %v542
        %v1239 = vunpack.c.h.b16 %v542
        %v1240 = vunpack.c.l.b16 %v543
        %v1241 = vunpack.c.h.b16 %v543
        %v1242 = vunpack.c.l.b16 %v544
        %v1243 = vunpack.c.h.b16 %v544
        %v1244 = vpack.c.b16 %v872, %v860
        %v1245 = vpack.c.b16 %v873, %v861
        %v1246 = vpack.c.b16 %v874, %v862
        %v1247 = vpack.c.b16 %v875, %v863
        %v1248 = vpack.c.b16 %v876, %v864
        %v1249 = vpack.c.b16 %v877, %v865
        %v1250 = vpack.c.b16 %v878, %v866
        %v1251 = vpack.c.b16 %v879, %v867
        %v1252 = vpack.c.b16 %v880, %v868
        %v1253 = vpack.c.b16 %v881, %v869
        %v1254 = vpack.c.b16 %v882, %v870
        %v1255 = vpack.c.b16 %v883, %v871
        %v1256 = vpack.c.b16 %v896, %v884
        %v1257 = vpack.c.b16 %v897, %v885
        %v1258 = vpack.c.b16 %v898, %v886
        %v1259 = vpack.c.b16 %v899, %v887
        %v1260 = vpack.c.b16 %v900, %v888
        %v1261 = vpack.c.b16 %v901, %v889
        %v1262 = vpack.c.b16 %v902, %v890
        %v1263 = vpack.c.b16 %v903, %v891
        %v1264 = vpack.c.b16 %v904, %v892
        %v1265 = vpack.c.b16 %v905, %v893
        %v1266 = vpack.c.b16 %v906, %v894
        %v1267 = vpack.c.b16 %v907, %v895
        %v1268 = vpack.c.b16 %v920, %v908
        %v1269 = vpack.c.b16 %v921, %v909
        %v1270 = vpack.c.b16 %v922, %v910
        %v1271 = vpack.c.b16 %v923, %v911
        %v1272 = vpack.c.b16 %v924, %v912
        %v1273 = vpack.c.b16 %v925, %v913
        %v1274 = vpack.c.b16 %v926, %v914
        %v1275 = vpack.c.b16 %v927, %v915
        %v1276 = vpack.c.b16 %v928, %v916
        %v1277 = vpack.c.b16 %v929, %v917
        %v1278 = vpack.c.b16 %v930, %v918
        %v1279 = vpack.c.b16 %v931, %v919
        %v1280 = vpack.c.b16 %v944, %v932
        %v1281 = vpack.c.b16 %v945, %v933
        %v1282 = vpack.c.b16 %v946, %v934
        %v1283 = vpack.c.b16 %v947, %v935
        %v1284 = vpack.c.b16 %v948, %v936
        %v1285 = vpack.c.b16 %v949, %v937
        %v1286 = vpack.c.b16 %v950, %v938
        %v1287 = vpack.c.b16 %v951, %v939
        %v1288 = vpack.c.b16 %v952, %v940
        %v1289 = vpack.c.b16 %v953, %v941
        %v1290 = vpack.c.b16 %v954, %v942
        %v1291 = vpack.c.b16 %v955, %v943
        %v1292 = vpack.c.b16 %v968, %v956
        %v1293 = vpack.c.b16 %v969, %v957
        %v1294 = vpack.c.b16 %v970, %v958
        %v1295 = vpack.c.b16 %v971, %v959
        %v1296 = vpack.c.b16 %v972, %v960
        %v1297 = vpack.c.b16 %v973, %v961
        %v1298 = vpack.c.b16 %v974, %v962
        %v1299 = vpack.c.b16 %v975, %v963
        %v1300 = vpack.c.b16 %v976, %v964
        %v1301 = vpack.c.b16 %v977, %v965
        %v1302 = vpack.c.b16 %v978, %v966
        %v1303 = vpack.c.b16 %v979, %v967
        %v1304 = vpack.c.b16 %v992, %v980
        %v1305 = vpack.c.b16 %v993, %v981
        %v1306 = vpack.c.b16 %v994, %v982
        %v1307 = vpack.c.b16 %v995, %v983
        %v1308 = vpack.c.b16 %v996, %v984
        %v1309 = vpack.c.b16 %v997, %v985
        %v1310 = vpack.c.b16 %v998, %v986
        %v1311 = vpack.c.b16 %v999, %v987
        %v1312 = vpack.c.b16 %v1000, %v988
        %v1313 = vpack.c.b16 %v1001, %v989
        %v1314 = vpack.c.b16 %v1002, %v990
        %v1315 = vpack.c.b16 %v1003, %v991
        %v1316 = vpack.c.b16 %v1016, %v1004
        %v1317 = vpack.c.b16 %v1017, %v1005
        %v1318 = vpack.c.b16 %v1018, %v1006
        %v1319 = vpack.c.b16 %v1019, %v1007
        %v1320 = vpack.c.b16 %v1020, %v1008
        %v1321 = vpack.c.b16 %v1021, %v1009
        %v1322 = vpack.c.b16 %v1022, %v1010
        %v1323 = vpack.c.b16 %v1023, %v1011
        %v1324 = vpack.c.b16 %v1024, %v1012
        %v1325 = vpack.c.b16 %v1025, %v1013
        %v1326 = vpack.c.b16 %v1026, %v1014
        %v1327 = vpack.c.b16 %v1027, %v1015
        %v1328 = vpack.c.b16 %v1040, %v1028
        %v1329 = vpack.c.b16 %v1041, %v1029
        %v1330 = vpack.c.b16 %v1042, %v1030
        %v1331 = vpack.c.b16 %v1043, %v1031
        %v1332 = vpack.c.b16 %v1044, %v1032
        %v1333 = vpack.c.b16 %v1045, %v1033
        %v1334 = vpack.c.b16 %v1046, %v1034
        %v1335 = vpack.c.b16 %v1047, %v1035
        %v1336 = vpack.c.b16 %v1048, %v1036
        %v1337 = vpack.c.b16 %v1049, %v1037
        %v1338 = vpack.c.b16 %v1050, %v1038
        %v1339 = vpack.c.b16 %v1051, %v1039
        %v1340 = vpack.c.b16 %v1064, %v1052
        %v1341 = vpack.c.b16 %v1065, %v1053
        %v1342 = vpack.c.b16 %v1066, %v1054
        %v1343 = vpack.c.b16 %v1067, %v1055
        %v1344 = vpack.c.b16 %v1068, %v1056
        %v1345 = vpack.c.b16 %v1069, %v1057
        %v1346 = vpack.c.b16 %v1070, %v1058
        %v1347 = vpack.c.b16 %v1071, %v1059
        %v1348 = vpack.c.b16 %v1072, %v1060
        %v1349 = vpack.c.b16 %v1073, %v1061
        %v1350 = vpack.c.b16 %v1074, %v1062
        %v1351 = vpack.c.b16 %v1075, %v1063
        %v1352 = vpack.c.b16 %v1088, %v1076
        %v1353 = vpack.c.b16 %v1089, %v1077
        %v1354 = vpack.c.b16 %v1090, %v1078
        %v1355 = vpack.c.b16 %v1091, %v1079
        %v1356 = vpack.c.b16 %v1092, %v1080
        %v1357 = vpack.c.b16 %v1093, %v1081
        %v1358 = vpack.c.b16 %v1094, %v1082
        %v1359 = vpack.c.b16 %v1095, %v1083
        %v1360 = vpack.c.b16 %v1096, %v1084
        %v1361 = vpack.c.b16 %v1097, %v1085
        %v1362 = vpack.c.b16 %v1098, %v1086
        %v1363 = vpack.c.b16 %v1099, %v1087
        %v1364 = vpack.c.b16 %v1112, %v1100
        %v1365 = vpack.c.b16 %v1113, %v1101
        %v1366 = vpack.c.b16 %v1114, %v1102
        %v1367 = vpack.c.b16 %v1115, %v1103
        %v1368 = vpack.c.b16 %v1116, %v1104
        %v1369 = vpack.c.b16 %v1117, %v1105
        %v1370 = vpack.c.b16 %v1118, %v1106
        %v1371 = vpack.c.b16 %v1119, %v1107
        %v1372 = vpack.c.b16 %v1120, %v1108
        %v1373 = vpack.c.b16 %v1121, %v1109
        %v1374 = vpack.c.b16 %v1122, %v1110
        %v1375 = vpack.c.b16 %v1123, %v1111
        %v1376 = vpack.c.b16 %v1136, %v1124
        %v1377 = vpack.c.b16 %v1137, %v1125
        %v1378 = vpack.c.b16 %v1138, %v1126
        %v1379 = vpack.c.b16 %v1139, %v1127
        %v1380 = vpack.c.b16 %v1140, %v1128
        %v1381 = vpack.c.b16 %v1141, %v1129
        %v1382 = vpack.c.b16 %v1142, %v1130
        %v1383 = vpack.c.b16 %v1143, %v1131
        %v1384 = vpack.c.b16 %v1144, %v1132
        %v1385 = vpack.c.b16 %v1145, %v1133
        %v1386 = vpack.c.b16 %v1146, %v1134
        %v1387 = vpack.c.b16 %v1147, %v1135
        %v1388 = vpack.c.b16 %v1160, %v1148
        %v1389 = vpack.c.b16 %v1161, %v1149
        %v1390 = vpack.c.b16 %v1162, %v1150
        %v1391 = vpack.c.b16 %v1163, %v1151
        %v1392 = vpack.c.b16 %v1164, %v1152
        %v1393 = vpack.c.b16 %v1165, %v1153
        %v1394 = vpack.c.b16 %v1166, %v1154
        %v1395 = vpack.c.b16 %v1167, %v1155
        %v1396 = vpack.c.b16 %v1168, %v1156
        %v1397 = vpack.c.b16 %v1169, %v1157
        %v1398 = vpack.c.b16 %v1170, %v1158
        %v1399 = vpack.c.b16 %v1171, %v1159
        %v1400 = vpack.c.b16 %v1184, %v1172
        %v1401 = vpack.c.b16 %v1185, %v1173
        %v1402 = vpack.c.b16 %v1186, %v1174
        %v1403 = vpack.c.b16 %v1187, %v1175
        %v1404 = vpack.c.b16 %v1188, %v1176
        %v1405 = vpack.c.b16 %v1189, %v1177
        %v1406 = vpack.c.b16 %v1190, %v1178
        %v1407 = vpack.c.b16 %v1191, %v1179
        %v1408 = vpack.c.b16 %v1192, %v1180
        %v1409 = vpack.c.b16 %v1193, %v1181
        %v1410 = vpack.c.b16 %v1194, %v1182
        %v1411 = vpack.c.b16 %v1195, %v1183
        %v1412 = vpack.c.b16 %v1208, %v1196
        %v1413 = vpack.c.b16 %v1209, %v1197
        %v1414 = vpack.c.b16 %v1210, %v1198
        %v1415 = vpack.c.b16 %v1211, %v1199
        %v1416 = vpack.c.b16 %v1212, %v1200
        %v1417 = vpack.c.b16 %v1213, %v1201
        %v1418 = vpack.c.b16 %v1214, %v1202
        %v1419 = vpack.c.b16 %v1215, %v1203
        %v1420 = vpack.c.b16 %v1216, %v1204
        %v1421 = vpack.c.b16 %v1217, %v1205
        %v1422 = vpack.c.b16 %v1218, %v1206
        %v1423 = vpack.c.b16 %v1219, %v1207
        %v1424 = vpack.c.b16 %v1232, %v1220
        %v1425 = vpack.c.b16 %v1233, %v1221
        %v1426 = vpack.c.b16 %v1234, %v1222
        %v1427 = vpack.c.b16 %v1235, %v1223
        %v1428 = vpack.c.b16 %v1236, %v1224
        %v1429 = vpack.c.b16 %v1237, %v1225
        %v1430 = vpack.c.b16 %v1238, %v1226
        %v1431 = vpack.c.b16 %v1239, %v1227
        %v1432 = vpack.c.b16 %v1240, %v1228
        %v1433 = vpack.c.b16 %v1241, %v1229
        %v1434 = vpack.c.b16 %v1242, %v1230
        %v1435 = vpack.c.b16 %v1243, %v1231
        %1628 = vmatprep.subr.bf16.mxu0 %v1245
        %1629 = vmatpush1.bf16.msra.mxu0 %v1244
        %1630 = vmatprep.subr.bf16.mxu0 %v1257
        %1631 = vmatpush1.bf16.msra.mxu0 %v1256
        %1632 = vmatprep.subr.bf16.mxu0 %v1269
        %1633 = vmatpush1.bf16.msra.mxu0 %v1268
        %1634 = vmatprep.subr.bf16.mxu0 %v1281
        %1635 = vmatpush1.bf16.msra.mxu0 %v1280
        %1636 = vmatprep.subr.bf16.mxu0 %v1293
        %1637 = vmatpush1.bf16.msra.mxu0 %v1292
        %1638 = vmatprep.subr.bf16.mxu0 %v1305
        %1639 = vmatpush1.bf16.msra.mxu0 %v1304
        %1640 = vmatprep.subr.bf16.mxu0 %v1317
        %1641 = vmatpush1.bf16.msra.mxu0 %v1316
        %1642 = vmatprep.subr.bf16.mxu0 %v1329
        %1643 = vmatpush1.bf16.msra.mxu0 %v1328
        %1644 = vmatprep.subr.bf16.mxu0 %v1341
        %1645 = vmatpush1.bf16.msra.mxu0 %v1340
        %1646 = vmatprep.subr.bf16.mxu0 %v1353
        %1647 = vmatpush1.bf16.msra.mxu0 %v1352
        %1648 = vmatprep.subr.bf16.mxu0 %v1365
        %1649 = vmatpush1.bf16.msra.mxu0 %v1364
        %1650 = vmatprep.subr.bf16.mxu0 %v1377
        %1651 = vmatpush1.bf16.msra.mxu0 %v1376
        %1652 = vmatprep.subr.bf16.mxu0 %v1389
        %1653 = vmatpush1.bf16.msra.mxu0 %v1388
        %1654 = vmatprep.subr.bf16.mxu0 %v1401
        %1655 = vmatpush1.bf16.msra.mxu0 %v1400
        %1656 = vmatprep.subr.bf16.mxu0 %v1413
        %1657 = vmatpush1.bf16.msra.mxu0 %v1412
        %1658 = vmatprep.subr.bf16.mxu0 %v1425
        %1659 = vmatpush1.bf16.msra.mxu0 %v1424
        %1660 = vmatprep.mubr.bf16.mxu0 %v665
        %1661 = vmatmul.mubr.bf16.gmra.mrb[0].mxu0 %v664
        %v1662 = vpop.f32.mrb[0].mxu0
        %v1663 = vadd.f32 %v616, %v1662
        %v1664 = vpop.f32.mrb[0].mxu0
        %v1665 = vadd.f32 %v620, %v1664
        %v1666 = vpop.f32.mrb[0].mxu0
        %v1667 = vpop.f32.mrb[0].mxu0
        %1668 = vdwg.mxu0
        %1669 = vmatprep.subr.bf16.mxu0 %v1247
        %1670 = vmatpush1.bf16.msra.mxu0 %v1246
        %1671 = vmatprep.subr.bf16.mxu0 %v1259
        %1672 = vmatpush1.bf16.msra.mxu0 %v1258
        %1673 = vmatprep.subr.bf16.mxu0 %v1271
        %1674 = vmatpush1.bf16.msra.mxu0 %v1270
        %1675 = vmatprep.subr.bf16.mxu0 %v1283
        %1676 = vmatpush1.bf16.msra.mxu0 %v1282
        %1677 = vmatprep.subr.bf16.mxu0 %v1295
        %1678 = vmatpush1.bf16.msra.mxu0 %v1294
        %1679 = vmatprep.subr.bf16.mxu0 %v1307
        %1680 = vmatpush1.bf16.msra.mxu0 %v1306
        %1681 = vmatprep.subr.bf16.mxu0 %v1319
        %1682 = vmatpush1.bf16.msra.mxu0 %v1318
        %1683 = vmatprep.subr.bf16.mxu0 %v1331
        %1684 = vmatpush1.bf16.msra.mxu0 %v1330
        %1685 = vmatprep.subr.bf16.mxu0 %v1343
        %1686 = vmatpush1.bf16.msra.mxu0 %v1342
        %1687 = vmatprep.subr.bf16.mxu0 %v1355
        %1688 = vmatpush1.bf16.msra.mxu0 %v1354
        %1689 = vmatprep.subr.bf16.mxu0 %v1367
        %1690 = vmatpush1.bf16.msra.mxu0 %v1366
        %1691 = vmatprep.subr.bf16.mxu0 %v1379
        %1692 = vmatpush1.bf16.msra.mxu0 %v1378
        %1693 = vmatprep.subr.bf16.mxu0 %v1391
        %1694 = vmatpush1.bf16.msra.mxu0 %v1390
        %1695 = vmatprep.subr.bf16.mxu0 %v1403
        %1696 = vmatpush1.bf16.msra.mxu0 %v1402
        %1697 = vmatprep.subr.bf16.mxu0 %v1415
        %1698 = vmatpush1.bf16.msra.mxu0 %v1414
        %1699 = vmatprep.subr.bf16.mxu0 %v1427
        %1700 = vmatpush1.bf16.msra.mxu0 %v1426
        %1701 = vmatprep.mubr.bf16.mxu0 %v665
        %1702 = vmatmul.mubr.bf16.gmra.mrb[0].mxu0 %v664
        %v1703 = vpop.f32.mrb[0].mxu0
        %v1704 = vadd.f32 %v624, %v1703
        %v1705 = vpop.f32.mrb[0].mxu0
        %v1706 = vadd.f32 %v628, %v1705
        %v1707 = vpop.f32.mrb[0].mxu0
        %v1708 = vpop.f32.mrb[0].mxu0
        %1709 = vdwg.mxu0
        %1710 = vmatprep.subr.bf16.mxu0 %v1249
        %1711 = vmatpush1.bf16.msra.mxu0 %v1248
        %1712 = vmatprep.subr.bf16.mxu0 %v1261
        %1713 = vmatpush1.bf16.msra.mxu0 %v1260
        %1714 = vmatprep.subr.bf16.mxu0 %v1273
        %1715 = vmatpush1.bf16.msra.mxu0 %v1272
        %1716 = vmatprep.subr.bf16.mxu0 %v1285
        %1717 = vmatpush1.bf16.msra.mxu0 %v1284
        %1718 = vmatprep.subr.bf16.mxu0 %v1297
        %1719 = vmatpush1.bf16.msra.mxu0 %v1296
        %1720 = vmatprep.subr.bf16.mxu0 %v1309
        %1721 = vmatpush1.bf16.msra.mxu0 %v1308
        %1722 = vmatprep.subr.bf16.mxu0 %v1321
        %1723 = vmatpush1.bf16.msra.mxu0 %v1320
        %1724 = vmatprep.subr.bf16.mxu0 %v1333
        %1725 = vmatpush1.bf16.msra.mxu0 %v1332
        %1726 = vmatprep.subr.bf16.mxu0 %v1345
        %1727 = vmatpush1.bf16.msra.mxu0 %v1344
        %1728 = vmatprep.subr.bf16.mxu0 %v1357
        %1729 = vmatpush1.bf16.msra.mxu0 %v1356
        %1730 = vmatprep.subr.bf16.mxu0 %v1369
        %1731 = vmatpush1.bf16.msra.mxu0 %v1368
        %1732 = vmatprep.subr.bf16.mxu0 %v1381
        %1733 = vmatpush1.bf16.msra.mxu0 %v1380
        %1734 = vmatprep.subr.bf16.mxu0 %v1393
        %1735 = vmatpush1.bf16.msra.mxu0 %v1392
        %1736 = vmatprep.subr.bf16.mxu0 %v1405
        %1737 = vmatpush1.bf16.msra.mxu0 %v1404
        %1738 = vmatprep.subr.bf16.mxu0 %v1417
        %1739 = vmatpush1.bf16.msra.mxu0 %v1416
        %1740 = vmatprep.subr.bf16.mxu0 %v1429
        %1741 = vmatpush1.bf16.msra.mxu0 %v1428
        %1742 = vmatprep.mubr.bf16.mxu0 %v665
        %1743 = vmatmul.mubr.bf16.gmra.mrb[0].mxu0 %v664
        %v1744 = vpop.f32.mrb[0].mxu0
        %v1745 = vadd.f32 %v632, %v1744
        %v1746 = vpop.f32.mrb[0].mxu0
        %v1747 = vadd.f32 %v636, %v1746
        %v1748 = vpop.f32.mrb[0].mxu0
        %v1749 = vpop.f32.mrb[0].mxu0
        %1750 = vdwg.mxu0
        %1751 = vmatprep.subr.bf16.mxu0 %v1251
        %1752 = vmatpush1.bf16.msra.mxu0 %v1250
        %1753 = vmatprep.subr.bf16.mxu0 %v1263
        %1754 = vmatpush1.bf16.msra.mxu0 %v1262
        %1755 = vmatprep.subr.bf16.mxu0 %v1275
        %1756 = vmatpush1.bf16.msra.mxu0 %v1274
        %1757 = vmatprep.subr.bf16.mxu0 %v1287
        %1758 = vmatpush1.bf16.msra.mxu0 %v1286
        %1759 = vmatprep.subr.bf16.mxu0 %v1299
        %1760 = vmatpush1.bf16.msra.mxu0 %v1298
        %1761 = vmatprep.subr.bf16.mxu0 %v1311
        %1762 = vmatpush1.bf16.msra.mxu0 %v1310
        %1763 = vmatprep.subr.bf16.mxu0 %v1323
        %1764 = vmatpush1.bf16.msra.mxu0 %v1322
        %1765 = vmatprep.subr.bf16.mxu0 %v1335
        %1766 = vmatpush1.bf16.msra.mxu0 %v1334
        %1767 = vmatprep.subr.bf16.mxu0 %v1347
        %1768 = vmatpush1.bf16.msra.mxu0 %v1346
        %1769 = vmatprep.subr.bf16.mxu0 %v1359
        %1770 = vmatpush1.bf16.msra.mxu0 %v1358
        %1771 = vmatprep.subr.bf16.mxu0 %v1371
        %1772 = vmatpush1.bf16.msra.mxu0 %v1370
        %1773 = vmatprep.subr.bf16.mxu0 %v1383
        %1774 = vmatpush1.bf16.msra.mxu0 %v1382
        %1775 = vmatprep.subr.bf16.mxu0 %v1395
        %1776 = vmatpush1.bf16.msra.mxu0 %v1394
        %1777 = vmatprep.subr.bf16.mxu0 %v1407
        %1778 = vmatpush1.bf16.msra.mxu0 %v1406
        %1779 = vmatprep.subr.bf16.mxu0 %v1419
        %1780 = vmatpush1.bf16.msra.mxu0 %v1418
        %1781 = vmatprep.subr.bf16.mxu0 %v1431
        %1782 = vmatpush1.bf16.msra.mxu0 %v1430
        %1783 = vmatprep.mubr.bf16.mxu0 %v665
        %1784 = vmatmul.mubr.bf16.gmra.mrb[0].mxu0 %v664
        %v1785 = vpop.f32.mrb[0].mxu0
        %v1786 = vadd.f32 %v640, %v1785
        %v1787 = vpop.f32.mrb[0].mxu0
        %v1788 = vadd.f32 %v644, %v1787
        %v1789 = vpop.f32.mrb[0].mxu0
        %v1790 = vpop.f32.mrb[0].mxu0
        %1791 = vdwg.mxu0
        %1792 = vmatprep.subr.bf16.mxu0 %v1253
        %1793 = vmatpush1.bf16.msra.mxu0 %v1252
        %1794 = vmatprep.subr.bf16.mxu0 %v1265
        %1795 = vmatpush1.bf16.msra.mxu0 %v1264
        %1796 = vmatprep.subr.bf16.mxu0 %v1277
        %1797 = vmatpush1.bf16.msra.mxu0 %v1276
        %1798 = vmatprep.subr.bf16.mxu0 %v1289
        %1799 = vmatpush1.bf16.msra.mxu0 %v1288
        %1800 = vmatprep.subr.bf16.mxu0 %v1301
        %1801 = vmatpush1.bf16.msra.mxu0 %v1300
        %1802 = vmatprep.subr.bf16.mxu0 %v1313
        %1803 = vmatpush1.bf16.msra.mxu0 %v1312
        %1804 = vmatprep.subr.bf16.mxu0 %v1325
        %1805 = vmatpush1.bf16.msra.mxu0 %v1324
        %1806 = vmatprep.subr.bf16.mxu0 %v1337
        %1807 = vmatpush1.bf16.msra.mxu0 %v1336
        %1808 = vmatprep.subr.bf16.mxu0 %v1349
        %1809 = vmatpush1.bf16.msra.mxu0 %v1348
        %1810 = vmatprep.subr.bf16.mxu0 %v1361
        %1811 = vmatpush1.bf16.msra.mxu0 %v1360
        %1812 = vmatprep.subr.bf16.mxu0 %v1373
        %1813 = vmatpush1.bf16.msra.mxu0 %v1372
        %1814 = vmatprep.subr.bf16.mxu0 %v1385
        %1815 = vmatpush1.bf16.msra.mxu0 %v1384
        %1816 = vmatprep.subr.bf16.mxu0 %v1397
        %1817 = vmatpush1.bf16.msra.mxu0 %v1396
        %1818 = vmatprep.subr.bf16.mxu0 %v1409
        %1819 = vmatpush1.bf16.msra.mxu0 %v1408
        %1820 = vmatprep.subr.bf16.mxu0 %v1421
        %1821 = vmatpush1.bf16.msra.mxu0 %v1420
        %1822 = vmatprep.subr.bf16.mxu0 %v1433
        %1823 = vmatpush1.bf16.msra.mxu0 %v1432
        %1824 = vmatprep.mubr.bf16.mxu0 %v665
        %1825 = vmatmul.mubr.bf16.gmra.mrb[0].mxu0 %v664
        %v1826 = vpop.f32.mrb[0].mxu0
        %v1827 = vadd.f32 %v648, %v1826
        %v1828 = vpop.f32.mrb[0].mxu0
        %v1829 = vadd.f32 %v652, %v1828
        %v1830 = vpop.f32.mrb[0].mxu0
        %v1831 = vpop.f32.mrb[0].mxu0
        %1832 = vdwg.mxu0
        %1833 = vmatprep.subr.bf16.mxu0 %v1255
        %1834 = vmatpush1.bf16.msra.mxu0 %v1254
        %1835 = vmatprep.subr.bf16.mxu0 %v1267
        %1836 = vmatpush1.bf16.msra.mxu0 %v1266
        %1837 = vmatprep.subr.bf16.mxu0 %v1279
        %1838 = vmatpush1.bf16.msra.mxu0 %v1278
        %1839 = vmatprep.subr.bf16.mxu0 %v1291
        %1840 = vmatpush1.bf16.msra.mxu0 %v1290
        %1841 = vmatprep.subr.bf16.mxu0 %v1303
        %1842 = vmatpush1.bf16.msra.mxu0 %v1302
        %1843 = vmatprep.subr.bf16.mxu0 %v1315
        %1844 = vmatpush1.bf16.msra.mxu0 %v1314
        %1845 = vmatprep.subr.bf16.mxu0 %v1327
        %1846 = vmatpush1.bf16.msra.mxu0 %v1326
        %1847 = vmatprep.subr.bf16.mxu0 %v1339
        %1848 = vmatpush1.bf16.msra.mxu0 %v1338
        %1849 = vmatprep.subr.bf16.mxu0 %v1351
        %1850 = vmatpush1.bf16.msra.mxu0 %v1350
        %1851 = vmatprep.subr.bf16.mxu0 %v1363
        %1852 = vmatpush1.bf16.msra.mxu0 %v1362
        %1853 = vmatprep.subr.bf16.mxu0 %v1375
        %1854 = vmatpush1.bf16.msra.mxu0 %v1374
        %1855 = vmatprep.subr.bf16.mxu0 %v1387
        %1856 = vmatpush1.bf16.msra.mxu0 %v1386
        %1857 = vmatprep.subr.bf16.mxu0 %v1399
        %1858 = vmatpush1.bf16.msra.mxu0 %v1398
        %1859 = vmatprep.subr.bf16.mxu0 %v1411
        %1860 = vmatpush1.bf16.msra.mxu0 %v1410
        %1861 = vmatprep.subr.bf16.mxu0 %v1423
        %1862 = vmatpush1.bf16.msra.mxu0 %v1422
        %1863 = vmatprep.subr.bf16.mxu0 %v1435
        %1864 = vmatpush1.bf16.msra.mxu0 %v1434
        %1865 = vmatprep.mubr.bf16.mxu0 %v665
        %1866 = vmatmul.mubr.bf16.gmra.mrb[0].mxu0 %v664
        %v1867 = vpop.f32.mrb[0].mxu0
        %v1868 = vadd.f32 %v656, %v1867
        %v1869 = vpop.f32.mrb[0].mxu0
        %v1870 = vadd.f32 %v660, %v1869
        %v1871 = vpop.f32.mrb[0].mxu0
        %v1872 = vpop.f32.mrb[0].mxu0
        %1873 = vdwg.mxu0
        %v1874 = vpack.c.bf16 %v1663, %v1663
        %v1875 = vpack.c.bf16 %v1665, %v1665
        %v1876 = vpack.c.bf16 %v1704, %v1704
        %v1877 = vpack.c.bf16 %v1706, %v1706
        %v1878 = vpack.c.bf16 %v1745, %v1745
        %v1879 = vpack.c.bf16 %v1747, %v1747
        %v1880 = vpack.c.bf16 %v1786, %v1786
        %v1881 = vpack.c.bf16 %v1788, %v1788
        %v1882 = vpack.c.bf16 %v1827, %v1827
        %v1883 = vpack.c.bf16 %v1829, %v1829
        %v1884 = vpack.c.bf16 %v1868, %v1868
        %v1885 = vpack.c.bf16 %v1870, %v1870
        %v1898 = vunpack.c.l.b16 %v1874
        %v1899 = vunpack.c.l.b16 %v1875
        %v1900 = vunpack.c.l.b16 %v1876
        %v1901 = vunpack.c.l.b16 %v1877
        %v1902 = vunpack.c.l.b16 %v1878
        %v1903 = vunpack.c.l.b16 %v1879
        %v1904 = vunpack.c.l.b16 %v1880
        %v1905 = vunpack.c.l.b16 %v1881
        %v1906 = vunpack.c.l.b16 %v1882
        %v1907 = vunpack.c.l.b16 %v1883
        %v1908 = vunpack.c.l.b16 %v1884
        %v1909 = vunpack.c.l.b16 %v1885
        %v1910 = vpack.c.b16 %v1899, %v1898
        %v1911 = vpack.c.b16 %v1901, %v1900
        %v1912 = vpack.c.b16 %v1903, %v1902
        %v1913 = vpack.c.b16 %v1905, %v1904
        %v1914 = vpack.c.b16 %v1907, %v1906
        %v1915 = vpack.c.b16 %v1909, %v1908
        %1922 = vst [vmem:[#allocation2] sm:$0xff] %v1910
        %1923 = vst [vmem:[#allocation2 + $0x8] sm:$0xff] %v1911
        %1924 = vst [vmem:[#allocation2 + $0x10] sm:$0xff] %v1912
        %1925 = vst [vmem:[#allocation2 + $0x18] sm:$0xff] %v1913
        %1926 = vst [vmem:[#allocation2 + $0x20] sm:$0xff] %v1914
        %1927 = vst [vmem:[#allocation2 + $0x28] sm:$0xff] %v1915
        %1928 = vst [vmem:[#allocation3] sm:$0xff] 0.0
        %1929 = vst [vmem:[#allocation3 + $0x8] sm:$0xff] 0.0
        %v1930 = vld [vmem:[#allocation2] sm:$0xf]
        %v1931 = vld [vmem:[#allocation2 + $0x10] sm:$0xf]
        %v1932 = vld [vmem:[#allocation2 + $0x20] sm:$0xf]
        %1933 = vmatprep.subr.bf16.mxu0 0
        %1934 = vmatpush1.bf16.xpose.msra.mxu0 %v1931
        %1935 = vmatprep.subr.bf16.mxu0 0
        %1936 = vmatpush1.bf16.xpose.msra.mxu0 0
        %1937 = vmatprep.subr.bf16.mxu0 0
        %1938 = vmatpush1.bf16.xpose.msra.mxu0 0
        %1939 = vmatprep.subr.bf16.mxu0 0
        %1940 = vmatpush1.bf16.xpose.msra.mxu0 0
        %1941 = vmatprep.subr.bf16.mxu0 0
        %1942 = vmatpush1.bf16.xpose.msra.mxu0 0
        %1943 = vmatprep.subr.bf16.mxu0 0
        %1944 = vmatpush1.bf16.xpose.msra.mxu0 0
        %1945 = vmatprep.subr.bf16.mxu0 0
        %1946 = vmatpush1.bf16.xpose.msra.mxu0 0
        %1947 = vmatprep.subr.bf16.mxu0 0
        %1948 = vmatpush1.bf16.xpose.msra.mxu0 0
        %1949 = vmatprep.subr.bf16.mxu0 0
        %1950 = vmatpush1.bf16.xpose.msra.mxu0 0
        %1951 = vmatprep.subr.bf16.mxu0 0
        %1952 = vmatpush1.bf16.xpose.msra.mxu0 0
        %1953 = vmatprep.subr.bf16.mxu0 0
        %1954 = vmatpush1.bf16.xpose.msra.mxu0 0
        %1955 = vmatprep.subr.bf16.mxu0 0
        %1956 = vmatpush1.bf16.xpose.msra.mxu0 0
        %1957 = vmatprep.subr.bf16.mxu0 0
        %1958 = vmatpush1.bf16.xpose.msra.mxu0 0
        %1959 = vmatprep.subr.bf16.mxu0 0
        %1960 = vmatpush1.bf16.xpose.msra.mxu0 0
        %1961 = vmatprep.subr.bf16.mxu0 0
        %1962 = vmatpush1.bf16.xpose.msra.mxu0 0
        %1963 = vmatprep.subr.bf16.mxu0 0
        %1964 = vmatpush1.bf16.xpose.msra.mxu0 0
        %1965 = vmatprep.mubr.bf16.mxu0 0
        %1966 = vmatmul.mubr.bf16.gmra.mrb[0].mxu0 %v1930
        %v1967 = vpop.f32.mrb[0].mxu0
        %v1968 = vadd.f32 0.0, %v1967
        %v1969 = vpop.f32.mrb[0].mxu0
        %v1970 = vpop.f32.mrb[0].mxu0
        %v1971 = vpop.f32.mrb[0].mxu0
        %1972 = vdwg.mxu0
        %v1973 = vmul.f32 %v1968, 0.125
        %v1975 = vlaneseq
        %v1976 = vshrl.u32 %v1975, 7
        %v1977 = vsub.s32 0, %v1976
        %v1978 = vrot.slane %v352, %v1977
        %v1980 = vadd.f32 %v1973, %v1978
        %vm1981 = vcmask 64512
        %v1982 = vsel %vm1981, %v1980, -inf
        %1983 = vmax.xlane.f32.xlu0 %v1982
        %v1984 = vpop.xlane.xlu0 %1983
        %v1985 = vsub.f32 %v1980, %v1984
        %v1986 = vmul.f32 %v1985, 1.442695
        %v1987 = vpow.pop %v1986
        %v1988 = vsel %vm1981, %v1987, 0.0
        %1989 = vadd.xlane.f32.xlu0 %v1988
        %v1990 = vpop.xlane.xlu0 %1989
        %v1991 = vrcp.pop %v1990
        %v1992 = vpack.c.bf16 %v1987, %v1987
        %v1994 = vsel %vm1981, %v1992, 0
        %vm1996 = vcmask 1043456
        %v1998 = vsel %vm1996, %v1932, 0
        %2000 = vmatprep.subr.bf16.mxu0 0
        %2001 = vmatpush1.bf16.msra.mxu0 %v1998
        %2002 = vmatprep.subr.bf16.mxu0 0
        %2003 = vmatpush1.bf16.msra.mxu0 0
        %2004 = vmatprep.subr.bf16.mxu0 0
        %2005 = vmatpush1.bf16.msra.mxu0 0
        %2006 = vmatprep.subr.bf16.mxu0 0
        %2007 = vmatpush1.bf16.msra.mxu0 0
        %2008 = vmatprep.subr.bf16.mxu0 0
        %2009 = vmatpush1.bf16.msra.mxu0 0
        %2010 = vmatprep.subr.bf16.mxu0 0
        %2011 = vmatpush1.bf16.msra.mxu0 0
        %2012 = vmatprep.subr.bf16.mxu0 0
        %2013 = vmatpush1.bf16.msra.mxu0 0
        %2014 = vmatprep.subr.bf16.mxu0 0
        %2015 = vmatpush1.bf16.msra.mxu0 0
        %2016 = vmatprep.subr.bf16.mxu0 0
        %2017 = vmatpush1.bf16.msra.mxu0 0
        %2018 = vmatprep.subr.bf16.mxu0 0
        %2019 = vmatpush1.bf16.msra.mxu0 0
        %2020 = vmatprep.subr.bf16.mxu0 0
        %2021 = vmatpush1.bf16.msra.mxu0 0
        %2022 = vmatprep.subr.bf16.mxu0 0
        %2023 = vmatpush1.bf16.msra.mxu0 0
        %2024 = vmatprep.subr.bf16.mxu0 0
        %2025 = vmatpush1.bf16.msra.mxu0 0
        %2026 = vmatprep.subr.bf16.mxu0 0
        %2027 = vmatpush1.bf16.msra.mxu0 0
        %2028 = vmatprep.subr.bf16.mxu0 0
        %2029 = vmatpush1.bf16.msra.mxu0 0
        %2030 = vmatprep.subr.bf16.mxu0 0
        %2031 = vmatpush1.bf16.msra.mxu0 0
        %2032 = vmatprep.mubr.bf16.mxu0 0
        %2033 = vmatmul.mubr.bf16.gmra.mrb[0].mxu0 %v1994
        %v2034 = vpop.f32.mrb[0].mxu0
        %v2035 = vadd.f32 0.0, %v2034
        %v2036 = vpop.f32.mrb[0].mxu0
        %v2037 = vpop.f32.mrb[0].mxu0
        %v2038 = vpop.f32.mrb[0].mxu0
        %2039 = vdwg.mxu0
        %v2040 = vmul.f32 %v2035, %v1991
        %v2041 = vld [vmem:[#allocation3] sm:$0xff]
        %v2042 = vld [vmem:[#allocation3 + $0x8] sm:$0xff]
        %v2043 = vpack.c.bf16 %v2040, %v2040
        %v2044 = vld [vmem:[#allocation6] sm:$0xff]
        %v2045 = vld [vmem:[#allocation6 + $0x8] sm:$0xff]
        %v2046 = vld [vmem:[#allocation6 + $0x10] sm:$0xff]
        %v2047 = vld [vmem:[#allocation6 + $0x18] sm:$0xff]
        %v2048 = vld [vmem:[#allocation6 + $0x20] sm:$0xff]
        %v2049 = vld [vmem:[#allocation6 + $0x28] sm:$0xff]
        %v2050 = vld [vmem:[#allocation6 + $0x30] sm:$0xff]
        %v2051 = vld [vmem:[#allocation6 + $0x38] sm:$0xff]
        %v2052 = vld [vmem:[#allocation6 + $0x40] sm:$0xff]
        %v2053 = vld [vmem:[#allocation6 + $0x48] sm:$0xff]
        %v2054 = vld [vmem:[#allocation6 + $0x50] sm:$0xff]
        %v2055 = vld [vmem:[#allocation6 + $0x58] sm:$0xff]
        %v2056 = vld [vmem:[#allocation6 + $0x60] sm:$0xff]
        %v2057 = vld [vmem:[#allocation6 + $0x68] sm:$0xff]
        %v2058 = vld [vmem:[#allocation6 + $0x70] sm:$0xff]
        %v2059 = vld [vmem:[#allocation6 + $0x78] sm:$0xff]
        %v2076 = vunpack.c.l.b16 %v2044
        %v2077 = vunpack.c.h.b16 %v2044
        %v2078 = vunpack.c.l.b16 %v2045
        %v2079 = vunpack.c.h.b16 %v2045
        %v2080 = vunpack.c.l.b16 %v2046
        %v2081 = vunpack.c.h.b16 %v2046
        %v2082 = vunpack.c.l.b16 %v2047
        %v2083 = vunpack.c.h.b16 %v2047
        %v2084 = vunpack.c.l.b16 %v2048
        %v2085 = vunpack.c.h.b16 %v2048
        %v2086 = vunpack.c.l.b16 %v2049
        %v2087 = vunpack.c.h.b16 %v2049
        %v2088 = vunpack.c.l.b16 %v2050
        %v2089 = vunpack.c.h.b16 %v2050
        %v2090 = vunpack.c.l.b16 %v2051
        %v2091 = vunpack.c.h.b16 %v2051
        %v2092 = vunpack.c.l.b16 %v2052
        %v2093 = vunpack.c.h.b16 %v2052
        %v2094 = vunpack.c.l.b16 %v2053
        %v2095 = vunpack.c.h.b16 %v2053
        %v2096 = vunpack.c.l.b16 %v2054
        %v2097 = vunpack.c.h.b16 %v2054
        %v2098 = vunpack.c.l.b16 %v2055
        %v2099 = vunpack.c.h.b16 %v2055
        %v2100 = vunpack.c.l.b16 %v2056
        %v2101 = vunpack.c.h.b16 %v2056
        %v2102 = vunpack.c.l.b16 %v2057
        %v2103 = vunpack.c.h.b16 %v2057
        %v2104 = vunpack.c.l.b16 %v2058
        %v2105 = vunpack.c.h.b16 %v2058
        %v2106 = vunpack.c.l.b16 %v2059
        %v2107 = vunpack.c.h.b16 %v2059
        %v2108 = vpack.c.b16 %v2078, %v2076
        %v2109 = vpack.c.b16 %v2079, %v2077
        %v2110 = vpack.c.b16 %v2082, %v2080
        %v2111 = vpack.c.b16 %v2083, %v2081
        %v2112 = vpack.c.b16 %v2086, %v2084
        %v2113 = vpack.c.b16 %v2087, %v2085
        %v2114 = vpack.c.b16 %v2090, %v2088
        %v2115 = vpack.c.b16 %v2091, %v2089
        %v2116 = vpack.c.b16 %v2094, %v2092
        %v2117 = vpack.c.b16 %v2095, %v2093
        %v2118 = vpack.c.b16 %v2098, %v2096
        %v2119 = vpack.c.b16 %v2099, %v2097
        %v2120 = vpack.c.b16 %v2102, %v2100
        %v2121 = vpack.c.b16 %v2103, %v2101
        %v2122 = vpack.c.b16 %v2106, %v2104
        %v2123 = vpack.c.b16 %v2107, %v2105
        %2140 = vmatprep.subr.bf16.mxu0 %v2109
        %2141 = vmatpush1.bf16.msra.mxu0 %v2108
        %2142 = vmatprep.subr.bf16.mxu0 %v2111
        %2143 = vmatpush1.bf16.msra.mxu0 %v2110
        %2144 = vmatprep.subr.bf16.mxu0 %v2113
        %2145 = vmatpush1.bf16.msra.mxu0 %v2112
        %2146 = vmatprep.subr.bf16.mxu0 %v2115
        %2147 = vmatpush1.bf16.msra.mxu0 %v2114
        %2148 = vmatprep.subr.bf16.mxu0 %v2117
        %2149 = vmatpush1.bf16.msra.mxu0 %v2116
        %2150 = vmatprep.subr.bf16.mxu0 %v2119
        %2151 = vmatpush1.bf16.msra.mxu0 %v2118
        %2152 = vmatprep.subr.bf16.mxu0 %v2121
        %2153 = vmatpush1.bf16.msra.mxu0 %v2120
        %2154 = vmatprep.subr.bf16.mxu0 %v2123
        %2155 = vmatpush1.bf16.msra.mxu0 %v2122
        %2156 = vmatprep.subr.bf16.mxu0 0
        %2157 = vmatpush1.bf16.msra.mxu0 0
        %2158 = vmatprep.subr.bf16.mxu0 0
        %2159 = vmatpush1.bf16.msra.mxu0 0
        %2160 = vmatprep.subr.bf16.mxu0 0
        %2161 = vmatpush1.bf16.msra.mxu0 0
        %2162 = vmatprep.subr.bf16.mxu0 0
        %2163 = vmatpush1.bf16.msra.mxu0 0
        %2164 = vmatprep.subr.bf16.mxu0 0
        %2165 = vmatpush1.bf16.msra.mxu0 0
        %2166 = vmatprep.subr.bf16.mxu0 0
        %2167 = vmatpush1.bf16.msra.mxu0 0
        %2168 = vmatprep.subr.bf16.mxu0 0
        %2169 = vmatpush1.bf16.msra.mxu0 0
        %2170 = vmatprep.subr.bf16.mxu0 0
        %2171 = vmatpush1.bf16.msra.mxu0 0
        %2172 = vmatprep.mubr.bf16.mxu0 0
        %2173 = vmatmul.mubr.bf16.gmra.mrb[0].mxu0 %v2043
        %v2174 = vpop.f32.mrb[0].mxu0
        %v2175 = vadd.f32 0.0, %v2174
        %v2176 = vpop.f32.mrb[0].mxu0
        %v2177 = vadd.f32 0.0, %v2176
        %v2178 = vpop.f32.mrb[0].mxu0
        %v2179 = vpop.f32.mrb[0].mxu0
        %2180 = vdwg.mxu0
        %v2181 = vadd.f32 %v2041, %v2175
        %v2182 = vadd.f32 %v2042, %v2177
        %2183 = vst [vmem:[#allocation3] sm:$0xff] %v2181
        %2184 = vst [vmem:[#allocation3 + $0x8] sm:$0xff] %v2182
        %v2185 = vld [vmem:[#allocation2 + $0x4] sm:$0xf]
        %v2186 = vld [vmem:[#allocation2 + $0x14] sm:$0xf]
        %v2187 = vld [vmem:[#allocation2 + $0x24] sm:$0xf]
        %2188 = vmatprep.subr.bf16.mxu0 0
        %2189 = vmatpush1.bf16.xpose.msra.mxu0 %v2186
        %2190 = vmatprep.subr.bf16.mxu0 0
        %2191 = vmatpush1.bf16.xpose.msra.mxu0 0
        %2192 = vmatprep.subr.bf16.mxu0 0
        %2193 = vmatpush1.bf16.xpose.msra.mxu0 0
        %2194 = vmatprep.subr.bf16.mxu0 0
        %2195 = vmatpush1.bf16.xpose.msra.mxu0 0
        %2196 = vmatprep.subr.bf16.mxu0 0
        %2197 = vmatpush1.bf16.xpose.msra.mxu0 0
        %2198 = vmatprep.subr.bf16.mxu0 0
        %2199 = vmatpush1.bf16.xpose.msra.mxu0 0
        %2200 = vmatprep.subr.bf16.mxu0 0
        %2201 = vmatpush1.bf16.xpose.msra.mxu0 0
        %2202 = vmatprep.subr.bf16.mxu0 0
        %2203 = vmatpush1.bf16.xpose.msra.mxu0 0
        %2204 = vmatprep.subr.bf16.mxu0 0
        %2205 = vmatpush1.bf16.xpose.msra.mxu0 0
        %2206 = vmatprep.subr.bf16.mxu0 0
        %2207 = vmatpush1.bf16.xpose.msra.mxu0 0
        %2208 = vmatprep.subr.bf16.mxu0 0
        %2209 = vmatpush1.bf16.xpose.msra.mxu0 0
        %2210 = vmatprep.subr.bf16.mxu0 0
        %2211 = vmatpush1.bf16.xpose.msra.mxu0 0
        %2212 = vmatprep.subr.bf16.mxu0 0
        %2213 = vmatpush1.bf16.xpose.msra.mxu0 0
        %2214 = vmatprep.subr.bf16.mxu0 0
        %2215 = vmatpush1.bf16.xpose.msra.mxu0 0
        %2216 = vmatprep.subr.bf16.mxu0 0
        %2217 = vmatpush1.bf16.xpose.msra.mxu0 0
        %2218 = vmatprep.subr.bf16.mxu0 0
        %2219 = vmatpush1.bf16.xpose.msra.mxu0 0
        %2220 = vmatprep.mubr.bf16.mxu0 0
        %2221 = vmatmul.mubr.bf16.gmra.mrb[0].mxu0 %v2185
        %v2222 = vpop.f32.mrb[0].mxu0
        %v2223 = vadd.f32 0.0, %v2222
        %v2224 = vpop.f32.mrb[0].mxu0
        %v2225 = vpop.f32.mrb[0].mxu0
        %v2226 = vpop.f32.mrb[0].mxu0
        %2227 = vdwg.mxu0
        %v2228 = vmul.f32 %v2223, 0.125
        %v2229 = vadd.f32 %v2228, %v1978
        %v2230 = vsel %vm1981, %v2229, -inf
        %2231 = vmax.xlane.f32.xlu0 %v2230
        %v2232 = vpop.xlane.xlu0 %2231
        %v2233 = vsub.f32 %v2229, %v2232
        %v2234 = vmul.f32 %v2233, 1.442695
        %v2235 = vpow.pop %v2234
        %v2236 = vsel %vm1981, %v2235, 0.0
        %2237 = vadd.xlane.f32.xlu0 %v2236
        %v2238 = vpop.xlane.xlu0 %2237
        %v2239 = vrcp.pop %v2238
        %v2240 = vpack.c.bf16 %v2235, %v2235
        %v2242 = vsel %vm1981, %v2240, 0
        %v2245 = vsel %vm1996, %v2187, 0
        %2247 = vmatprep.subr.bf16.mxu0 0
        %2248 = vmatpush1.bf16.msra.mxu0 %v2245
        %2249 = vmatprep.subr.bf16.mxu0 0
        %2250 = vmatpush1.bf16.msra.mxu0 0
        %2251 = vmatprep.subr.bf16.mxu0 0
        %2252 = vmatpush1.bf16.msra.mxu0 0
        %2253 = vmatprep.subr.bf16.mxu0 0
        %2254 = vmatpush1.bf16.msra.mxu0 0
        %2255 = vmatprep.subr.bf16.mxu0 0
        %2256 = vmatpush1.bf16.msra.mxu0 0
        %2257 = vmatprep.subr.bf16.mxu0 0
        %2258 = vmatpush1.bf16.msra.mxu0 0
        %2259 = vmatprep.subr.bf16.mxu0 0
        %2260 = vmatpush1.bf16.msra.mxu0 0
        %2261 = vmatprep.subr.bf16.mxu0 0
        %2262 = vmatpush1.bf16.msra.mxu0 0
        %2263 = vmatprep.subr.bf16.mxu0 0
        %2264 = vmatpush1.bf16.msra.mxu0 0
        %2265 = vmatprep.subr.bf16.mxu0 0
        %2266 = vmatpush1.bf16.msra.mxu0 0
        %2267 = vmatprep.subr.bf16.mxu0 0
        %2268 = vmatpush1.bf16.msra.mxu0 0
        %2269 = vmatprep.subr.bf16.mxu0 0
        %2270 = vmatpush1.bf16.msra.mxu0 0
        %2271 = vmatprep.subr.bf16.mxu0 0
        %2272 = vmatpush1.bf16.msra.mxu0 0
        %2273 = vmatprep.subr.bf16.mxu0 0
        %2274 = vmatpush1.bf16.msra.mxu0 0
        %2275 = vmatprep.subr.bf16.mxu0 0
        %2276 = vmatpush1.bf16.msra.mxu0 0
        %2277 = vmatprep.subr.bf16.mxu0 0
        %2278 = vmatpush1.bf16.msra.mxu0 0
        %2279 = vmatprep.mubr.bf16.mxu0 0
        %2280 = vmatmul.mubr.bf16.gmra.mrb[0].mxu0 %v2242
        %v2281 = vpop.f32.mrb[0].mxu0
        %v2282 = vadd.f32 0.0, %v2281
        %v2283 = vpop.f32.mrb[0].mxu0
        %v2284 = vpop.f32.mrb[0].mxu0
        %v2285 = vpop.f32.mrb[0].mxu0
        %2286 = vdwg.mxu0
        %v2287 = vmul.f32 %v2282, %v2239
        %v2288 = vld [vmem:[#allocation3] sm:$0xff]
        %v2289 = vld [vmem:[#allocation3 + $0x8] sm:$0xff]
        %v2290 = vpack.c.bf16 %v2287, %v2287
        %v2291 = vld [vmem:[#allocation6 + $0x80] sm:$0xff]
        %v2292 = vld [vmem:[#allocation6 + $0x88] sm:$0xff]
        %v2293 = vld [vmem:[#allocation6 + $0x90] sm:$0xff]
        %v2294 = vld [vmem:[#allocation6 + $0x98] sm:$0xff]
        %v2295 = vld [vmem:[#allocation6 + $0xa0] sm:$0xff]
        %v2296 = vld [vmem:[#allocation6 + $0xa8] sm:$0xff]
        %v2297 = vld [vmem:[#allocation6 + $0xb0] sm:$0xff]
        %v2298 = vld [vmem:[#allocation6 + $0xb8] sm:$0xff]
        %v2299 = vld [vmem:[#allocation6 + $0xc0] sm:$0xff]
        %v2300 = vld [vmem:[#allocation6 + $0xc8] sm:$0xff]
        %v2301 = vld [vmem:[#allocation6 + $0xd0] sm:$0xff]
        %v2302 = vld [vmem:[#allocation6 + $0xd8] sm:$0xff]
        %v2303 = vld [vmem:[#allocation6 + $0xe0] sm:$0xff]
        %v2304 = vld [vmem:[#allocation6 + $0xe8] sm:$0xff]
        %v2305 = vld [vmem:[#allocation6 + $0xf0] sm:$0xff]
        %v2306 = vld [vmem:[#allocation6 + $0xf8] sm:$0xff]
        %v2323 = vunpack.c.l.b16 %v2291
        %v2324 = vunpack.c.h.b16 %v2291
        %v2325 = vunpack.c.l.b16 %v2292
        %v2326 = vunpack.c.h.b16 %v2292
        %v2327 = vunpack.c.l.b16 %v2293
        %v2328 = vunpack.c.h.b16 %v2293
        %v2329 = vunpack.c.l.b16 %v2294
        %v2330 = vunpack.c.h.b16 %v2294
        %v2331 = vunpack.c.l.b16 %v2295
        %v2332 = vunpack.c.h.b16 %v2295
        %v2333 = vunpack.c.l.b16 %v2296
        %v2334 = vunpack.c.h.b16 %v2296
        %v2335 = vunpack.c.l.b16 %v2297
        %v2336 = vunpack.c.h.b16 %v2297
        %v2337 = vunpack.c.l.b16 %v2298
        %v2338 = vunpack.c.h.b16 %v2298
        %v2339 = vunpack.c.l.b16 %v2299
        %v2340 = vunpack.c.h.b16 %v2299
        %v2341 = vunpack.c.l.b16 %v2300
        %v2342 = vunpack.c.h.b16 %v2300
        %v2343 = vunpack.c.l.b16 %v2301
        %v2344 = vunpack.c.h.b16 %v2301
        %v2345 = vunpack.c.l.b16 %v2302
        %v2346 = vunpack.c.h.b16 %v2302
        %v2347 = vunpack.c.l.b16 %v2303
        %v2348 = vunpack.c.h.b16 %v2303
        %v2349 = vunpack.c.l.b16 %v2304
        %v2350 = vunpack.c.h.b16 %v2304
        %v2351 = vunpack.c.l.b16 %v2305
        %v2352 = vunpack.c.h.b16 %v2305
        %v2353 = vunpack.c.l.b16 %v2306
        %v2354 = vunpack.c.h.b16 %v2306
        %v2355 = vpack.c.b16 %v2325, %v2323
        %v2356 = vpack.c.b16 %v2326, %v2324
        %v2357 = vpack.c.b16 %v2329, %v2327
        %v2358 = vpack.c.b16 %v2330, %v2328
        %v2359 = vpack.c.b16 %v2333, %v2331
        %v2360 = vpack.c.b16 %v2334, %v2332
        %v2361 = vpack.c.b16 %v2337, %v2335
        %v2362 = vpack.c.b16 %v2338, %v2336
        %v2363 = vpack.c.b16 %v2341, %v2339
        %v2364 = vpack.c.b16 %v2342, %v2340
        %v2365 = vpack.c.b16 %v2345, %v2343
        %v2366 = vpack.c.b16 %v2346, %v2344
        %v2367 = vpack.c.b16 %v2349, %v2347
        %v2368 = vpack.c.b16 %v2350, %v2348
        %v2369 = vpack.c.b16 %v2353, %v2351
        %v2370 = vpack.c.b16 %v2354, %v2352
        %2387 = vmatprep.subr.bf16.mxu0 %v2356
        %2388 = vmatpush1.bf16.msra.mxu0 %v2355
        %2389 = vmatprep.subr.bf16.mxu0 %v2358
        %2390 = vmatpush1.bf16.msra.mxu0 %v2357
        %2391 = vmatprep.subr.bf16.mxu0 %v2360
        %2392 = vmatpush1.bf16.msra.mxu0 %v2359
        %2393 = vmatprep.subr.bf16.mxu0 %v2362
        %2394 = vmatpush1.bf16.msra.mxu0 %v2361
        %2395 = vmatprep.subr.bf16.mxu0 %v2364
        %2396 = vmatpush1.bf16.msra.mxu0 %v2363
        %2397 = vmatprep.subr.bf16.mxu0 %v2366
        %2398 = vmatpush1.bf16.msra.mxu0 %v2365
        %2399 = vmatprep.subr.bf16.mxu0 %v2368
        %2400 = vmatpush1.bf16.msra.mxu0 %v2367
        %2401 = vmatprep.subr.bf16.mxu0 %v2370
        %2402 = vmatpush1.bf16.msra.mxu0 %v2369
        %2403 = vmatprep.subr.bf16.mxu0 0
        %2404 = vmatpush1.bf16.msra.mxu0 0
        %2405 = vmatprep.subr.bf16.mxu0 0
        %2406 = vmatpush1.bf16.msra.mxu0 0
        %2407 = vmatprep.subr.bf16.mxu0 0
        %2408 = vmatpush1.bf16.msra.mxu0 0
        %2409 = vmatprep.subr.bf16.mxu0 0
        %2410 = vmatpush1.bf16.msra.mxu0 0
        %2411 = vmatprep.subr.bf16.mxu0 0
        %2412 = vmatpush1.bf16.msra.mxu0 0
        %2413 = vmatprep.subr.bf16.mxu0 0
        %2414 = vmatpush1.bf16.msra.mxu0 0
        %2415 = vmatprep.subr.bf16.mxu0 0
        %2416 = vmatpush1.bf16.msra.mxu0 0
        %2417 = vmatprep.subr.bf16.mxu0 0
        %2418 = vmatpush1.bf16.msra.mxu0 0
        %2419 = vmatprep.mubr.bf16.mxu0 0
        %2420 = vmatmul.mubr.bf16.gmra.mrb[0].mxu0 %v2290
        %v2421 = vpop.f32.mrb[0].mxu0
        %v2422 = vadd.f32 0.0, %v2421
        %v2423 = vpop.f32.mrb[0].mxu0
        %v2424 = vadd.f32 0.0, %v2423
        %v2425 = vpop.f32.mrb[0].mxu0
        %v2426 = vpop.f32.mrb[0].mxu0
        %2427 = vdwg.mxu0
        %v2428 = vadd.f32 %v2288, %v2422
        %v2429 = vadd.f32 %v2289, %v2424
        %2430 = vst [vmem:[#allocation3] sm:$0xff] %v2428
        %2431 = vst [vmem:[#allocation3 + $0x8] sm:$0xff] %v2429
        %v2432 = vld [vmem:[#allocation2 + $0x8] sm:$0xf]
        %v2433 = vld [vmem:[#allocation2 + $0x18] sm:$0xf]
        %v2434 = vld [vmem:[#allocation2 + $0x28] sm:$0xf]
        %2435 = vmatprep.subr.bf16.mxu0 0
        %2436 = vmatpush1.bf16.xpose.msra.mxu0 %v2433
        %2437 = vmatprep.subr.bf16.mxu0 0
        %2438 = vmatpush1.bf16.xpose.msra.mxu0 0
        %2439 = vmatprep.subr.bf16.mxu0 0
        %2440 = vmatpush1.bf16.xpose.msra.mxu0 0
        %2441 = vmatprep.subr.bf16.mxu0 0
        %2442 = vmatpush1.bf16.xpose.msra.mxu0 0
        %2443 = vmatprep.subr.bf16.mxu0 0
        %2444 = vmatpush1.bf16.xpose.msra.mxu0 0
        %2445 = vmatprep.subr.bf16.mxu0 0
        %2446 = vmatpush1.bf16.xpose.msra.mxu0 0
        %2447 = vmatprep.subr.bf16.mxu0 0
        %2448 = vmatpush1.bf16.xpose.msra.mxu0 0
        %2449 = vmatprep.subr.bf16.mxu0 0
        %2450 = vmatpush1.bf16.xpose.msra.mxu0 0
        %2451 = vmatprep.subr.bf16.mxu0 0
        %2452 = vmatpush1.bf16.xpose.msra.mxu0 0
        %2453 = vmatprep.subr.bf16.mxu0 0
        %2454 = vmatpush1.bf16.xpose.msra.mxu0 0
        %2455 = vmatprep.subr.bf16.mxu0 0
        %2456 = vmatpush1.bf16.xpose.msra.mxu0 0
        %2457 = vmatprep.subr.bf16.mxu0 0
        %2458 = vmatpush1.bf16.xpose.msra.mxu0 0
        %2459 = vmatprep.subr.bf16.mxu0 0
        %2460 = vmatpush1.bf16.xpose.msra.mxu0 0
        %2461 = vmatprep.subr.bf16.mxu0 0
        %2462 = vmatpush1.bf16.xpose.msra.mxu0 0
        %2463 = vmatprep.subr.bf16.mxu0 0
        %2464 = vmatpush1.bf16.xpose.msra.mxu0 0
        %2465 = vmatprep.subr.bf16.mxu0 0
        %2466 = vmatpush1.bf16.xpose.msra.mxu0 0
        %2467 = vmatprep.mubr.bf16.mxu0 0
        %2468 = vmatmul.mubr.bf16.gmra.mrb[0].mxu0 %v2432
        %v2469 = vpop.f32.mrb[0].mxu0
        %v2470 = vadd.f32 0.0, %v2469
        %v2471 = vpop.f32.mrb[0].mxu0
        %v2472 = vpop.f32.mrb[0].mxu0
        %v2473 = vpop.f32.mrb[0].mxu0
        %2474 = vdwg.mxu0
        %v2475 = vmul.f32 %v2470, 0.125
        %v2476 = vadd.f32 %v2475, %v1978
        %v2477 = vsel %vm1981, %v2476, -inf
        %2478 = vmax.xlane.f32.xlu0 %v2477
        %v2479 = vpop.xlane.xlu0 %2478
        %v2480 = vsub.f32 %v2476, %v2479
        %v2481 = vmul.f32 %v2480, 1.442695
        %v2482 = vpow.pop %v2481
        %v2483 = vsel %vm1981, %v2482, 0.0
        %2484 = vadd.xlane.f32.xlu0 %v2483
        %v2485 = vpop.xlane.xlu0 %2484
        %v2486 = vrcp.pop %v2485
        %v2487 = vpack.c.bf16 %v2482, %v2482
        %v2489 = vsel %vm1981, %v2487, 0
        %v2492 = vsel %vm1996, %v2434, 0
        %2494 = vmatprep.subr.bf16.mxu0 0
        %2495 = vmatpush1.bf16.msra.mxu0 %v2492
        %2496 = vmatprep.subr.bf16.mxu0 0
        %2497 = vmatpush1.bf16.msra.mxu0 0
        %2498 = vmatprep.subr.bf16.mxu0 0
        %2499 = vmatpush1.bf16.msra.mxu0 0
        %2500 = vmatprep.subr.bf16.mxu0 0
        %2501 = vmatpush1.bf16.msra.mxu0 0
        %2502 = vmatprep.subr.bf16.mxu0 0
        %2503 = vmatpush1.bf16.msra.mxu0 0
        %2504 = vmatprep.subr.bf16.mxu0 0
        %2505 = vmatpush1.bf16.msra.mxu0 0
        %2506 = vmatprep.subr.bf16.mxu0 0
        %2507 = vmatpush1.bf16.msra.mxu0 0
        %2508 = vmatprep.subr.bf16.mxu0 0
        %2509 = vmatpush1.bf16.msra.mxu0 0
        %2510 = vmatprep.subr.bf16.mxu0 0
        %2511 = vmatpush1.bf16.msra.mxu0 0
        %2512 = vmatprep.subr.bf16.mxu0 0
        %2513 = vmatpush1.bf16.msra.mxu0 0
        %2514 = vmatprep.subr.bf16.mxu0 0
        %2515 = vmatpush1.bf16.msra.mxu0 0
        %2516 = vmatprep.subr.bf16.mxu0 0
        %2517 = vmatpush1.bf16.msra.mxu0 0
        %2518 = vmatprep.subr.bf16.mxu0 0
        %2519 = vmatpush1.bf16.msra.mxu0 0
        %2520 = vmatprep.subr.bf16.mxu0 0
        %2521 = vmatpush1.bf16.msra.mxu0 0
        %2522 = vmatprep.subr.bf16.mxu0 0
        %2523 = vmatpush1.bf16.msra.mxu0 0
        %2524 = vmatprep.subr.bf16.mxu0 0
        %2525 = vmatpush1.bf16.msra.mxu0 0
        %2526 = vmatprep.mubr.bf16.mxu0 0
        %2527 = vmatmul.mubr.bf16.gmra.mrb[0].mxu0 %v2489
        %v2528 = vpop.f32.mrb[0].mxu0
        %v2529 = vadd.f32 0.0, %v2528
        %v2530 = vpop.f32.mrb[0].mxu0
        %v2531 = vpop.f32.mrb[0].mxu0
        %v2532 = vpop.f32.mrb[0].mxu0
        %2533 = vdwg.mxu0
        %v2534 = vmul.f32 %v2529, %v2486
        %v2535 = vld [vmem:[#allocation3] sm:$0xff]
        %v2536 = vld [vmem:[#allocation3 + $0x8] sm:$0xff]
        %v2537 = vpack.c.bf16 %v2534, %v2534
        %v2538 = vld [vmem:[#allocation6 + $0x100] sm:$0xff]
        %v2539 = vld [vmem:[#allocation6 + $0x108] sm:$0xff]
        %v2540 = vld [vmem:[#allocation6 + $0x110] sm:$0xff]
        %v2541 = vld [vmem:[#allocation6 + $0x118] sm:$0xff]
        %v2542 = vld [vmem:[#allocation6 + $0x120] sm:$0xff]
        %v2543 = vld [vmem:[#allocation6 + $0x128] sm:$0xff]
        %v2544 = vld [vmem:[#allocation6 + $0x130] sm:$0xff]
        %v2545 = vld [vmem:[#allocation6 + $0x138] sm:$0xff]
        %v2546 = vld [vmem:[#allocation6 + $0x140] sm:$0xff]
        %v2547 = vld [vmem:[#allocation6 + $0x148] sm:$0xff]
        %v2548 = vld [vmem:[#allocation6 + $0x150] sm:$0xff]
        %v2549 = vld [vmem:[#allocation6 + $0x158] sm:$0xff]
        %v2550 = vld [vmem:[#allocation6 + $0x160] sm:$0xff]
        %v2551 = vld [vmem:[#allocation6 + $0x168] sm:$0xff]
        %v2552 = vld [vmem:[#allocation6 + $0x170] sm:$0xff]
        %v2553 = vld [vmem:[#allocation6 + $0x178] sm:$0xff]
        %v2570 = vunpack.c.l.b16 %v2538
        %v2571 = vunpack.c.h.b16 %v2538
        %v2572 = vunpack.c.l.b16 %v2539
        %v2573 = vunpack.c.h.b16 %v2539
        %v2574 = vunpack.c.l.b16 %v2540
        %v2575 = vunpack.c.h.b16 %v2540
        %v2576 = vunpack.c.l.b16 %v2541
        %v2577 = vunpack.c.h.b16 %v2541
        %v2578 = vunpack.c.l.b16 %v2542
        %v2579 = vunpack.c.h.b16 %v2542
        %v2580 = vunpack.c.l.b16 %v2543
        %v2581 = vunpack.c.h.b16 %v2543
        %v2582 = vunpack.c.l.b16 %v2544
        %v2583 = vunpack.c.h.b16 %v2544
        %v2584 = vunpack.c.l.b16 %v2545
        %v2585 = vunpack.c.h.b16 %v2545
        %v2586 = vunpack.c.l.b16 %v2546
        %v2587 = vunpack.c.h.b16 %v2546
        %v2588 = vunpack.c.l.b16 %v2547
        %v2589 = vunpack.c.h.b16 %v2547
        %v2590 = vunpack.c.l.b16 %v2548
        %v2591 = vunpack.c.h.b16 %v2548
        %v2592 = vunpack.c.l.b16 %v2549
        %v2593 = vunpack.c.h.b16 %v2549
        %v2594 = vunpack.c.l.b16 %v2550
        %v2595 = vunpack.c.h.b16 %v2550
        %v2596 = vunpack.c.l.b16 %v2551
        %v2597 = vunpack.c.h.b16 %v2551
        %v2598 = vunpack.c.l.b16 %v2552
        %v2599 = vunpack.c.h.b16 %v2552
        %v2600 = vunpack.c.l.b16 %v2553
        %v2601 = vunpack.c.h.b16 %v2553
        %v2602 = vpack.c.b16 %v2572, %v2570
        %v2603 = vpack.c.b16 %v2573, %v2571
        %v2604 = vpack.c.b16 %v2576, %v2574
        %v2605 = vpack.c.b16 %v2577, %v2575
        %v2606 = vpack.c.b16 %v2580, %v2578
        %v2607 = vpack.c.b16 %v2581, %v2579
        %v2608 = vpack.c.b16 %v2584, %v2582
        %v2609 = vpack.c.b16 %v2585, %v2583
        %v2610 = vpack.c.b16 %v2588, %v2586
        %v2611 = vpack.c.b16 %v2589, %v2587
        %v2612 = vpack.c.b16 %v2592, %v2590
        %v2613 = vpack.c.b16 %v2593, %v2591
        %v2614 = vpack.c.b16 %v2596, %v2594
        %v2615 = vpack.c.b16 %v2597, %v2595
        %v2616 = vpack.c.b16 %v2600, %v2598
        %v2617 = vpack.c.b16 %v2601, %v2599
        %2634 = vmatprep.subr.bf16.mxu0 %v2603
        %2635 = vmatpush1.bf16.msra.mxu0 %v2602
        %2636 = vmatprep.subr.bf16.mxu0 %v2605
        %2637 = vmatpush1.bf16.msra.mxu0 %v2604
        %2638 = vmatprep.subr.bf16.mxu0 %v2607
        %2639 = vmatpush1.bf16.msra.mxu0 %v2606
        %2640 = vmatprep.subr.bf16.mxu0 %v2609
        %2641 = vmatpush1.bf16.msra.mxu0 %v2608
        %2642 = vmatprep.subr.bf16.mxu0 %v2611
        %2643 = vmatpush1.bf16.msra.mxu0 %v2610
        %2644 = vmatprep.subr.bf16.mxu0 %v2613
        %2645 = vmatpush1.bf16.msra.mxu0 %v2612
        %2646 = vmatprep.subr.bf16.mxu0 %v2615
        %2647 = vmatpush1.bf16.msra.mxu0 %v2614
        %2648 = vmatprep.subr.bf16.mxu0 %v2617
        %2649 = vmatpush1.bf16.msra.mxu0 %v2616
        %2650 = vmatprep.subr.bf16.mxu0 0
        %2651 = vmatpush1.bf16.msra.mxu0 0
        %2652 = vmatprep.subr.bf16.mxu0 0
        %2653 = vmatpush1.bf16.msra.mxu0 0
        %2654 = vmatprep.subr.bf16.mxu0 0
        %2655 = vmatpush1.bf16.msra.mxu0 0
        %2656 = vmatprep.subr.bf16.mxu0 0
        %2657 = vmatpush1.bf16.msra.mxu0 0
        %2658 = vmatprep.subr.bf16.mxu0 0
        %2659 = vmatpush1.bf16.msra.mxu0 0
        %2660 = vmatprep.subr.bf16.mxu0 0
        %2661 = vmatpush1.bf16.msra.mxu0 0
        %2662 = vmatprep.subr.bf16.mxu0 0
        %2663 = vmatpush1.bf16.msra.mxu0 0
        %2664 = vmatprep.subr.bf16.mxu0 0
        %2665 = vmatpush1.bf16.msra.mxu0 0
        %2666 = vmatprep.mubr.bf16.mxu0 0
        %2667 = vmatmul.mubr.bf16.gmra.mrb[0].mxu0 %v2537
        %v2668 = vpop.f32.mrb[0].mxu0
        %v2669 = vadd.f32 0.0, %v2668
        %v2670 = vpop.f32.mrb[0].mxu0
        %v2671 = vadd.f32 0.0, %v2670
        %v2672 = vpop.f32.mrb[0].mxu0
        %v2673 = vpop.f32.mrb[0].mxu0
        %2674 = vdwg.mxu0
        %v2675 = vadd.f32 %v2535, %v2669
        %v2676 = vadd.f32 %v2536, %v2671
        %2677 = vst [vmem:[#allocation3] sm:$0xff] %v2675
        %2678 = vst [vmem:[#allocation3 + $0x8] sm:$0xff] %v2676
        %v2679 = vld [vmem:[#allocation2 + $0xc] sm:$0xf]
        %v2680 = vld [vmem:[#allocation2 + $0x1c] sm:$0xf]
        %v2681 = vld [vmem:[#allocation2 + $0x2c] sm:$0xf]
        %2682 = vmatprep.subr.bf16.mxu0 0
        %2683 = vmatpush1.bf16.xpose.msra.mxu0 %v2680
        %2684 = vmatprep.subr.bf16.mxu0 0
        %2685 = vmatpush1.bf16.xpose.msra.mxu0 0
        %2686 = vmatprep.subr.bf16.mxu0 0
        %2687 = vmatpush1.bf16.xpose.msra.mxu0 0
        %2688 = vmatprep.subr.bf16.mxu0 0
        %2689 = vmatpush1.bf16.xpose.msra.mxu0 0
        %2690 = vmatprep.subr.bf16.mxu0 0
        %2691 = vmatpush1.bf16.xpose.msra.mxu0 0
        %2692 = vmatprep.subr.bf16.mxu0 0
        %2693 = vmatpush1.bf16.xpose.msra.mxu0 0
        %2694 = vmatprep.subr.bf16.mxu0 0
        %2695 = vmatpush1.bf16.xpose.msra.mxu0 0
        %2696 = vmatprep.subr.bf16.mxu0 0
        %2697 = vmatpush1.bf16.xpose.msra.mxu0 0
        %2698 = vmatprep.subr.bf16.mxu0 0
        %2699 = vmatpush1.bf16.xpose.msra.mxu0 0
        %2700 = vmatprep.subr.bf16.mxu0 0
        %2701 = vmatpush1.bf16.xpose.msra.mxu0 0
        %2702 = vmatprep.subr.bf16.mxu0 0
        %2703 = vmatpush1.bf16.xpose.msra.mxu0 0
        %2704 = vmatprep.subr.bf16.mxu0 0
        %2705 = vmatpush1.bf16.xpose.msra.mxu0 0
        %2706 = vmatprep.subr.bf16.mxu0 0
        %2707 = vmatpush1.bf16.xpose.msra.mxu0 0
        %2708 = vmatprep.subr.bf16.mxu0 0
        %2709 = vmatpush1.bf16.xpose.msra.mxu0 0
        %2710 = vmatprep.subr.bf16.mxu0 0
        %2711 = vmatpush1.bf16.xpose.msra.mxu0 0
        %2712 = vmatprep.subr.bf16.mxu0 0
        %2713 = vmatpush1.bf16.xpose.msra.mxu0 0
        %2714 = vmatprep.mubr.bf16.mxu0 0
        %2715 = vmatmul.mubr.bf16.gmra.mrb[0].mxu0 %v2679
        %v2716 = vpop.f32.mrb[0].mxu0
        %v2717 = vadd.f32 0.0, %v2716
        %v2718 = vpop.f32.mrb[0].mxu0
        %v2719 = vpop.f32.mrb[0].mxu0
        %v2720 = vpop.f32.mrb[0].mxu0
        %2721 = vdwg.mxu0
        %v2722 = vmul.f32 %v2717, 0.125
        %v2723 = vadd.f32 %v2722, %v1978
        %v2724 = vsel %vm1981, %v2723, -inf
        %2725 = vmax.xlane.f32.xlu0 %v2724
        %v2726 = vpop.xlane.xlu0 %2725
        %v2727 = vsub.f32 %v2723, %v2726
        %v2728 = vmul.f32 %v2727, 1.442695
        %v2729 = vpow.pop %v2728
        %v2730 = vsel %vm1981, %v2729, 0.0
        %2731 = vadd.xlane.f32.xlu0 %v2730
        %v2732 = vpop.xlane.xlu0 %2731
        %v2733 = vrcp.pop %v2732
        %v2734 = vpack.c.bf16 %v2729, %v2729
        %v2736 = vsel %vm1981, %v2734, 0
        %v2739 = vsel %vm1996, %v2681, 0
        %2741 = vmatprep.subr.bf16.mxu0 0
        %2742 = vmatpush1.bf16.msra.mxu0 %v2739
        %2743 = vmatprep.subr.bf16.mxu0 0
        %2744 = vmatpush1.bf16.msra.mxu0 0
        %2745 = vmatprep.subr.bf16.mxu0 0
        %2746 = vmatpush1.bf16.msra.mxu0 0
        %2747 = vmatprep.subr.bf16.mxu0 0
        %2748 = vmatpush1.bf16.msra.mxu0 0
        %2749 = vmatprep.subr.bf16.mxu0 0
        %2750 = vmatpush1.bf16.msra.mxu0 0
        %2751 = vmatprep.subr.bf16.mxu0 0
        %2752 = vmatpush1.bf16.msra.mxu0 0
        %2753 = vmatprep.subr.bf16.mxu0 0
        %2754 = vmatpush1.bf16.msra.mxu0 0
        %2755 = vmatprep.subr.bf16.mxu0 0
        %2756 = vmatpush1.bf16.msra.mxu0 0
        %2757 = vmatprep.subr.bf16.mxu0 0
        %2758 = vmatpush1.bf16.msra.mxu0 0
        %2759 = vmatprep.subr.bf16.mxu0 0
        %2760 = vmatpush1.bf16.msra.mxu0 0
        %2761 = vmatprep.subr.bf16.mxu0 0
        %2762 = vmatpush1.bf16.msra.mxu0 0
        %2763 = vmatprep.subr.bf16.mxu0 0
        %2764 = vmatpush1.bf16.msra.mxu0 0
        %2765 = vmatprep.subr.bf16.mxu0 0
        %2766 = vmatpush1.bf16.msra.mxu0 0
        %2767 = vmatprep.subr.bf16.mxu0 0
        %2768 = vmatpush1.bf16.msra.mxu0 0
        %2769 = vmatprep.subr.bf16.mxu0 0
        %2770 = vmatpush1.bf16.msra.mxu0 0
        %2771 = vmatprep.subr.bf16.mxu0 0
        %2772 = vmatpush1.bf16.msra.mxu0 0
        %2773 = vmatprep.mubr.bf16.mxu0 0
        %2774 = vmatmul.mubr.bf16.gmra.mrb[0].mxu0 %v2736
        %v2775 = vpop.f32.mrb[0].mxu0
        %v2776 = vadd.f32 0.0, %v2775
        %v2777 = vpop.f32.mrb[0].mxu0
        %v2778 = vpop.f32.mrb[0].mxu0
        %v2779 = vpop.f32.mrb[0].mxu0
        %2780 = vdwg.mxu0
        %v2781 = vmul.f32 %v2776, %v2733
        %v2782 = vld [vmem:[#allocation3] sm:$0xff]
        %v2783 = vld [vmem:[#allocation3 + $0x8] sm:$0xff]
        %v2784 = vpack.c.bf16 %v2781, %v2781
        %v2785 = vld [vmem:[#allocation6 + $0x180] sm:$0xff]
        %v2786 = vld [vmem:[#allocation6 + $0x188] sm:$0xff]
        %v2787 = vld [vmem:[#allocation6 + $0x190] sm:$0xff]
        %v2788 = vld [vmem:[#allocation6 + $0x198] sm:$0xff]
        %v2789 = vld [vmem:[#allocation6 + $0x1a0] sm:$0xff]
        %v2790 = vld [vmem:[#allocation6 + $0x1a8] sm:$0xff]
        %v2791 = vld [vmem:[#allocation6 + $0x1b0] sm:$0xff]
        %v2792 = vld [vmem:[#allocation6 + $0x1b8] sm:$0xff]
        %v2793 = vld [vmem:[#allocation6 + $0x1c0] sm:$0xff]
        %v2794 = vld [vmem:[#allocation6 + $0x1c8] sm:$0xff]
        %v2795 = vld [vmem:[#allocation6 + $0x1d0] sm:$0xff]
        %v2796 = vld [vmem:[#allocation6 + $0x1d8] sm:$0xff]
        %v2797 = vld [vmem:[#allocation6 + $0x1e0] sm:$0xff]
        %v2798 = vld [vmem:[#allocation6 + $0x1e8] sm:$0xff]
        %v2799 = vld [vmem:[#allocation6 + $0x1f0] sm:$0xff]
        %v2800 = vld [vmem:[#allocation6 + $0x1f8] sm:$0xff]
        %v2817 = vunpack.c.l.b16 %v2785
        %v2818 = vunpack.c.h.b16 %v2785
        %v2819 = vunpack.c.l.b16 %v2786
        %v2820 = vunpack.c.h.b16 %v2786
        %v2821 = vunpack.c.l.b16 %v2787
        %v2822 = vunpack.c.h.b16 %v2787
        %v2823 = vunpack.c.l.b16 %v2788
        %v2824 = vunpack.c.h.b16 %v2788
        %v2825 = vunpack.c.l.b16 %v2789
        %v2826 = vunpack.c.h.b16 %v2789
        %v2827 = vunpack.c.l.b16 %v2790
        %v2828 = vunpack.c.h.b16 %v2790
        %v2829 = vunpack.c.l.b16 %v2791
        %v2830 = vunpack.c.h.b16 %v2791
        %v2831 = vunpack.c.l.b16 %v2792
        %v2832 = vunpack.c.h.b16 %v2792
        %v2833 = vunpack.c.l.b16 %v2793
        %v2834 = vunpack.c.h.b16 %v2793
        %v2835 = vunpack.c.l.b16 %v2794
        %v2836 = vunpack.c.h.b16 %v2794
        %v2837 = vunpack.c.l.b16 %v2795
        %v2838 = vunpack.c.h.b16 %v2795
        %v2839 = vunpack.c.l.b16 %v2796
        %v2840 = vunpack.c.h.b16 %v2796
        %v2841 = vunpack.c.l.b16 %v2797
        %v2842 = vunpack.c.h.b16 %v2797
        %v2843 = vunpack.c.l.b16 %v2798
        %v2844 = vunpack.c.h.b16 %v2798
        %v2845 = vunpack.c.l.b16 %v2799
        %v2846 = vunpack.c.h.b16 %v2799
        %v2847 = vunpack.c.l.b16 %v2800
        %v2848 = vunpack.c.h.b16 %v2800
        %v2849 = vpack.c.b16 %v2819, %v2817
        %v2850 = vpack.c.b16 %v2820, %v2818
        %v2851 = vpack.c.b16 %v2823, %v2821
        %v2852 = vpack.c.b16 %v2824, %v2822
        %v2853 = vpack.c.b16 %v2827, %v2825
        %v2854 = vpack.c.b16 %v2828, %v2826
        %v2855 = vpack.c.b16 %v2831, %v2829
        %v2856 = vpack.c.b16 %v2832, %v2830
        %v2857 = vpack.c.b16 %v2835, %v2833
        %v2858 = vpack.c.b16 %v2836, %v2834
        %v2859 = vpack.c.b16 %v2839, %v2837
        %v2860 = vpack.c.b16 %v2840, %v2838
        %v2861 = vpack.c.b16 %v2843, %v2841
        %v2862 = vpack.c.b16 %v2844, %v2842
        %v2863 = vpack.c.b16 %v2847, %v2845
        %v2864 = vpack.c.b16 %v2848, %v2846
        %2881 = vmatprep.subr.bf16.mxu0 %v2850
        %2882 = vmatpush1.bf16.msra.mxu0 %v2849
        %2883 = vmatprep.subr.bf16.mxu0 %v2852
        %2884 = vmatpush1.bf16.msra.mxu0 %v2851
        %2885 = vmatprep.subr.bf16.mxu0 %v2854
        %2886 = vmatpush1.bf16.msra.mxu0 %v2853
        %2887 = vmatprep.subr.bf16.mxu0 %v2856
        %2888 = vmatpush1.bf16.msra.mxu0 %v2855
        %2889 = vmatprep.subr.bf16.mxu0 %v2858
        %2890 = vmatpush1.bf16.msra.mxu0 %v2857
        %2891 = vmatprep.subr.bf16.mxu0 %v2860
        %2892 = vmatpush1.bf16.msra.mxu0 %v2859
        %2893 = vmatprep.subr.bf16.mxu0 %v2862
        %2894 = vmatpush1.bf16.msra.mxu0 %v2861
        %2895 = vmatprep.subr.bf16.mxu0 %v2864
        %2896 = vmatpush1.bf16.msra.mxu0 %v2863
        %2897 = vmatprep.subr.bf16.mxu0 0
        %2898 = vmatpush1.bf16.msra.mxu0 0
        %2899 = vmatprep.subr.bf16.mxu0 0
        %2900 = vmatpush1.bf16.msra.mxu0 0
        %2901 = vmatprep.subr.bf16.mxu0 0
        %2902 = vmatpush1.bf16.msra.mxu0 0
        %2903 = vmatprep.subr.bf16.mxu0 0
        %2904 = vmatpush1.bf16.msra.mxu0 0
        %2905 = vmatprep.subr.bf16.mxu0 0
        %2906 = vmatpush1.bf16.msra.mxu0 0
        %2907 = vmatprep.subr.bf16.mxu0 0
        %2908 = vmatpush1.bf16.msra.mxu0 0
        %2909 = vmatprep.subr.bf16.mxu0 0
        %2910 = vmatpush1.bf16.msra.mxu0 0
        %2911 = vmatprep.subr.bf16.mxu0 0
        %2912 = vmatpush1.bf16.msra.mxu0 0
        %2913 = vmatprep.mubr.bf16.mxu0 0
        %2914 = vmatmul.mubr.bf16.gmra.mrb[0].mxu0 %v2784
        %v2915 = vpop.f32.mrb[0].mxu0
        %v2916 = vadd.f32 0.0, %v2915
        %v2917 = vpop.f32.mrb[0].mxu0
        %v2918 = vadd.f32 0.0, %v2917
        %v2919 = vpop.f32.mrb[0].mxu0
        %v2920 = vpop.f32.mrb[0].mxu0
        %2921 = vdwg.mxu0
        %v2922 = vadd.f32 %v2782, %v2916
        %v2923 = vadd.f32 %v2783, %v2918
        %2924 = vst [vmem:[#allocation3] sm:$0xff] %v2922
        %2925 = vst [vmem:[#allocation3 + $0x8] sm:$0xff] %v2923
        %v2926 = vld [vmem:[#allocation3] sm:$0xff]
        %v2927 = vld [vmem:[#allocation3 + $0x8] sm:$0xff]
        %v2928 = vld [vmem:[%s4] sm:$0x3]
        %v2929 = vunpack.c.l.bf16 %v2928
        %v2931 = vlaneseq
        %v2932 = vshrl.u32 %v2931, 7
        %v2933 = vsub.s32 0, %v2932
        %v2934 = vrot.slane %v2929, %v2933
        %v2935 = vlaneseq
        %v2936 = vshrl.u32 %v2935, 7
        %v2937 = vsub.s32 2, %v2936
        %v2938 = vrot.slane %v2929, %v2937
        %v2941 = vlaneseq
        %v2942 = vshrl.u32 %v2941, 7
        %v2943 = vsub.s32 0, %v2942
        %v2944 = vrot.slane %v2934, %v2943
        %v2945 = vlaneseq
        %v2946 = vshrl.u32 %v2945, 7
        %v2947 = vsub.s32 0, %v2946
        %v2948 = vrot.slane %v2938, %v2947
        %v2949 = vadd.f32 %v2926, %v2944
        %v2950 = vadd.f32 %v2927, %v2948
        %v2951 = vunpack.c.l.bf16 %v351
        %v2952 = vunpack.c.h.bf16 %v351
        %v2953 = vadd.f32 %v2949, %v2951
        %v2954 = vadd.f32 %v2950, %v2952
        %v2955 = vld [vmem:[%s5] sm:$0x3]
        %v2956 = vunpack.c.l.bf16 %v2955
        %v2957 = vld [vmem:[%s6] sm:$0x3]
        %v2958 = vunpack.c.l.bf16 %v2957
        %v2959 = vadd.f32 %v2953, %v2954
        %2960 = vadd.xlane.f32.xlu0 %v2959
        %v2961 = vpop.xlane.xlu0 %2960
        %v2962 = vrcp.pop 256.0
        %v2963 = vmul.f32 %v2961, %v2962
        %v2964 = vsub.f32 %v2953, %v2963
        %v2965 = vsub.f32 %v2954, %v2963
        %v2966 = vmul.f32 %v2964, %v2964
        %v2967 = vmul.f32 %v2965, %v2965
        %v2968 = vadd.f32 %v2966, %v2967
        %2969 = vadd.xlane.f32.xlu0 %v2968
        %v2970 = vpop.xlane.xlu0 %2969
        %v2971 = vmul.f32 %v2970, %v2962
        %v2972 = vadd.f32 %v2971, 1e-05
        %v2973 = vrsqrt.pop %v2972
        %v2974 = vmul.f32 %v2964, %v2973
        %v2975 = vmul.f32 %v2965, %v2973
        %v2977 = vlaneseq
        %v2978 = vshrl.u32 %v2977, 7
        %v2979 = vsub.s32 0, %v2978
        %v2980 = vrot.slane %v2956, %v2979
        %v2981 = vlaneseq
        %v2982 = vshrl.u32 %v2981, 7
        %v2983 = vsub.s32 2, %v2982
        %v2984 = vrot.slane %v2956, %v2983
        %v2987 = vlaneseq
        %v2988 = vshrl.u32 %v2987, 7
        %v2989 = vsub.s32 0, %v2988
        %v2990 = vrot.slane %v2980, %v2989
        %v2991 = vlaneseq
        %v2992 = vshrl.u32 %v2991, 7
        %v2993 = vsub.s32 0, %v2992
        %v2994 = vrot.slane %v2984, %v2993
        %v2995 = vmul.f32 %v2974, %v2990
        %v2996 = vmul.f32 %v2975, %v2994
        %v2998 = vlaneseq
        %v2999 = vshrl.u32 %v2998, 7
        %v3000 = vsub.s32 0, %v2999
        %v3001 = vrot.slane %v2958, %v3000
        %v3002 = vlaneseq
        %v3003 = vshrl.u32 %v3002, 7
        %v3004 = vsub.s32 2, %v3003
        %v3005 = vrot.slane %v2958, %v3004
        %v3008 = vlaneseq
        %v3009 = vshrl.u32 %v3008, 7
        %v3010 = vsub.s32 0, %v3009
        %v3011 = vrot.slane %v3001, %v3010
        %v3012 = vlaneseq
        %v3013 = vshrl.u32 %v3012, 7
        %v3014 = vsub.s32 0, %v3013
        %v3015 = vrot.slane %v3005, %v3014
        %v3016 = vadd.f32 %v2995, %v3011
        %v3017 = vadd.f32 %v2996, %v3015
        %v3018 = vpack.c.bf16 %v3016, %v3016
        %v3019 = vpack.c.bf16 %v3017, %v3017
        %v3022 = vunpack.c.l.b16 %v3018
        %v3023 = vunpack.c.l.b16 %v3019
        %v3024 = vpack.c.b16 %v3023, %v3022
        %3026 = vst [vmem:[%s349] sm:$0xff] %v3024
        %p3027 = scmp.lt.s32.totalorder %s21, 1
        %s3028 = scalar_select %p3027, %s21, 1
        %s3029 = smul.addr %s3028, 2
        %s3030 = smul.addr %s3029, 4
        %s3031 = scalar_lea.vmem %s8, %s3030
        // Predicated region
        $region61: #{forward.7} parent=51 // pred_check
          %p3032 = pneg %p217
        $region62: #{forward.7} parent=51 // pred_check_branch
          %3034 = sbr.rel (%p3032) target = $region64
        $region63: #{forward.7} parent=51 // pred_region
          _
        $region64: #{forward.7} parent=51 // pred_fallthru
          _
      $region52: #{forward.7} parent=5 // pred_fallthru
        _
      %p3035 = scmp.le.s32.totalorder 2, %s16
      // Predicated region
      $region65: #{forward.7} parent=5 // pred_check
        %p3036 = pneg %p3035
      $region66: #{forward.7} parent=5 // pred_check_branch
        %3038 = sbr.rel (%p3036) target = $region68
      $region67: #{forward.7} parent=5 // pred_region
        %s3039 = ssub.s32 %s16, 2
        // Predicated region
        $region69: #{forward.7} parent=67 // pred_check
          %p3040 = pneg %p223
        $region70: #{forward.7} parent=67 // pred_check_branch
          %3042 = sbr.rel (%p3040) target = $region72
        $region71: #{forward.7} parent=67 // pred_region
          %p3043 = scmp.lt.s32.totalorder %s22, 1
          %s3044 = scalar_select %p3043, %s22, 1
          %s3045 = smul.addr %s3044, 2
          %s3046 = smul.addr %s3045, 4
          %s3047 = scalar_lea.vmem %s8, %s3046
        $region72: #{forward.7} parent=67 // pred_fallthru
          _
      $region68: #{forward.7} parent=5 // pred_fallthru
        _
    $region6: #{forward.7} parent=1 // loop_footer
      %s20 = sadd.s32 1, %s16
    $region7: #{forward.7} parent=1 // loop_footer_branch
      %15 = sbr.rel target = $region3
    $region8: #{forward.7} parent=1 // loop_exit
      _
    %3048 = vsyncpa [#allocation5], 1
    %s3049 = scalar_lea.sflag [#allocation5], 1
    %3050 = vsyncpa %s3049, 1
    %3051 = vsyncpa [#allocation7], 1

// kernel: forward.9
$region0: #{forward.9}
  #allocation0 [shape = 'u32[]', space=smem, size = 0x4, offset = 0x4, fixed_abs, tag = 'smem constant byte address 0x4 - core index']
  #allocation1 [shape = 'u32[144,128]{1,0:T(1,128)}', space=vmem, size = 0x12000, scoped, tag = 'internal scratch']
  #allocation2 [shape = 'bf16[8,1536]{1,0:T(8,128)(2,1)}', space=vmem, size = 0x6000, scoped, tag = 'scratch operand']
  #allocation3 [shape = 'f32[8,256]{1,0:T(8,128)}', space=vmem, size = 0x2000, scoped, tag = 'scratch operand']
  %s0 = inlined_call_operand.vmem [shape: bf16[2,8,256], index: 0, kind: input, shape index: {}]
  %s1 = inlined_call_operand.vmem [shape: bf16[256,1536], index: 1, kind: input, shape index: {}]
  %s2 = inlined_call_operand.vmem [shape: bf16[1,1536], index: 2, kind: input, shape index: {}]
  %s3 = inlined_call_operand.vmem [shape: bf16[512,256], index: 3, kind: input, shape index: {}]
  %s4 = inlined_call_operand.vmem [shape: bf16[1,256], index: 4, kind: input, shape index: {}]
  %s5 = inlined_call_operand.vmem [shape: bf16[1,256], index: 5, kind: input, shape index: {}]
  %s6 = inlined_call_operand.vmem [shape: bf16[1,256], index: 6, kind: input, shape index: {}]
  %s7 = inlined_call_operand.vmem [shape: f32[2,1,8], index: 7, kind: input, shape index: {}]
  %s8 = inlined_call_operand.vmem [shape: bf16[2,8,256], index: 8, kind: output, shape index: {}]
  %s9 = sld [smem:[#allocation0]]
  $region65: #{forward.9} parent=0
    _
  %s11 = ssub.s32 1, %s9
  %s12 = scalar_select 0, %s11, %s9
  loop: start=0, step=1, limit=4
  $region2: #{forward.9} parent=0 // loop_pre_header
    _
  $region3: #{forward.9} parent=0 // loop_header
    %s14 = sphi 0, %s18
    %p15 = scmp.ge.s32.totalorder %s14, 4
    %s24 = sphi 0, %s26
    %s27 = sphi 0, %s24
    %s28 = sphi 0, %s27
    %s44 = sphi 0, %s28
    %s48 = sphi 0, %s48
    %s50 = sphi 0, %s48
    %s51 = sphi 0, %s50
    %s65 = sphi 0, %s51
    %s69 = sphi 0, %s69
    %s71 = sphi 0, %s69
    %s72 = sphi 0, %s71
    %s86 = sphi 0, %s72
    %s90 = sphi 0, %s90
    %s92 = sphi 0, %s90
    %s93 = sphi 0, %s92
    %s107 = sphi 0, %s93
    %s111 = sphi 0, %s111
    %s113 = sphi 0, %s111
    %s114 = sphi 0, %s113
    %s128 = sphi 0, %s114
    %s132 = sphi 0, %s132
    %s134 = sphi 0, %s132
    %s135 = sphi 0, %s134
    %s149 = sphi 0, %s135
    %s153 = sphi 0, %s153
    %s155 = sphi 0, %s153
    %s156 = sphi 0, %s155
    %s170 = sphi 0, %s156
    %s176 = sphi 0, %s178
    %s179 = sphi 0, %s176
    %s180 = sphi 0, %s179
    %s196 = sphi 0, %s180
    %s202 = sphi 0, %s204
    %s205 = sphi 0, %s202
    %s206 = sphi 0, %s205
    %s222 = sphi 0, %s206
  $region4: #{forward.9} parent=0 // loop_header_branch
    %17 = sbr.rel (%p15) target = $region8
  $region5: #{forward.9} parent=0 // loop_body
    %s19 = ssub.s32 %s14, 1
    %s20 = ssub.s32 %s14, 2
    %s21 = sadd.s32 %s14, 1
    %s22 = ssub.s32 %s14, %s21
    %p23 = scmp.eq.s32.totalorder %s22, 0
    %s25 = sadd.s32 %s24, 1
    %s26 = scalar_select %p23, %s24, %s25
    %p29 = pneg %p23
    %p30 = scmp.eq.s32.totalorder %s14, 1
    %p31 = por %p29, %p30
    %p32 = scmp.ne.s32.totalorder %s24, %s27
    %p33 = scmp.eq.s32.totalorder %s14, 0
    %p34 = por %p32, %p33
    %p35 = scmp.ne.s32.totalorder %s24, %s27
    %p36 = scmp.eq.s32.totalorder %s19, 1
    %p37 = por %p35, %p36
    %p38 = scmp.ne.s32.totalorder %s27, %s28
    %p39 = scmp.eq.s32.totalorder %s19, 0
    %p40 = por %p38, %p39
    %p41 = scmp.ne.s32.totalorder %s27, %s28
    %p42 = scmp.eq.s32.totalorder %s20, 1
    %p43 = por %p41, %p42
    %p45 = scmp.ne.s32.totalorder %s28, %s44
    %p46 = scmp.eq.s32.totalorder %s20, 0
    %p47 = por %p45, %p46
    %s49 = sadd.s32 %s48, 1
    %p52 = scmp.eq.s32.totalorder %s14, 1
    %p53 = scmp.ne.s32.totalorder %s48, %s50
    %p54 = scmp.eq.s32.totalorder %s14, 0
    %p55 = por %p53, %p54
    %p56 = scmp.ne.s32.totalorder %s48, %s50
    %p57 = scmp.eq.s32.totalorder %s19, 1
    %p58 = por %p56, %p57
    %p59 = scmp.ne.s32.totalorder %s50, %s51
    %p60 = scmp.eq.s32.totalorder %s19, 0
    %p61 = por %p59, %p60
    %p62 = scmp.ne.s32.totalorder %s50, %s51
    %p63 = scmp.eq.s32.totalorder %s20, 1
    %p64 = por %p62, %p63
    %p66 = scmp.ne.s32.totalorder %s51, %s65
    %p67 = scmp.eq.s32.totalorder %s20, 0
    %p68 = por %p66, %p67
    %s70 = sadd.s32 %s69, 1
    %p73 = scmp.eq.s32.totalorder %s14, 1
    %p74 = scmp.ne.s32.totalorder %s69, %s71
    %p75 = scmp.eq.s32.totalorder %s14, 0
    %p76 = por %p74, %p75
    %p77 = scmp.ne.s32.totalorder %s69, %s71
    %p78 = scmp.eq.s32.totalorder %s19, 1
    %p79 = por %p77, %p78
    %p80 = scmp.ne.s32.totalorder %s71, %s72
    %p81 = scmp.eq.s32.totalorder %s19, 0
    %p82 = por %p80, %p81
    %p83 = scmp.ne.s32.totalorder %s71, %s72
    %p84 = scmp.eq.s32.totalorder %s20, 1
    %p85 = por %p83, %p84
    %p87 = scmp.ne.s32.totalorder %s72, %s86
    %p88 = scmp.eq.s32.totalorder %s20, 0
    %p89 = por %p87, %p88
    %s91 = sadd.s32 %s90, 1
    %p94 = scmp.eq.s32.totalorder %s14, 1
    %p95 = scmp.ne.s32.totalorder %s90, %s92
    %p96 = scmp.eq.s32.totalorder %s14, 0
    %p97 = por %p95, %p96
    %p98 = scmp.ne.s32.totalorder %s90, %s92
    %p99 = scmp.eq.s32.totalorder %s19, 1
    %p100 = por %p98, %p99
    %p101 = scmp.ne.s32.totalorder %s92, %s93
    %p102 = scmp.eq.s32.totalorder %s19, 0
    %p103 = por %p101, %p102
    %p104 = scmp.ne.s32.totalorder %s92, %s93
    %p105 = scmp.eq.s32.totalorder %s20, 1
    %p106 = por %p104, %p105
    %p108 = scmp.ne.s32.totalorder %s93, %s107
    %p109 = scmp.eq.s32.totalorder %s20, 0
    %p110 = por %p108, %p109
    %s112 = sadd.s32 %s111, 1
    %p115 = scmp.eq.s32.totalorder %s14, 1
    %p116 = scmp.ne.s32.totalorder %s111, %s113
    %p117 = scmp.eq.s32.totalorder %s14, 0
    %p118 = por %p116, %p117
    %p119 = scmp.ne.s32.totalorder %s111, %s113
    %p120 = scmp.eq.s32.totalorder %s19, 1
    %p121 = por %p119, %p120
    %p122 = scmp.ne.s32.totalorder %s113, %s114
    %p123 = scmp.eq.s32.totalorder %s19, 0
    %p124 = por %p122, %p123
    %p125 = scmp.ne.s32.totalorder %s113, %s114
    %p126 = scmp.eq.s32.totalorder %s20, 1
    %p127 = por %p125, %p126
    %p129 = scmp.ne.s32.totalorder %s114, %s128
    %p130 = scmp.eq.s32.totalorder %s20, 0
    %p131 = por %p129, %p130
    %s133 = sadd.s32 %s132, 1
    %p136 = scmp.eq.s32.totalorder %s14, 1
    %p137 = scmp.ne.s32.totalorder %s132, %s134
    %p138 = scmp.eq.s32.totalorder %s14, 0
    %p139 = por %p137, %p138
    %p140 = scmp.ne.s32.totalorder %s132, %s134
    %p141 = scmp.eq.s32.totalorder %s19, 1
    %p142 = por %p140, %p141
    %p143 = scmp.ne.s32.totalorder %s134, %s135
    %p144 = scmp.eq.s32.totalorder %s19, 0
    %p145 = por %p143, %p144
    %p146 = scmp.ne.s32.totalorder %s134, %s135
    %p147 = scmp.eq.s32.totalorder %s20, 1
    %p148 = por %p146, %p147
    %p150 = scmp.ne.s32.totalorder %s135, %s149
    %p151 = scmp.eq.s32.totalorder %s20, 0
    %p152 = por %p150, %p151
    %s154 = sadd.s32 %s153, 1
    %p157 = scmp.eq.s32.totalorder %s14, 1
    %p158 = scmp.ne.s32.totalorder %s153, %s155
    %p159 = scmp.eq.s32.totalorder %s14, 0
    %p160 = por %p158, %p159
    %p161 = scmp.ne.s32.totalorder %s153, %s155
    %p162 = scmp.eq.s32.totalorder %s19, 1
    %p163 = por %p161, %p162
    %p164 = scmp.ne.s32.totalorder %s155, %s156
    %p165 = scmp.eq.s32.totalorder %s19, 0
    %p166 = por %p164, %p165
    %p167 = scmp.ne.s32.totalorder %s155, %s156
    %p168 = scmp.eq.s32.totalorder %s20, 1
    %p169 = por %p167, %p168
    %p171 = scmp.ne.s32.totalorder %s156, %s170
    %p172 = scmp.eq.s32.totalorder %s20, 0
    %p173 = por %p171, %p172
    %s174 = ssub.s32 %s14, %s21
    %p175 = scmp.eq.s32.totalorder %s174, 0
    %s177 = sadd.s32 %s176, 1
    %s178 = scalar_select %p175, %s176, %s177
    %p181 = pneg %p175
    %p182 = scmp.eq.s32.totalorder %s14, 1
    %p183 = por %p181, %p182
    %p184 = scmp.ne.s32.totalorder %s176, %s179
    %p185 = scmp.eq.s32.totalorder %s14, 0
    %p186 = por %p184, %p185
    %p187 = scmp.ne.s32.totalorder %s176, %s179
    %p188 = scmp.eq.s32.totalorder %s19, 1
    %p189 = por %p187, %p188
    %p190 = scmp.ne.s32.totalorder %s179, %s180
    %p191 = scmp.eq.s32.totalorder %s19, 0
    %p192 = por %p190, %p191
    %p193 = scmp.ne.s32.totalorder %s179, %s180
    %p194 = scmp.eq.s32.totalorder %s20, 1
    %p195 = por %p193, %p194
    %p197 = scmp.ne.s32.totalorder %s180, %s196
    %p198 = scmp.eq.s32.totalorder %s20, 0
    %p199 = por %p197, %p198
    %s200 = ssub.s32 %s14, %s21
    %p201 = scmp.eq.s32.totalorder %s200, 0
    %s203 = sadd.s32 %s202, 1
    %s204 = scalar_select %p201, %s202, %s203
    %p207 = pneg %p201
    %p208 = scmp.eq.s32.totalorder %s14, 1
    %p209 = por %p207, %p208
    %p210 = scmp.ne.s32.totalorder %s202, %s205
    %p211 = scmp.eq.s32.totalorder %s14, 0
    %p212 = por %p210, %p211
    %p213 = scmp.ne.s32.totalorder %s202, %s205
    %p214 = scmp.eq.s32.totalorder %s19, 1
    %p215 = por %p213, %p214
    %p216 = scmp.ne.s32.totalorder %s205, %s206
    %p217 = scmp.eq.s32.totalorder %s19, 0
    %p218 = por %p216, %p217
    %p219 = scmp.ne.s32.totalorder %s205, %s206
    %p220 = scmp.eq.s32.totalorder %s20, 1
    %p221 = por %p219, %p220
    %p223 = scmp.ne.s32.totalorder %s206, %s222
    %p224 = scmp.eq.s32.totalorder %s20, 0
    %p225 = por %p223, %p224
    %p226 = scmp.le.s32.totalorder 1, %s14
    %p227 = scmp.lt.s32.totalorder %s14, 3
    %p228 = pnand %p226, %p227
    %p229 = pneg %p228
    // Predicated region
    $region9: #{forward.9} parent=5 // pred_check
      _
    $region10: #{forward.9} parent=5 // pred_check_branch
      %231 = sbr.rel (%p228) target = $region12
    $region11: #{forward.9} parent=5 // pred_region
      %s232 = ssub.s32 %s14, 1
      // Predicated region
      $region13: #{forward.9} parent=11 // pred_check
        %p233 = pneg %p61
      $region14: #{forward.9} parent=11 // pred_check_branch
        %235 = sbr.rel (%p233) target = $region16
      $region15: #{forward.9} parent=11 // pred_region
        _
      $region16: #{forward.9} parent=11 // pred_fallthru
        _
      // Predicated region
      $region17: #{forward.9} parent=11 // pred_check
        %p236 = pneg %p82
      $region18: #{forward.9} parent=11 // pred_check_branch
        %238 = sbr.rel (%p236) target = $region20
      $region19: #{forward.9} parent=11 // pred_region
        _
      $region20: #{forward.9} parent=11 // pred_fallthru
        _
      // Predicated region
      $region21: #{forward.9} parent=11 // pred_check
        %p239 = pneg %p103
      $region22: #{forward.9} parent=11 // pred_check_branch
        %241 = sbr.rel (%p239) target = $region24
      $region23: #{forward.9} parent=11 // pred_region
        _
      $region24: #{forward.9} parent=11 // pred_fallthru
        _
      // Predicated region
      $region25: #{forward.9} parent=11 // pred_check
        %p242 = pneg %p124
      $region26: #{forward.9} parent=11 // pred_check_branch
        %244 = sbr.rel (%p242) target = $region28
      $region27: #{forward.9} parent=11 // pred_region
        _
      $region28: #{forward.9} parent=11 // pred_fallthru
        _
      // Predicated region
      $region29: #{forward.9} parent=11 // pred_check
        %p245 = pneg %p145
      $region30: #{forward.9} parent=11 // pred_check_branch
        %247 = sbr.rel (%p245) target = $region32
      $region31: #{forward.9} parent=11 // pred_region
        _
      $region32: #{forward.9} parent=11 // pred_fallthru
        _
      // Predicated region
      $region33: #{forward.9} parent=11 // pred_check
        %p248 = pneg %p166
      $region34: #{forward.9} parent=11 // pred_check_branch
        %250 = sbr.rel (%p248) target = $region36
      $region35: #{forward.9} parent=11 // pred_region
        _
      $region36: #{forward.9} parent=11 // pred_fallthru
        _
    $region12: #{forward.9} parent=5 // pred_fallthru
      _
    %p251 = scmp.lt.s32.totalorder %s14, 2
    // Predicated region
    $region37: #{forward.9} parent=5 // pred_check
      %p252 = pneg %p251
    $region38: #{forward.9} parent=5 // pred_check_branch
      %254 = sbr.rel (%p252) target = $region40
    $region39: #{forward.9} parent=5 // pred_region
      // Predicated region
      $region41: #{forward.9} parent=39 // pred_check
        %p255 = pneg %p34
      $region42: #{forward.9} parent=39 // pred_check_branch
        %257 = sbr.rel (%p255) target = $region44
      $region43: #{forward.9} parent=39 // pred_region
        %p258 = scmp.lt.s32.totalorder %s14, 1
        %s259 = scalar_select %p258, %s14, 1
        %s260 = smul.addr %s259, 2
        %s261 = smul.addr %s260, 4
        %s262 = scalar_lea.vmem %s0, %s261
      $region44: #{forward.9} parent=39 // pred_fallthru
        _
      // Predicated region
      $region45: #{forward.9} parent=39 // pred_check
        %p263 = pneg %p186
      $region46: #{forward.9} parent=39 // pred_check_branch
        %265 = sbr.rel (%p263) target = $region48
      $region47: #{forward.9} parent=39 // pred_region
        %p266 = scmp.lt.s32.totalorder %s14, 1
        %s267 = scalar_select %p266, %s14, 1
        %s268 = scalar_lea.vmem %s7, %s267
      $region48: #{forward.9} parent=39 // pred_fallthru
        _
    $region40: #{forward.9} parent=5 // pred_fallthru
      _
    %p269 = scmp.le.s32.totalorder 1, %s14
    %p270 = scmp.lt.s32.totalorder %s14, 3
    %p271 = pnand %p269, %p270
    %p272 = pneg %p271
    // Predicated region
    $region49: #{forward.9} parent=5 // pred_check
      _
    $region50: #{forward.9} parent=5 // pred_check_branch
      %274 = sbr.rel (%p271) target = $region52
    $region51: #{forward.9} parent=5 // pred_region
      %s275 = ssub.s32 %s14, 1
      %p276 = scmp.lt.s32.totalorder %s19, 1
      %s277 = scalar_select %p276, %s19, 1
      %s278 = smul.addr %s277, 2
      %s279 = smul.addr %s278, 4
      %s280 = scalar_lea.vmem %s0, %s279
      %p281 = pneg %p40
      %p282 = pneg %p37
      %p283 = pneg %p61
      %p284 = pneg %p58
      %p285 = pneg %p82
      %p286 = pneg %p79
      %p287 = pneg %p103
      %p288 = pneg %p100
      %p289 = pneg %p124
      %p290 = pneg %p121
      %p291 = pneg %p145
      %p292 = pneg %p142
      %p293 = pneg %p166
      %p294 = pneg %p163
      %p295 = scmp.lt.s32.totalorder %s19, 1
      %s296 = scalar_select %p295, %s19, 1
      %s297 = scalar_lea.vmem %s7, %s296
      %p298 = pneg %p192
      %p299 = pneg %p189
      %p300 = pneg %p218
      %p301 = pneg %p215
      %p302 = scmp.lt.s32.totalorder %s19, 1
      %s303 = scalar_select %p302, %s19, 1
      %s304 = smul.addr %s303, 2
      %s305 = smul.addr %s304, 4
      %s306 = scalar_lea.vmem %s8, %s305
      %p307 = scmp.lt.s32.totalorder %s19, 1
      %s308 = scalar_select %p307, %s19, 1
      %s309 = smul.addr %s308, 2
      %s310 = smul.addr %s309, 4
      %s311 = scalar_lea.vmem %s0, %s310
      %p312 = scmp.lt.s32.totalorder %s19, 1
      %s313 = scalar_select %p312, %s19, 1
      %s314 = scalar_lea.vmem %s7, %s313
      %p315 = scmp.lt.s32.totalorder %s19, 1
      %s316 = scalar_select %p315, %s19, 1
      %s317 = smul.addr %s316, 2
      %s318 = smul.addr %s317, 4
      %s319 = scalar_lea.vmem %s8, %s318
      %v321 = vld [vmem:[%s311] sm:$0xff]
      %v322 = vld [vmem:[%s314] sm:$0x1]
      %v323 = vld [vmem:[%s1] sm:$0xff]
      %v324 = vld [vmem:[%s1 + $0x8] sm:$0xff]
      %v325 = vld [vmem:[%s1 + $0x10] sm:$0xff]
      %v326 = vld [vmem:[%s1 + $0x18] sm:$0xff]
      %v327 = vld [vmem:[%s1 + $0x20] sm:$0xff]
      %v328 = vld [vmem:[%s1 + $0x28] sm:$0xff]
      %v329 = vld [vmem:[%s1 + $0x30] sm:$0xff]
      %v330 = vld [vmem:[%s1 + $0x38] sm:$0xff]
      %v331 = vld [vmem:[%s1 + $0x40] sm:$0xff]
      %v332 = vld [vmem:[%s1 + $0x48] sm:$0xff]
      %v333 = vld [vmem:[%s1 + $0x50] sm:$0xff]
      %v334 = vld [vmem:[%s1 + $0x58] sm:$0xff]
      %v335 = vld [vmem:[%s1 + $0x60] sm:$0xff]
      %v336 = vld [vmem:[%s1 + $0x68] sm:$0xff]
      %v337 = vld [vmem:[%s1 + $0x70] sm:$0xff]
      %v338 = vld [vmem:[%s1 + $0x78] sm:$0xff]
      %v339 = vld [vmem:[%s1 + $0x80] sm:$0xff]
      %v340 = vld [vmem:[%s1 + $0x88] sm:$0xff]
      %v341 = vld [vmem:[%s1 + $0x90] sm:$0xff]
      %v342 = vld [vmem:[%s1 + $0x98] sm:$0xff]
      %v343 = vld [vmem:[%s1 + $0xa0] sm:$0xff]
      %v344 = vld [vmem:[%s1 + $0xa8] sm:$0xff]
      %v345 = vld [vmem:[%s1 + $0xb0] sm:$0xff]
      %v346 = vld [vmem:[%s1 + $0xb8] sm:$0xff]
      %v347 = vld [vmem:[%s1 + $0xc0] sm:$0xff]
      %v348 = vld [vmem:[%s1 + $0xc8] sm:$0xff]
      %v349 = vld [vmem:[%s1 + $0xd0] sm:$0xff]
      %v350 = vld [vmem:[%s1 + $0xd8] sm:$0xff]
      %v351 = vld [vmem:[%s1 + $0xe0] sm:$0xff]
      %v352 = vld [vmem:[%s1 + $0xe8] sm:$0xff]
      %v353 = vld [vmem:[%s1 + $0xf0] sm:$0xff]
      %v354 = vld [vmem:[%s1 + $0xf8] sm:$0xff]
      %v355 = vld [vmem:[%s1 + $0x100] sm:$0xff]
      %v356 = vld [vmem:[%s1 + $0x108] sm:$0xff]
      %v357 = vld [vmem:[%s1 + $0x110] sm:$0xff]
      %v358 = vld [vmem:[%s1 + $0x118] sm:$0xff]
      %v359 = vld [vmem:[%s1 + $0x120] sm:$0xff]
      %v360 = vld [vmem:[%s1 + $0x128] sm:$0xff]
      %v361 = vld [vmem:[%s1 + $0x130] sm:$0xff]
      %v362 = vld [vmem:[%s1 + $0x138] sm:$0xff]
      %v363 = vld [vmem:[%s1 + $0x140] sm:$0xff]
      %v364 = vld [vmem:[%s1 + $0x148] sm:$0xff]
      %v365 = vld [vmem:[%s1 + $0x150] sm:$0xff]
      %v366 = vld [vmem:[%s1 + $0x158] sm:$0xff]
      %v367 = vld [vmem:[%s1 + $0x160] sm:$0xff]
      %v368 = vld [vmem:[%s1 + $0x168] sm:$0xff]
      %v369 = vld [vmem:[%s1 + $0x170] sm:$0xff]
      %v370 = vld [vmem:[%s1 + $0x178] sm:$0xff]
      %v371 = vld [vmem:[%s1 + $0x180] sm:$0xff]
      %v372 = vld [vmem:[%s1 + $0x188] sm:$0xff]
      %v373 = vld [vmem:[%s1 + $0x190] sm:$0xff]
      %v374 = vld [vmem:[%s1 + $0x198] sm:$0xff]
      %v375 = vld [vmem:[%s1 + $0x1a0] sm:$0xff]
      %v376 = vld [vmem:[%s1 + $0x1a8] sm:$0xff]
      %v377 = vld [vmem:[%s1 + $0x1b0] sm:$0xff]
      %v378 = vld [vmem:[%s1 + $0x1b8] sm:$0xff]
      %v379 = vld [vmem:[%s1 + $0x1c0] sm:$0xff]
      %v380 = vld [vmem:[%s1 + $0x1c8] sm:$0xff]
      %v381 = vld [vmem:[%s1 + $0x1d0] sm:$0xff]
      %v382 = vld [vmem:[%s1 + $0x1d8] sm:$0xff]
      %v383 = vld [vmem:[%s1 + $0x1e0] sm:$0xff]
      %v384 = vld [vmem:[%s1 + $0x1e8] sm:$0xff]
      %v385 = vld [vmem:[%s1 + $0x1f0] sm:$0xff]
      %v386 = vld [vmem:[%s1 + $0x1f8] sm:$0xff]
      %v387 = vld [vmem:[%s1 + $0x200] sm:$0xff]
      %v388 = vld [vmem:[%s1 + $0x208] sm:$0xff]
      %v389 = vld [vmem:[%s1 + $0x210] sm:$0xff]
      %v390 = vld [vmem:[%s1 + $0x218] sm:$0xff]
      %v391 = vld [vmem:[%s1 + $0x220] sm:$0xff]
      %v392 = vld [vmem:[%s1 + $0x228] sm:$0xff]
      %v393 = vld [vmem:[%s1 + $0x230] sm:$0xff]
      %v394 = vld [vmem:[%s1 + $0x238] sm:$0xff]
      %v395 = vld [vmem:[%s1 + $0x240] sm:$0xff]
      %v396 = vld [vmem:[%s1 + $0x248] sm:$0xff]
      %v397 = vld [vmem:[%s1 + $0x250] sm:$0xff]
      %v398 = vld [vmem:[%s1 + $0x258] sm:$0xff]
      %v399 = vld [vmem:[%s1 + $0x260] sm:$0xff]
      %v400 = vld [vmem:[%s1 + $0x268] sm:$0xff]
      %v401 = vld [vmem:[%s1 + $0x270] sm:$0xff]
      %v402 = vld [vmem:[%s1 + $0x278] sm:$0xff]
      %v403 = vld [vmem:[%s1 + $0x280] sm:$0xff]
      %v404 = vld [vmem:[%s1 + $0x288] sm:$0xff]
      %v405 = vld [vmem:[%s1 + $0x290] sm:$0xff]
      %v406 = vld [vmem:[%s1 + $0x298] sm:$0xff]
      %v407 = vld [vmem:[%s1 + $0x2a0] sm:$0xff]
      %v408 = vld [vmem:[%s1 + $0x2a8] sm:$0xff]
      %v409 = vld [vmem:[%s1 + $0x2b0] sm:$0xff]
      %v410 = vld [vmem:[%s1 + $0x2b8] sm:$0xff]
      %v411 = vld [vmem:[%s1 + $0x2c0] sm:$0xff]
      %v412 = vld [vmem:[%s1 + $0x2c8] sm:$0xff]
      %v413 = vld [vmem:[%s1 + $0x2d0] sm:$0xff]
      %v414 = vld [vmem:[%s1 + $0x2d8] sm:$0xff]
      %v415 = vld [vmem:[%s1 + $0x2e0] sm:$0xff]
      %v416 = vld [vmem:[%s1 + $0x2e8] sm:$0xff]
      %v417 = vld [vmem:[%s1 + $0x2f0] sm:$0xff]
      %v418 = vld [vmem:[%s1 + $0x2f8] sm:$0xff]
      %v419 = vld [vmem:[%s1 + $0x300] sm:$0xff]
      %v420 = vld [vmem:[%s1 + $0x308] sm:$0xff]
      %v421 = vld [vmem:[%s1 + $0x310] sm:$0xff]
      %v422 = vld [vmem:[%s1 + $0x318] sm:$0xff]
      %v423 = vld [vmem:[%s1 + $0x320] sm:$0xff]
      %v424 = vld [vmem:[%s1 + $0x328] sm:$0xff]
      %v425 = vld [vmem:[%s1 + $0x330] sm:$0xff]
      %v426 = vld [vmem:[%s1 + $0x338] sm:$0xff]
      %v427 = vld [vmem:[%s1 + $0x340] sm:$0xff]
      %v428 = vld [vmem:[%s1 + $0x348] sm:$0xff]
      %v429 = vld [vmem:[%s1 + $0x350] sm:$0xff]
      %v430 = vld [vmem:[%s1 + $0x358] sm:$0xff]
      %v431 = vld [vmem:[%s1 + $0x360] sm:$0xff]
      %v432 = vld [vmem:[%s1 + $0x368] sm:$0xff]
      %v433 = vld [vmem:[%s1 + $0x370] sm:$0xff]
      %v434 = vld [vmem:[%s1 + $0x378] sm:$0xff]
      %v435 = vld [vmem:[%s1 + $0x380] sm:$0xff]
      %v436 = vld [vmem:[%s1 + $0x388] sm:$0xff]
      %v437 = vld [vmem:[%s1 + $0x390] sm:$0xff]
      %v438 = vld [vmem:[%s1 + $0x398] sm:$0xff]
      %v439 = vld [vmem:[%s1 + $0x3a0] sm:$0xff]
      %v440 = vld [vmem:[%s1 + $0x3a8] sm:$0xff]
      %v441 = vld [vmem:[%s1 + $0x3b0] sm:$0xff]
      %v442 = vld [vmem:[%s1 + $0x3b8] sm:$0xff]
      %v443 = vld [vmem:[%s1 + $0x3c0] sm:$0xff]
      %v444 = vld [vmem:[%s1 + $0x3c8] sm:$0xff]
      %v445 = vld [vmem:[%s1 + $0x3d0] sm:$0xff]
      %v446 = vld [vmem:[%s1 + $0x3d8] sm:$0xff]
      %v447 = vld [vmem:[%s1 + $0x3e0] sm:$0xff]
      %v448 = vld [vmem:[%s1 + $0x3e8] sm:$0xff]
      %v449 = vld [vmem:[%s1 + $0x3f0] sm:$0xff]
      %v450 = vld [vmem:[%s1 + $0x3f8] sm:$0xff]
      %v451 = vld [vmem:[%s1 + $0x400] sm:$0xff]
      %v452 = vld [vmem:[%s1 + $0x408] sm:$0xff]
      %v453 = vld [vmem:[%s1 + $0x410] sm:$0xff]
      %v454 = vld [vmem:[%s1 + $0x418] sm:$0xff]
      %v455 = vld [vmem:[%s1 + $0x420] sm:$0xff]
      %v456 = vld [vmem:[%s1 + $0x428] sm:$0xff]
      %v457 = vld [vmem:[%s1 + $0x430] sm:$0xff]
      %v458 = vld [vmem:[%s1 + $0x438] sm:$0xff]
      %v459 = vld [vmem:[%s1 + $0x440] sm:$0xff]
      %v460 = vld [vmem:[%s1 + $0x448] sm:$0xff]
      %v461 = vld [vmem:[%s1 + $0x450] sm:$0xff]
      %v462 = vld [vmem:[%s1 + $0x458] sm:$0xff]
      %v463 = vld [vmem:[%s1 + $0x460] sm:$0xff]
      %v464 = vld [vmem:[%s1 + $0x468] sm:$0xff]
      %v465 = vld [vmem:[%s1 + $0x470] sm:$0xff]
      %v466 = vld [vmem:[%s1 + $0x478] sm:$0xff]
      %v467 = vld [vmem:[%s1 + $0x480] sm:$0xff]
      %v468 = vld [vmem:[%s1 + $0x488] sm:$0xff]
      %v469 = vld [vmem:[%s1 + $0x490] sm:$0xff]
      %v470 = vld [vmem:[%s1 + $0x498] sm:$0xff]
      %v471 = vld [vmem:[%s1 + $0x4a0] sm:$0xff]
      %v472 = vld [vmem:[%s1 + $0x4a8] sm:$0xff]
      %v473 = vld [vmem:[%s1 + $0x4b0] sm:$0xff]
      %v474 = vld [vmem:[%s1 + $0x4b8] sm:$0xff]
      %v475 = vld [vmem:[%s1 + $0x4c0] sm:$0xff]
      %v476 = vld [vmem:[%s1 + $0x4c8] sm:$0xff]
      %v477 = vld [vmem:[%s1 + $0x4d0] sm:$0xff]
      %v478 = vld [vmem:[%s1 + $0x4d8] sm:$0xff]
      %v479 = vld [vmem:[%s1 + $0x4e0] sm:$0xff]
      %v480 = vld [vmem:[%s1 + $0x4e8] sm:$0xff]
      %v481 = vld [vmem:[%s1 + $0x4f0] sm:$0xff]
      %v482 = vld [vmem:[%s1 + $0x4f8] sm:$0xff]
      %v483 = vld [vmem:[%s1 + $0x500] sm:$0xff]
      %v484 = vld [vmem:[%s1 + $0x508] sm:$0xff]
      %v485 = vld [vmem:[%s1 + $0x510] sm:$0xff]
      %v486 = vld [vmem:[%s1 + $0x518] sm:$0xff]
      %v487 = vld [vmem:[%s1 + $0x520] sm:$0xff]
      %v488 = vld [vmem:[%s1 + $0x528] sm:$0xff]
      %v489 = vld [vmem:[%s1 + $0x530] sm:$0xff]
      %v490 = vld [vmem:[%s1 + $0x538] sm:$0xff]
      %v491 = vld [vmem:[%s1 + $0x540] sm:$0xff]
      %v492 = vld [vmem:[%s1 + $0x548] sm:$0xff]
      %v493 = vld [vmem:[%s1 + $0x550] sm:$0xff]
      %v494 = vld [vmem:[%s1 + $0x558] sm:$0xff]
      %v495 = vld [vmem:[%s1 + $0x560] sm:$0xff]
      %v496 = vld [vmem:[%s1 + $0x568] sm:$0xff]
      %v497 = vld [vmem:[%s1 + $0x570] sm:$0xff]
      %v498 = vld [vmem:[%s1 + $0x578] sm:$0xff]
      %v499 = vld [vmem:[%s1 + $0x580] sm:$0xff]
      %v500 = vld [vmem:[%s1 + $0x588] sm:$0xff]
      %v501 = vld [vmem:[%s1 + $0x590] sm:$0xff]
      %v502 = vld [vmem:[%s1 + $0x598] sm:$0xff]
      %v503 = vld [vmem:[%s1 + $0x5a0] sm:$0xff]
      %v504 = vld [vmem:[%s1 + $0x5a8] sm:$0xff]
      %v505 = vld [vmem:[%s1 + $0x5b0] sm:$0xff]
      %v506 = vld [vmem:[%s1 + $0x5b8] sm:$0xff]
      %v507 = vld [vmem:[%s1 + $0x5c0] sm:$0xff]
      %v508 = vld [vmem:[%s1 + $0x5c8] sm:$0xff]
      %v509 = vld [vmem:[%s1 + $0x5d0] sm:$0xff]
      %v510 = vld [vmem:[%s1 + $0x5d8] sm:$0xff]
      %v511 = vld [vmem:[%s1 + $0x5e0] sm:$0xff]
      %v512 = vld [vmem:[%s1 + $0x5e8] sm:$0xff]
      %v513 = vld [vmem:[%s1 + $0x5f0] sm:$0xff]
      %v514 = vld [vmem:[%s1 + $0x5f8] sm:$0xff]
      %v515 = vld [vmem:[%s2] sm:$0xff]
      %v516 = vld [vmem:[%s2 + $0x8] sm:$0xf]
      %v517 = vunpack.c.l.bf16 %v515
      %v518 = vunpack.c.h.bf16 %v515
      %v519 = vunpack.c.l.bf16 %v516
      %v523 = vlaneseq
      %v524 = vshrl.u32 %v523, 7
      %v525 = vsub.s32 0, %v524
      %v526 = vrot.slane %v517, %v525
      %v527 = vlaneseq
      %v528 = vshrl.u32 %v527, 7
      %v529 = vsub.s32 2, %v528
      %v530 = vrot.slane %v517, %v529
      %v531 = vlaneseq
      %v532 = vshrl.u32 %v531, 7
      %v533 = vsub.s32 4, %v532
      %v534 = vrot.slane %v517, %v533
      %v535 = vlaneseq
      %v536 = vshrl.u32 %v535, 7
      %v537 = vsub.s32 6, %v536
      %v538 = vrot.slane %v517, %v537
      %v539 = vlaneseq
      %v540 = vshrl.u32 %v539, 7
      %v541 = vsub.s32 0, %v540
      %v542 = vrot.slane %v518, %v541
      %v543 = vlaneseq
      %v544 = vshrl.u32 %v543, 7
      %v545 = vsub.s32 2, %v544
      %v546 = vrot.slane %v518, %v545
      %v547 = vlaneseq
      %v548 = vshrl.u32 %v547, 7
      %v549 = vsub.s32 4, %v548
      %v550 = vrot.slane %v518, %v549
      %v551 = vlaneseq
      %v552 = vshrl.u32 %v551, 7
      %v553 = vsub.s32 6, %v552
      %v554 = vrot.slane %v518, %v553
      %v555 = vlaneseq
      %v556 = vshrl.u32 %v555, 7
      %v557 = vsub.s32 0, %v556
      %v558 = vrot.slane %v519, %v557
      %v559 = vlaneseq
      %v560 = vshrl.u32 %v559, 7
      %v561 = vsub.s32 2, %v560
      %v562 = vrot.slane %v519, %v561
      %v563 = vlaneseq
      %v564 = vshrl.u32 %v563, 7
      %v565 = vsub.s32 4, %v564
      %v566 = vrot.slane %v519, %v565
      %v567 = vlaneseq
      %v568 = vshrl.u32 %v567, 7
      %v569 = vsub.s32 6, %v568
      %v570 = vrot.slane %v519, %v569
      %v583 = vlaneseq
      %v584 = vshrl.u32 %v583, 7
      %v585 = vsub.s32 0, %v584
      %v586 = vrot.slane %v526, %v585
      %v587 = vlaneseq
      %v588 = vshrl.u32 %v587, 7
      %v589 = vsub.s32 0, %v588
      %v590 = vrot.slane %v530, %v589
      %v591 = vlaneseq
      %v592 = vshrl.u32 %v591, 7
      %v593 = vsub.s32 0, %v592
      %v594 = vrot.slane %v534, %v593
      %v595 = vlaneseq
      %v596 = vshrl.u32 %v595, 7
      %v597 = vsub.s32 0, %v596
      %v598 = vrot.slane %v538, %v597
      %v599 = vlaneseq
      %v600 = vshrl.u32 %v599, 7
      %v601 = vsub.s32 0, %v600
      %v602 = vrot.slane %v542, %v601
      %v603 = vlaneseq
      %v604 = vshrl.u32 %v603, 7
      %v605 = vsub.s32 0, %v604
      %v606 = vrot.slane %v546, %v605
      %v607 = vlaneseq
      %v608 = vshrl.u32 %v607, 7
      %v609 = vsub.s32 0, %v608
      %v610 = vrot.slane %v550, %v609
      %v611 = vlaneseq
      %v612 = vshrl.u32 %v611, 7
      %v613 = vsub.s32 0, %v612
      %v614 = vrot.slane %v554, %v613
      %v615 = vlaneseq
      %v616 = vshrl.u32 %v615, 7
      %v617 = vsub.s32 0, %v616
      %v618 = vrot.slane %v558, %v617
      %v619 = vlaneseq
      %v620 = vshrl.u32 %v619, 7
      %v621 = vsub.s32 0, %v620
      %v622 = vrot.slane %v562, %v621
      %v623 = vlaneseq
      %v624 = vshrl.u32 %v623, 7
      %v625 = vsub.s32 0, %v624
      %v626 = vrot.slane %v566, %v625
      %v627 = vlaneseq
      %v628 = vshrl.u32 %v627, 7
      %v629 = vsub.s32 0, %v628
      %v630 = vrot.slane %v570, %v629
      %v632 = vunpack.c.l.b16 %v321
      %v633 = vunpack.c.h.b16 %v321
      %v634 = vpack.c.b16 %v632, %v632
      %v635 = vpack.c.b16 %v633, %v633
      %v830 = vunpack.c.l.b16 %v323
      %v831 = vunpack.c.h.b16 %v323
      %v832 = vunpack.c.l.b16 %v324
      %v833 = vunpack.c.h.b16 %v324
      %v834 = vunpack.c.l.b16 %v325
      %v835 = vunpack.c.h.b16 %v325
      %v836 = vunpack.c.l.b16 %v326
      %v837 = vunpack.c.h.b16 %v326
      %v838 = vunpack.c.l.b16 %v327
      %v839 = vunpack.c.h.b16 %v327
      %v840 = vunpack.c.l.b16 %v328
      %v841 = vunpack.c.h.b16 %v328
      %v842 = vunpack.c.l.b16 %v329
      %v843 = vunpack.c.h.b16 %v329
      %v844 = vunpack.c.l.b16 %v330
      %v845 = vunpack.c.h.b16 %v330
      %v846 = vunpack.c.l.b16 %v331
      %v847 = vunpack.c.h.b16 %v331
      %v848 = vunpack.c.l.b16 %v332
      %v849 = vunpack.c.h.b16 %v332
      %v850 = vunpack.c.l.b16 %v333
      %v851 = vunpack.c.h.b16 %v333
      %v852 = vunpack.c.l.b16 %v334
      %v853 = vunpack.c.h.b16 %v334
      %v854 = vunpack.c.l.b16 %v335
      %v855 = vunpack.c.h.b16 %v335
      %v856 = vunpack.c.l.b16 %v336
      %v857 = vunpack.c.h.b16 %v336
      %v858 = vunpack.c.l.b16 %v337
      %v859 = vunpack.c.h.b16 %v337
      %v860 = vunpack.c.l.b16 %v338
      %v861 = vunpack.c.h.b16 %v338
      %v862 = vunpack.c.l.b16 %v339
      %v863 = vunpack.c.h.b16 %v339
      %v864 = vunpack.c.l.b16 %v340
      %v865 = vunpack.c.h.b16 %v340
      %v866 = vunpack.c.l.b16 %v341
      %v867 = vunpack.c.h.b16 %v341
      %v868 = vunpack.c.l.b16 %v342
      %v869 = vunpack.c.h.b16 %v342
      %v870 = vunpack.c.l.b16 %v343
      %v871 = vunpack.c.h.b16 %v343
      %v872 = vunpack.c.l.b16 %v344
      %v873 = vunpack.c.h.b16 %v344
      %v874 = vunpack.c.l.b16 %v345
      %v875 = vunpack.c.h.b16 %v345
      %v876 = vunpack.c.l.b16 %v346
      %v877 = vunpack.c.h.b16 %v346
      %v878 = vunpack.c.l.b16 %v347
      %v879 = vunpack.c.h.b16 %v347
      %v880 = vunpack.c.l.b16 %v348
      %v881 = vunpack.c.h.b16 %v348
      %v882 = vunpack.c.l.b16 %v349
      %v883 = vunpack.c.h.b16 %v349
      %v884 = vunpack.c.l.b16 %v350
      %v885 = vunpack.c.h.b16 %v350
      %v886 = vunpack.c.l.b16 %v351
      %v887 = vunpack.c.h.b16 %v351
      %v888 = vunpack.c.l.b16 %v352
      %v889 = vunpack.c.h.b16 %v352
      %v890 = vunpack.c.l.b16 %v353
      %v891 = vunpack.c.h.b16 %v353
      %v892 = vunpack.c.l.b16 %v354
      %v893 = vunpack.c.h.b16 %v354
      %v894 = vunpack.c.l.b16 %v355
      %v895 = vunpack.c.h.b16 %v355
      %v896 = vunpack.c.l.b16 %v356
      %v897 = vunpack.c.h.b16 %v356
      %v898 = vunpack.c.l.b16 %v357
      %v899 = vunpack.c.h.b16 %v357
      %v900 = vunpack.c.l.b16 %v358
      %v901 = vunpack.c.h.b16 %v358
      %v902 = vunpack.c.l.b16 %v359
      %v903 = vunpack.c.h.b16 %v359
      %v904 = vunpack.c.l.b16 %v360
      %v905 = vunpack.c.h.b16 %v360
      %v906 = vunpack.c.l.b16 %v361
      %v907 = vunpack.c.h.b16 %v361
      %v908 = vunpack.c.l.b16 %v362
      %v909 = vunpack.c.h.b16 %v362
      %v910 = vunpack.c.l.b16 %v363
      %v911 = vunpack.c.h.b16 %v363
      %v912 = vunpack.c.l.b16 %v364
      %v913 = vunpack.c.h.b16 %v364
      %v914 = vunpack.c.l.b16 %v365
      %v915 = vunpack.c.h.b16 %v365
      %v916 = vunpack.c.l.b16 %v366
      %v917 = vunpack.c.h.b16 %v366
      %v918 = vunpack.c.l.b16 %v367
      %v919 = vunpack.c.h.b16 %v367
      %v920 = vunpack.c.l.b16 %v368
      %v921 = vunpack.c.h.b16 %v368
      %v922 = vunpack.c.l.b16 %v369
      %v923 = vunpack.c.h.b16 %v369
      %v924 = vunpack.c.l.b16 %v370
      %v925 = vunpack.c.h.b16 %v370
      %v926 = vunpack.c.l.b16 %v371
      %v927 = vunpack.c.h.b16 %v371
      %v928 = vunpack.c.l.b16 %v372
      %v929 = vunpack.c.h.b16 %v372
      %v930 = vunpack.c.l.b16 %v373
      %v931 = vunpack.c.h.b16 %v373
      %v932 = vunpack.c.l.b16 %v374
      %v933 = vunpack.c.h.b16 %v374
      %v934 = vunpack.c.l.b16 %v375
      %v935 = vunpack.c.h.b16 %v375
      %v936 = vunpack.c.l.b16 %v376
      %v937 = vunpack.c.h.b16 %v376
      %v938 = vunpack.c.l.b16 %v377
      %v939 = vunpack.c.h.b16 %v377
      %v940 = vunpack.c.l.b16 %v378
      %v941 = vunpack.c.h.b16 %v378
      %v942 = vunpack.c.l.b16 %v379
      %v943 = vunpack.c.h.b16 %v379
      %v944 = vunpack.c.l.b16 %v380
      %v945 = vunpack.c.h.b16 %v380
      %v946 = vunpack.c.l.b16 %v381
      %v947 = vunpack.c.h.b16 %v381
      %v948 = vunpack.c.l.b16 %v382
      %v949 = vunpack.c.h.b16 %v382
      %v950 = vunpack.c.l.b16 %v383
      %v951 = vunpack.c.h.b16 %v383
      %v952 = vunpack.c.l.b16 %v384
      %v953 = vunpack.c.h.b16 %v384
      %v954 = vunpack.c.l.b16 %v385
      %v955 = vunpack.c.h.b16 %v385
      %v956 = vunpack.c.l.b16 %v386
      %v957 = vunpack.c.h.b16 %v386
      %v958 = vunpack.c.l.b16 %v387
      %v959 = vunpack.c.h.b16 %v387
      %v960 = vunpack.c.l.b16 %v388
      %v961 = vunpack.c.h.b16 %v388
      %v962 = vunpack.c.l.b16 %v389
      %v963 = vunpack.c.h.b16 %v389
      %v964 = vunpack.c.l.b16 %v390
      %v965 = vunpack.c.h.b16 %v390
      %v966 = vunpack.c.l.b16 %v391
      %v967 = vunpack.c.h.b16 %v391
      %v968 = vunpack.c.l.b16 %v392
      %v969 = vunpack.c.h.b16 %v392
      %v970 = vunpack.c.l.b16 %v393
      %v971 = vunpack.c.h.b16 %v393
      %v972 = vunpack.c.l.b16 %v394
      %v973 = vunpack.c.h.b16 %v394
      %v974 = vunpack.c.l.b16 %v395
      %v975 = vunpack.c.h.b16 %v395
      %v976 = vunpack.c.l.b16 %v396
      %v977 = vunpack.c.h.b16 %v396
      %v978 = vunpack.c.l.b16 %v397
      %v979 = vunpack.c.h.b16 %v397
      %v980 = vunpack.c.l.b16 %v398
      %v981 = vunpack.c.h.b16 %v398
      %v982 = vunpack.c.l.b16 %v399
      %v983 = vunpack.c.h.b16 %v399
      %v984 = vunpack.c.l.b16 %v400
      %v985 = vunpack.c.h.b16 %v400
      %v986 = vunpack.c.l.b16 %v401
      %v987 = vunpack.c.h.b16 %v401
      %v988 = vunpack.c.l.b16 %v402
      %v989 = vunpack.c.h.b16 %v402
      %v990 = vunpack.c.l.b16 %v403
      %v991 = vunpack.c.h.b16 %v403
      %v992 = vunpack.c.l.b16 %v404
      %v993 = vunpack.c.h.b16 %v404
      %v994 = vunpack.c.l.b16 %v405
      %v995 = vunpack.c.h.b16 %v405
      %v996 = vunpack.c.l.b16 %v406
      %v997 = vunpack.c.h.b16 %v406
      %v998 = vunpack.c.l.b16 %v407
      %v999 = vunpack.c.h.b16 %v407
      %v1000 = vunpack.c.l.b16 %v408
      %v1001 = vunpack.c.h.b16 %v408
      %v1002 = vunpack.c.l.b16 %v409
      %v1003 = vunpack.c.h.b16 %v409
      %v1004 = vunpack.c.l.b16 %v410
      %v1005 = vunpack.c.h.b16 %v410
      %v1006 = vunpack.c.l.b16 %v411
      %v1007 = vunpack.c.h.b16 %v411
      %v1008 = vunpack.c.l.b16 %v412
      %v1009 = vunpack.c.h.b16 %v412
      %v1010 = vunpack.c.l.b16 %v413
      %v1011 = vunpack.c.h.b16 %v413
      %v1012 = vunpack.c.l.b16 %v414
      %v1013 = vunpack.c.h.b16 %v414
      %v1014 = vunpack.c.l.b16 %v415
      %v1015 = vunpack.c.h.b16 %v415
      %v1016 = vunpack.c.l.b16 %v416
      %v1017 = vunpack.c.h.b16 %v416
      %v1018 = vunpack.c.l.b16 %v417
      %v1019 = vunpack.c.h.b16 %v417
      %v1020 = vunpack.c.l.b16 %v418
      %v1021 = vunpack.c.h.b16 %v418
      %v1022 = vunpack.c.l.b16 %v419
      %v1023 = vunpack.c.h.b16 %v419
      %v1024 = vunpack.c.l.b16 %v420
      %v1025 = vunpack.c.h.b16 %v420
      %v1026 = vunpack.c.l.b16 %v421
      %v1027 = vunpack.c.h.b16 %v421
      %v1028 = vunpack.c.l.b16 %v422
      %v1029 = vunpack.c.h.b16 %v422
      %v1030 = vunpack.c.l.b16 %v423
      %v1031 = vunpack.c.h.b16 %v423
      %v1032 = vunpack.c.l.b16 %v424
      %v1033 = vunpack.c.h.b16 %v424
      %v1034 = vunpack.c.l.b16 %v425
      %v1035 = vunpack.c.h.b16 %v425
      %v1036 = vunpack.c.l.b16 %v426
      %v1037 = vunpack.c.h.b16 %v426
      %v1038 = vunpack.c.l.b16 %v427
      %v1039 = vunpack.c.h.b16 %v427
      %v1040 = vunpack.c.l.b16 %v428
      %v1041 = vunpack.c.h.b16 %v428
      %v1042 = vunpack.c.l.b16 %v429
      %v1043 = vunpack.c.h.b16 %v429
      %v1044 = vunpack.c.l.b16 %v430
      %v1045 = vunpack.c.h.b16 %v430
      %v1046 = vunpack.c.l.b16 %v431
      %v1047 = vunpack.c.h.b16 %v431
      %v1048 = vunpack.c.l.b16 %v432
      %v1049 = vunpack.c.h.b16 %v432
      %v1050 = vunpack.c.l.b16 %v433
      %v1051 = vunpack.c.h.b16 %v433
      %v1052 = vunpack.c.l.b16 %v434
      %v1053 = vunpack.c.h.b16 %v434
      %v1054 = vunpack.c.l.b16 %v435
      %v1055 = vunpack.c.h.b16 %v435
      %v1056 = vunpack.c.l.b16 %v436
      %v1057 = vunpack.c.h.b16 %v436
      %v1058 = vunpack.c.l.b16 %v437
      %v1059 = vunpack.c.h.b16 %v437
      %v1060 = vunpack.c.l.b16 %v438
      %v1061 = vunpack.c.h.b16 %v438
      %v1062 = vunpack.c.l.b16 %v439
      %v1063 = vunpack.c.h.b16 %v439
      %v1064 = vunpack.c.l.b16 %v440
      %v1065 = vunpack.c.h.b16 %v440
      %v1066 = vunpack.c.l.b16 %v441
      %v1067 = vunpack.c.h.b16 %v441
      %v1068 = vunpack.c.l.b16 %v442
      %v1069 = vunpack.c.h.b16 %v442
      %v1070 = vunpack.c.l.b16 %v443
      %v1071 = vunpack.c.h.b16 %v443
      %v1072 = vunpack.c.l.b16 %v444
      %v1073 = vunpack.c.h.b16 %v444
      %v1074 = vunpack.c.l.b16 %v445
      %v1075 = vunpack.c.h.b16 %v445
      %v1076 = vunpack.c.l.b16 %v446
      %v1077 = vunpack.c.h.b16 %v446
      %v1078 = vunpack.c.l.b16 %v447
      %v1079 = vunpack.c.h.b16 %v447
      %v1080 = vunpack.c.l.b16 %v448
      %v1081 = vunpack.c.h.b16 %v448
      %v1082 = vunpack.c.l.b16 %v449
      %v1083 = vunpack.c.h.b16 %v449
      %v1084 = vunpack.c.l.b16 %v450
      %v1085 = vunpack.c.h.b16 %v450
      %v1086 = vunpack.c.l.b16 %v451
      %v1087 = vunpack.c.h.b16 %v451
      %v1088 = vunpack.c.l.b16 %v452
      %v1089 = vunpack.c.h.b16 %v452
      %v1090 = vunpack.c.l.b16 %v453
      %v1091 = vunpack.c.h.b16 %v453
      %v1092 = vunpack.c.l.b16 %v454
      %v1093 = vunpack.c.h.b16 %v454
      %v1094 = vunpack.c.l.b16 %v455
      %v1095 = vunpack.c.h.b16 %v455
      %v1096 = vunpack.c.l.b16 %v456
      %v1097 = vunpack.c.h.b16 %v456
      %v1098 = vunpack.c.l.b16 %v457
      %v1099 = vunpack.c.h.b16 %v457
      %v1100 = vunpack.c.l.b16 %v458
      %v1101 = vunpack.c.h.b16 %v458
      %v1102 = vunpack.c.l.b16 %v459
      %v1103 = vunpack.c.h.b16 %v459
      %v1104 = vunpack.c.l.b16 %v460
      %v1105 = vunpack.c.h.b16 %v460
      %v1106 = vunpack.c.l.b16 %v461
      %v1107 = vunpack.c.h.b16 %v461
      %v1108 = vunpack.c.l.b16 %v462
      %v1109 = vunpack.c.h.b16 %v462
      %v1110 = vunpack.c.l.b16 %v463
      %v1111 = vunpack.c.h.b16 %v463
      %v1112 = vunpack.c.l.b16 %v464
      %v1113 = vunpack.c.h.b16 %v464
      %v1114 = vunpack.c.l.b16 %v465
      %v1115 = vunpack.c.h.b16 %v465
      %v1116 = vunpack.c.l.b16 %v466
      %v1117 = vunpack.c.h.b16 %v466
      %v1118 = vunpack.c.l.b16 %v467
      %v1119 = vunpack.c.h.b16 %v467
      %v1120 = vunpack.c.l.b16 %v468
      %v1121 = vunpack.c.h.b16 %v468
      %v1122 = vunpack.c.l.b16 %v469
      %v1123 = vunpack.c.h.b16 %v469
      %v1124 = vunpack.c.l.b16 %v470
      %v1125 = vunpack.c.h.b16 %v470
      %v1126 = vunpack.c.l.b16 %v471
      %v1127 = vunpack.c.h.b16 %v471
      %v1128 = vunpack.c.l.b16 %v472
      %v1129 = vunpack.c.h.b16 %v472
      %v1130 = vunpack.c.l.b16 %v473
      %v1131 = vunpack.c.h.b16 %v473
      %v1132 = vunpack.c.l.b16 %v474
      %v1133 = vunpack.c.h.b16 %v474
      %v1134 = vunpack.c.l.b16 %v475
      %v1135 = vunpack.c.h.b16 %v475
      %v1136 = vunpack.c.l.b16 %v476
      %v1137 = vunpack.c.h.b16 %v476
      %v1138 = vunpack.c.l.b16 %v477
      %v1139 = vunpack.c.h.b16 %v477
      %v1140 = vunpack.c.l.b16 %v478
      %v1141 = vunpack.c.h.b16 %v478
      %v1142 = vunpack.c.l.b16 %v479
      %v1143 = vunpack.c.h.b16 %v479
      %v1144 = vunpack.c.l.b16 %v480
      %v1145 = vunpack.c.h.b16 %v480
      %v1146 = vunpack.c.l.b16 %v481
      %v1147 = vunpack.c.h.b16 %v481
      %v1148 = vunpack.c.l.b16 %v482
      %v1149 = vunpack.c.h.b16 %v482
      %v1150 = vunpack.c.l.b16 %v483
      %v1151 = vunpack.c.h.b16 %v483
      %v1152 = vunpack.c.l.b16 %v484
      %v1153 = vunpack.c.h.b16 %v484
      %v1154 = vunpack.c.l.b16 %v485
      %v1155 = vunpack.c.h.b16 %v485
      %v1156 = vunpack.c.l.b16 %v486
      %v1157 = vunpack.c.h.b16 %v486
      %v1158 = vunpack.c.l.b16 %v487
      %v1159 = vunpack.c.h.b16 %v487
      %v1160 = vunpack.c.l.b16 %v488
      %v1161 = vunpack.c.h.b16 %v488
      %v1162 = vunpack.c.l.b16 %v489
      %v1163 = vunpack.c.h.b16 %v489
      %v1164 = vunpack.c.l.b16 %v490
      %v1165 = vunpack.c.h.b16 %v490
      %v1166 = vunpack.c.l.b16 %v491
      %v1167 = vunpack.c.h.b16 %v491
      %v1168 = vunpack.c.l.b16 %v492
      %v1169 = vunpack.c.h.b16 %v492
      %v1170 = vunpack.c.l.b16 %v493
      %v1171 = vunpack.c.h.b16 %v493
      %v1172 = vunpack.c.l.b16 %v494
      %v1173 = vunpack.c.h.b16 %v494
      %v1174 = vunpack.c.l.b16 %v495
      %v1175 = vunpack.c.h.b16 %v495
      %v1176 = vunpack.c.l.b16 %v496
      %v1177 = vunpack.c.h.b16 %v496
      %v1178 = vunpack.c.l.b16 %v497
      %v1179 = vunpack.c.h.b16 %v497
      %v1180 = vunpack.c.l.b16 %v498
      %v1181 = vunpack.c.h.b16 %v498
      %v1182 = vunpack.c.l.b16 %v499
      %v1183 = vunpack.c.h.b16 %v499
      %v1184 = vunpack.c.l.b16 %v500
      %v1185 = vunpack.c.h.b16 %v500
      %v1186 = vunpack.c.l.b16 %v501
      %v1187 = vunpack.c.h.b16 %v501
      %v1188 = vunpack.c.l.b16 %v502
      %v1189 = vunpack.c.h.b16 %v502
      %v1190 = vunpack.c.l.b16 %v503
      %v1191 = vunpack.c.h.b16 %v503
      %v1192 = vunpack.c.l.b16 %v504
      %v1193 = vunpack.c.h.b16 %v504
      %v1194 = vunpack.c.l.b16 %v505
      %v1195 = vunpack.c.h.b16 %v505
      %v1196 = vunpack.c.l.b16 %v506
      %v1197 = vunpack.c.h.b16 %v506
      %v1198 = vunpack.c.l.b16 %v507
      %v1199 = vunpack.c.h.b16 %v507
      %v1200 = vunpack.c.l.b16 %v508
      %v1201 = vunpack.c.h.b16 %v508
      %v1202 = vunpack.c.l.b16 %v509
      %v1203 = vunpack.c.h.b16 %v509
      %v1204 = vunpack.c.l.b16 %v510
      %v1205 = vunpack.c.h.b16 %v510
      %v1206 = vunpack.c.l.b16 %v511
      %v1207 = vunpack.c.h.b16 %v511
      %v1208 = vunpack.c.l.b16 %v512
      %v1209 = vunpack.c.h.b16 %v512
      %v1210 = vunpack.c.l.b16 %v513
      %v1211 = vunpack.c.h.b16 %v513
      %v1212 = vunpack.c.l.b16 %v514
      %v1213 = vunpack.c.h.b16 %v514
      %v1214 = vpack.c.b16 %v842, %v830
      %v1215 = vpack.c.b16 %v843, %v831
      %v1216 = vpack.c.b16 %v844, %v832
      %v1217 = vpack.c.b16 %v845, %v833
      %v1218 = vpack.c.b16 %v846, %v834
      %v1219 = vpack.c.b16 %v847, %v835
      %v1220 = vpack.c.b16 %v848, %v836
      %v1221 = vpack.c.b16 %v849, %v837
      %v1222 = vpack.c.b16 %v850, %v838
      %v1223 = vpack.c.b16 %v851, %v839
      %v1224 = vpack.c.b16 %v852, %v840
      %v1225 = vpack.c.b16 %v853, %v841
      %v1226 = vpack.c.b16 %v866, %v854
      %v1227 = vpack.c.b16 %v867, %v855
      %v1228 = vpack.c.b16 %v868, %v856
      %v1229 = vpack.c.b16 %v869, %v857
      %v1230 = vpack.c.b16 %v870, %v858
      %v1231 = vpack.c.b16 %v871, %v859
      %v1232 = vpack.c.b16 %v872, %v860
      %v1233 = vpack.c.b16 %v873, %v861
      %v1234 = vpack.c.b16 %v874, %v862
      %v1235 = vpack.c.b16 %v875, %v863
      %v1236 = vpack.c.b16 %v876, %v864
      %v1237 = vpack.c.b16 %v877, %v865
      %v1238 = vpack.c.b16 %v890, %v878
      %v1239 = vpack.c.b16 %v891, %v879
      %v1240 = vpack.c.b16 %v892, %v880
      %v1241 = vpack.c.b16 %v893, %v881
      %v1242 = vpack.c.b16 %v894, %v882
      %v1243 = vpack.c.b16 %v895, %v883
      %v1244 = vpack.c.b16 %v896, %v884
      %v1245 = vpack.c.b16 %v897, %v885
      %v1246 = vpack.c.b16 %v898, %v886
      %v1247 = vpack.c.b16 %v899, %v887
      %v1248 = vpack.c.b16 %v900, %v888
      %v1249 = vpack.c.b16 %v901, %v889
      %v1250 = vpack.c.b16 %v914, %v902
      %v1251 = vpack.c.b16 %v915, %v903
      %v1252 = vpack.c.b16 %v916, %v904
      %v1253 = vpack.c.b16 %v917, %v905
      %v1254 = vpack.c.b16 %v918, %v906
      %v1255 = vpack.c.b16 %v919, %v907
      %v1256 = vpack.c.b16 %v920, %v908
      %v1257 = vpack.c.b16 %v921, %v909
      %v1258 = vpack.c.b16 %v922, %v910
      %v1259 = vpack.c.b16 %v923, %v911
      %v1260 = vpack.c.b16 %v924, %v912
      %v1261 = vpack.c.b16 %v925, %v913
      %v1262 = vpack.c.b16 %v938, %v926
      %v1263 = vpack.c.b16 %v939, %v927
      %v1264 = vpack.c.b16 %v940, %v928
      %v1265 = vpack.c.b16 %v941, %v929
      %v1266 = vpack.c.b16 %v942, %v930
      %v1267 = vpack.c.b16 %v943, %v931
      %v1268 = vpack.c.b16 %v944, %v932
      %v1269 = vpack.c.b16 %v945, %v933
      %v1270 = vpack.c.b16 %v946, %v934
      %v1271 = vpack.c.b16 %v947, %v935
      %v1272 = vpack.c.b16 %v948, %v936
      %v1273 = vpack.c.b16 %v949, %v937
      %v1274 = vpack.c.b16 %v962, %v950
      %v1275 = vpack.c.b16 %v963, %v951
      %v1276 = vpack.c.b16 %v964, %v952
      %v1277 = vpack.c.b16 %v965, %v953
      %v1278 = vpack.c.b16 %v966, %v954
      %v1279 = vpack.c.b16 %v967, %v955
      %v1280 = vpack.c.b16 %v968, %v956
      %v1281 = vpack.c.b16 %v969, %v957
      %v1282 = vpack.c.b16 %v970, %v958
      %v1283 = vpack.c.b16 %v971, %v959
      %v1284 = vpack.c.b16 %v972, %v960
      %v1285 = vpack.c.b16 %v973, %v961
      %v1286 = vpack.c.b16 %v986, %v974
      %v1287 = vpack.c.b16 %v987, %v975
      %v1288 = vpack.c.b16 %v988, %v976
      %v1289 = vpack.c.b16 %v989, %v977
      %v1290 = vpack.c.b16 %v990, %v978
      %v1291 = vpack.c.b16 %v991, %v979
      %v1292 = vpack.c.b16 %v992, %v980
      %v1293 = vpack.c.b16 %v993, %v981
      %v1294 = vpack.c.b16 %v994, %v982
      %v1295 = vpack.c.b16 %v995, %v983
      %v1296 = vpack.c.b16 %v996, %v984
      %v1297 = vpack.c.b16 %v997, %v985
      %v1298 = vpack.c.b16 %v1010, %v998
      %v1299 = vpack.c.b16 %v1011, %v999
      %v1300 = vpack.c.b16 %v1012, %v1000
      %v1301 = vpack.c.b16 %v1013, %v1001
      %v1302 = vpack.c.b16 %v1014, %v1002
      %v1303 = vpack.c.b16 %v1015, %v1003
      %v1304 = vpack.c.b16 %v1016, %v1004
      %v1305 = vpack.c.b16 %v1017, %v1005
      %v1306 = vpack.c.b16 %v1018, %v1006
      %v1307 = vpack.c.b16 %v1019, %v1007
      %v1308 = vpack.c.b16 %v1020, %v1008
      %v1309 = vpack.c.b16 %v1021, %v1009
      %v1310 = vpack.c.b16 %v1034, %v1022
      %v1311 = vpack.c.b16 %v1035, %v1023
      %v1312 = vpack.c.b16 %v1036, %v1024
      %v1313 = vpack.c.b16 %v1037, %v1025
      %v1314 = vpack.c.b16 %v1038, %v1026
      %v1315 = vpack.c.b16 %v1039, %v1027
      %v1316 = vpack.c.b16 %v1040, %v1028
      %v1317 = vpack.c.b16 %v1041, %v1029
      %v1318 = vpack.c.b16 %v1042, %v1030
      %v1319 = vpack.c.b16 %v1043, %v1031
      %v1320 = vpack.c.b16 %v1044, %v1032
      %v1321 = vpack.c.b16 %v1045, %v1033
      %v1322 = vpack.c.b16 %v1058, %v1046
      %v1323 = vpack.c.b16 %v1059, %v1047
      %v1324 = vpack.c.b16 %v1060, %v1048
      %v1325 = vpack.c.b16 %v1061, %v1049
      %v1326 = vpack.c.b16 %v1062, %v1050
      %v1327 = vpack.c.b16 %v1063, %v1051
      %v1328 = vpack.c.b16 %v1064, %v1052
      %v1329 = vpack.c.b16 %v1065, %v1053
      %v1330 = vpack.c.b16 %v1066, %v1054
      %v1331 = vpack.c.b16 %v1067, %v1055
      %v1332 = vpack.c.b16 %v1068, %v1056
      %v1333 = vpack.c.b16 %v1069, %v1057
      %v1334 = vpack.c.b16 %v1082, %v1070
      %v1335 = vpack.c.b16 %v1083, %v1071
      %v1336 = vpack.c.b16 %v1084, %v1072
      %v1337 = vpack.c.b16 %v1085, %v1073
      %v1338 = vpack.c.b16 %v1086, %v1074
      %v1339 = vpack.c.b16 %v1087, %v1075
      %v1340 = vpack.c.b16 %v1088, %v1076
      %v1341 = vpack.c.b16 %v1089, %v1077
      %v1342 = vpack.c.b16 %v1090, %v1078
      %v1343 = vpack.c.b16 %v1091, %v1079
      %v1344 = vpack.c.b16 %v1092, %v1080
      %v1345 = vpack.c.b16 %v1093, %v1081
      %v1346 = vpack.c.b16 %v1106, %v1094
      %v1347 = vpack.c.b16 %v1107, %v1095
      %v1348 = vpack.c.b16 %v1108, %v1096
      %v1349 = vpack.c.b16 %v1109, %v1097
      %v1350 = vpack.c.b16 %v1110, %v1098
      %v1351 = vpack.c.b16 %v1111, %v1099
      %v1352 = vpack.c.b16 %v1112, %v1100
      %v1353 = vpack.c.b16 %v1113, %v1101
      %v1354 = vpack.c.b16 %v1114, %v1102
      %v1355 = vpack.c.b16 %v1115, %v1103
      %v1356 = vpack.c.b16 %v1116, %v1104
      %v1357 = vpack.c.b16 %v1117, %v1105
      %v1358 = vpack.c.b16 %v1130, %v1118
      %v1359 = vpack.c.b16 %v1131, %v1119
      %v1360 = vpack.c.b16 %v1132, %v1120
      %v1361 = vpack.c.b16 %v1133, %v1121
      %v1362 = vpack.c.b16 %v1134, %v1122
      %v1363 = vpack.c.b16 %v1135, %v1123
      %v1364 = vpack.c.b16 %v1136, %v1124
      %v1365 = vpack.c.b16 %v1137, %v1125
      %v1366 = vpack.c.b16 %v1138, %v1126
      %v1367 = vpack.c.b16 %v1139, %v1127
      %v1368 = vpack.c.b16 %v1140, %v1128
      %v1369 = vpack.c.b16 %v1141, %v1129
      %v1370 = vpack.c.b16 %v1154, %v1142
      %v1371 = vpack.c.b16 %v1155, %v1143
      %v1372 = vpack.c.b16 %v1156, %v1144
      %v1373 = vpack.c.b16 %v1157, %v1145
      %v1374 = vpack.c.b16 %v1158, %v1146
      %v1375 = vpack.c.b16 %v1159, %v1147
      %v1376 = vpack.c.b16 %v1160, %v1148
      %v1377 = vpack.c.b16 %v1161, %v1149
      %v1378 = vpack.c.b16 %v1162, %v1150
      %v1379 = vpack.c.b16 %v1163, %v1151
      %v1380 = vpack.c.b16 %v1164, %v1152
      %v1381 = vpack.c.b16 %v1165, %v1153
      %v1382 = vpack.c.b16 %v1178, %v1166
      %v1383 = vpack.c.b16 %v1179, %v1167
      %v1384 = vpack.c.b16 %v1180, %v1168
      %v1385 = vpack.c.b16 %v1181, %v1169
      %v1386 = vpack.c.b16 %v1182, %v1170
      %v1387 = vpack.c.b16 %v1183, %v1171
      %v1388 = vpack.c.b16 %v1184, %v1172
      %v1389 = vpack.c.b16 %v1185, %v1173
      %v1390 = vpack.c.b16 %v1186, %v1174
      %v1391 = vpack.c.b16 %v1187, %v1175
      %v1392 = vpack.c.b16 %v1188, %v1176
      %v1393 = vpack.c.b16 %v1189, %v1177
      %v1394 = vpack.c.b16 %v1202, %v1190
      %v1395 = vpack.c.b16 %v1203, %v1191
      %v1396 = vpack.c.b16 %v1204, %v1192
      %v1397 = vpack.c.b16 %v1205, %v1193
      %v1398 = vpack.c.b16 %v1206, %v1194
      %v1399 = vpack.c.b16 %v1207, %v1195
      %v1400 = vpack.c.b16 %v1208, %v1196
      %v1401 = vpack.c.b16 %v1209, %v1197
      %v1402 = vpack.c.b16 %v1210, %v1198
      %v1403 = vpack.c.b16 %v1211, %v1199
      %v1404 = vpack.c.b16 %v1212, %v1200
      %v1405 = vpack.c.b16 %v1213, %v1201
      %1598 = vmatprep.subr.bf16.mxu0 %v1215
      %1599 = vmatpush1.bf16.msra.mxu0 %v1214
      %1600 = vmatprep.subr.bf16.mxu0 %v1227
      %1601 = vmatpush1.bf16.msra.mxu0 %v1226
      %1602 = vmatprep.subr.bf16.mxu0 %v1239
      %1603 = vmatpush1.bf16.msra.mxu0 %v1238
      %1604 = vmatprep.subr.bf16.mxu0 %v1251
      %1605 = vmatpush1.bf16.msra.mxu0 %v1250
      %1606 = vmatprep.subr.bf16.mxu0 %v1263
      %1607 = vmatpush1.bf16.msra.mxu0 %v1262
      %1608 = vmatprep.subr.bf16.mxu0 %v1275
      %1609 = vmatpush1.bf16.msra.mxu0 %v1274
      %1610 = vmatprep.subr.bf16.mxu0 %v1287
      %1611 = vmatpush1.bf16.msra.mxu0 %v1286
      %1612 = vmatprep.subr.bf16.mxu0 %v1299
      %1613 = vmatpush1.bf16.msra.mxu0 %v1298
      %1614 = vmatprep.subr.bf16.mxu0 %v1311
      %1615 = vmatpush1.bf16.msra.mxu0 %v1310
      %1616 = vmatprep.subr.bf16.mxu0 %v1323
      %1617 = vmatpush1.bf16.msra.mxu0 %v1322
      %1618 = vmatprep.subr.bf16.mxu0 %v1335
      %1619 = vmatpush1.bf16.msra.mxu0 %v1334
      %1620 = vmatprep.subr.bf16.mxu0 %v1347
      %1621 = vmatpush1.bf16.msra.mxu0 %v1346
      %1622 = vmatprep.subr.bf16.mxu0 %v1359
      %1623 = vmatpush1.bf16.msra.mxu0 %v1358
      %1624 = vmatprep.subr.bf16.mxu0 %v1371
      %1625 = vmatpush1.bf16.msra.mxu0 %v1370
      %1626 = vmatprep.subr.bf16.mxu0 %v1383
      %1627 = vmatpush1.bf16.msra.mxu0 %v1382
      %1628 = vmatprep.subr.bf16.mxu0 %v1395
      %1629 = vmatpush1.bf16.msra.mxu0 %v1394
      %1630 = vmatprep.mubr.bf16.mxu0 %v635
      %1631 = vmatmul.mubr.bf16.gmra.mrb[0].mxu0 %v634
      %v1632 = vpop.f32.mrb[0].mxu0
      %v1633 = vadd.f32 %v586, %v1632
      %v1634 = vpop.f32.mrb[0].mxu0
      %v1635 = vadd.f32 %v590, %v1634
      %v1636 = vpop.f32.mrb[0].mxu0
      %v1637 = vpop.f32.mrb[0].mxu0
      %1638 = vdwg.mxu0
      %1639 = vmatprep.subr.bf16.mxu0 %v1217
      %1640 = vmatpush1.bf16.msra.mxu0 %v1216
      %1641 = vmatprep.subr.bf16.mxu0 %v1229
      %1642 = vmatpush1.bf16.msra.mxu0 %v1228
      %1643 = vmatprep.subr.bf16.mxu0 %v1241
      %1644 = vmatpush1.bf16.msra.mxu0 %v1240
      %1645 = vmatprep.subr.bf16.mxu0 %v1253
      %1646 = vmatpush1.bf16.msra.mxu0 %v1252
      %1647 = vmatprep.subr.bf16.mxu0 %v1265
      %1648 = vmatpush1.bf16.msra.mxu0 %v1264
      %1649 = vmatprep.subr.bf16.mxu0 %v1277
      %1650 = vmatpush1.bf16.msra.mxu0 %v1276
      %1651 = vmatprep.subr.bf16.mxu0 %v1289
      %1652 = vmatpush1.bf16.msra.mxu0 %v1288
      %1653 = vmatprep.subr.bf16.mxu0 %v1301
      %1654 = vmatpush1.bf16.msra.mxu0 %v1300
      %1655 = vmatprep.subr.bf16.mxu0 %v1313
      %1656 = vmatpush1.bf16.msra.mxu0 %v1312
      %1657 = vmatprep.subr.bf16.mxu0 %v1325
      %1658 = vmatpush1.bf16.msra.mxu0 %v1324
      %1659 = vmatprep.subr.bf16.mxu0 %v1337
      %1660 = vmatpush1.bf16.msra.mxu0 %v1336
      %1661 = vmatprep.subr.bf16.mxu0 %v1349
      %1662 = vmatpush1.bf16.msra.mxu0 %v1348
      %1663 = vmatprep.subr.bf16.mxu0 %v1361
      %1664 = vmatpush1.bf16.msra.mxu0 %v1360
      %1665 = vmatprep.subr.bf16.mxu0 %v1373
      %1666 = vmatpush1.bf16.msra.mxu0 %v1372
      %1667 = vmatprep.subr.bf16.mxu0 %v1385
      %1668 = vmatpush1.bf16.msra.mxu0 %v1384
      %1669 = vmatprep.subr.bf16.mxu0 %v1397
      %1670 = vmatpush1.bf16.msra.mxu0 %v1396
      %1671 = vmatprep.mubr.bf16.mxu0 %v635
      %1672 = vmatmul.mubr.bf16.gmra.mrb[0].mxu0 %v634
      %v1673 = vpop.f32.mrb[0].mxu0
      %v1674 = vadd.f32 %v594, %v1673
      %v1675 = vpop.f32.mrb[0].mxu0
      %v1676 = vadd.f32 %v598, %v1675
      %v1677 = vpop.f32.mrb[0].mxu0
      %v1678 = vpop.f32.mrb[0].mxu0
      %1679 = vdwg.mxu0
      %1680 = vmatprep.subr.bf16.mxu0 %v1219
      %1681 = vmatpush1.bf16.msra.mxu0 %v1218
      %1682 = vmatprep.subr.bf16.mxu0 %v1231
      %1683 = vmatpush1.bf16.msra.mxu0 %v1230
      %1684 = vmatprep.subr.bf16.mxu0 %v1243
      %1685 = vmatpush1.bf16.msra.mxu0 %v1242
      %1686 = vmatprep.subr.bf16.mxu0 %v1255
      %1687 = vmatpush1.bf16.msra.mxu0 %v1254
      %1688 = vmatprep.subr.bf16.mxu0 %v1267
      %1689 = vmatpush1.bf16.msra.mxu0 %v1266
      %1690 = vmatprep.subr.bf16.mxu0 %v1279
      %1691 = vmatpush1.bf16.msra.mxu0 %v1278
      %1692 = vmatprep.subr.bf16.mxu0 %v1291
      %1693 = vmatpush1.bf16.msra.mxu0 %v1290
      %1694 = vmatprep.subr.bf16.mxu0 %v1303
      %1695 = vmatpush1.bf16.msra.mxu0 %v1302
      %1696 = vmatprep.subr.bf16.mxu0 %v1315
      %1697 = vmatpush1.bf16.msra.mxu0 %v1314
      %1698 = vmatprep.subr.bf16.mxu0 %v1327
      %1699 = vmatpush1.bf16.msra.mxu0 %v1326
      %1700 = vmatprep.subr.bf16.mxu0 %v1339
      %1701 = vmatpush1.bf16.msra.mxu0 %v1338
      %1702 = vmatprep.subr.bf16.mxu0 %v1351
      %1703 = vmatpush1.bf16.msra.mxu0 %v1350
      %1704 = vmatprep.subr.bf16.mxu0 %v1363
      %1705 = vmatpush1.bf16.msra.mxu0 %v1362
      %1706 = vmatprep.subr.bf16.mxu0 %v1375
      %1707 = vmatpush1.bf16.msra.mxu0 %v1374
      %1708 = vmatprep.subr.bf16.mxu0 %v1387
      %1709 = vmatpush1.bf16.msra.mxu0 %v1386
      %1710 = vmatprep.subr.bf16.mxu0 %v1399
      %1711 = vmatpush1.bf16.msra.mxu0 %v1398
      %1712 = vmatprep.mubr.bf16.mxu0 %v635
      %1713 = vmatmul.mubr.bf16.gmra.mrb[0].mxu0 %v634
      %v1714 = vpop.f32.mrb[0].mxu0
      %v1715 = vadd.f32 %v602, %v1714
      %v1716 = vpop.f32.mrb[0].mxu0
      %v1717 = vadd.f32 %v606, %v1716
      %v1718 = vpop.f32.mrb[0].mxu0
      %v1719 = vpop.f32.mrb[0].mxu0
      %1720 = vdwg.mxu0
      %1721 = vmatprep.subr.bf16.mxu0 %v1221
      %1722 = vmatpush1.bf16.msra.mxu0 %v1220
      %1723 = vmatprep.subr.bf16.mxu0 %v1233
      %1724 = vmatpush1.bf16.msra.mxu0 %v1232
      %1725 = vmatprep.subr.bf16.mxu0 %v1245
      %1726 = vmatpush1.bf16.msra.mxu0 %v1244
      %1727 = vmatprep.subr.bf16.mxu0 %v1257
      %1728 = vmatpush1.bf16.msra.mxu0 %v1256
      %1729 = vmatprep.subr.bf16.mxu0 %v1269
      %1730 = vmatpush1.bf16.msra.mxu0 %v1268
      %1731 = vmatprep.subr.bf16.mxu0 %v1281
      %1732 = vmatpush1.bf16.msra.mxu0 %v1280
      %1733 = vmatprep.subr.bf16.mxu0 %v1293
      %1734 = vmatpush1.bf16.msra.mxu0 %v1292
      %1735 = vmatprep.subr.bf16.mxu0 %v1305
      %1736 = vmatpush1.bf16.msra.mxu0 %v1304
      %1737 = vmatprep.subr.bf16.mxu0 %v1317
      %1738 = vmatpush1.bf16.msra.mxu0 %v1316
      %1739 = vmatprep.subr.bf16.mxu0 %v1329
      %1740 = vmatpush1.bf16.msra.mxu0 %v1328
      %1741 = vmatprep.subr.bf16.mxu0 %v1341
      %1742 = vmatpush1.bf16.msra.mxu0 %v1340
      %1743 = vmatprep.subr.bf16.mxu0 %v1353
      %1744 = vmatpush1.bf16.msra.mxu0 %v1352
      %1745 = vmatprep.subr.bf16.mxu0 %v1365
      %1746 = vmatpush1.bf16.msra.mxu0 %v1364
      %1747 = vmatprep.subr.bf16.mxu0 %v1377
      %1748 = vmatpush1.bf16.msra.mxu0 %v1376
      %1749 = vmatprep.subr.bf16.mxu0 %v1389
      %1750 = vmatpush1.bf16.msra.mxu0 %v1388
      %1751 = vmatprep.subr.bf16.mxu0 %v1401
      %1752 = vmatpush1.bf16.msra.mxu0 %v1400
      %1753 = vmatprep.mubr.bf16.mxu0 %v635
      %1754 = vmatmul.mubr.bf16.gmra.mrb[0].mxu0 %v634
      %v1755 = vpop.f32.mrb[0].mxu0
      %v1756 = vadd.f32 %v610, %v1755
      %v1757 = vpop.f32.mrb[0].mxu0
      %v1758 = vadd.f32 %v614, %v1757
      %v1759 = vpop.f32.mrb[0].mxu0
      %v1760 = vpop.f32.mrb[0].mxu0
      %1761 = vdwg.mxu0
      %1762 = vmatprep.subr.bf16.mxu0 %v1223
      %1763 = vmatpush1.bf16.msra.mxu0 %v1222
      %1764 = vmatprep.subr.bf16.mxu0 %v1235
      %1765 = vmatpush1.bf16.msra.mxu0 %v1234
      %1766 = vmatprep.subr.bf16.mxu0 %v1247
      %1767 = vmatpush1.bf16.msra.mxu0 %v1246
      %1768 = vmatprep.subr.bf16.mxu0 %v1259
      %1769 = vmatpush1.bf16.msra.mxu0 %v1258
      %1770 = vmatprep.subr.bf16.mxu0 %v1271
      %1771 = vmatpush1.bf16.msra.mxu0 %v1270
      %1772 = vmatprep.subr.bf16.mxu0 %v1283
      %1773 = vmatpush1.bf16.msra.mxu0 %v1282
      %1774 = vmatprep.subr.bf16.mxu0 %v1295
      %1775 = vmatpush1.bf16.msra.mxu0 %v1294
      %1776 = vmatprep.subr.bf16.mxu0 %v1307
      %1777 = vmatpush1.bf16.msra.mxu0 %v1306
      %1778 = vmatprep.subr.bf16.mxu0 %v1319
      %1779 = vmatpush1.bf16.msra.mxu0 %v1318
      %1780 = vmatprep.subr.bf16.mxu0 %v1331
      %1781 = vmatpush1.bf16.msra.mxu0 %v1330
      %1782 = vmatprep.subr.bf16.mxu0 %v1343
      %1783 = vmatpush1.bf16.msra.mxu0 %v1342
      %1784 = vmatprep.subr.bf16.mxu0 %v1355
      %1785 = vmatpush1.bf16.msra.mxu0 %v1354
      %1786 = vmatprep.subr.bf16.mxu0 %v1367
      %1787 = vmatpush1.bf16.msra.mxu0 %v1366
      %1788 = vmatprep.subr.bf16.mxu0 %v1379
      %1789 = vmatpush1.bf16.msra.mxu0 %v1378
      %1790 = vmatprep.subr.bf16.mxu0 %v1391
      %1791 = vmatpush1.bf16.msra.mxu0 %v1390
      %1792 = vmatprep.subr.bf16.mxu0 %v1403
      %1793 = vmatpush1.bf16.msra.mxu0 %v1402
      %1794 = vmatprep.mubr.bf16.mxu0 %v635
      %1795 = vmatmul.mubr.bf16.gmra.mrb[0].mxu0 %v634
      %v1796 = vpop.f32.mrb[0].mxu0
      %v1797 = vadd.f32 %v618, %v1796
      %v1798 = vpop.f32.mrb[0].mxu0
      %v1799 = vadd.f32 %v622, %v1798
      %v1800 = vpop.f32.mrb[0].mxu0
      %v1801 = vpop.f32.mrb[0].mxu0
      %1802 = vdwg.mxu0
      %1803 = vmatprep.subr.bf16.mxu0 %v1225
      %1804 = vmatpush1.bf16.msra.mxu0 %v1224
      %1805 = vmatprep.subr.bf16.mxu0 %v1237
      %1806 = vmatpush1.bf16.msra.mxu0 %v1236
      %1807 = vmatprep.subr.bf16.mxu0 %v1249
      %1808 = vmatpush1.bf16.msra.mxu0 %v1248
      %1809 = vmatprep.subr.bf16.mxu0 %v1261
      %1810 = vmatpush1.bf16.msra.mxu0 %v1260
      %1811 = vmatprep.subr.bf16.mxu0 %v1273
      %1812 = vmatpush1.bf16.msra.mxu0 %v1272
      %1813 = vmatprep.subr.bf16.mxu0 %v1285
      %1814 = vmatpush1.bf16.msra.mxu0 %v1284
      %1815 = vmatprep.subr.bf16.mxu0 %v1297
      %1816 = vmatpush1.bf16.msra.mxu0 %v1296
      %1817 = vmatprep.subr.bf16.mxu0 %v1309
      %1818 = vmatpush1.bf16.msra.mxu0 %v1308
      %1819 = vmatprep.subr.bf16.mxu0 %v1321
      %1820 = vmatpush1.bf16.msra.mxu0 %v1320
      %1821 = vmatprep.subr.bf16.mxu0 %v1333
      %1822 = vmatpush1.bf16.msra.mxu0 %v1332
      %1823 = vmatprep.subr.bf16.mxu0 %v1345
      %1824 = vmatpush1.bf16.msra.mxu0 %v1344
      %1825 = vmatprep.subr.bf16.mxu0 %v1357
      %1826 = vmatpush1.bf16.msra.mxu0 %v1356
      %1827 = vmatprep.subr.bf16.mxu0 %v1369
      %1828 = vmatpush1.bf16.msra.mxu0 %v1368
      %1829 = vmatprep.subr.bf16.mxu0 %v1381
      %1830 = vmatpush1.bf16.msra.mxu0 %v1380
      %1831 = vmatprep.subr.bf16.mxu0 %v1393
      %1832 = vmatpush1.bf16.msra.mxu0 %v1392
      %1833 = vmatprep.subr.bf16.mxu0 %v1405
      %1834 = vmatpush1.bf16.msra.mxu0 %v1404
      %1835 = vmatprep.mubr.bf16.mxu0 %v635
      %1836 = vmatmul.mubr.bf16.gmra.mrb[0].mxu0 %v634
      %v1837 = vpop.f32.mrb[0].mxu0
      %v1838 = vadd.f32 %v626, %v1837
      %v1839 = vpop.f32.mrb[0].mxu0
      %v1840 = vadd.f32 %v630, %v1839
      %v1841 = vpop.f32.mrb[0].mxu0
      %v1842 = vpop.f32.mrb[0].mxu0
      %1843 = vdwg.mxu0
      %v1844 = vpack.c.bf16 %v1633, %v1633
      %v1845 = vpack.c.bf16 %v1635, %v1635
      %v1846 = vpack.c.bf16 %v1674, %v1674
      %v1847 = vpack.c.bf16 %v1676, %v1676
      %v1848 = vpack.c.bf16 %v1715, %v1715
      %v1849 = vpack.c.bf16 %v1717, %v1717
      %v1850 = vpack.c.bf16 %v1756, %v1756
      %v1851 = vpack.c.bf16 %v1758, %v1758
      %v1852 = vpack.c.bf16 %v1797, %v1797
      %v1853 = vpack.c.bf16 %v1799, %v1799
      %v1854 = vpack.c.bf16 %v1838, %v1838
      %v1855 = vpack.c.bf16 %v1840, %v1840
      %v1868 = vunpack.c.l.b16 %v1844
      %v1869 = vunpack.c.l.b16 %v1845
      %v1870 = vunpack.c.l.b16 %v1846
      %v1871 = vunpack.c.l.b16 %v1847
      %v1872 = vunpack.c.l.b16 %v1848
      %v1873 = vunpack.c.l.b16 %v1849
      %v1874 = vunpack.c.l.b16 %v1850
      %v1875 = vunpack.c.l.b16 %v1851
      %v1876 = vunpack.c.l.b16 %v1852
      %v1877 = vunpack.c.l.b16 %v1853
      %v1878 = vunpack.c.l.b16 %v1854
      %v1879 = vunpack.c.l.b16 %v1855
      %v1880 = vpack.c.b16 %v1869, %v1868
      %v1881 = vpack.c.b16 %v1871, %v1870
      %v1882 = vpack.c.b16 %v1873, %v1872
      %v1883 = vpack.c.b16 %v1875, %v1874
      %v1884 = vpack.c.b16 %v1877, %v1876
      %v1885 = vpack.c.b16 %v1879, %v1878
      %1892 = vst [vmem:[#allocation2] sm:$0xff] %v1880
      %1893 = vst [vmem:[#allocation2 + $0x8] sm:$0xff] %v1881
      %1894 = vst [vmem:[#allocation2 + $0x10] sm:$0xff] %v1882
      %1895 = vst [vmem:[#allocation2 + $0x18] sm:$0xff] %v1883
      %1896 = vst [vmem:[#allocation2 + $0x20] sm:$0xff] %v1884
      %1897 = vst [vmem:[#allocation2 + $0x28] sm:$0xff] %v1885
      %1898 = vst [vmem:[#allocation3] sm:$0xff] 0.0
      %1899 = vst [vmem:[#allocation3 + $0x8] sm:$0xff] 0.0
      %v1900 = vld [vmem:[#allocation2] sm:$0xf]
      %v1901 = vld [vmem:[#allocation2 + $0x10] sm:$0xf]
      %v1902 = vld [vmem:[#allocation2 + $0x20] sm:$0xf]
      %1903 = vmatprep.subr.bf16.mxu0 0
      %1904 = vmatpush1.bf16.xpose.msra.mxu0 %v1901
      %1905 = vmatprep.subr.bf16.mxu0 0
      %1906 = vmatpush1.bf16.xpose.msra.mxu0 0
      %1907 = vmatprep.subr.bf16.mxu0 0
      %1908 = vmatpush1.bf16.xpose.msra.mxu0 0
      %1909 = vmatprep.subr.bf16.mxu0 0
      %1910 = vmatpush1.bf16.xpose.msra.mxu0 0
      %1911 = vmatprep.subr.bf16.mxu0 0
      %1912 = vmatpush1.bf16.xpose.msra.mxu0 0
      %1913 = vmatprep.subr.bf16.mxu0 0
      %1914 = vmatpush1.bf16.xpose.msra.mxu0 0
      %1915 = vmatprep.subr.bf16.mxu0 0
      %1916 = vmatpush1.bf16.xpose.msra.mxu0 0
      %1917 = vmatprep.subr.bf16.mxu0 0
      %1918 = vmatpush1.bf16.xpose.msra.mxu0 0
      %1919 = vmatprep.subr.bf16.mxu0 0
      %1920 = vmatpush1.bf16.xpose.msra.mxu0 0
      %1921 = vmatprep.subr.bf16.mxu0 0
      %1922 = vmatpush1.bf16.xpose.msra.mxu0 0
      %1923 = vmatprep.subr.bf16.mxu0 0
      %1924 = vmatpush1.bf16.xpose.msra.mxu0 0
      %1925 = vmatprep.subr.bf16.mxu0 0
      %1926 = vmatpush1.bf16.xpose.msra.mxu0 0
      %1927 = vmatprep.subr.bf16.mxu0 0
      %1928 = vmatpush1.bf16.xpose.msra.mxu0 0
      %1929 = vmatprep.subr.bf16.mxu0 0
      %1930 = vmatpush1.bf16.xpose.msra.mxu0 0
      %1931 = vmatprep.subr.bf16.mxu0 0
      %1932 = vmatpush1.bf16.xpose.msra.mxu0 0
      %1933 = vmatprep.subr.bf16.mxu0 0
      %1934 = vmatpush1.bf16.xpose.msra.mxu0 0
      %1935 = vmatprep.mubr.bf16.mxu0 0
      %1936 = vmatmul.mubr.bf16.gmra.mrb[0].mxu0 %v1900
      %v1937 = vpop.f32.mrb[0].mxu0
      %v1938 = vadd.f32 0.0, %v1937
      %v1939 = vpop.f32.mrb[0].mxu0
      %v1940 = vpop.f32.mrb[0].mxu0
      %v1941 = vpop.f32.mrb[0].mxu0
      %1942 = vdwg.mxu0
      %v1943 = vmul.f32 %v1938, 0.125
      %v1945 = vlaneseq
      %v1946 = vshrl.u32 %v1945, 7
      %v1947 = vsub.s32 0, %v1946
      %v1948 = vrot.slane %v322, %v1947
      %v1950 = vadd.f32 %v1943, %v1948
      %vm1951 = vcmask 64512
      %v1952 = vsel %vm1951, %v1950, -inf
      %1953 = vmax.xlane.f32.xlu0 %v1952
      %v1954 = vpop.xlane.xlu0 %1953
      %v1955 = vsub.f32 %v1950, %v1954
      %v1956 = vmul.f32 %v1955, 1.442695
      %v1957 = vpow.pop %v1956
      %v1958 = vsel %vm1951, %v1957, 0.0
      %1959 = vadd.xlane.f32.xlu0 %v1958
      %v1960 = vpop.xlane.xlu0 %1959
      %v1961 = vrcp.pop %v1960
      %v1962 = vpack.c.bf16 %v1957, %v1957
      %v1964 = vsel %vm1951, %v1962, 0
      %vm1966 = vcmask 1043456
      %v1968 = vsel %vm1966, %v1902, 0
      %1970 = vmatprep.subr.bf16.mxu0 0
      %1971 = vmatpush1.bf16.msra.mxu0 %v1968
      %1972 = vmatprep.subr.bf16.mxu0 0
      %1973 = vmatpush1.bf16.msra.mxu0 0
      %1974 = vmatprep.subr.bf16.mxu0 0
      %1975 = vmatpush1.bf16.msra.mxu0 0
      %1976 = vmatprep.subr.bf16.mxu0 0
      %1977 = vmatpush1.bf16.msra.mxu0 0
      %1978 = vmatprep.subr.bf16.mxu0 0
      %1979 = vmatpush1.bf16.msra.mxu0 0
      %1980 = vmatprep.subr.bf16.mxu0 0
      %1981 = vmatpush1.bf16.msra.mxu0 0
      %1982 = vmatprep.subr.bf16.mxu0 0
      %1983 = vmatpush1.bf16.msra.mxu0 0
      %1984 = vmatprep.subr.bf16.mxu0 0
      %1985 = vmatpush1.bf16.msra.mxu0 0
      %1986 = vmatprep.subr.bf16.mxu0 0
      %1987 = vmatpush1.bf16.msra.mxu0 0
      %1988 = vmatprep.subr.bf16.mxu0 0
      %1989 = vmatpush1.bf16.msra.mxu0 0
      %1990 = vmatprep.subr.bf16.mxu0 0
      %1991 = vmatpush1.bf16.msra.mxu0 0
      %1992 = vmatprep.subr.bf16.mxu0 0
      %1993 = vmatpush1.bf16.msra.mxu0 0
      %1994 = vmatprep.subr.bf16.mxu0 0
      %1995 = vmatpush1.bf16.msra.mxu0 0
      %1996 = vmatprep.subr.bf16.mxu0 0
      %1997 = vmatpush1.bf16.msra.mxu0 0
      %1998 = vmatprep.subr.bf16.mxu0 0
      %1999 = vmatpush1.bf16.msra.mxu0 0
      %2000 = vmatprep.subr.bf16.mxu0 0
      %2001 = vmatpush1.bf16.msra.mxu0 0
      %2002 = vmatprep.mubr.bf16.mxu0 0
      %2003 = vmatmul.mubr.bf16.gmra.mrb[0].mxu0 %v1964
      %v2004 = vpop.f32.mrb[0].mxu0
      %v2005 = vadd.f32 0.0, %v2004
      %v2006 = vpop.f32.mrb[0].mxu0
      %v2007 = vpop.f32.mrb[0].mxu0
      %v2008 = vpop.f32.mrb[0].mxu0
      %2009 = vdwg.mxu0
      %v2010 = vmul.f32 %v2005, %v1961
      %v2011 = vld [vmem:[#allocation3] sm:$0xff]
      %v2012 = vld [vmem:[#allocation3 + $0x8] sm:$0xff]
      %v2013 = vpack.c.bf16 %v2010, %v2010
      %v2014 = vld [vmem:[%s3] sm:$0xff]
      %v2015 = vld [vmem:[%s3 + $0x8] sm:$0xff]
      %v2016 = vld [vmem:[%s3 + $0x10] sm:$0xff]
      %v2017 = vld [vmem:[%s3 + $0x18] sm:$0xff]
      %v2018 = vld [vmem:[%s3 + $0x20] sm:$0xff]
      %v2019 = vld [vmem:[%s3 + $0x28] sm:$0xff]
      %v2020 = vld [vmem:[%s3 + $0x30] sm:$0xff]
      %v2021 = vld [vmem:[%s3 + $0x38] sm:$0xff]
      %v2022 = vld [vmem:[%s3 + $0x40] sm:$0xff]
      %v2023 = vld [vmem:[%s3 + $0x48] sm:$0xff]
      %v2024 = vld [vmem:[%s3 + $0x50] sm:$0xff]
      %v2025 = vld [vmem:[%s3 + $0x58] sm:$0xff]
      %v2026 = vld [vmem:[%s3 + $0x60] sm:$0xff]
      %v2027 = vld [vmem:[%s3 + $0x68] sm:$0xff]
      %v2028 = vld [vmem:[%s3 + $0x70] sm:$0xff]
      %v2029 = vld [vmem:[%s3 + $0x78] sm:$0xff]
      %v2046 = vunpack.c.l.b16 %v2014
      %v2047 = vunpack.c.h.b16 %v2014
      %v2048 = vunpack.c.l.b16 %v2015
      %v2049 = vunpack.c.h.b16 %v2015
      %v2050 = vunpack.c.l.b16 %v2016
      %v2051 = vunpack.c.h.b16 %v2016
      %v2052 = vunpack.c.l.b16 %v2017
      %v2053 = vunpack.c.h.b16 %v2017
      %v2054 = vunpack.c.l.b16 %v2018
      %v2055 = vunpack.c.h.b16 %v2018
      %v2056 = vunpack.c.l.b16 %v2019
      %v2057 = vunpack.c.h.b16 %v2019
      %v2058 = vunpack.c.l.b16 %v2020
      %v2059 = vunpack.c.h.b16 %v2020
      %v2060 = vunpack.c.l.b16 %v2021
      %v2061 = vunpack.c.h.b16 %v2021
      %v2062 = vunpack.c.l.b16 %v2022
      %v2063 = vunpack.c.h.b16 %v2022
      %v2064 = vunpack.c.l.b16 %v2023
      %v2065 = vunpack.c.h.b16 %v2023
      %v2066 = vunpack.c.l.b16 %v2024
      %v2067 = vunpack.c.h.b16 %v2024
      %v2068 = vunpack.c.l.b16 %v2025
      %v2069 = vunpack.c.h.b16 %v2025
      %v2070 = vunpack.c.l.b16 %v2026
      %v2071 = vunpack.c.h.b16 %v2026
      %v2072 = vunpack.c.l.b16 %v2027
      %v2073 = vunpack.c.h.b16 %v2027
      %v2074 = vunpack.c.l.b16 %v2028
      %v2075 = vunpack.c.h.b16 %v2028
      %v2076 = vunpack.c.l.b16 %v2029
      %v2077 = vunpack.c.h.b16 %v2029
      %v2078 = vpack.c.b16 %v2048, %v2046
      %v2079 = vpack.c.b16 %v2049, %v2047
      %v2080 = vpack.c.b16 %v2052, %v2050
      %v2081 = vpack.c.b16 %v2053, %v2051
      %v2082 = vpack.c.b16 %v2056, %v2054
      %v2083 = vpack.c.b16 %v2057, %v2055
      %v2084 = vpack.c.b16 %v2060, %v2058
      %v2085 = vpack.c.b16 %v2061, %v2059
      %v2086 = vpack.c.b16 %v2064, %v2062
      %v2087 = vpack.c.b16 %v2065, %v2063
      %v2088 = vpack.c.b16 %v2068, %v2066
      %v2089 = vpack.c.b16 %v2069, %v2067
      %v2090 = vpack.c.b16 %v2072, %v2070
      %v2091 = vpack.c.b16 %v2073, %v2071
      %v2092 = vpack.c.b16 %v2076, %v2074
      %v2093 = vpack.c.b16 %v2077, %v2075
      %2110 = vmatprep.subr.bf16.mxu0 %v2079
      %2111 = vmatpush1.bf16.msra.mxu0 %v2078
      %2112 = vmatprep.subr.bf16.mxu0 %v2081
      %2113 = vmatpush1.bf16.msra.mxu0 %v2080
      %2114 = vmatprep.subr.bf16.mxu0 %v2083
      %2115 = vmatpush1.bf16.msra.mxu0 %v2082
      %2116 = vmatprep.subr.bf16.mxu0 %v2085
      %2117 = vmatpush1.bf16.msra.mxu0 %v2084
      %2118 = vmatprep.subr.bf16.mxu0 %v2087
      %2119 = vmatpush1.bf16.msra.mxu0 %v2086
      %2120 = vmatprep.subr.bf16.mxu0 %v2089
      %2121 = vmatpush1.bf16.msra.mxu0 %v2088
      %2122 = vmatprep.subr.bf16.mxu0 %v2091
      %2123 = vmatpush1.bf16.msra.mxu0 %v2090
      %2124 = vmatprep.subr.bf16.mxu0 %v2093
      %2125 = vmatpush1.bf16.msra.mxu0 %v2092
      %2126 = vmatprep.subr.bf16.mxu0 0
      %2127 = vmatpush1.bf16.msra.mxu0 0
      %2128 = vmatprep.subr.bf16.mxu0 0
      %2129 = vmatpush1.bf16.msra.mxu0 0
      %2130 = vmatprep.subr.bf16.mxu0 0
      %2131 = vmatpush1.bf16.msra.mxu0 0
      %2132 = vmatprep.subr.bf16.mxu0 0
      %2133 = vmatpush1.bf16.msra.mxu0 0
      %2134 = vmatprep.subr.bf16.mxu0 0
      %2135 = vmatpush1.bf16.msra.mxu0 0
      %2136 = vmatprep.subr.bf16.mxu0 0
      %2137 = vmatpush1.bf16.msra.mxu0 0
      %2138 = vmatprep.subr.bf16.mxu0 0
      %2139 = vmatpush1.bf16.msra.mxu0 0
      %2140 = vmatprep.subr.bf16.mxu0 0
      %2141 = vmatpush1.bf16.msra.mxu0 0
      %2142 = vmatprep.mubr.bf16.mxu0 0
      %2143 = vmatmul.mubr.bf16.gmra.mrb[0].mxu0 %v2013
      %v2144 = vpop.f32.mrb[0].mxu0
      %v2145 = vadd.f32 0.0, %v2144
      %v2146 = vpop.f32.mrb[0].mxu0
      %v2147 = vadd.f32 0.0, %v2146
      %v2148 = vpop.f32.mrb[0].mxu0
      %v2149 = vpop.f32.mrb[0].mxu0
      %2150 = vdwg.mxu0
      %v2151 = vadd.f32 %v2011, %v2145
      %v2152 = vadd.f32 %v2012, %v2147
      %2153 = vst [vmem:[#allocation3] sm:$0xff] %v2151
      %2154 = vst [vmem:[#allocation3 + $0x8] sm:$0xff] %v2152
      %v2155 = vld [vmem:[#allocation2 + $0x4] sm:$0xf]
      %v2156 = vld [vmem:[#allocation2 + $0x14] sm:$0xf]
      %v2157 = vld [vmem:[#allocation2 + $0x24] sm:$0xf]
      %2158 = vmatprep.subr.bf16.mxu0 0
      %2159 = vmatpush1.bf16.xpose.msra.mxu0 %v2156
      %2160 = vmatprep.subr.bf16.mxu0 0
      %2161 = vmatpush1.bf16.xpose.msra.mxu0 0
      %2162 = vmatprep.subr.bf16.mxu0 0
      %2163 = vmatpush1.bf16.xpose.msra.mxu0 0
      %2164 = vmatprep.subr.bf16.mxu0 0
      %2165 = vmatpush1.bf16.xpose.msra.mxu0 0
      %2166 = vmatprep.subr.bf16.mxu0 0
      %2167 = vmatpush1.bf16.xpose.msra.mxu0 0
      %2168 = vmatprep.subr.bf16.mxu0 0
      %2169 = vmatpush1.bf16.xpose.msra.mxu0 0
      %2170 = vmatprep.subr.bf16.mxu0 0
      %2171 = vmatpush1.bf16.xpose.msra.mxu0 0
      %2172 = vmatprep.subr.bf16.mxu0 0
      %2173 = vmatpush1.bf16.xpose.msra.mxu0 0
      %2174 = vmatprep.subr.bf16.mxu0 0
      %2175 = vmatpush1.bf16.xpose.msra.mxu0 0
      %2176 = vmatprep.subr.bf16.mxu0 0
      %2177 = vmatpush1.bf16.xpose.msra.mxu0 0
      %2178 = vmatprep.subr.bf16.mxu0 0
      %2179 = vmatpush1.bf16.xpose.msra.mxu0 0
      %2180 = vmatprep.subr.bf16.mxu0 0
      %2181 = vmatpush1.bf16.xpose.msra.mxu0 0
      %2182 = vmatprep.subr.bf16.mxu0 0
      %2183 = vmatpush1.bf16.xpose.msra.mxu0 0
      %2184 = vmatprep.subr.bf16.mxu0 0
      %2185 = vmatpush1.bf16.xpose.msra.mxu0 0
      %2186 = vmatprep.subr.bf16.mxu0 0
      %2187 = vmatpush1.bf16.xpose.msra.mxu0 0
      %2188 = vmatprep.subr.bf16.mxu0 0
      %2189 = vmatpush1.bf16.xpose.msra.mxu0 0
      %2190 = vmatprep.mubr.bf16.mxu0 0
      %2191 = vmatmul.mubr.bf16.gmra.mrb[0].mxu0 %v2155
      %v2192 = vpop.f32.mrb[0].mxu0
      %v2193 = vadd.f32 0.0, %v2192
      %v2194 = vpop.f32.mrb[0].mxu0
      %v2195 = vpop.f32.mrb[0].mxu0
      %v2196 = vpop.f32.mrb[0].mxu0
      %2197 = vdwg.mxu0
      %v2198 = vmul.f32 %v2193, 0.125
      %v2199 = vadd.f32 %v2198, %v1948
      %v2200 = vsel %vm1951, %v2199, -inf
      %2201 = vmax.xlane.f32.xlu0 %v2200
      %v2202 = vpop.xlane.xlu0 %2201
      %v2203 = vsub.f32 %v2199, %v2202
      %v2204 = vmul.f32 %v2203, 1.442695
      %v2205 = vpow.pop %v2204
      %v2206 = vsel %vm1951, %v2205, 0.0
      %2207 = vadd.xlane.f32.xlu0 %v2206
      %v2208 = vpop.xlane.xlu0 %2207
      %v2209 = vrcp.pop %v2208
      %v2210 = vpack.c.bf16 %v2205, %v2205
      %v2212 = vsel %vm1951, %v2210, 0
      %v2215 = vsel %vm1966, %v2157, 0
      %2217 = vmatprep.subr.bf16.mxu0 0
      %2218 = vmatpush1.bf16.msra.mxu0 %v2215
      %2219 = vmatprep.subr.bf16.mxu0 0
      %2220 = vmatpush1.bf16.msra.mxu0 0
      %2221 = vmatprep.subr.bf16.mxu0 0
      %2222 = vmatpush1.bf16.msra.mxu0 0
      %2223 = vmatprep.subr.bf16.mxu0 0
      %2224 = vmatpush1.bf16.msra.mxu0 0
      %2225 = vmatprep.subr.bf16.mxu0 0
      %2226 = vmatpush1.bf16.msra.mxu0 0
      %2227 = vmatprep.subr.bf16.mxu0 0
      %2228 = vmatpush1.bf16.msra.mxu0 0
      %2229 = vmatprep.subr.bf16.mxu0 0
      %2230 = vmatpush1.bf16.msra.mxu0 0
      %2231 = vmatprep.subr.bf16.mxu0 0
      %2232 = vmatpush1.bf16.msra.mxu0 0
      %2233 = vmatprep.subr.bf16.mxu0 0
      %2234 = vmatpush1.bf16.msra.mxu0 0
      %2235 = vmatprep.subr.bf16.mxu0 0
      %2236 = vmatpush1.bf16.msra.mxu0 0
      %2237 = vmatprep.subr.bf16.mxu0 0
      %2238 = vmatpush1.bf16.msra.mxu0 0
      %2239 = vmatprep.subr.bf16.mxu0 0
      %2240 = vmatpush1.bf16.msra.mxu0 0
      %2241 = vmatprep.subr.bf16.mxu0 0
      %2242 = vmatpush1.bf16.msra.mxu0 0
      %2243 = vmatprep.subr.bf16.mxu0 0
      %2244 = vmatpush1.bf16.msra.mxu0 0
      %2245 = vmatprep.subr.bf16.mxu0 0
      %2246 = vmatpush1.bf16.msra.mxu0 0
      %2247 = vmatprep.subr.bf16.mxu0 0
      %2248 = vmatpush1.bf16.msra.mxu0 0
      %2249 = vmatprep.mubr.bf16.mxu0 0
      %2250 = vmatmul.mubr.bf16.gmra.mrb[0].mxu0 %v2212
      %v2251 = vpop.f32.mrb[0].mxu0
      %v2252 = vadd.f32 0.0, %v2251
      %v2253 = vpop.f32.mrb[0].mxu0
      %v2254 = vpop.f32.mrb[0].mxu0
      %v2255 = vpop.f32.mrb[0].mxu0
      %2256 = vdwg.mxu0
      %v2257 = vmul.f32 %v2252, %v2209
      %v2258 = vld [vmem:[#allocation3] sm:$0xff]
      %v2259 = vld [vmem:[#allocation3 + $0x8] sm:$0xff]
      %v2260 = vpack.c.bf16 %v2257, %v2257
      %v2261 = vld [vmem:[%s3 + $0x80] sm:$0xff]
      %v2262 = vld [vmem:[%s3 + $0x88] sm:$0xff]
      %v2263 = vld [vmem:[%s3 + $0x90] sm:$0xff]
      %v2264 = vld [vmem:[%s3 + $0x98] sm:$0xff]
      %v2265 = vld [vmem:[%s3 + $0xa0] sm:$0xff]
      %v2266 = vld [vmem:[%s3 + $0xa8] sm:$0xff]
      %v2267 = vld [vmem:[%s3 + $0xb0] sm:$0xff]
      %v2268 = vld [vmem:[%s3 + $0xb8] sm:$0xff]
      %v2269 = vld [vmem:[%s3 + $0xc0] sm:$0xff]
      %v2270 = vld [vmem:[%s3 + $0xc8] sm:$0xff]
      %v2271 = vld [vmem:[%s3 + $0xd0] sm:$0xff]
      %v2272 = vld [vmem:[%s3 + $0xd8] sm:$0xff]
      %v2273 = vld [vmem:[%s3 + $0xe0] sm:$0xff]
      %v2274 = vld [vmem:[%s3 + $0xe8] sm:$0xff]
      %v2275 = vld [vmem:[%s3 + $0xf0] sm:$0xff]
      %v2276 = vld [vmem:[%s3 + $0xf8] sm:$0xff]
      %v2293 = vunpack.c.l.b16 %v2261
      %v2294 = vunpack.c.h.b16 %v2261
      %v2295 = vunpack.c.l.b16 %v2262
      %v2296 = vunpack.c.h.b16 %v2262
      %v2297 = vunpack.c.l.b16 %v2263
      %v2298 = vunpack.c.h.b16 %v2263
      %v2299 = vunpack.c.l.b16 %v2264
      %v2300 = vunpack.c.h.b16 %v2264
      %v2301 = vunpack.c.l.b16 %v2265
      %v2302 = vunpack.c.h.b16 %v2265
      %v2303 = vunpack.c.l.b16 %v2266
      %v2304 = vunpack.c.h.b16 %v2266
      %v2305 = vunpack.c.l.b16 %v2267
      %v2306 = vunpack.c.h.b16 %v2267
      %v2307 = vunpack.c.l.b16 %v2268
      %v2308 = vunpack.c.h.b16 %v2268
      %v2309 = vunpack.c.l.b16 %v2269
      %v2310 = vunpack.c.h.b16 %v2269
      %v2311 = vunpack.c.l.b16 %v2270
      %v2312 = vunpack.c.h.b16 %v2270
      %v2313 = vunpack.c.l.b16 %v2271
      %v2314 = vunpack.c.h.b16 %v2271
      %v2315 = vunpack.c.l.b16 %v2272
      %v2316 = vunpack.c.h.b16 %v2272
      %v2317 = vunpack.c.l.b16 %v2273
      %v2318 = vunpack.c.h.b16 %v2273
      %v2319 = vunpack.c.l.b16 %v2274
      %v2320 = vunpack.c.h.b16 %v2274
      %v2321 = vunpack.c.l.b16 %v2275
      %v2322 = vunpack.c.h.b16 %v2275
      %v2323 = vunpack.c.l.b16 %v2276
      %v2324 = vunpack.c.h.b16 %v2276
      %v2325 = vpack.c.b16 %v2295, %v2293
      %v2326 = vpack.c.b16 %v2296, %v2294
      %v2327 = vpack.c.b16 %v2299, %v2297
      %v2328 = vpack.c.b16 %v2300, %v2298
      %v2329 = vpack.c.b16 %v2303, %v2301
      %v2330 = vpack.c.b16 %v2304, %v2302
      %v2331 = vpack.c.b16 %v2307, %v2305
      %v2332 = vpack.c.b16 %v2308, %v2306
      %v2333 = vpack.c.b16 %v2311, %v2309
      %v2334 = vpack.c.b16 %v2312, %v2310
      %v2335 = vpack.c.b16 %v2315, %v2313
      %v2336 = vpack.c.b16 %v2316, %v2314
      %v2337 = vpack.c.b16 %v2319, %v2317
      %v2338 = vpack.c.b16 %v2320, %v2318
      %v2339 = vpack.c.b16 %v2323, %v2321
      %v2340 = vpack.c.b16 %v2324, %v2322
      %2357 = vmatprep.subr.bf16.mxu0 %v2326
      %2358 = vmatpush1.bf16.msra.mxu0 %v2325
      %2359 = vmatprep.subr.bf16.mxu0 %v2328
      %2360 = vmatpush1.bf16.msra.mxu0 %v2327
      %2361 = vmatprep.subr.bf16.mxu0 %v2330
      %2362 = vmatpush1.bf16.msra.mxu0 %v2329
      %2363 = vmatprep.subr.bf16.mxu0 %v2332
      %2364 = vmatpush1.bf16.msra.mxu0 %v2331
      %2365 = vmatprep.subr.bf16.mxu0 %v2334
      %2366 = vmatpush1.bf16.msra.mxu0 %v2333
      %2367 = vmatprep.subr.bf16.mxu0 %v2336
      %2368 = vmatpush1.bf16.msra.mxu0 %v2335
      %2369 = vmatprep.subr.bf16.mxu0 %v2338
      %2370 = vmatpush1.bf16.msra.mxu0 %v2337
      %2371 = vmatprep.subr.bf16.mxu0 %v2340
      %2372 = vmatpush1.bf16.msra.mxu0 %v2339
      %2373 = vmatprep.subr.bf16.mxu0 0
      %2374 = vmatpush1.bf16.msra.mxu0 0
      %2375 = vmatprep.subr.bf16.mxu0 0
      %2376 = vmatpush1.bf16.msra.mxu0 0
      %2377 = vmatprep.subr.bf16.mxu0 0
      %2378 = vmatpush1.bf16.msra.mxu0 0
      %2379 = vmatprep.subr.bf16.mxu0 0
      %2380 = vmatpush1.bf16.msra.mxu0 0
      %2381 = vmatprep.subr.bf16.mxu0 0
      %2382 = vmatpush1.bf16.msra.mxu0 0
      %2383 = vmatprep.subr.bf16.mxu0 0
      %2384 = vmatpush1.bf16.msra.mxu0 0
      %2385 = vmatprep.subr.bf16.mxu0 0
      %2386 = vmatpush1.bf16.msra.mxu0 0
      %2387 = vmatprep.subr.bf16.mxu0 0
      %2388 = vmatpush1.bf16.msra.mxu0 0
      %2389 = vmatprep.mubr.bf16.mxu0 0
      %2390 = vmatmul.mubr.bf16.gmra.mrb[0].mxu0 %v2260
      %v2391 = vpop.f32.mrb[0].mxu0
      %v2392 = vadd.f32 0.0, %v2391
      %v2393 = vpop.f32.mrb[0].mxu0
      %v2394 = vadd.f32 0.0, %v2393
      %v2395 = vpop.f32.mrb[0].mxu0
      %v2396 = vpop.f32.mrb[0].mxu0
      %2397 = vdwg.mxu0
      %v2398 = vadd.f32 %v2258, %v2392
      %v2399 = vadd.f32 %v2259, %v2394
      %2400 = vst [vmem:[#allocation3] sm:$0xff] %v2398
      %2401 = vst [vmem:[#allocation3 + $0x8] sm:$0xff] %v2399
      %v2402 = vld [vmem:[#allocation2 + $0x8] sm:$0xf]
      %v2403 = vld [vmem:[#allocation2 + $0x18] sm:$0xf]
      %v2404 = vld [vmem:[#allocation2 + $0x28] sm:$0xf]
      %2405 = vmatprep.subr.bf16.mxu0 0
      %2406 = vmatpush1.bf16.xpose.msra.mxu0 %v2403
      %2407 = vmatprep.subr.bf16.mxu0 0
      %2408 = vmatpush1.bf16.xpose.msra.mxu0 0
      %2409 = vmatprep.subr.bf16.mxu0 0
      %2410 = vmatpush1.bf16.xpose.msra.mxu0 0
      %2411 = vmatprep.subr.bf16.mxu0 0
      %2412 = vmatpush1.bf16.xpose.msra.mxu0 0
      %2413 = vmatprep.subr.bf16.mxu0 0
      %2414 = vmatpush1.bf16.xpose.msra.mxu0 0
      %2415 = vmatprep.subr.bf16.mxu0 0
      %2416 = vmatpush1.bf16.xpose.msra.mxu0 0
      %2417 = vmatprep.subr.bf16.mxu0 0
      %2418 = vmatpush1.bf16.xpose.msra.mxu0 0
      %2419 = vmatprep.subr.bf16.mxu0 0
      %2420 = vmatpush1.bf16.xpose.msra.mxu0 0
      %2421 = vmatprep.subr.bf16.mxu0 0
      %2422 = vmatpush1.bf16.xpose.msra.mxu0 0
      %2423 = vmatprep.subr.bf16.mxu0 0
      %2424 = vmatpush1.bf16.xpose.msra.mxu0 0
      %2425 = vmatprep.subr.bf16.mxu0 0
      %2426 = vmatpush1.bf16.xpose.msra.mxu0 0
      %2427 = vmatprep.subr.bf16.mxu0 0
      %2428 = vmatpush1.bf16.xpose.msra.mxu0 0
      %2429 = vmatprep.subr.bf16.mxu0 0
      %2430 = vmatpush1.bf16.xpose.msra.mxu0 0
      %2431 = vmatprep.subr.bf16.mxu0 0
      %2432 = vmatpush1.bf16.xpose.msra.mxu0 0
      %2433 = vmatprep.subr.bf16.mxu0 0
      %2434 = vmatpush1.bf16.xpose.msra.mxu0 0
      %2435 = vmatprep.subr.bf16.mxu0 0
      %2436 = vmatpush1.bf16.xpose.msra.mxu0 0
      %2437 = vmatprep.mubr.bf16.mxu0 0
      %2438 = vmatmul.mubr.bf16.gmra.mrb[0].mxu0 %v2402
      %v2439 = vpop.f32.mrb[0].mxu0
      %v2440 = vadd.f32 0.0, %v2439
      %v2441 = vpop.f32.mrb[0].mxu0
      %v2442 = vpop.f32.mrb[0].mxu0
      %v2443 = vpop.f32.mrb[0].mxu0
      %2444 = vdwg.mxu0
      %v2445 = vmul.f32 %v2440, 0.125
      %v2446 = vadd.f32 %v2445, %v1948
      %v2447 = vsel %vm1951, %v2446, -inf
      %2448 = vmax.xlane.f32.xlu0 %v2447
      %v2449 = vpop.xlane.xlu0 %2448
      %v2450 = vsub.f32 %v2446, %v2449
      %v2451 = vmul.f32 %v2450, 1.442695
      %v2452 = vpow.pop %v2451
      %v2453 = vsel %vm1951, %v2452, 0.0
      %2454 = vadd.xlane.f32.xlu0 %v2453
      %v2455 = vpop.xlane.xlu0 %2454
      %v2456 = vrcp.pop %v2455
      %v2457 = vpack.c.bf16 %v2452, %v2452
      %v2459 = vsel %vm1951, %v2457, 0
      %v2462 = vsel %vm1966, %v2404, 0
      %2464 = vmatprep.subr.bf16.mxu0 0
      %2465 = vmatpush1.bf16.msra.mxu0 %v2462
      %2466 = vmatprep.subr.bf16.mxu0 0
      %2467 = vmatpush1.bf16.msra.mxu0 0
      %2468 = vmatprep.subr.bf16.mxu0 0
      %2469 = vmatpush1.bf16.msra.mxu0 0
      %2470 = vmatprep.subr.bf16.mxu0 0
      %2471 = vmatpush1.bf16.msra.mxu0 0
      %2472 = vmatprep.subr.bf16.mxu0 0
      %2473 = vmatpush1.bf16.msra.mxu0 0
      %2474 = vmatprep.subr.bf16.mxu0 0
      %2475 = vmatpush1.bf16.msra.mxu0 0
      %2476 = vmatprep.subr.bf16.mxu0 0
      %2477 = vmatpush1.bf16.msra.mxu0 0
      %2478 = vmatprep.subr.bf16.mxu0 0
      %2479 = vmatpush1.bf16.msra.mxu0 0
      %2480 = vmatprep.subr.bf16.mxu0 0
      %2481 = vmatpush1.bf16.msra.mxu0 0
      %2482 = vmatprep.subr.bf16.mxu0 0
      %2483 = vmatpush1.bf16.msra.mxu0 0
      %2484 = vmatprep.subr.bf16.mxu0 0
      %2485 = vmatpush1.bf16.msra.mxu0 0
      %2486 = vmatprep.subr.bf16.mxu0 0
      %2487 = vmatpush1.bf16.msra.mxu0 0
      %2488 = vmatprep.subr.bf16.mxu0 0
      %2489 = vmatpush1.bf16.msra.mxu0 0
      %2490 = vmatprep.subr.bf16.mxu0 0
      %2491 = vmatpush1.bf16.msra.mxu0 0
      %2492 = vmatprep.subr.bf16.mxu0 0
      %2493 = vmatpush1.bf16.msra.mxu0 0
      %2494 = vmatprep.subr.bf16.mxu0 0
      %2495 = vmatpush1.bf16.msra.mxu0 0
      %2496 = vmatprep.mubr.bf16.mxu0 0
      %2497 = vmatmul.mubr.bf16.gmra.mrb[0].mxu0 %v2459
      %v2498 = vpop.f32.mrb[0].mxu0
      %v2499 = vadd.f32 0.0, %v2498
      %v2500 = vpop.f32.mrb[0].mxu0
      %v2501 = vpop.f32.mrb[0].mxu0
      %v2502 = vpop.f32.mrb[0].mxu0
      %2503 = vdwg.mxu0
      %v2504 = vmul.f32 %v2499, %v2456
      %v2505 = vld [vmem:[#allocation3] sm:$0xff]
      %v2506 = vld [vmem:[#allocation3 + $0x8] sm:$0xff]
      %v2507 = vpack.c.bf16 %v2504, %v2504
      %v2508 = vld [vmem:[%s3 + $0x100] sm:$0xff]
      %v2509 = vld [vmem:[%s3 + $0x108] sm:$0xff]
      %v2510 = vld [vmem:[%s3 + $0x110] sm:$0xff]
      %v2511 = vld [vmem:[%s3 + $0x118] sm:$0xff]
      %v2512 = vld [vmem:[%s3 + $0x120] sm:$0xff]
      %v2513 = vld [vmem:[%s3 + $0x128] sm:$0xff]
      %v2514 = vld [vmem:[%s3 + $0x130] sm:$0xff]
      %v2515 = vld [vmem:[%s3 + $0x138] sm:$0xff]
      %v2516 = vld [vmem:[%s3 + $0x140] sm:$0xff]
      %v2517 = vld [vmem:[%s3 + $0x148] sm:$0xff]
      %v2518 = vld [vmem:[%s3 + $0x150] sm:$0xff]
      %v2519 = vld [vmem:[%s3 + $0x158] sm:$0xff]
      %v2520 = vld [vmem:[%s3 + $0x160] sm:$0xff]
      %v2521 = vld [vmem:[%s3 + $0x168] sm:$0xff]
      %v2522 = vld [vmem:[%s3 + $0x170] sm:$0xff]
      %v2523 = vld [vmem:[%s3 + $0x178] sm:$0xff]
      %v2540 = vunpack.c.l.b16 %v2508
      %v2541 = vunpack.c.h.b16 %v2508
      %v2542 = vunpack.c.l.b16 %v2509
      %v2543 = vunpack.c.h.b16 %v2509
      %v2544 = vunpack.c.l.b16 %v2510
      %v2545 = vunpack.c.h.b16 %v2510
      %v2546 = vunpack.c.l.b16 %v2511
      %v2547 = vunpack.c.h.b16 %v2511
      %v2548 = vunpack.c.l.b16 %v2512
      %v2549 = vunpack.c.h.b16 %v2512
      %v2550 = vunpack.c.l.b16 %v2513
      %v2551 = vunpack.c.h.b16 %v2513
      %v2552 = vunpack.c.l.b16 %v2514
      %v2553 = vunpack.c.h.b16 %v2514
      %v2554 = vunpack.c.l.b16 %v2515
      %v2555 = vunpack.c.h.b16 %v2515
      %v2556 = vunpack.c.l.b16 %v2516
      %v2557 = vunpack.c.h.b16 %v2516
      %v2558 = vunpack.c.l.b16 %v2517
      %v2559 = vunpack.c.h.b16 %v2517
      %v2560 = vunpack.c.l.b16 %v2518
      %v2561 = vunpack.c.h.b16 %v2518
      %v2562 = vunpack.c.l.b16 %v2519
      %v2563 = vunpack.c.h.b16 %v2519
      %v2564 = vunpack.c.l.b16 %v2520
      %v2565 = vunpack.c.h.b16 %v2520
      %v2566 = vunpack.c.l.b16 %v2521
      %v2567 = vunpack.c.h.b16 %v2521
      %v2568 = vunpack.c.l.b16 %v2522
      %v2569 = vunpack.c.h.b16 %v2522
      %v2570 = vunpack.c.l.b16 %v2523
      %v2571 = vunpack.c.h.b16 %v2523
      %v2572 = vpack.c.b16 %v2542, %v2540
      %v2573 = vpack.c.b16 %v2543, %v2541
      %v2574 = vpack.c.b16 %v2546, %v2544
      %v2575 = vpack.c.b16 %v2547, %v2545
      %v2576 = vpack.c.b16 %v2550, %v2548
      %v2577 = vpack.c.b16 %v2551, %v2549
      %v2578 = vpack.c.b16 %v2554, %v2552
      %v2579 = vpack.c.b16 %v2555, %v2553
      %v2580 = vpack.c.b16 %v2558, %v2556
      %v2581 = vpack.c.b16 %v2559, %v2557
      %v2582 = vpack.c.b16 %v2562, %v2560
      %v2583 = vpack.c.b16 %v2563, %v2561
      %v2584 = vpack.c.b16 %v2566, %v2564
      %v2585 = vpack.c.b16 %v2567, %v2565
      %v2586 = vpack.c.b16 %v2570, %v2568
      %v2587 = vpack.c.b16 %v2571, %v2569
      %2604 = vmatprep.subr.bf16.mxu0 %v2573
      %2605 = vmatpush1.bf16.msra.mxu0 %v2572
      %2606 = vmatprep.subr.bf16.mxu0 %v2575
      %2607 = vmatpush1.bf16.msra.mxu0 %v2574
      %2608 = vmatprep.subr.bf16.mxu0 %v2577
      %2609 = vmatpush1.bf16.msra.mxu0 %v2576
      %2610 = vmatprep.subr.bf16.mxu0 %v2579
      %2611 = vmatpush1.bf16.msra.mxu0 %v2578
      %2612 = vmatprep.subr.bf16.mxu0 %v2581
      %2613 = vmatpush1.bf16.msra.mxu0 %v2580
      %2614 = vmatprep.subr.bf16.mxu0 %v2583
      %2615 = vmatpush1.bf16.msra.mxu0 %v2582
      %2616 = vmatprep.subr.bf16.mxu0 %v2585
      %2617 = vmatpush1.bf16.msra.mxu0 %v2584
      %2618 = vmatprep.subr.bf16.mxu0 %v2587
      %2619 = vmatpush1.bf16.msra.mxu0 %v2586
      %2620 = vmatprep.subr.bf16.mxu0 0
      %2621 = vmatpush1.bf16.msra.mxu0 0
      %2622 = vmatprep.subr.bf16.mxu0 0
      %2623 = vmatpush1.bf16.msra.mxu0 0
      %2624 = vmatprep.subr.bf16.mxu0 0
      %2625 = vmatpush1.bf16.msra.mxu0 0
      %2626 = vmatprep.subr.bf16.mxu0 0
      %2627 = vmatpush1.bf16.msra.mxu0 0
      %2628 = vmatprep.subr.bf16.mxu0 0
      %2629 = vmatpush1.bf16.msra.mxu0 0
      %2630 = vmatprep.subr.bf16.mxu0 0
      %2631 = vmatpush1.bf16.msra.mxu0 0
      %2632 = vmatprep.subr.bf16.mxu0 0
      %2633 = vmatpush1.bf16.msra.mxu0 0
      %2634 = vmatprep.subr.bf16.mxu0 0
      %2635 = vmatpush1.bf16.msra.mxu0 0
      %2636 = vmatprep.mubr.bf16.mxu0 0
      %2637 = vmatmul.mubr.bf16.gmra.mrb[0].mxu0 %v2507
      %v2638 = vpop.f32.mrb[0].mxu0
      %v2639 = vadd.f32 0.0, %v2638
      %v2640 = vpop.f32.mrb[0].mxu0
      %v2641 = vadd.f32 0.0, %v2640
      %v2642 = vpop.f32.mrb[0].mxu0
      %v2643 = vpop.f32.mrb[0].mxu0
      %2644 = vdwg.mxu0
      %v2645 = vadd.f32 %v2505, %v2639
      %v2646 = vadd.f32 %v2506, %v2641
      %2647 = vst [vmem:[#allocation3] sm:$0xff] %v2645
      %2648 = vst [vmem:[#allocation3 + $0x8] sm:$0xff] %v2646
      %v2649 = vld [vmem:[#allocation2 + $0xc] sm:$0xf]
      %v2650 = vld [vmem:[#allocation2 + $0x1c] sm:$0xf]
      %v2651 = vld [vmem:[#allocation2 + $0x2c] sm:$0xf]
      %2652 = vmatprep.subr.bf16.mxu0 0
      %2653 = vmatpush1.bf16.xpose.msra.mxu0 %v2650
      %2654 = vmatprep.subr.bf16.mxu0 0
      %2655 = vmatpush1.bf16.xpose.msra.mxu0 0
      %2656 = vmatprep.subr.bf16.mxu0 0
      %2657 = vmatpush1.bf16.xpose.msra.mxu0 0
      %2658 = vmatprep.subr.bf16.mxu0 0
      %2659 = vmatpush1.bf16.xpose.msra.mxu0 0
      %2660 = vmatprep.subr.bf16.mxu0 0
      %2661 = vmatpush1.bf16.xpose.msra.mxu0 0
      %2662 = vmatprep.subr.bf16.mxu0 0
      %2663 = vmatpush1.bf16.xpose.msra.mxu0 0
      %2664 = vmatprep.subr.bf16.mxu0 0
      %2665 = vmatpush1.bf16.xpose.msra.mxu0 0
      %2666 = vmatprep.subr.bf16.mxu0 0
      %2667 = vmatpush1.bf16.xpose.msra.mxu0 0
      %2668 = vmatprep.subr.bf16.mxu0 0
      %2669 = vmatpush1.bf16.xpose.msra.mxu0 0
      %2670 = vmatprep.subr.bf16.mxu0 0
      %2671 = vmatpush1.bf16.xpose.msra.mxu0 0
      %2672 = vmatprep.subr.bf16.mxu0 0
      %2673 = vmatpush1.bf16.xpose.msra.mxu0 0
      %2674 = vmatprep.subr.bf16.mxu0 0
      %2675 = vmatpush1.bf16.xpose.msra.mxu0 0
      %2676 = vmatprep.subr.bf16.mxu0 0
      %2677 = vmatpush1.bf16.xpose.msra.mxu0 0
      %2678 = vmatprep.subr.bf16.mxu0 0
      %2679 = vmatpush1.bf16.xpose.msra.mxu0 0
      %2680 = vmatprep.subr.bf16.mxu0 0
      %2681 = vmatpush1.bf16.xpose.msra.mxu0 0
      %2682 = vmatprep.subr.bf16.mxu0 0
      %2683 = vmatpush1.bf16.xpose.msra.mxu0 0
      %2684 = vmatprep.mubr.bf16.mxu0 0
      %2685 = vmatmul.mubr.bf16.gmra.mrb[0].mxu0 %v2649
      %v2686 = vpop.f32.mrb[0].mxu0
      %v2687 = vadd.f32 0.0, %v2686
      %v2688 = vpop.f32.mrb[0].mxu0
      %v2689 = vpop.f32.mrb[0].mxu0
      %v2690 = vpop.f32.mrb[0].mxu0
      %2691 = vdwg.mxu0
      %v2692 = vmul.f32 %v2687, 0.125
      %v2693 = vadd.f32 %v2692, %v1948
      %v2694 = vsel %vm1951, %v2693, -inf
      %2695 = vmax.xlane.f32.xlu0 %v2694
      %v2696 = vpop.xlane.xlu0 %2695
      %v2697 = vsub.f32 %v2693, %v2696
      %v2698 = vmul.f32 %v2697, 1.442695
      %v2699 = vpow.pop %v2698
      %v2700 = vsel %vm1951, %v2699, 0.0
      %2701 = vadd.xlane.f32.xlu0 %v2700
      %v2702 = vpop.xlane.xlu0 %2701
      %v2703 = vrcp.pop %v2702
      %v2704 = vpack.c.bf16 %v2699, %v2699
      %v2706 = vsel %vm1951, %v2704, 0
      %v2709 = vsel %vm1966, %v2651, 0
      %2711 = vmatprep.subr.bf16.mxu0 0
      %2712 = vmatpush1.bf16.msra.mxu0 %v2709
      %2713 = vmatprep.subr.bf16.mxu0 0
      %2714 = vmatpush1.bf16.msra.mxu0 0
      %2715 = vmatprep.subr.bf16.mxu0 0
      %2716 = vmatpush1.bf16.msra.mxu0 0
      %2717 = vmatprep.subr.bf16.mxu0 0
      %2718 = vmatpush1.bf16.msra.mxu0 0
      %2719 = vmatprep.subr.bf16.mxu0 0
      %2720 = vmatpush1.bf16.msra.mxu0 0
      %2721 = vmatprep.subr.bf16.mxu0 0
      %2722 = vmatpush1.bf16.msra.mxu0 0
      %2723 = vmatprep.subr.bf16.mxu0 0
      %2724 = vmatpush1.bf16.msra.mxu0 0
      %2725 = vmatprep.subr.bf16.mxu0 0
      %2726 = vmatpush1.bf16.msra.mxu0 0
      %2727 = vmatprep.subr.bf16.mxu0 0
      %2728 = vmatpush1.bf16.msra.mxu0 0
      %2729 = vmatprep.subr.bf16.mxu0 0
      %2730 = vmatpush1.bf16.msra.mxu0 0
      %2731 = vmatprep.subr.bf16.mxu0 0
      %2732 = vmatpush1.bf16.msra.mxu0 0
      %2733 = vmatprep.subr.bf16.mxu0 0
      %2734 = vmatpush1.bf16.msra.mxu0 0
      %2735 = vmatprep.subr.bf16.mxu0 0
      %2736 = vmatpush1.bf16.msra.mxu0 0
      %2737 = vmatprep.subr.bf16.mxu0 0
      %2738 = vmatpush1.bf16.msra.mxu0 0
      %2739 = vmatprep.subr.bf16.mxu0 0
      %2740 = vmatpush1.bf16.msra.mxu0 0
      %2741 = vmatprep.subr.bf16.mxu0 0
      %2742 = vmatpush1.bf16.msra.mxu0 0
      %2743 = vmatprep.mubr.bf16.mxu0 0
      %2744 = vmatmul.mubr.bf16.gmra.mrb[0].mxu0 %v2706
      %v2745 = vpop.f32.mrb[0].mxu0
      %v2746 = vadd.f32 0.0, %v2745
      %v2747 = vpop.f32.mrb[0].mxu0
      %v2748 = vpop.f32.mrb[0].mxu0
      %v2749 = vpop.f32.mrb[0].mxu0
      %2750 = vdwg.mxu0
      %v2751 = vmul.f32 %v2746, %v2703
      %v2752 = vld [vmem:[#allocation3] sm:$0xff]
      %v2753 = vld [vmem:[#allocation3 + $0x8] sm:$0xff]
      %v2754 = vpack.c.bf16 %v2751, %v2751
      %v2755 = vld [vmem:[%s3 + $0x180] sm:$0xff]
      %v2756 = vld [vmem:[%s3 + $0x188] sm:$0xff]
      %v2757 = vld [vmem:[%s3 + $0x190] sm:$0xff]
      %v2758 = vld [vmem:[%s3 + $0x198] sm:$0xff]
      %v2759 = vld [vmem:[%s3 + $0x1a0] sm:$0xff]
      %v2760 = vld [vmem:[%s3 + $0x1a8] sm:$0xff]
      %v2761 = vld [vmem:[%s3 + $0x1b0] sm:$0xff]
      %v2762 = vld [vmem:[%s3 + $0x1b8] sm:$0xff]
      %v2763 = vld [vmem:[%s3 + $0x1c0] sm:$0xff]
      %v2764 = vld [vmem:[%s3 + $0x1c8] sm:$0xff]
      %v2765 = vld [vmem:[%s3 + $0x1d0] sm:$0xff]
      %v2766 = vld [vmem:[%s3 + $0x1d8] sm:$0xff]
      %v2767 = vld [vmem:[%s3 + $0x1e0] sm:$0xff]
      %v2768 = vld [vmem:[%s3 + $0x1e8] sm:$0xff]
      %v2769 = vld [vmem:[%s3 + $0x1f0] sm:$0xff]
      %v2770 = vld [vmem:[%s3 + $0x1f8] sm:$0xff]
      %v2787 = vunpack.c.l.b16 %v2755
      %v2788 = vunpack.c.h.b16 %v2755
      %v2789 = vunpack.c.l.b16 %v2756
      %v2790 = vunpack.c.h.b16 %v2756
      %v2791 = vunpack.c.l.b16 %v2757
      %v2792 = vunpack.c.h.b16 %v2757
      %v2793 = vunpack.c.l.b16 %v2758
      %v2794 = vunpack.c.h.b16 %v2758
      %v2795 = vunpack.c.l.b16 %v2759
      %v2796 = vunpack.c.h.b16 %v2759
      %v2797 = vunpack.c.l.b16 %v2760
      %v2798 = vunpack.c.h.b16 %v2760
      %v2799 = vunpack.c.l.b16 %v2761
      %v2800 = vunpack.c.h.b16 %v2761
      %v2801 = vunpack.c.l.b16 %v2762
      %v2802 = vunpack.c.h.b16 %v2762
      %v2803 = vunpack.c.l.b16 %v2763
      %v2804 = vunpack.c.h.b16 %v2763
      %v2805 = vunpack.c.l.b16 %v2764
      %v2806 = vunpack.c.h.b16 %v2764
      %v2807 = vunpack.c.l.b16 %v2765
      %v2808 = vunpack.c.h.b16 %v2765
      %v2809 = vunpack.c.l.b16 %v2766
      %v2810 = vunpack.c.h.b16 %v2766
      %v2811 = vunpack.c.l.b16 %v2767
      %v2812 = vunpack.c.h.b16 %v2767
      %v2813 = vunpack.c.l.b16 %v2768
      %v2814 = vunpack.c.h.b16 %v2768
      %v2815 = vunpack.c.l.b16 %v2769
      %v2816 = vunpack.c.h.b16 %v2769
      %v2817 = vunpack.c.l.b16 %v2770
      %v2818 = vunpack.c.h.b16 %v2770
      %v2819 = vpack.c.b16 %v2789, %v2787
      %v2820 = vpack.c.b16 %v2790, %v2788
      %v2821 = vpack.c.b16 %v2793, %v2791
      %v2822 = vpack.c.b16 %v2794, %v2792
      %v2823 = vpack.c.b16 %v2797, %v2795
      %v2824 = vpack.c.b16 %v2798, %v2796
      %v2825 = vpack.c.b16 %v2801, %v2799
      %v2826 = vpack.c.b16 %v2802, %v2800
      %v2827 = vpack.c.b16 %v2805, %v2803
      %v2828 = vpack.c.b16 %v2806, %v2804
      %v2829 = vpack.c.b16 %v2809, %v2807
      %v2830 = vpack.c.b16 %v2810, %v2808
      %v2831 = vpack.c.b16 %v2813, %v2811
      %v2832 = vpack.c.b16 %v2814, %v2812
      %v2833 = vpack.c.b16 %v2817, %v2815
      %v2834 = vpack.c.b16 %v2818, %v2816
      %2851 = vmatprep.subr.bf16.mxu0 %v2820
      %2852 = vmatpush1.bf16.msra.mxu0 %v2819
      %2853 = vmatprep.subr.bf16.mxu0 %v2822
      %2854 = vmatpush1.bf16.msra.mxu0 %v2821
      %2855 = vmatprep.subr.bf16.mxu0 %v2824
      %2856 = vmatpush1.bf16.msra.mxu0 %v2823
      %2857 = vmatprep.subr.bf16.mxu0 %v2826
      %2858 = vmatpush1.bf16.msra.mxu0 %v2825
      %2859 = vmatprep.subr.bf16.mxu0 %v2828
      %2860 = vmatpush1.bf16.msra.mxu0 %v2827
      %2861 = vmatprep.subr.bf16.mxu0 %v2830
      %2862 = vmatpush1.bf16.msra.mxu0 %v2829
      %2863 = vmatprep.subr.bf16.mxu0 %v2832
      %2864 = vmatpush1.bf16.msra.mxu0 %v2831
      %2865 = vmatprep.subr.bf16.mxu0 %v2834
      %2866 = vmatpush1.bf16.msra.mxu0 %v2833
      %2867 = vmatprep.subr.bf16.mxu0 0
      %2868 = vmatpush1.bf16.msra.mxu0 0
      %2869 = vmatprep.subr.bf16.mxu0 0
      %2870 = vmatpush1.bf16.msra.mxu0 0
      %2871 = vmatprep.subr.bf16.mxu0 0
      %2872 = vmatpush1.bf16.msra.mxu0 0
      %2873 = vmatprep.subr.bf16.mxu0 0
      %2874 = vmatpush1.bf16.msra.mxu0 0
      %2875 = vmatprep.subr.bf16.mxu0 0
      %2876 = vmatpush1.bf16.msra.mxu0 0
      %2877 = vmatprep.subr.bf16.mxu0 0
      %2878 = vmatpush1.bf16.msra.mxu0 0
      %2879 = vmatprep.subr.bf16.mxu0 0
      %2880 = vmatpush1.bf16.msra.mxu0 0
      %2881 = vmatprep.subr.bf16.mxu0 0
      %2882 = vmatpush1.bf16.msra.mxu0 0
      %2883 = vmatprep.mubr.bf16.mxu0 0
      %2884 = vmatmul.mubr.bf16.gmra.mrb[0].mxu0 %v2754
      %v2885 = vpop.f32.mrb[0].mxu0
      %v2886 = vadd.f32 0.0, %v2885
      %v2887 = vpop.f32.mrb[0].mxu0
      %v2888 = vadd.f32 0.0, %v2887
      %v2889 = vpop.f32.mrb[0].mxu0
      %v2890 = vpop.f32.mrb[0].mxu0
      %2891 = vdwg.mxu0
      %v2892 = vadd.f32 %v2752, %v2886
      %v2893 = vadd.f32 %v2753, %v2888
      %2894 = vst [vmem:[#allocation3] sm:$0xff] %v2892
      %2895 = vst [vmem:[#allocation3 + $0x8] sm:$0xff] %v2893
      %v2896 = vld [vmem:[#allocation3] sm:$0xff]
      %v2897 = vld [vmem:[#allocation3 + $0x8] sm:$0xff]
      %v2898 = vld [vmem:[%s4] sm:$0x3]
      %v2899 = vunpack.c.l.bf16 %v2898
      %v2901 = vlaneseq
      %v2902 = vshrl.u32 %v2901, 7
      %v2903 = vsub.s32 0, %v2902
      %v2904 = vrot.slane %v2899, %v2903
      %v2905 = vlaneseq
      %v2906 = vshrl.u32 %v2905, 7
      %v2907 = vsub.s32 2, %v2906
      %v2908 = vrot.slane %v2899, %v2907
      %v2911 = vlaneseq
      %v2912 = vshrl.u32 %v2911, 7
      %v2913 = vsub.s32 0, %v2912
      %v2914 = vrot.slane %v2904, %v2913
      %v2915 = vlaneseq
      %v2916 = vshrl.u32 %v2915, 7
      %v2917 = vsub.s32 0, %v2916
      %v2918 = vrot.slane %v2908, %v2917
      %v2919 = vadd.f32 %v2896, %v2914
      %v2920 = vadd.f32 %v2897, %v2918
      %v2921 = vunpack.c.l.bf16 %v321
      %v2922 = vunpack.c.h.bf16 %v321
      %v2923 = vadd.f32 %v2919, %v2921
      %v2924 = vadd.f32 %v2920, %v2922
      %v2925 = vld [vmem:[%s5] sm:$0x3]
      %v2926 = vunpack.c.l.bf16 %v2925
      %v2927 = vld [vmem:[%s6] sm:$0x3]
      %v2928 = vunpack.c.l.bf16 %v2927
      %v2929 = vadd.f32 %v2923, %v2924
      %2930 = vadd.xlane.f32.xlu0 %v2929
      %v2931 = vpop.xlane.xlu0 %2930
      %v2932 = vrcp.pop 256.0
      %v2933 = vmul.f32 %v2931, %v2932
      %v2934 = vsub.f32 %v2923, %v2933
      %v2935 = vsub.f32 %v2924, %v2933
      %v2936 = vmul.f32 %v2934, %v2934
      %v2937 = vmul.f32 %v2935, %v2935
      %v2938 = vadd.f32 %v2936, %v2937
      %2939 = vadd.xlane.f32.xlu0 %v2938
      %v2940 = vpop.xlane.xlu0 %2939
      %v2941 = vmul.f32 %v2940, %v2932
      %v2942 = vadd.f32 %v2941, 1e-05
      %v2943 = vrsqrt.pop %v2942
      %v2944 = vmul.f32 %v2934, %v2943
      %v2945 = vmul.f32 %v2935, %v2943
      %v2947 = vlaneseq
      %v2948 = vshrl.u32 %v2947, 7
      %v2949 = vsub.s32 0, %v2948
      %v2950 = vrot.slane %v2926, %v2949
      %v2951 = vlaneseq
      %v2952 = vshrl.u32 %v2951, 7
      %v2953 = vsub.s32 2, %v2952
      %v2954 = vrot.slane %v2926, %v2953
      %v2957 = vlaneseq
      %v2958 = vshrl.u32 %v2957, 7
      %v2959 = vsub.s32 0, %v2958
      %v2960 = vrot.slane %v2950, %v2959
      %v2961 = vlaneseq
      %v2962 = vshrl.u32 %v2961, 7
      %v2963 = vsub.s32 0, %v2962
      %v2964 = vrot.slane %v2954, %v2963
      %v2965 = vmul.f32 %v2944, %v2960
      %v2966 = vmul.f32 %v2945, %v2964
      %v2968 = vlaneseq
      %v2969 = vshrl.u32 %v2968, 7
      %v2970 = vsub.s32 0, %v2969
      %v2971 = vrot.slane %v2928, %v2970
      %v2972 = vlaneseq
      %v2973 = vshrl.u32 %v2972, 7
      %v2974 = vsub.s32 2, %v2973
      %v2975 = vrot.slane %v2928, %v2974
      %v2978 = vlaneseq
      %v2979 = vshrl.u32 %v2978, 7
      %v2980 = vsub.s32 0, %v2979
      %v2981 = vrot.slane %v2971, %v2980
      %v2982 = vlaneseq
      %v2983 = vshrl.u32 %v2982, 7
      %v2984 = vsub.s32 0, %v2983
      %v2985 = vrot.slane %v2975, %v2984
      %v2986 = vadd.f32 %v2965, %v2981
      %v2987 = vadd.f32 %v2966, %v2985
      %v2988 = vpack.c.bf16 %v2986, %v2986
      %v2989 = vpack.c.bf16 %v2987, %v2987
      %v2992 = vunpack.c.l.b16 %v2988
      %v2993 = vunpack.c.l.b16 %v2989
      %v2994 = vpack.c.b16 %v2993, %v2992
      %2996 = vst [vmem:[%s319] sm:$0xff] %v2994
      %p2997 = scmp.lt.s32.totalorder %s19, 1
      %s2998 = scalar_select %p2997, %s19, 1
      %s2999 = smul.addr %s2998, 2
      %s3000 = smul.addr %s2999, 4
      %s3001 = scalar_lea.vmem %s8, %s3000
      // Predicated region
      $region53: #{forward.9} parent=51 // pred_check
        %p3002 = pneg %p215
      $region54: #{forward.9} parent=51 // pred_check_branch
        %3004 = sbr.rel (%p3002) target = $region56
      $region55: #{forward.9} parent=51 // pred_region
        _
      $region56: #{forward.9} parent=51 // pred_fallthru
        _
    $region52: #{forward.9} parent=5 // pred_fallthru
      _
    %p3005 = scmp.le.s32.totalorder 2, %s14
    // Predicated region
    $region57: #{forward.9} parent=5 // pred_check
      %p3006 = pneg %p3005
    $region58: #{forward.9} parent=5 // pred_check_branch
      %3008 = sbr.rel (%p3006) target = $region60
    $region59: #{forward.9} parent=5 // pred_region
      %s3009 = ssub.s32 %s14, 2
      // Predicated region
      $region61: #{forward.9} parent=59 // pred_check
        %p3010 = pneg %p221
      $region62: #{forward.9} parent=59 // pred_check_branch
        %3012 = sbr.rel (%p3010) target = $region64
      $region63: #{forward.9} parent=59 // pred_region
        %p3013 = scmp.lt.s32.totalorder %s20, 1
        %s3014 = scalar_select %p3013, %s20, 1
        %s3015 = smul.addr %s3014, 2
        %s3016 = smul.addr %s3015, 4
        %s3017 = scalar_lea.vmem %s8, %s3016
      $region64: #{forward.9} parent=59 // pred_fallthru
        _
    $region60: #{forward.9} parent=5 // pred_fallthru
      _
  $region6: #{forward.9} parent=0 // loop_footer
    %s18 = sadd.s32 1, %s14
  $region7: #{forward.9} parent=0 // loop_footer_branch
    %13 = sbr.rel target = $region3
  $region8: #{forward.9} parent=0 // loop_exit
    _

</llo_original>
